<compile_context>
chip_gen: v6e
topology: v6e:2x2x1
jax: 0.10.0
libtpu: 0.0.40
codegen_flags: <defaults>
</compile_context>

<pallas_src>
import functools

import jax
import jax.numpy as jnp
import numpy as np
from jax import lax
from jax.experimental import pallas as pl
from jax.experimental.pallas import tpu as pltpu

_VMEM_SPEC = pl.BlockSpec(memory_space=pltpu.MemorySpace.VMEM)
_KSIZE = 4  # conv kernel size for both convs


# -----------------------------------------------------------------------------
# Fused Pallas kernel
# -----------------------------------------------------------------------------
def _make_fused_kernel(n, h, w, cin, c1, c2, use_bf16_matmul):
    """Build the fused forward kernel for static shapes.

    Row-ordering invariant: after each conv matmul the activation matrix has
    rows ordered (batch, out_row, out_col); the 2x2 pool then needs only a
    leading-dim-splitting reshape + sublane-aligned slice adds (row pairs) and
    a short static loop of single-column slice adds (col pairs).
    """
    kh = kw = _KSIZE
    hp1, wp1 = h + 3, w + 3                     # F.pad(x, (2,1,2,1))
    hc1, wc1 = hp1 - kh + 1, wp1 - kw + 1       # conv1 output spatial (= h, w)
    ho1, wo1 = hc1 // 2, wc1 // 2               # pool1 output spatial
    hp2, wp2 = ho1 + 3, wo1 + 3
    hc2, wc2 = hp2 - kh + 1, wp2 - kw + 1       # conv2 output spatial (= ho1, wo1)
    ho2, wo2 = hc2 // 2, wc2 // 2               # pool2 output spatial
    k1, k2 = kh * kw * cin, kh * kw * c1
    m1, m2 = n * hc1 * wc1, n * hc2 * wc2
    cdt = jnp.bfloat16 if use_bf16_matmul else jnp.float32

    def kernel(x_ref, w1_ref, b1_ref, w2_ref, b2_ref,
               fw1_ref, fb1_ref, fw2_ref, fb2_ref, o_ref,
               xp1_ref, cols1_ref, xp2_ref, cols2_ref, flat_ref):
        # ---- stage 1: on-chip pad, on-chip im2col, conv1 matmul, bias, ReLU ----
        xp1_ref[...] = jnp.zeros_like(xp1_ref)
        xp1_ref[:, 2:2 + h, 2:2 + w, :] = x_ref[...]
        for t in range(kh * kw):                 # patch columns ordered (kh, kw, cin)
            i, j = divmod(t, kw)
            cols1_ref[:, :, :, t * cin:(t + 1) * cin] = xp1_ref[:, i:i + hc1, j:j + wc1, :]
        a1 = jnp.dot(cols1_ref[...].reshape(m1, k1).astype(cdt),
                     w1_ref[...].astype(cdt),
                     preferred_element_type=jnp.float32)
        a1 = jnp.maximum(a1 + b1_ref[...], 0.0)              # (m1, c1), rows (b, y, x)

        # ---- pool1: 2x2 window-sum * 0.5 (divisor_override=2), write padded
        #      conv2 input directly into its VMEM scratch ----
        a1 = a1.reshape(n * ho1, 2 * wc1, c1)                # pair conv rows (sublane-aligned)
        h1 = (a1[:, :wc1, :] + a1[:, wc1:, :]).reshape(n, ho1, wc1, c1)
        xp2_ref[...] = jnp.zeros_like(xp2_ref)
        for x0 in range(wo1):                                # pair conv cols
            xp2_ref[:, 2:2 + ho1, 2 + x0:3 + x0, :] = (
                h1[:, :, 2 * x0:2 * x0 + 1, :]
                + h1[:, :, 2 * x0 + 1:2 * x0 + 2, :]) * 0.5

        # ---- stage 2: conv2 matmul, bias, ReLU ----
        for t in range(kh * kw):
            i, j = divmod(t, kw)
            cols2_ref[:, :, :, t * c1:(t + 1) * c1] = xp2_ref[:, i:i + hc2, j:j + wc2, :]
        a2 = jnp.dot(cols2_ref[...].reshape(m2, k2).astype(cdt),
                     w2_ref[...].astype(cdt),
                     preferred_element_type=jnp.float32)
        a2 = jnp.maximum(a2 + b2_ref[...], 0.0)              # (m2, c2)

        # ---- pool2 + flatten in (y, x, c) order (fc1 weights pre-permuted) ----
        a2 = a2.reshape(n * ho2, 2 * wc2, c2)
        h2 = (a2[:, :wc2, :] + a2[:, wc2:, :]).reshape(n, ho2, wc2, c2)
        for y0 in range(ho2):
            for x0 in range(wo2):
                s = y0 * wo2 + x0
                v = (h2[:, y0:y0 + 1, 2 * x0:2 * x0 + 1, :]
                     + h2[:, y0:y0 + 1, 2 * x0 + 1:2 * x0 + 2, :]) * 0.5
                flat_ref[:, s * c2:(s + 1) * c2] = v.reshape(n, c2)

        # ---- fc1 -> ReLU -> fc2, all in VMEM ----
        hid = jnp.dot(flat_ref[...].astype(cdt), fw1_ref[...].astype(cdt),
                      preferred_element_type=jnp.float32)
        hid = jnp.maximum(hid + fb1_ref[...], 0.0)
        out = jnp.dot(hid.astype(cdt), fw2_ref[...].astype(cdt),
                      preferred_element_type=jnp.float32)
        o_ref[...] = (out + fb2_ref[...]).astype(o_ref.dtype)

    return kernel


# -----------------------------------------------------------------------------
# One-time (outside jit) parameter layout preparation - no per-forward transposes
# -----------------------------------------------------------------------------
def prepare_params(params, img_size):
    c1 = params["conv1_w"].shape[0]
    c2 = params["conv2_w"].shape[0]
    # (Cout, Cin, KH, KW) -> (KH, KW, Cin, Cout) -> (K, Cout): matches the
    # in-kernel im2col column order (kh, kw, cin).
    w1 = jnp.transpose(params["conv1_w"], (2, 3, 1, 0)).reshape(-1, c1)
    w2 = jnp.transpose(params["conv2_w"], (2, 3, 1, 0)).reshape(-1, c2)
    # PyTorch flattens NCHW, i.e. feature order (c, h, w); the kernel flattens
    # in (h, w, c) order, so permute fc1's input columns once here.
    f_out, f_in = params["fc1_w"].shape
    sp = img_size // 4
    fw1 = (params["fc1_w"].reshape(f_out, c2, sp, sp)
           .transpose(0, 2, 3, 1).reshape(f_out, f_in).T)       # (f_in, f_out)
    fw2 = params["fc2_w"].T                                     # (100, num_classes)
    return {
        "w1": w1, "b1": params["conv1_b"].reshape(1, -1),
        "w2": w2, "b2": params["conv2_b"].reshape(1, -1),
        "fw1": fw1, "fb1": params["fc1_b"].reshape(1, -1),
        "fw2": fw2, "fb2": params["fc2_b"].reshape(1, -1),
    }


# -----------------------------------------------------------------------------
# Public forward: one pallas_call; only a tiny NCHW->NHWC transpose stays in XLA
# -----------------------------------------------------------------------------
def aol_2c2f_forward(x_nchw, kp, *, use_bf16_matmul=False):
    n, cin, h, w = x_nchw.shape
    assert h % 4 == 0 and w % 4 == 0, "spatial dims must be divisible by 4"
    c1 = kp["w1"].shape[1]
    c2 = kp["w2"].shape[1]
    ncls = kp["fw2"].shape[1]
    k = _KSIZE
    ho1, wo1 = h // 2, w // 2
    ho2, wo2 = h // 4, w // 4

    x_nhwc = jnp.transpose(x_nchw, (0, 2, 3, 1))   # tiny; everything else is fused
    kernel = _make_fused_kernel(n, h, w, cin, c1, c2, use_bf16_matmul)
    scratch = [
        pltpu.VMEM((n, h + 3, w + 3, cin), jnp.float32),       # padded conv1 input
        pltpu.VMEM((n, h, w, k * k * cin), jnp.float32),       # conv1 im2col patches
        pltpu.VMEM((n, ho1 + 3, wo1 + 3, c1), jnp.float32),    # padded conv2 input
        pltpu.VMEM((n, ho1, wo1, k * k * c1), jnp.float32),    # conv2 im2col patches
        pltpu.VMEM((n, ho2 * wo2 * c2), jnp.float32),          # flattened fc input
    ]
    return pl.pallas_call(
        kernel,
        out_shape=jax.ShapeDtypeStruct((n, ncls), jnp.float32),
        in_specs=[_VMEM_SPEC] * 9,
        out_specs=_VMEM_SPEC,
        scratch_shapes=scratch,
    )(x_nhwc, kp["w1"], kp["b1"], kp["w2"], kp["b2"],
      kp["fw1"], kp["fb1"], kp["fw2"], kp["fb2"])


# -----------------------------------------------------------------------------
# Deterministic parameter init (PyTorch default shapes / fan-in uniform bounds)
# -----------------------------------------------------------------------------
def init_params(key, in_channels, img_size, num_classes):
    n = img_size // 4
    ks = jax.random.split(key, 8)

    def u(k, shape, fan_in):
        bound = 1.0 / np.sqrt(fan_in)
        return jax.random.uniform(k, shape, jnp.float32, -bound, bound)

    return {
        "conv1_w": u(ks[0], (16, in_channels, 4, 4), in_channels * 16),
        "conv1_b": u(ks[1], (16,), in_channels * 16),
        "conv2_w": u(ks[2], (32, 16, 4, 4), 16 * 16),
        "conv2_b": u(ks[3], (32,), 16 * 16),
        "fc1_w": u(ks[4], (100, 32 * n * n), 32 * n * n),
        "fc1_b": u(ks[5], (100,), 32 * n * n),
        "fc2_w": u(ks[6], (num_classes, 100), 100),
        "fc2_b": u(ks[7], (num_classes,), 100),
    }


# -----------------------------------------------------------------------------
# Pure-JAX reference (mirrors the PyTorch forward exactly, NCHW)
# -----------------------------------------------------------------------------
def reference_forward(x_nchw, params):
    def conv(x, w, b):
        y = lax.conv_general_dilated(x, w, (1, 1), "VALID",
                                     dimension_numbers=("NCHW", "OIHW", "NCHW"))
        return y + b.reshape(1, -1, 1, 1)

    def pool(x):  # AvgPool2d(2, divisor_override=2) == 2x2 window sum / 2
        return lax.reduce_window(x, 0.0, lax.add,
                                 (1, 1, 2, 2), (1, 1, 2, 2), "VALID") * 0.5

    pad = ((0, 0), (0, 0), (2, 1), (2, 1))
    x = pool(jax.nn.relu(conv(jnp.pad(x_nchw, pad),
                              params["conv1_w"], params["conv1_b"])))
    x = pool(jax.nn.relu(conv(jnp.pad(x, pad),
                              params["conv2_w"], params["conv2_b"])))
    x = x.reshape(x.shape[0], -1)
    x = jax.nn.relu(x @ params["fc1_w"].T + params["fc1_b"])
    return x @ params["fc2_w"].T + params["fc2_b"]


if __name__ == "__main__":
    # config: in_channels=4, img_size=16, num_classes=10 (layer / gamma unused in forward)
    batch, in_channels, img_size, num_classes = 2, 4, 16, 10

    key = jax.random.PRNGKey(0)
    k_x, k_p = jax.random.split(key)
    x = jax.random.normal(k_x, (batch, in_channels, img_size, img_size), jnp.float32)
    params = init_params(k_p, in_channels, img_size, num_classes)

    kparams = prepare_params(params, img_size)   # one-time layout prep, outside jit
    fwd = jax.jit(functools.partial(aol_2c2f_forward, use_bf16_matmul=False))

    out = jax.block_until_ready(fwd(x, kparams))
    assert out.shape == (batch, num_classes)

    ref = reference_forward(x, params)
    np.testing.assert_allclose(np.asarray(out), np.asarray(ref), rtol=1e-4, atol=1e-4)

    print("KERNEL_OK")
</pallas_src>

<mosaic_0001>
module attributes {stable_mosaic.version = 11 : i64} {
  func.func @kernel(%arg0: memref<2x16x16x4xf32, #tpu.memory_space<vmem>>, %arg1: memref<64x16xf32, #tpu.memory_space<vmem>>, %arg2: memref<1x16xf32, #tpu.memory_space<vmem>>, %arg3: memref<256x32xf32, #tpu.memory_space<vmem>>, %arg4: memref<1x32xf32, #tpu.memory_space<vmem>>, %arg5: memref<512x100xf32, #tpu.memory_space<vmem>>, %arg6: memref<1x100xf32, #tpu.memory_space<vmem>>, %arg7: memref<100x10xf32, #tpu.memory_space<vmem>>, %arg8: memref<1x10xf32, #tpu.memory_space<vmem>>, %arg9: memref<2x10xf32, #tpu.memory_space<vmem>>, %arg10: memref<2x19x19x4xf32, #tpu.memory_space<vmem>>, %arg11: memref<2x16x16x64xf32, #tpu.memory_space<vmem>>, %arg12: memref<2x11x11x16xf32, #tpu.memory_space<vmem>>, %arg13: memref<2x8x8x256xf32, #tpu.memory_space<vmem>>, %arg14: memref<2x512xf32, #tpu.memory_space<vmem>>) attributes {dimension_semantics = [], scalar_prefetch = 0 : i64, scratch_operands = 5 : i64, tpu.core_type = #tpu.core_type<tc>} {
    %cst = arith.constant 0.000000e+00 : f32
    %0 = vector.broadcast %cst : f32 to vector<2x19x19x4xf32>
    %c0 = arith.constant 0 : index
    %c0_0 = arith.constant 0 : index
    %c0_1 = arith.constant 0 : index
    %c0_2 = arith.constant 0 : index
    %1 = vector.load %arg10[%c0, %c0_0, %c0_1, %c0_2] : memref<2x19x19x4xf32, #tpu.memory_space<vmem>>, vector<2x19x19x4xf32>
    tpu.vector_store %arg10[%c0, %c0_0, %c0_1, %c0_2], %0 {strides = array<i32>} : memref<2x19x19x4xf32, #tpu.memory_space<vmem>>, vector<2x19x19x4xf32>,
    %c0_3 = arith.constant 0 : index
    %c0_4 = arith.constant 0 : index
    %c0_5 = arith.constant 0 : index
    %c0_6 = arith.constant 0 : index
    %2 = vector.load %arg0[%c0_3, %c0_4, %c0_5, %c0_6] : memref<2x16x16x4xf32, #tpu.memory_space<vmem>>, vector<2x16x16x4xf32>
    %c0_7 = arith.constant 0 : index
    %c2 = arith.constant 2 : index
    %c2_8 = arith.constant 2 : index
    %c0_9 = arith.constant 0 : index
    %3 = vector.load %arg10[%c0_7, %c2, %c2_8, %c0_9] : memref<2x19x19x4xf32, #tpu.memory_space<vmem>>, vector<2x16x16x4xf32>
    tpu.vector_store %arg10[%c0_7, %c2, %c2_8, %c0_9], %2 {strides = array<i32>} : memref<2x19x19x4xf32, #tpu.memory_space<vmem>>, vector<2x16x16x4xf32>,
    %c0_10 = arith.constant 0 : index
    %c0_11 = arith.constant 0 : index
    %c0_12 = arith.constant 0 : index
    %c0_13 = arith.constant 0 : index
    %4 = vector.load %arg10[%c0_10, %c0_11, %c0_12, %c0_13] : memref<2x19x19x4xf32, #tpu.memory_space<vmem>>, vector<2x16x16x4xf32>
    %c0_14 = arith.constant 0 : index
    %c0_15 = arith.constant 0 : index
    %c0_16 = arith.constant 0 : index
    %c0_17 = arith.constant 0 : index
    %5 = vector.load %arg11[%c0_14, %c0_15, %c0_16, %c0_17] : memref<2x16x16x64xf32, #tpu.memory_space<vmem>>, vector<2x16x16x4xf32>
    tpu.vector_store %arg11[%c0_14, %c0_15, %c0_16, %c0_17], %4 {strides = array<i32>} : memref<2x16x16x64xf32, #tpu.memory_space<vmem>>, vector<2x16x16x4xf32>,
    %c0_18 = arith.constant 0 : index
    %c0_19 = arith.constant 0 : index
    %c1 = arith.constant 1 : index
    %c0_20 = arith.constant 0 : index
    %6 = vector.load %arg10[%c0_18, %c0_19, %c1, %c0_20] : memref<2x19x19x4xf32, #tpu.memory_space<vmem>>, vector<2x16x16x4xf32>
    %c0_21 = arith.constant 0 : index
    %c0_22 = arith.constant 0 : index
    %c0_23 = arith.constant 0 : index
    %c4 = arith.constant 4 : index
    %7 = vector.load %arg11[%c0_21, %c0_22, %c0_23, %c4] : memref<2x16x16x64xf32, #tpu.memory_space<vmem>>, vector<2x16x16x4xf32>
    tpu.vector_store %arg11[%c0_21, %c0_22, %c0_23, %c4], %6 {strides = array<i32>} : memref<2x16x16x64xf32, #tpu.memory_space<vmem>>, vector<2x16x16x4xf32>,
    %c0_24 = arith.constant 0 : index
    %c0_25 = arith.constant 0 : index
    %c2_26 = arith.constant 2 : index
    %c0_27 = arith.constant 0 : index
    %8 = vector.load %arg10[%c0_24, %c0_25, %c2_26, %c0_27] : memref<2x19x19x4xf32, #tpu.memory_space<vmem>>, vector<2x16x16x4xf32>
    %c0_28 = arith.constant 0 : index
    %c0_29 = arith.constant 0 : index
    %c0_30 = arith.constant 0 : index
    %c8 = arith.constant 8 : index
    %9 = vector.load %arg11[%c0_28, %c0_29, %c0_30, %c8] : memref<2x16x16x64xf32, #tpu.memory_space<vmem>>, vector<2x16x16x4xf32>
    tpu.vector_store %arg11[%c0_28, %c0_29, %c0_30, %c8], %8 {strides = array<i32>} : memref<2x16x16x64xf32, #tpu.memory_space<vmem>>, vector<2x16x16x4xf32>,
    %c0_31 = arith.constant 0 : index
    %c0_32 = arith.constant 0 : index
    %c3 = arith.constant 3 : index
    %c0_33 = arith.constant 0 : index
    %10 = vector.load %arg10[%c0_31, %c0_32, %c3, %c0_33] : memref<2x19x19x4xf32, #tpu.memory_space<vmem>>, vector<2x16x16x4xf32>
    %c0_34 = arith.constant 0 : index
    %c0_35 = arith.constant 0 : index
    %c0_36 = arith.constant 0 : index
    %c12 = arith.constant 12 : index
    %11 = vector.load %arg11[%c0_34, %c0_35, %c0_36, %c12] : memref<2x16x16x64xf32, #tpu.memory_space<vmem>>, vector<2x16x16x4xf32>
    tpu.vector_store %arg11[%c0_34, %c0_35, %c0_36, %c12], %10 {strides = array<i32>} : memref<2x16x16x64xf32, #tpu.memory_space<vmem>>, vector<2x16x16x4xf32>,
    %c0_37 = arith.constant 0 : index
    %c1_38 = arith.constant 1 : index
    %c0_39 = arith.constant 0 : index
    %c0_40 = arith.constant 0 : index
    %12 = vector.load %arg10[%c0_37, %c1_38, %c0_39, %c0_40] : memref<2x19x19x4xf32, #tpu.memory_space<vmem>>, vector<2x16x16x4xf32>
    %c0_41 = arith.constant 0 : index
    %c0_42 = arith.constant 0 : index
    %c0_43 = arith.constant 0 : index
    %c16 = arith.constant 16 : index
    %13 = vector.load %arg11[%c0_41, %c0_42, %c0_43, %c16] : memref<2x16x16x64xf32, #tpu.memory_space<vmem>>, vector<2x16x16x4xf32>
    tpu.vector_store %arg11[%c0_41, %c0_42, %c0_43, %c16], %12 {strides = array<i32>} : memref<2x16x16x64xf32, #tpu.memory_space<vmem>>, vector<2x16x16x4xf32>,
    %c0_44 = arith.constant 0 : index
    %c1_45 = arith.constant 1 : index
    %c1_46 = arith.constant 1 : index
    %c0_47 = arith.constant 0 : index
    %14 = vector.load %arg10[%c0_44, %c1_45, %c1_46, %c0_47] : memref<2x19x19x4xf32, #tpu.memory_space<vmem>>, vector<2x16x16x4xf32>
    %c0_48 = arith.constant 0 : index
    %c0_49 = arith.constant 0 : index
    %c0_50 = arith.constant 0 : index
    %c20 = arith.constant 20 : index
    %15 = vector.load %arg11[%c0_48, %c0_49, %c0_50, %c20] : memref<2x16x16x64xf32, #tpu.memory_space<vmem>>, vector<2x16x16x4xf32>
    tpu.vector_store %arg11[%c0_48, %c0_49, %c0_50, %c20], %14 {strides = array<i32>} : memref<2x16x16x64xf32, #tpu.memory_space<vmem>>, vector<2x16x16x4xf32>,
    %c0_51 = arith.constant 0 : index
    %c1_52 = arith.constant 1 : index
    %c2_53 = arith.constant 2 : index
    %c0_54 = arith.constant 0 : index
    %16 = vector.load %arg10[%c0_51, %c1_52, %c2_53, %c0_54] : memref<2x19x19x4xf32, #tpu.memory_space<vmem>>, vector<2x16x16x4xf32>
    %c0_55 = arith.constant 0 : index
    %c0_56 = arith.constant 0 : index
    %c0_57 = arith.constant 0 : index
    %c24 = arith.constant 24 : index
    %17 = vector.load %arg11[%c0_55, %c0_56, %c0_57, %c24] : memref<2x16x16x64xf32, #tpu.memory_space<vmem>>, vector<2x16x16x4xf32>
    tpu.vector_store %arg11[%c0_55, %c0_56, %c0_57, %c24], %16 {strides = array<i32>} : memref<2x16x16x64xf32, #tpu.memory_space<vmem>>, vector<2x16x16x4xf32>,
    %c0_58 = arith.constant 0 : index
    %c1_59 = arith.constant 1 : index
    %c3_60 = arith.constant 3 : index
    %c0_61 = arith.constant 0 : index
    %18 = vector.load %arg10[%c0_58, %c1_59, %c3_60, %c0_61] : memref<2x19x19x4xf32, #tpu.memory_space<vmem>>, vector<2x16x16x4xf32>
    %c0_62 = arith.constant 0 : index
    %c0_63 = arith.constant 0 : index
    %c0_64 = arith.constant 0 : index
    %c28 = arith.constant 28 : index
    %19 = vector.load %arg11[%c0_62, %c0_63, %c0_64, %c28] : memref<2x16x16x64xf32, #tpu.memory_space<vmem>>, vector<2x16x16x4xf32>
    tpu.vector_store %arg11[%c0_62, %c0_63, %c0_64, %c28], %18 {strides = array<i32>} : memref<2x16x16x64xf32, #tpu.memory_space<vmem>>, vector<2x16x16x4xf32>,
    %c0_65 = arith.constant 0 : index
    %c2_66 = arith.constant 2 : index
    %c0_67 = arith.constant 0 : index
    %c0_68 = arith.constant 0 : index
    %20 = vector.load %arg10[%c0_65, %c2_66, %c0_67, %c0_68] : memref<2x19x19x4xf32, #tpu.memory_space<vmem>>, vector<2x16x16x4xf32>
    %c0_69 = arith.constant 0 : index
    %c0_70 = arith.constant 0 : index
    %c0_71 = arith.constant 0 : index
    %c32 = arith.constant 32 : index
    %21 = vector.load %arg11[%c0_69, %c0_70, %c0_71, %c32] : memref<2x16x16x64xf32, #tpu.memory_space<vmem>>, vector<2x16x16x4xf32>
    tpu.vector_store %arg11[%c0_69, %c0_70, %c0_71, %c32], %20 {strides = array<i32>} : memref<2x16x16x64xf32, #tpu.memory_space<vmem>>, vector<2x16x16x4xf32>,
    %c0_72 = arith.constant 0 : index
    %c2_73 = arith.constant 2 : index
    %c1_74 = arith.constant 1 : index
    %c0_75 = arith.constant 0 : index
    %22 = vector.load %arg10[%c0_72, %c2_73, %c1_74, %c0_75] : memref<2x19x19x4xf32, #tpu.memory_space<vmem>>, vector<2x16x16x4xf32>
    %c0_76 = arith.constant 0 : index
    %c0_77 = arith.constant 0 : index
    %c0_78 = arith.constant 0 : index
    %c36 = arith.constant 36 : index
    %23 = vector.load %arg11[%c0_76, %c0_77, %c0_78, %c36] : memref<2x16x16x64xf32, #tpu.memory_space<vmem>>, vector<2x16x16x4xf32>
    tpu.vector_store %arg11[%c0_76, %c0_77, %c0_78, %c36], %22 {strides = array<i32>} : memref<2x16x16x64xf32, #tpu.memory_space<vmem>>, vector<2x16x16x4xf32>,
    %c0_79 = arith.constant 0 : index
    %c2_80 = arith.constant 2 : index
    %c2_81 = arith.constant 2 : index
    %c0_82 = arith.constant 0 : index
    %24 = vector.load %arg10[%c0_79, %c2_80, %c2_81, %c0_82] : memref<2x19x19x4xf32, #tpu.memory_space<vmem>>, vector<2x16x16x4xf32>
    %c0_83 = arith.constant 0 : index
    %c0_84 = arith.constant 0 : index
    %c0_85 = arith.constant 0 : index
    %c40 = arith.constant 40 : index
    %25 = vector.load %arg11[%c0_83, %c0_84, %c0_85, %c40] : memref<2x16x16x64xf32, #tpu.memory_space<vmem>>, vector<2x16x16x4xf32>
    tpu.vector_store %arg11[%c0_83, %c0_84, %c0_85, %c40], %24 {strides = array<i32>} : memref<2x16x16x64xf32, #tpu.memory_space<vmem>>, vector<2x16x16x4xf32>,
    %c0_86 = arith.constant 0 : index
    %c2_87 = arith.constant 2 : index
    %c3_88 = arith.constant 3 : index
    %c0_89 = arith.constant 0 : index
    %26 = vector.load %arg10[%c0_86, %c2_87, %c3_88, %c0_89] : memref<2x19x19x4xf32, #tpu.memory_space<vmem>>, vector<2x16x16x4xf32>
    %c0_90 = arith.constant 0 : index
    %c0_91 = arith.constant 0 : index
    %c0_92 = arith.constant 0 : index
    %c44 = arith.constant 44 : index
    %27 = vector.load %arg11[%c0_90, %c0_91, %c0_92, %c44] : memref<2x16x16x64xf32, #tpu.memory_space<vmem>>, vector<2x16x16x4xf32>
    tpu.vector_store %arg11[%c0_90, %c0_91, %c0_92, %c44], %26 {strides = array<i32>} : memref<2x16x16x64xf32, #tpu.memory_space<vmem>>, vector<2x16x16x4xf32>,
    %c0_93 = arith.constant 0 : index
    %c3_94 = arith.constant 3 : index
    %c0_95 = arith.constant 0 : index
    %c0_96 = arith.constant 0 : index
    %28 = vector.load %arg10[%c0_93, %c3_94, %c0_95, %c0_96] : memref<2x19x19x4xf32, #tpu.memory_space<vmem>>, vector<2x16x16x4xf32>
    %c0_97 = arith.constant 0 : index
    %c0_98 = arith.constant 0 : index
    %c0_99 = arith.constant 0 : index
    %c48 = arith.constant 48 : index
    %29 = vector.load %arg11[%c0_97, %c0_98, %c0_99, %c48] : memref<2x16x16x64xf32, #tpu.memory_space<vmem>>, vector<2x16x16x4xf32>
    tpu.vector_store %arg11[%c0_97, %c0_98, %c0_99, %c48], %28 {strides = array<i32>} : memref<2x16x16x64xf32, #tpu.memory_space<vmem>>, vector<2x16x16x4xf32>,
    %c0_100 = arith.constant 0 : index
    %c3_101 = arith.constant 3 : index
    %c1_102 = arith.constant 1 : index
    %c0_103 = arith.constant 0 : index
    %30 = vector.load %arg10[%c0_100, %c3_101, %c1_102, %c0_103] : memref<2x19x19x4xf32, #tpu.memory_space<vmem>>, vector<2x16x16x4xf32>
    %c0_104 = arith.constant 0 : index
    %c0_105 = arith.constant 0 : index
    %c0_106 = arith.constant 0 : index
    %c52 = arith.constant 52 : index
    %31 = vector.load %arg11[%c0_104, %c0_105, %c0_106, %c52] : memref<2x16x16x64xf32, #tpu.memory_space<vmem>>, vector<2x16x16x4xf32>
    tpu.vector_store %arg11[%c0_104, %c0_105, %c0_106, %c52], %30 {strides = array<i32>} : memref<2x16x16x64xf32, #tpu.memory_space<vmem>>, vector<2x16x16x4xf32>,
    %c0_107 = arith.constant 0 : index
    %c3_108 = arith.constant 3 : index
    %c2_109 = arith.constant 2 : index
    %c0_110 = arith.constant 0 : index
    %32 = vector.load %arg10[%c0_107, %c3_108, %c2_109, %c0_110] : memref<2x19x19x4xf32, #tpu.memory_space<vmem>>, vector<2x16x16x4xf32>
    %c0_111 = arith.constant 0 : index
    %c0_112 = arith.constant 0 : index
    %c0_113 = arith.constant 0 : index
    %c56 = arith.constant 56 : index
    %33 = vector.load %arg11[%c0_111, %c0_112, %c0_113, %c56] : memref<2x16x16x64xf32, #tpu.memory_space<vmem>>, vector<2x16x16x4xf32>
    tpu.vector_store %arg11[%c0_111, %c0_112, %c0_113, %c56], %32 {strides = array<i32>} : memref<2x16x16x64xf32, #tpu.memory_space<vmem>>, vector<2x16x16x4xf32>,
    %c0_114 = arith.constant 0 : index
    %c3_115 = arith.constant 3 : index
    %c3_116 = arith.constant 3 : index
    %c0_117 = arith.constant 0 : index
    %34 = vector.load %arg10[%c0_114, %c3_115, %c3_116, %c0_117] : memref<2x19x19x4xf32, #tpu.memory_space<vmem>>, vector<2x16x16x4xf32>
    %c0_118 = arith.constant 0 : index
    %c0_119 = arith.constant 0 : index
    %c0_120 = arith.constant 0 : index
    %c60 = arith.constant 60 : index
    %35 = vector.load %arg11[%c0_118, %c0_119, %c0_120, %c60] : memref<2x16x16x64xf32, #tpu.memory_space<vmem>>, vector<2x16x16x4xf32>
    tpu.vector_store %arg11[%c0_118, %c0_119, %c0_120, %c60], %34 {strides = array<i32>} : memref<2x16x16x64xf32, #tpu.memory_space<vmem>>, vector<2x16x16x4xf32>,
    %c0_121 = arith.constant 0 : index
    %c0_122 = arith.constant 0 : index
    %c0_123 = arith.constant 0 : index
    %c0_124 = arith.constant 0 : index
    %36 = vector.load %arg11[%c0_121, %c0_122, %c0_123, %c0_124] : memref<2x16x16x64xf32, #tpu.memory_space<vmem>>, vector<2x16x16x64xf32>
    %37 = vector.shape_cast %36 : vector<2x16x16x64xf32> to vector<512x64xf32>
    %c0_125 = arith.constant 0 : index
    %c0_126 = arith.constant 0 : index
    %38 = vector.load %arg1[%c0_125, %c0_126] : memref<64x16xf32, #tpu.memory_space<vmem>>, vector<64x16xf32>
    %cst_127 = arith.constant dense<0.000000e+00> : vector<512x16xf32>
    %39 = tpu.matmul %37, %38, %cst_127 {dimension_numbers = #tpu.dot_dimension_numbers<[1], [0], [0], [1], [0, 0, 1, 1], [], []>} : vector<512x64xf32>, vector<64x16xf32>, vector<512x16xf32> -> vector<512x16xf32>
    %c0_128 = arith.constant 0 : index
    %c0_129 = arith.constant 0 : index
    %40 = vector.load %arg2[%c0_128, %c0_129] : memref<1x16xf32, #tpu.memory_space<vmem>>, vector<1x16xf32>
    %41 = vector.broadcast %40 : vector<1x16xf32> to vector<512x16xf32>
    %42 = arith.addf %39, %41 : vector<512x16xf32>
    %cst_130 = arith.constant 0.000000e+00 : f32
    %43 = vector.broadcast %cst_130 : f32 to vector<512x16xf32>
    %44 = arith.maximumf %42, %43 : vector<512x16xf32>
    %45 = vector.shape_cast %44 : vector<512x16xf32> to vector<16x32x16xf32>
    %46 = vector.extract_strided_slice %45 {offsets = [0, 0, 0], sizes = [16, 16, 16], strides = [1, 1, 1]} : vector<16x32x16xf32> to vector<16x16x16xf32>
    %47 = vector.extract_strided_slice %45 {offsets = [0, 16, 0], sizes = [16, 16, 16], strides = [1, 1, 1]} : vector<16x32x16xf32> to vector<16x16x16xf32>
    %48 = arith.addf %46, %47 : vector<16x16x16xf32>
    %49 = vector.shape_cast %48 : vector<16x16x16xf32> to vector<2x8x16x16xf32>
    %cst_131 = arith.constant 0.000000e+00 : f32
    %50 = vector.broadcast %cst_131 : f32 to vector<2x11x11x16xf32>
    %c0_132 = arith.constant 0 : index
    %c0_133 = arith.constant 0 : index
    %c0_134 = arith.constant 0 : index
    %c0_135 = arith.constant 0 : index
    %51 = vector.load %arg12[%c0_132, %c0_133, %c0_134, %c0_135] : memref<2x11x11x16xf32, #tpu.memory_space<vmem>>, vector<2x11x11x16xf32>
    tpu.vector_store %arg12[%c0_132, %c0_133, %c0_134, %c0_135], %50 {strides = array<i32>} : memref<2x11x11x16xf32, #tpu.memory_space<vmem>>, vector<2x11x11x16xf32>,
    %52 = vector.extract_strided_slice %49 {offsets = [0, 0, 0, 0], sizes = [2, 8, 1, 16], strides = [1, 1, 1, 1]} : vector<2x8x16x16xf32> to vector<2x8x1x16xf32>
    %53 = vector.extract_strided_slice %49 {offsets = [0, 0, 1, 0], sizes = [2, 8, 1, 16], strides = [1, 1, 1, 1]} : vector<2x8x16x16xf32> to vector<2x8x1x16xf32>
    %54 = arith.addf %52, %53 : vector<2x8x1x16xf32>
    %cst_136 = arith.constant 5.000000e-01 : f32
    %55 = vector.broadcast %cst_136 : f32 to vector<2x8x1x16xf32>
    %56 = arith.mulf %54, %55 : vector<2x8x1x16xf32>
    %c0_137 = arith.constant 0 : index
    %c2_138 = arith.constant 2 : index
    %c2_139 = arith.constant 2 : index
    %c0_140 = arith.constant 0 : index
    %57 = vector.load %arg12[%c0_137, %c2_138, %c2_139, %c0_140] : memref<2x11x11x16xf32, #tpu.memory_space<vmem>>, vector<2x8x1x16xf32>
    tpu.vector_store %arg12[%c0_137, %c2_138, %c2_139, %c0_140], %56 {strides = array<i32>} : memref<2x11x11x16xf32, #tpu.memory_space<vmem>>, vector<2x8x1x16xf32>,
    %58 = vector.extract_strided_slice %49 {offsets = [0, 0, 2, 0], sizes = [2, 8, 1, 16], strides = [1, 1, 1, 1]} : vector<2x8x16x16xf32> to vector<2x8x1x16xf32>
    %59 = vector.extract_strided_slice %49 {offsets = [0, 0, 3, 0], sizes = [2, 8, 1, 16], strides = [1, 1, 1, 1]} : vector<2x8x16x16xf32> to vector<2x8x1x16xf32>
    %60 = arith.addf %58, %59 : vector<2x8x1x16xf32>
    %cst_141 = arith.constant 5.000000e-01 : f32
    %61 = vector.broadcast %cst_141 : f32 to vector<2x8x1x16xf32>
    %62 = arith.mulf %60, %61 : vector<2x8x1x16xf32>
    %c0_142 = arith.constant 0 : index
    %c2_143 = arith.constant 2 : index
    %c3_144 = arith.constant 3 : index
    %c0_145 = arith.constant 0 : index
    %63 = vector.load %arg12[%c0_142, %c2_143, %c3_144, %c0_145] : memref<2x11x11x16xf32, #tpu.memory_space<vmem>>, vector<2x8x1x16xf32>
    tpu.vector_store %arg12[%c0_142, %c2_143, %c3_144, %c0_145], %62 {strides = array<i32>} : memref<2x11x11x16xf32, #tpu.memory_space<vmem>>, vector<2x8x1x16xf32>,
    %64 = vector.extract_strided_slice %49 {offsets = [0, 0, 4, 0], sizes = [2, 8, 1, 16], strides = [1, 1, 1, 1]} : vector<2x8x16x16xf32> to vector<2x8x1x16xf32>
    %65 = vector.extract_strided_slice %49 {offsets = [0, 0, 5, 0], sizes = [2, 8, 1, 16], strides = [1, 1, 1, 1]} : vector<2x8x16x16xf32> to vector<2x8x1x16xf32>
    %66 = arith.addf %64, %65 : vector<2x8x1x16xf32>
    %cst_146 = arith.constant 5.000000e-01 : f32
    %67 = vector.broadcast %cst_146 : f32 to vector<2x8x1x16xf32>
    %68 = arith.mulf %66, %67 : vector<2x8x1x16xf32>
    %c0_147 = arith.constant 0 : index
    %c2_148 = arith.constant 2 : index
    %c4_149 = arith.constant 4 : index
    %c0_150 = arith.constant 0 : index
    %69 = vector.load %arg12[%c0_147, %c2_148, %c4_149, %c0_150] : memref<2x11x11x16xf32, #tpu.memory_space<vmem>>, vector<2x8x1x16xf32>
    tpu.vector_store %arg12[%c0_147, %c2_148, %c4_149, %c0_150], %68 {strides = array<i32>} : memref<2x11x11x16xf32, #tpu.memory_space<vmem>>, vector<2x8x1x16xf32>,
    %70 = vector.extract_strided_slice %49 {offsets = [0, 0, 6, 0], sizes = [2, 8, 1, 16], strides = [1, 1, 1, 1]} : vector<2x8x16x16xf32> to vector<2x8x1x16xf32>
    %71 = vector.extract_strided_slice %49 {offsets = [0, 0, 7, 0], sizes = [2, 8, 1, 16], strides = [1, 1, 1, 1]} : vector<2x8x16x16xf32> to vector<2x8x1x16xf32>
    %72 = arith.addf %70, %71 : vector<2x8x1x16xf32>
    %cst_151 = arith.constant 5.000000e-01 : f32
    %73 = vector.broadcast %cst_151 : f32 to vector<2x8x1x16xf32>
    %74 = arith.mulf %72, %73 : vector<2x8x1x16xf32>
    %c0_152 = arith.constant 0 : index
    %c2_153 = arith.constant 2 : index
    %c5 = arith.constant 5 : index
    %c0_154 = arith.constant 0 : index
    %75 = vector.load %arg12[%c0_152, %c2_153, %c5, %c0_154] : memref<2x11x11x16xf32, #tpu.memory_space<vmem>>, vector<2x8x1x16xf32>
    tpu.vector_store %arg12[%c0_152, %c2_153, %c5, %c0_154], %74 {strides = array<i32>} : memref<2x11x11x16xf32, #tpu.memory_space<vmem>>, vector<2x8x1x16xf32>,
    %76 = vector.extract_strided_slice %49 {offsets = [0, 0, 8, 0], sizes = [2, 8, 1, 16], strides = [1, 1, 1, 1]} : vector<2x8x16x16xf32> to vector<2x8x1x16xf32>
    %77 = vector.extract_strided_slice %49 {offsets = [0, 0, 9, 0], sizes = [2, 8, 1, 16], strides = [1, 1, 1, 1]} : vector<2x8x16x16xf32> to vector<2x8x1x16xf32>
    %78 = arith.addf %76, %77 : vector<2x8x1x16xf32>
    %cst_155 = arith.constant 5.000000e-01 : f32
    %79 = vector.broadcast %cst_155 : f32 to vector<2x8x1x16xf32>
    %80 = arith.mulf %78, %79 : vector<2x8x1x16xf32>
    %c0_156 = arith.constant 0 : index
    %c2_157 = arith.constant 2 : index
    %c6 = arith.constant 6 : index
    %c0_158 = arith.constant 0 : index
    %81 = vector.load %arg12[%c0_156, %c2_157, %c6, %c0_158] : memref<2x11x11x16xf32, #tpu.memory_space<vmem>>, vector<2x8x1x16xf32>
    tpu.vector_store %arg12[%c0_156, %c2_157, %c6, %c0_158], %80 {strides = array<i32>} : memref<2x11x11x16xf32, #tpu.memory_space<vmem>>, vector<2x8x1x16xf32>,
    %82 = vector.extract_strided_slice %49 {offsets = [0, 0, 10, 0], sizes = [2, 8, 1, 16], strides = [1, 1, 1, 1]} : vector<2x8x16x16xf32> to vector<2x8x1x16xf32>
    %83 = vector.extract_strided_slice %49 {offsets = [0, 0, 11, 0], sizes = [2, 8, 1, 16], strides = [1, 1, 1, 1]} : vector<2x8x16x16xf32> to vector<2x8x1x16xf32>
    %84 = arith.addf %82, %83 : vector<2x8x1x16xf32>
    %cst_159 = arith.constant 5.000000e-01 : f32
    %85 = vector.broadcast %cst_159 : f32 to vector<2x8x1x16xf32>
    %86 = arith.mulf %84, %85 : vector<2x8x1x16xf32>
    %c0_160 = arith.constant 0 : index
    %c2_161 = arith.constant 2 : index
    %c7 = arith.constant 7 : index
    %c0_162 = arith.constant 0 : index
    %87 = vector.load %arg12[%c0_160, %c2_161, %c7, %c0_162] : memref<2x11x11x16xf32, #tpu.memory_space<vmem>>, vector<2x8x1x16xf32>
    tpu.vector_store %arg12[%c0_160, %c2_161, %c7, %c0_162], %86 {strides = array<i32>} : memref<2x11x11x16xf32, #tpu.memory_space<vmem>>, vector<2x8x1x16xf32>,
    %88 = vector.extract_strided_slice %49 {offsets = [0, 0, 12, 0], sizes = [2, 8, 1, 16], strides = [1, 1, 1, 1]} : vector<2x8x16x16xf32> to vector<2x8x1x16xf32>
    %89 = vector.extract_strided_slice %49 {offsets = [0, 0, 13, 0], sizes = [2, 8, 1, 16], strides = [1, 1, 1, 1]} : vector<2x8x16x16xf32> to vector<2x8x1x16xf32>
    %90 = arith.addf %88, %89 : vector<2x8x1x16xf32>
    %cst_163 = arith.constant 5.000000e-01 : f32
    %91 = vector.broadcast %cst_163 : f32 to vector<2x8x1x16xf32>
    %92 = arith.mulf %90, %91 : vector<2x8x1x16xf32>
    %c0_164 = arith.constant 0 : index
    %c2_165 = arith.constant 2 : index
    %c8_166 = arith.constant 8 : index
    %c0_167 = arith.constant 0 : index
    %93 = vector.load %arg12[%c0_164, %c2_165, %c8_166, %c0_167] : memref<2x11x11x16xf32, #tpu.memory_space<vmem>>, vector<2x8x1x16xf32>
    tpu.vector_store %arg12[%c0_164, %c2_165, %c8_166, %c0_167], %92 {strides = array<i32>} : memref<2x11x11x16xf32, #tpu.memory_space<vmem>>, vector<2x8x1x16xf32>,
    %94 = vector.extract_strided_slice %49 {offsets = [0, 0, 14, 0], sizes = [2, 8, 1, 16], strides = [1, 1, 1, 1]} : vector<2x8x16x16xf32> to vector<2x8x1x16xf32>
    %95 = vector.extract_strided_slice %49 {offsets = [0, 0, 15, 0], sizes = [2, 8, 1, 16], strides = [1, 1, 1, 1]} : vector<2x8x16x16xf32> to vector<2x8x1x16xf32>
    %96 = arith.addf %94, %95 : vector<2x8x1x16xf32>
    %cst_168 = arith.constant 5.000000e-01 : f32
    %97 = vector.broadcast %cst_168 : f32 to vector<2x8x1x16xf32>
    %98 = arith.mulf %96, %97 : vector<2x8x1x16xf32>
    %c0_169 = arith.constant 0 : index
    %c2_170 = arith.constant 2 : index
    %c9 = arith.constant 9 : index
    %c0_171 = arith.constant 0 : index
    %99 = vector.load %arg12[%c0_169, %c2_170, %c9, %c0_171] : memref<2x11x11x16xf32, #tpu.memory_space<vmem>>, vector<2x8x1x16xf32>
    tpu.vector_store %arg12[%c0_169, %c2_170, %c9, %c0_171], %98 {strides = array<i32>} : memref<2x11x11x16xf32, #tpu.memory_space<vmem>>, vector<2x8x1x16xf32>,
    %c0_172 = arith.constant 0 : index
    %c0_173 = arith.constant 0 : index
    %c0_174 = arith.constant 0 : index
    %c0_175 = arith.constant 0 : index
    %100 = vector.load %arg12[%c0_172, %c0_173, %c0_174, %c0_175] : memref<2x11x11x16xf32, #tpu.memory_space<vmem>>, vector<2x8x8x16xf32>
    %c0_176 = arith.constant 0 : index
    %c0_177 = arith.constant 0 : index
    %c0_178 = arith.constant 0 : index
    %c0_179 = arith.constant 0 : index
    %101 = vector.load %arg13[%c0_176, %c0_177, %c0_178, %c0_179] : memref<2x8x8x256xf32, #tpu.memory_space<vmem>>, vector<2x8x8x16xf32>
    tpu.vector_store %arg13[%c0_176, %c0_177, %c0_178, %c0_179], %100 {strides = array<i32>} : memref<2x8x8x256xf32, #tpu.memory_space<vmem>>, vector<2x8x8x16xf32>,
    %c0_180 = arith.constant 0 : index
    %c0_181 = arith.constant 0 : index
    %c1_182 = arith.constant 1 : index
    %c0_183 = arith.constant 0 : index
    %102 = vector.load %arg12[%c0_180, %c0_181, %c1_182, %c0_183] : memref<2x11x11x16xf32, #tpu.memory_space<vmem>>, vector<2x8x8x16xf32>
    %c0_184 = arith.constant 0 : index
    %c0_185 = arith.constant 0 : index
    %c0_186 = arith.constant 0 : index
    %c16_187 = arith.constant 16 : index
    %103 = vector.load %arg13[%c0_184, %c0_185, %c0_186, %c16_187] : memref<2x8x8x256xf32, #tpu.memory_space<vmem>>, vector<2x8x8x16xf32>
    tpu.vector_store %arg13[%c0_184, %c0_185, %c0_186, %c16_187], %102 {strides = array<i32>} : memref<2x8x8x256xf32, #tpu.memory_space<vmem>>, vector<2x8x8x16xf32>,
    %c0_188 = arith.constant 0 : index
    %c0_189 = arith.constant 0 : index
    %c2_190 = arith.constant 2 : index
    %c0_191 = arith.constant 0 : index
    %104 = vector.load %arg12[%c0_188, %c0_189, %c2_190, %c0_191] : memref<2x11x11x16xf32, #tpu.memory_space<vmem>>, vector<2x8x8x16xf32>
    %c0_192 = arith.constant 0 : index
    %c0_193 = arith.constant 0 : index
    %c0_194 = arith.constant 0 : index
    %c32_195 = arith.constant 32 : index
    %105 = vector.load %arg13[%c0_192, %c0_193, %c0_194, %c32_195] : memref<2x8x8x256xf32, #tpu.memory_space<vmem>>, vector<2x8x8x16xf32>
    tpu.vector_store %arg13[%c0_192, %c0_193, %c0_194, %c32_195], %104 {strides = array<i32>} : memref<2x8x8x256xf32, #tpu.memory_space<vmem>>, vector<2x8x8x16xf32>,
    %c0_196 = arith.constant 0 : index
    %c0_197 = arith.constant 0 : index
    %c3_198 = arith.constant 3 : index
    %c0_199 = arith.constant 0 : index
    %106 = vector.load %arg12[%c0_196, %c0_197, %c3_198, %c0_199] : memref<2x11x11x16xf32, #tpu.memory_space<vmem>>, vector<2x8x8x16xf32>
    %c0_200 = arith.constant 0 : index
    %c0_201 = arith.constant 0 : index
    %c0_202 = arith.constant 0 : index
    %c48_203 = arith.constant 48 : index
    %107 = vector.load %arg13[%c0_200, %c0_201, %c0_202, %c48_203] : memref<2x8x8x256xf32, #tpu.memory_space<vmem>>, vector<2x8x8x16xf32>
    tpu.vector_store %arg13[%c0_200, %c0_201, %c0_202, %c48_203], %106 {strides = array<i32>} : memref<2x8x8x256xf32, #tpu.memory_space<vmem>>, vector<2x8x8x16xf32>,
    %c0_204 = arith.constant 0 : index
    %c1_205 = arith.constant 1 : index
    %c0_206 = arith.constant 0 : index
    %c0_207 = arith.constant 0 : index
    %108 = vector.load %arg12[%c0_204, %c1_205, %c0_206, %c0_207] : memref<2x11x11x16xf32, #tpu.memory_space<vmem>>, vector<2x8x8x16xf32>
    %c0_208 = arith.constant 0 : index
    %c0_209 = arith.constant 0 : index
    %c0_210 = arith.constant 0 : index
    %c64 = arith.constant 64 : index
    %109 = vector.load %arg13[%c0_208, %c0_209, %c0_210, %c64] : memref<2x8x8x256xf32, #tpu.memory_space<vmem>>, vector<2x8x8x16xf32>
    tpu.vector_store %arg13[%c0_208, %c0_209, %c0_210, %c64], %108 {strides = array<i32>} : memref<2x8x8x256xf32, #tpu.memory_space<vmem>>, vector<2x8x8x16xf32>,
    %c0_211 = arith.constant 0 : index
    %c1_212 = arith.constant 1 : index
    %c1_213 = arith.constant 1 : index
    %c0_214 = arith.constant 0 : index
    %110 = vector.load %arg12[%c0_211, %c1_212, %c1_213, %c0_214] : memref<2x11x11x16xf32, #tpu.memory_space<vmem>>, vector<2x8x8x16xf32>
    %c0_215 = arith.constant 0 : index
    %c0_216 = arith.constant 0 : index
    %c0_217 = arith.constant 0 : index
    %c80 = arith.constant 80 : index
    %111 = vector.load %arg13[%c0_215, %c0_216, %c0_217, %c80] : memref<2x8x8x256xf32, #tpu.memory_space<vmem>>, vector<2x8x8x16xf32>
    tpu.vector_store %arg13[%c0_215, %c0_216, %c0_217, %c80], %110 {strides = array<i32>} : memref<2x8x8x256xf32, #tpu.memory_space<vmem>>, vector<2x8x8x16xf32>,
    %c0_218 = arith.constant 0 : index
    %c1_219 = arith.constant 1 : index
    %c2_220 = arith.constant 2 : index
    %c0_221 = arith.constant 0 : index
    %112 = vector.load %arg12[%c0_218, %c1_219, %c2_220, %c0_221] : memref<2x11x11x16xf32, #tpu.memory_space<vmem>>, vector<2x8x8x16xf32>
    %c0_222 = arith.constant 0 : index
    %c0_223 = arith.constant 0 : index
    %c0_224 = arith.constant 0 : index
    %c96 = arith.constant 96 : index
    %113 = vector.load %arg13[%c0_222, %c0_223, %c0_224, %c96] : memref<2x8x8x256xf32, #tpu.memory_space<vmem>>, vector<2x8x8x16xf32>
    tpu.vector_store %arg13[%c0_222, %c0_223, %c0_224, %c96], %112 {strides = array<i32>} : memref<2x8x8x256xf32, #tpu.memory_space<vmem>>, vector<2x8x8x16xf32>,
    %c0_225 = arith.constant 0 : index
    %c1_226 = arith.constant 1 : index
    %c3_227 = arith.constant 3 : index
    %c0_228 = arith.constant 0 : index
    %114 = vector.load %arg12[%c0_225, %c1_226, %c3_227, %c0_228] : memref<2x11x11x16xf32, #tpu.memory_space<vmem>>, vector<2x8x8x16xf32>
    %c0_229 = arith.constant 0 : index
    %c0_230 = arith.constant 0 : index
    %c0_231 = arith.constant 0 : index
    %c112 = arith.constant 112 : index
    %115 = vector.load %arg13[%c0_229, %c0_230, %c0_231, %c112] : memref<2x8x8x256xf32, #tpu.memory_space<vmem>>, vector<2x8x8x16xf32>
    tpu.vector_store %arg13[%c0_229, %c0_230, %c0_231, %c112], %114 {strides = array<i32>} : memref<2x8x8x256xf32, #tpu.memory_space<vmem>>, vector<2x8x8x16xf32>,
    %c0_232 = arith.constant 0 : index
    %c2_233 = arith.constant 2 : index
    %c0_234 = arith.constant 0 : index
    %c0_235 = arith.constant 0 : index
    %116 = vector.load %arg12[%c0_232, %c2_233, %c0_234, %c0_235] : memref<2x11x11x16xf32, #tpu.memory_space<vmem>>, vector<2x8x8x16xf32>
    %c0_236 = arith.constant 0 : index
    %c0_237 = arith.constant 0 : index
    %c0_238 = arith.constant 0 : index
    %c128 = arith.constant 128 : index
    %117 = vector.load %arg13[%c0_236, %c0_237, %c0_238, %c128] : memref<2x8x8x256xf32, #tpu.memory_space<vmem>>, vector<2x8x8x16xf32>
    tpu.vector_store %arg13[%c0_236, %c0_237, %c0_238, %c128], %116 {strides = array<i32>} : memref<2x8x8x256xf32, #tpu.memory_space<vmem>>, vector<2x8x8x16xf32>,
    %c0_239 = arith.constant 0 : index
    %c2_240 = arith.constant 2 : index
    %c1_241 = arith.constant 1 : index
    %c0_242 = arith.constant 0 : index
    %118 = vector.load %arg12[%c0_239, %c2_240, %c1_241, %c0_242] : memref<2x11x11x16xf32, #tpu.memory_space<vmem>>, vector<2x8x8x16xf32>
    %c0_243 = arith.constant 0 : index
    %c0_244 = arith.constant 0 : index
    %c0_245 = arith.constant 0 : index
    %c144 = arith.constant 144 : index
    %119 = vector.load %arg13[%c0_243, %c0_244, %c0_245, %c144] : memref<2x8x8x256xf32, #tpu.memory_space<vmem>>, vector<2x8x8x16xf32>
    tpu.vector_store %arg13[%c0_243, %c0_244, %c0_245, %c144], %118 {strides = array<i32>} : memref<2x8x8x256xf32, #tpu.memory_space<vmem>>, vector<2x8x8x16xf32>,
    %c0_246 = arith.constant 0 : index
    %c2_247 = arith.constant 2 : index
    %c2_248 = arith.constant 2 : index
    %c0_249 = arith.constant 0 : index
    %120 = vector.load %arg12[%c0_246, %c2_247, %c2_248, %c0_249] : memref<2x11x11x16xf32, #tpu.memory_space<vmem>>, vector<2x8x8x16xf32>
    %c0_250 = arith.constant 0 : index
    %c0_251 = arith.constant 0 : index
    %c0_252 = arith.constant 0 : index
    %c160 = arith.constant 160 : index
    %121 = vector.load %arg13[%c0_250, %c0_251, %c0_252, %c160] : memref<2x8x8x256xf32, #tpu.memory_space<vmem>>, vector<2x8x8x16xf32>
    tpu.vector_store %arg13[%c0_250, %c0_251, %c0_252, %c160], %120 {strides = array<i32>} : memref<2x8x8x256xf32, #tpu.memory_space<vmem>>, vector<2x8x8x16xf32>,
    %c0_253 = arith.constant 0 : index
    %c2_254 = arith.constant 2 : index
    %c3_255 = arith.constant 3 : index
    %c0_256 = arith.constant 0 : index
    %122 = vector.load %arg12[%c0_253, %c2_254, %c3_255, %c0_256] : memref<2x11x11x16xf32, #tpu.memory_space<vmem>>, vector<2x8x8x16xf32>
    %c0_257 = arith.constant 0 : index
    %c0_258 = arith.constant 0 : index
    %c0_259 = arith.constant 0 : index
    %c176 = arith.constant 176 : index
    %123 = vector.load %arg13[%c0_257, %c0_258, %c0_259, %c176] : memref<2x8x8x256xf32, #tpu.memory_space<vmem>>, vector<2x8x8x16xf32>
    tpu.vector_store %arg13[%c0_257, %c0_258, %c0_259, %c176], %122 {strides = array<i32>} : memref<2x8x8x256xf32, #tpu.memory_space<vmem>>, vector<2x8x8x16xf32>,
    %c0_260 = arith.constant 0 : index
    %c3_261 = arith.constant 3 : index
    %c0_262 = arith.constant 0 : index
    %c0_263 = arith.constant 0 : index
    %124 = vector.load %arg12[%c0_260, %c3_261, %c0_262, %c0_263] : memref<2x11x11x16xf32, #tpu.memory_space<vmem>>, vector<2x8x8x16xf32>
    %c0_264 = arith.constant 0 : index
    %c0_265 = arith.constant 0 : index
    %c0_266 = arith.constant 0 : index
    %c192 = arith.constant 192 : index
    %125 = vector.load %arg13[%c0_264, %c0_265, %c0_266, %c192] : memref<2x8x8x256xf32, #tpu.memory_space<vmem>>, vector<2x8x8x16xf32>
    tpu.vector_store %arg13[%c0_264, %c0_265, %c0_266, %c192], %124 {strides = array<i32>} : memref<2x8x8x256xf32, #tpu.memory_space<vmem>>, vector<2x8x8x16xf32>,
    %c0_267 = arith.constant 0 : index
    %c3_268 = arith.constant 3 : index
    %c1_269 = arith.constant 1 : index
    %c0_270 = arith.constant 0 : index
    %126 = vector.load %arg12[%c0_267, %c3_268, %c1_269, %c0_270] : memref<2x11x11x16xf32, #tpu.memory_space<vmem>>, vector<2x8x8x16xf32>
    %c0_271 = arith.constant 0 : index
    %c0_272 = arith.constant 0 : index
    %c0_273 = arith.constant 0 : index
    %c208 = arith.constant 208 : index
    %127 = vector.load %arg13[%c0_271, %c0_272, %c0_273, %c208] : memref<2x8x8x256xf32, #tpu.memory_space<vmem>>, vector<2x8x8x16xf32>
    tpu.vector_store %arg13[%c0_271, %c0_272, %c0_273, %c208], %126 {strides = array<i32>} : memref<2x8x8x256xf32, #tpu.memory_space<vmem>>, vector<2x8x8x16xf32>,
    %c0_274 = arith.constant 0 : index
    %c3_275 = arith.constant 3 : index
    %c2_276 = arith.constant 2 : index
    %c0_277 = arith.constant 0 : index
    %128 = vector.load %arg12[%c0_274, %c3_275, %c2_276, %c0_277] : memref<2x11x11x16xf32, #tpu.memory_space<vmem>>, vector<2x8x8x16xf32>
    %c0_278 = arith.constant 0 : index
    %c0_279 = arith.constant 0 : index
    %c0_280 = arith.constant 0 : index
    %c224 = arith.constant 224 : index
    %129 = vector.load %arg13[%c0_278, %c0_279, %c0_280, %c224] : memref<2x8x8x256xf32, #tpu.memory_space<vmem>>, vector<2x8x8x16xf32>
    tpu.vector_store %arg13[%c0_278, %c0_279, %c0_280, %c224], %128 {strides = array<i32>} : memref<2x8x8x256xf32, #tpu.memory_space<vmem>>, vector<2x8x8x16xf32>,
    %c0_281 = arith.constant 0 : index
    %c3_282 = arith.constant 3 : index
    %c3_283 = arith.constant 3 : index
    %c0_284 = arith.constant 0 : index
    %130 = vector.load %arg12[%c0_281, %c3_282, %c3_283, %c0_284] : memref<2x11x11x16xf32, #tpu.memory_space<vmem>>, vector<2x8x8x16xf32>
    %c0_285 = arith.constant 0 : index
    %c0_286 = arith.constant 0 : index
    %c0_287 = arith.constant 0 : index
    %c240 = arith.constant 240 : index
    %131 = vector.load %arg13[%c0_285, %c0_286, %c0_287, %c240] : memref<2x8x8x256xf32, #tpu.memory_space<vmem>>, vector<2x8x8x16xf32>
    tpu.vector_store %arg13[%c0_285, %c0_286, %c0_287, %c240], %130 {strides = array<i32>} : memref<2x8x8x256xf32, #tpu.memory_space<vmem>>, vector<2x8x8x16xf32>,
    %c0_288 = arith.constant 0 : index
    %c0_289 = arith.constant 0 : index
    %c0_290 = arith.constant 0 : index
    %c0_291 = arith.constant 0 : index
    %132 = vector.load %arg13[%c0_288, %c0_289, %c0_290, %c0_291] : memref<2x8x8x256xf32, #tpu.memory_space<vmem>>, vector<2x8x8x256xf32>
    %133 = vector.shape_cast %132 : vector<2x8x8x256xf32> to vector<128x256xf32>
    %c0_292 = arith.constant 0 : index
    %c0_293 = arith.constant 0 : index
    %134 = vector.load %arg3[%c0_292, %c0_293] : memref<256x32xf32, #tpu.memory_space<vmem>>, vector<256x32xf32>
    %cst_294 = arith.constant dense<0.000000e+00> : vector<128x32xf32>
    %135 = tpu.matmul %133, %134, %cst_294 {dimension_numbers = #tpu.dot_dimension_numbers<[1], [0], [0], [1], [0, 0, 1, 1], [], []>} : vector<128x256xf32>, vector<256x32xf32>, vector<128x32xf32> -> vector<128x32xf32>
    %c0_295 = arith.constant 0 : index
    %c0_296 = arith.constant 0 : index
    %136 = vector.load %arg4[%c0_295, %c0_296] : memref<1x32xf32, #tpu.memory_space<vmem>>, vector<1x32xf32>
    %137 = vector.broadcast %136 : vector<1x32xf32> to vector<128x32xf32>
    %138 = arith.addf %135, %137 : vector<128x32xf32>
    %cst_297 = arith.constant 0.000000e+00 : f32
    %139 = vector.broadcast %cst_297 : f32 to vector<128x32xf32>
    %140 = arith.maximumf %138, %139 : vector<128x32xf32>
    %141 = vector.shape_cast %140 : vector<128x32xf32> to vector<8x16x32xf32>
    %142 = vector.extract_strided_slice %141 {offsets = [0, 0, 0], sizes = [8, 8, 32], strides = [1, 1, 1]} : vector<8x16x32xf32> to vector<8x8x32xf32>
    %143 = vector.extract_strided_slice %141 {offsets = [0, 8, 0], sizes = [8, 8, 32], strides = [1, 1, 1]} : vector<8x16x32xf32> to vector<8x8x32xf32>
    %144 = arith.addf %142, %143 : vector<8x8x32xf32>
    %145 = vector.shape_cast %144 : vector<8x8x32xf32> to vector<2x4x8x32xf32>
    %146 = vector.extract_strided_slice %145 {offsets = [0, 0, 0, 0], sizes = [2, 1, 1, 32], strides = [1, 1, 1, 1]} : vector<2x4x8x32xf32> to vector<2x1x1x32xf32>
    %147 = vector.extract_strided_slice %145 {offsets = [0, 0, 1, 0], sizes = [2, 1, 1, 32], strides = [1, 1, 1, 1]} : vector<2x4x8x32xf32> to vector<2x1x1x32xf32>
    %148 = arith.addf %146, %147 : vector<2x1x1x32xf32>
    %cst_298 = arith.constant 5.000000e-01 : f32
    %149 = vector.broadcast %cst_298 : f32 to vector<2x1x1x32xf32>
    %150 = arith.mulf %148, %149 : vector<2x1x1x32xf32>
    %151 = vector.shape_cast %150 : vector<2x1x1x32xf32> to vector<2x32xf32>
    %c0_299 = arith.constant 0 : index
    %c0_300 = arith.constant 0 : index
    %152 = vector.load %arg14[%c0_299, %c0_300] : memref<2x512xf32, #tpu.memory_space<vmem>>, vector<2x32xf32>
    tpu.vector_store %arg14[%c0_299, %c0_300], %151 {strides = array<i32>} : memref<2x512xf32, #tpu.memory_space<vmem>>, vector<2x32xf32>,
    %153 = vector.extract_strided_slice %145 {offsets = [0, 0, 2, 0], sizes = [2, 1, 1, 32], strides = [1, 1, 1, 1]} : vector<2x4x8x32xf32> to vector<2x1x1x32xf32>
    %154 = vector.extract_strided_slice %145 {offsets = [0, 0, 3, 0], sizes = [2, 1, 1, 32], strides = [1, 1, 1, 1]} : vector<2x4x8x32xf32> to vector<2x1x1x32xf32>
    %155 = arith.addf %153, %154 : vector<2x1x1x32xf32>
    %cst_301 = arith.constant 5.000000e-01 : f32
    %156 = vector.broadcast %cst_301 : f32 to vector<2x1x1x32xf32>
    %157 = arith.mulf %155, %156 : vector<2x1x1x32xf32>
    %158 = vector.shape_cast %157 : vector<2x1x1x32xf32> to vector<2x32xf32>
    %c0_302 = arith.constant 0 : index
    %c32_303 = arith.constant 32 : index
    %159 = vector.load %arg14[%c0_302, %c32_303] : memref<2x512xf32, #tpu.memory_space<vmem>>, vector<2x32xf32>
    tpu.vector_store %arg14[%c0_302, %c32_303], %158 {strides = array<i32>} : memref<2x512xf32, #tpu.memory_space<vmem>>, vector<2x32xf32>,
    %160 = vector.extract_strided_slice %145 {offsets = [0, 0, 4, 0], sizes = [2, 1, 1, 32], strides = [1, 1, 1, 1]} : vector<2x4x8x32xf32> to vector<2x1x1x32xf32>
    %161 = vector.extract_strided_slice %145 {offsets = [0, 0, 5, 0], sizes = [2, 1, 1, 32], strides = [1, 1, 1, 1]} : vector<2x4x8x32xf32> to vector<2x1x1x32xf32>
    %162 = arith.addf %160, %161 : vector<2x1x1x32xf32>
    %cst_304 = arith.constant 5.000000e-01 : f32
    %163 = vector.broadcast %cst_304 : f32 to vector<2x1x1x32xf32>
    %164 = arith.mulf %162, %163 : vector<2x1x1x32xf32>
    %165 = vector.shape_cast %164 : vector<2x1x1x32xf32> to vector<2x32xf32>
    %c0_305 = arith.constant 0 : index
    %c64_306 = arith.constant 64 : index
    %166 = vector.load %arg14[%c0_305, %c64_306] : memref<2x512xf32, #tpu.memory_space<vmem>>, vector<2x32xf32>
    tpu.vector_store %arg14[%c0_305, %c64_306], %165 {strides = array<i32>} : memref<2x512xf32, #tpu.memory_space<vmem>>, vector<2x32xf32>,
    %167 = vector.extract_strided_slice %145 {offsets = [0, 0, 6, 0], sizes = [2, 1, 1, 32], strides = [1, 1, 1, 1]} : vector<2x4x8x32xf32> to vector<2x1x1x32xf32>
    %168 = vector.extract_strided_slice %145 {offsets = [0, 0, 7, 0], sizes = [2, 1, 1, 32], strides = [1, 1, 1, 1]} : vector<2x4x8x32xf32> to vector<2x1x1x32xf32>
    %169 = arith.addf %167, %168 : vector<2x1x1x32xf32>
    %cst_307 = arith.constant 5.000000e-01 : f32
    %170 = vector.broadcast %cst_307 : f32 to vector<2x1x1x32xf32>
    %171 = arith.mulf %169, %170 : vector<2x1x1x32xf32>
    %172 = vector.shape_cast %171 : vector<2x1x1x32xf32> to vector<2x32xf32>
    %c0_308 = arith.constant 0 : index
    %c96_309 = arith.constant 96 : index
    %173 = vector.load %arg14[%c0_308, %c96_309] : memref<2x512xf32, #tpu.memory_space<vmem>>, vector<2x32xf32>
    tpu.vector_store %arg14[%c0_308, %c96_309], %172 {strides = array<i32>} : memref<2x512xf32, #tpu.memory_space<vmem>>, vector<2x32xf32>,
    %174 = vector.extract_strided_slice %145 {offsets = [0, 1, 0, 0], sizes = [2, 1, 1, 32], strides = [1, 1, 1, 1]} : vector<2x4x8x32xf32> to vector<2x1x1x32xf32>
    %175 = vector.extract_strided_slice %145 {offsets = [0, 1, 1, 0], sizes = [2, 1, 1, 32], strides = [1, 1, 1, 1]} : vector<2x4x8x32xf32> to vector<2x1x1x32xf32>
    %176 = arith.addf %174, %175 : vector<2x1x1x32xf32>
    %cst_310 = arith.constant 5.000000e-01 : f32
    %177 = vector.broadcast %cst_310 : f32 to vector<2x1x1x32xf32>
    %178 = arith.mulf %176, %177 : vector<2x1x1x32xf32>
    %179 = vector.shape_cast %178 : vector<2x1x1x32xf32> to vector<2x32xf32>
    %c0_311 = arith.constant 0 : index
    %c128_312 = arith.constant 128 : index
    %180 = vector.load %arg14[%c0_311, %c128_312] : memref<2x512xf32, #tpu.memory_space<vmem>>, vector<2x32xf32>
    tpu.vector_store %arg14[%c0_311, %c128_312], %179 {strides = array<i32>} : memref<2x512xf32, #tpu.memory_space<vmem>>, vector<2x32xf32>,
    %181 = vector.extract_strided_slice %145 {offsets = [0, 1, 2, 0], sizes = [2, 1, 1, 32], strides = [1, 1, 1, 1]} : vector<2x4x8x32xf32> to vector<2x1x1x32xf32>
    %182 = vector.extract_strided_slice %145 {offsets = [0, 1, 3, 0], sizes = [2, 1, 1, 32], strides = [1, 1, 1, 1]} : vector<2x4x8x32xf32> to vector<2x1x1x32xf32>
    %183 = arith.addf %181, %182 : vector<2x1x1x32xf32>
    %cst_313 = arith.constant 5.000000e-01 : f32
    %184 = vector.broadcast %cst_313 : f32 to vector<2x1x1x32xf32>
    %185 = arith.mulf %183, %184 : vector<2x1x1x32xf32>
    %186 = vector.shape_cast %185 : vector<2x1x1x32xf32> to vector<2x32xf32>
    %c0_314 = arith.constant 0 : index
    %c160_315 = arith.constant 160 : index
    %187 = vector.load %arg14[%c0_314, %c160_315] : memref<2x512xf32, #tpu.memory_space<vmem>>, vector<2x32xf32>
    tpu.vector_store %arg14[%c0_314, %c160_315], %186 {strides = array<i32>} : memref<2x512xf32, #tpu.memory_space<vmem>>, vector<2x32xf32>,
    %188 = vector.extract_strided_slice %145 {offsets = [0, 1, 4, 0], sizes = [2, 1, 1, 32], strides = [1, 1, 1, 1]} : vector<2x4x8x32xf32> to vector<2x1x1x32xf32>
    %189 = vector.extract_strided_slice %145 {offsets = [0, 1, 5, 0], sizes = [2, 1, 1, 32], strides = [1, 1, 1, 1]} : vector<2x4x8x32xf32> to vector<2x1x1x32xf32>
    %190 = arith.addf %188, %189 : vector<2x1x1x32xf32>
    %cst_316 = arith.constant 5.000000e-01 : f32
    %191 = vector.broadcast %cst_316 : f32 to vector<2x1x1x32xf32>
    %192 = arith.mulf %190, %191 : vector<2x1x1x32xf32>
    %193 = vector.shape_cast %192 : vector<2x1x1x32xf32> to vector<2x32xf32>
    %c0_317 = arith.constant 0 : index
    %c192_318 = arith.constant 192 : index
    %194 = vector.load %arg14[%c0_317, %c192_318] : memref<2x512xf32, #tpu.memory_space<vmem>>, vector<2x32xf32>
    tpu.vector_store %arg14[%c0_317, %c192_318], %193 {strides = array<i32>} : memref<2x512xf32, #tpu.memory_space<vmem>>, vector<2x32xf32>,
    %195 = vector.extract_strided_slice %145 {offsets = [0, 1, 6, 0], sizes = [2, 1, 1, 32], strides = [1, 1, 1, 1]} : vector<2x4x8x32xf32> to vector<2x1x1x32xf32>
    %196 = vector.extract_strided_slice %145 {offsets = [0, 1, 7, 0], sizes = [2, 1, 1, 32], strides = [1, 1, 1, 1]} : vector<2x4x8x32xf32> to vector<2x1x1x32xf32>
    %197 = arith.addf %195, %196 : vector<2x1x1x32xf32>
    %cst_319 = arith.constant 5.000000e-01 : f32
    %198 = vector.broadcast %cst_319 : f32 to vector<2x1x1x32xf32>
    %199 = arith.mulf %197, %198 : vector<2x1x1x32xf32>
    %200 = vector.shape_cast %199 : vector<2x1x1x32xf32> to vector<2x32xf32>
    %c0_320 = arith.constant 0 : index
    %c224_321 = arith.constant 224 : index
    %201 = vector.load %arg14[%c0_320, %c224_321] : memref<2x512xf32, #tpu.memory_space<vmem>>, vector<2x32xf32>
    tpu.vector_store %arg14[%c0_320, %c224_321], %200 {strides = array<i32>} : memref<2x512xf32, #tpu.memory_space<vmem>>, vector<2x32xf32>,
    %202 = vector.extract_strided_slice %145 {offsets = [0, 2, 0, 0], sizes = [2, 1, 1, 32], strides = [1, 1, 1, 1]} : vector<2x4x8x32xf32> to vector<2x1x1x32xf32>
    %203 = vector.extract_strided_slice %145 {offsets = [0, 2, 1, 0], sizes = [2, 1, 1, 32], strides = [1, 1, 1, 1]} : vector<2x4x8x32xf32> to vector<2x1x1x32xf32>
    %204 = arith.addf %202, %203 : vector<2x1x1x32xf32>
    %cst_322 = arith.constant 5.000000e-01 : f32
    %205 = vector.broadcast %cst_322 : f32 to vector<2x1x1x32xf32>
    %206 = arith.mulf %204, %205 : vector<2x1x1x32xf32>
    %207 = vector.shape_cast %206 : vector<2x1x1x32xf32> to vector<2x32xf32>
    %c0_323 = arith.constant 0 : index
    %c256 = arith.constant 256 : index
    %208 = vector.load %arg14[%c0_323, %c256] : memref<2x512xf32, #tpu.memory_space<vmem>>, vector<2x32xf32>
    tpu.vector_store %arg14[%c0_323, %c256], %207 {strides = array<i32>} : memref<2x512xf32, #tpu.memory_space<vmem>>, vector<2x32xf32>,
    %209 = vector.extract_strided_slice %145 {offsets = [0, 2, 2, 0], sizes = [2, 1, 1, 32], strides = [1, 1, 1, 1]} : vector<2x4x8x32xf32> to vector<2x1x1x32xf32>
    %210 = vector.extract_strided_slice %145 {offsets = [0, 2, 3, 0], sizes = [2, 1, 1, 32], strides = [1, 1, 1, 1]} : vector<2x4x8x32xf32> to vector<2x1x1x32xf32>
    %211 = arith.addf %209, %210 : vector<2x1x1x32xf32>
    %cst_324 = arith.constant 5.000000e-01 : f32
    %212 = vector.broadcast %cst_324 : f32 to vector<2x1x1x32xf32>
    %213 = arith.mulf %211, %212 : vector<2x1x1x32xf32>
    %214 = vector.shape_cast %213 : vector<2x1x1x32xf32> to vector<2x32xf32>
    %c0_325 = arith.constant 0 : index
    %c288 = arith.constant 288 : index
    %215 = vector.load %arg14[%c0_325, %c288] : memref<2x512xf32, #tpu.memory_space<vmem>>, vector<2x32xf32>
    tpu.vector_store %arg14[%c0_325, %c288], %214 {strides = array<i32>} : memref<2x512xf32, #tpu.memory_space<vmem>>, vector<2x32xf32>,
    %216 = vector.extract_strided_slice %145 {offsets = [0, 2, 4, 0], sizes = [2, 1, 1, 32], strides = [1, 1, 1, 1]} : vector<2x4x8x32xf32> to vector<2x1x1x32xf32>
    %217 = vector.extract_strided_slice %145 {offsets = [0, 2, 5, 0], sizes = [2, 1, 1, 32], strides = [1, 1, 1, 1]} : vector<2x4x8x32xf32> to vector<2x1x1x32xf32>
    %218 = arith.addf %216, %217 : vector<2x1x1x32xf32>
    %cst_326 = arith.constant 5.000000e-01 : f32
    %219 = vector.broadcast %cst_326 : f32 to vector<2x1x1x32xf32>
    %220 = arith.mulf %218, %219 : vector<2x1x1x32xf32>
    %221 = vector.shape_cast %220 : vector<2x1x1x32xf32> to vector<2x32xf32>
    %c0_327 = arith.constant 0 : index
    %c320 = arith.constant 320 : index
    %222 = vector.load %arg14[%c0_327, %c320] : memref<2x512xf32, #tpu.memory_space<vmem>>, vector<2x32xf32>
    tpu.vector_store %arg14[%c0_327, %c320], %221 {strides = array<i32>} : memref<2x512xf32, #tpu.memory_space<vmem>>, vector<2x32xf32>,
    %223 = vector.extract_strided_slice %145 {offsets = [0, 2, 6, 0], sizes = [2, 1, 1, 32], strides = [1, 1, 1, 1]} : vector<2x4x8x32xf32> to vector<2x1x1x32xf32>
    %224 = vector.extract_strided_slice %145 {offsets = [0, 2, 7, 0], sizes = [2, 1, 1, 32], strides = [1, 1, 1, 1]} : vector<2x4x8x32xf32> to vector<2x1x1x32xf32>
    %225 = arith.addf %223, %224 : vector<2x1x1x32xf32>
    %cst_328 = arith.constant 5.000000e-01 : f32
    %226 = vector.broadcast %cst_328 : f32 to vector<2x1x1x32xf32>
    %227 = arith.mulf %225, %226 : vector<2x1x1x32xf32>
    %228 = vector.shape_cast %227 : vector<2x1x1x32xf32> to vector<2x32xf32>
    %c0_329 = arith.constant 0 : index
    %c352 = arith.constant 352 : index
    %229 = vector.load %arg14[%c0_329, %c352] : memref<2x512xf32, #tpu.memory_space<vmem>>, vector<2x32xf32>
    tpu.vector_store %arg14[%c0_329, %c352], %228 {strides = array<i32>} : memref<2x512xf32, #tpu.memory_space<vmem>>, vector<2x32xf32>,
    %230 = vector.extract_strided_slice %145 {offsets = [0, 3, 0, 0], sizes = [2, 1, 1, 32], strides = [1, 1, 1, 1]} : vector<2x4x8x32xf32> to vector<2x1x1x32xf32>
    %231 = vector.extract_strided_slice %145 {offsets = [0, 3, 1, 0], sizes = [2, 1, 1, 32], strides = [1, 1, 1, 1]} : vector<2x4x8x32xf32> to vector<2x1x1x32xf32>
    %232 = arith.addf %230, %231 : vector<2x1x1x32xf32>
    %cst_330 = arith.constant 5.000000e-01 : f32
    %233 = vector.broadcast %cst_330 : f32 to vector<2x1x1x32xf32>
    %234 = arith.mulf %232, %233 : vector<2x1x1x32xf32>
    %235 = vector.shape_cast %234 : vector<2x1x1x32xf32> to vector<2x32xf32>
    %c0_331 = arith.constant 0 : index
    %c384 = arith.constant 384 : index
    %236 = vector.load %arg14[%c0_331, %c384] : memref<2x512xf32, #tpu.memory_space<vmem>>, vector<2x32xf32>
    tpu.vector_store %arg14[%c0_331, %c384], %235 {strides = array<i32>} : memref<2x512xf32, #tpu.memory_space<vmem>>, vector<2x32xf32>,
    %237 = vector.extract_strided_slice %145 {offsets = [0, 3, 2, 0], sizes = [2, 1, 1, 32], strides = [1, 1, 1, 1]} : vector<2x4x8x32xf32> to vector<2x1x1x32xf32>
    %238 = vector.extract_strided_slice %145 {offsets = [0, 3, 3, 0], sizes = [2, 1, 1, 32], strides = [1, 1, 1, 1]} : vector<2x4x8x32xf32> to vector<2x1x1x32xf32>
    %239 = arith.addf %237, %238 : vector<2x1x1x32xf32>
    %cst_332 = arith.constant 5.000000e-01 : f32
    %240 = vector.broadcast %cst_332 : f32 to vector<2x1x1x32xf32>
    %241 = arith.mulf %239, %240 : vector<2x1x1x32xf32>
    %242 = vector.shape_cast %241 : vector<2x1x1x32xf32> to vector<2x32xf32>
    %c0_333 = arith.constant 0 : index
    %c416 = arith.constant 416 : index
    %243 = vector.load %arg14[%c0_333, %c416] : memref<2x512xf32, #tpu.memory_space<vmem>>, vector<2x32xf32>
    tpu.vector_store %arg14[%c0_333, %c416], %242 {strides = array<i32>} : memref<2x512xf32, #tpu.memory_space<vmem>>, vector<2x32xf32>,
    %244 = vector.extract_strided_slice %145 {offsets = [0, 3, 4, 0], sizes = [2, 1, 1, 32], strides = [1, 1, 1, 1]} : vector<2x4x8x32xf32> to vector<2x1x1x32xf32>
    %245 = vector.extract_strided_slice %145 {offsets = [0, 3, 5, 0], sizes = [2, 1, 1, 32], strides = [1, 1, 1, 1]} : vector<2x4x8x32xf32> to vector<2x1x1x32xf32>
    %246 = arith.addf %244, %245 : vector<2x1x1x32xf32>
    %cst_334 = arith.constant 5.000000e-01 : f32
    %247 = vector.broadcast %cst_334 : f32 to vector<2x1x1x32xf32>
    %248 = arith.mulf %246, %247 : vector<2x1x1x32xf32>
    %249 = vector.shape_cast %248 : vector<2x1x1x32xf32> to vector<2x32xf32>
    %c0_335 = arith.constant 0 : index
    %c448 = arith.constant 448 : index
    %250 = vector.load %arg14[%c0_335, %c448] : memref<2x512xf32, #tpu.memory_space<vmem>>, vector<2x32xf32>
    tpu.vector_store %arg14[%c0_335, %c448], %249 {strides = array<i32>} : memref<2x512xf32, #tpu.memory_space<vmem>>, vector<2x32xf32>,
    %251 = vector.extract_strided_slice %145 {offsets = [0, 3, 6, 0], sizes = [2, 1, 1, 32], strides = [1, 1, 1, 1]} : vector<2x4x8x32xf32> to vector<2x1x1x32xf32>
    %252 = vector.extract_strided_slice %145 {offsets = [0, 3, 7, 0], sizes = [2, 1, 1, 32], strides = [1, 1, 1, 1]} : vector<2x4x8x32xf32> to vector<2x1x1x32xf32>
    %253 = arith.addf %251, %252 : vector<2x1x1x32xf32>
    %cst_336 = arith.constant 5.000000e-01 : f32
    %254 = vector.broadcast %cst_336 : f32 to vector<2x1x1x32xf32>
    %255 = arith.mulf %253, %254 : vector<2x1x1x32xf32>
    %256 = vector.shape_cast %255 : vector<2x1x1x32xf32> to vector<2x32xf32>
    %c0_337 = arith.constant 0 : index
    %c480 = arith.constant 480 : index
    %257 = vector.load %arg14[%c0_337, %c480] : memref<2x512xf32, #tpu.memory_space<vmem>>, vector<2x32xf32>
    tpu.vector_store %arg14[%c0_337, %c480], %256 {strides = array<i32>} : memref<2x512xf32, #tpu.memory_space<vmem>>, vector<2x32xf32>,
    %c0_338 = arith.constant 0 : index
    %c0_339 = arith.constant 0 : index
    %258 = vector.load %arg14[%c0_338, %c0_339] : memref<2x512xf32, #tpu.memory_space<vmem>>, vector<2x512xf32>
    %c0_340 = arith.constant 0 : index
    %c0_341 = arith.constant 0 : index
    %259 = vector.load %arg5[%c0_340, %c0_341] : memref<512x100xf32, #tpu.memory_space<vmem>>, vector<512x100xf32>
    %cst_342 = arith.constant dense<0.000000e+00> : vector<2x100xf32>
    %260 = tpu.matmul %258, %259, %cst_342 {dimension_numbers = #tpu.dot_dimension_numbers<[1], [0], [0], [1], [0, 0, 1, 1], [], []>} : vector<2x512xf32>, vector<512x100xf32>, vector<2x100xf32> -> vector<2x100xf32>
    %c0_343 = arith.constant 0 : index
    %c0_344 = arith.constant 0 : index
    %261 = vector.load %arg6[%c0_343, %c0_344] : memref<1x100xf32, #tpu.memory_space<vmem>>, vector<1x100xf32>
    %262 = vector.broadcast %261 : vector<1x100xf32> to vector<2x100xf32>
    %263 = arith.addf %260, %262 : vector<2x100xf32>
    %cst_345 = arith.constant 0.000000e+00 : f32
    %264 = vector.broadcast %cst_345 : f32 to vector<2x100xf32>
    %265 = arith.maximumf %263, %264 : vector<2x100xf32>
    %c0_346 = arith.constant 0 : index
    %c0_347 = arith.constant 0 : index
    %266 = vector.load %arg7[%c0_346, %c0_347] : memref<100x10xf32, #tpu.memory_space<vmem>>, vector<100x10xf32>
    %cst_348 = arith.constant dense<0.000000e+00> : vector<2x10xf32>
    %267 = tpu.matmul %265, %266, %cst_348 {dimension_numbers = #tpu.dot_dimension_numbers<[1], [0], [0], [1], [0, 0, 1, 1], [], []>} : vector<2x100xf32>, vector<100x10xf32>, vector<2x10xf32> -> vector<2x10xf32>
    %c0_349 = arith.constant 0 : index
    %c0_350 = arith.constant 0 : index
    %268 = vector.load %arg8[%c0_349, %c0_350] : memref<1x10xf32, #tpu.memory_space<vmem>>, vector<1x10xf32>
    %269 = vector.broadcast %268 : vector<1x10xf32> to vector<2x10xf32>
    %270 = arith.addf %267, %269 : vector<2x10xf32>
    %c0_351 = arith.constant 0 : index
    %c0_352 = arith.constant 0 : index
    %271 = vector.load %arg9[%c0_351, %c0_352] : memref<2x10xf32, #tpu.memory_space<vmem>>, vector<2x10xf32>
    tpu.vector_store %arg9[%c0_351, %c0_352], %270 {strides = array<i32>} : memref<2x10xf32, #tpu.memory_space<vmem>>, vector<2x10xf32>,
    return
  }
}

</mosaic_0001>

<llo_original>
// kernel: aol_2c2f_forward.1
$region0: #{aol_2c2f_forward.1}
  #allocation0 [shape = 'u32[]', space=smem, size = 0x4, offset = 0x4, fixed_abs, tag = 'smem constant byte address 0x4 - core index']
  #allocation1 [shape = 'u32[144,128]{1,0:T(1,128)}', space=vmem, size = 0x12000, scoped, tag = 'internal scratch']
  #allocation2 [shape = 'f32[2,19,19,4]{3,2,1,0:T(8,128)}', space=vmem, size = 0x72000, scoped, tag = 'scratch operand']
  #allocation3 [shape = 'f32[2,16,16,64]{3,2,1,0:T(8,128)}', space=vmem, size = 0x40000, scoped, tag = 'scratch operand']
  #allocation4 [shape = 'f32[2,11,11,16]{3,2,1,0:T(8,128)}', space=vmem, size = 0x2c000, scoped, tag = 'scratch operand']
  #allocation5 [shape = 'f32[2,8,8,256]{3,2,1,0:T(8,128)}', space=vmem, size = 0x20000, scoped, tag = 'scratch operand']
  #allocation6 [shape = 'f32[2,512]{1,0:T(2,128)}', space=vmem, size = 0x1000, scoped, tag = 'scratch operand']
  %s0 = inlined_call_operand.vmem [shape: f32[2,16,16,4], index: 0, kind: input, shape index: {}]
  %s1 = inlined_call_operand.vmem [shape: f32[64,16], index: 1, kind: input, shape index: {}]
  %s2 = inlined_call_operand.vmem [shape: f32[1,16], index: 2, kind: input, shape index: {}]
  %s3 = inlined_call_operand.vmem [shape: f32[256,32], index: 3, kind: input, shape index: {}]
  %s4 = inlined_call_operand.vmem [shape: f32[1,32], index: 4, kind: input, shape index: {}]
  %s5 = inlined_call_operand.vmem [shape: f32[512,100], index: 5, kind: input, shape index: {}]
  %s6 = inlined_call_operand.vmem [shape: f32[1,100], index: 6, kind: input, shape index: {}]
  %s7 = inlined_call_operand.vmem [shape: f32[100,10], index: 7, kind: input, shape index: {}]
  %s8 = inlined_call_operand.vmem [shape: f32[1,10], index: 8, kind: input, shape index: {}]
  %s9 = inlined_call_operand.hbm [shape: f32[2,10], index: 9, kind: output, shape index: {}]
  %s10 = sld [smem:[#allocation0]]
  $region46: #{aol_2c2f_forward.1} parent=0
    _
  %s12 = ssub.s32 1, %s10
  %s13 = scalar_select 0, %s12, %s10
  $region1: #{aol_2c2f_forward.1} parent=0
    #allocation7 [shape = 'u8[1024]{0}', space=vmem, size = 0x400, scoped, tag = 'output window, operand 0, single buffered']
    #allocation8 [shape = 's32[1]{0}', space=sflag, size = 0x4, scoped, tag = 'scoped memory for aol_2c2f_forward.1']
    %14 = vsyncpa [#allocation8], 0
    // Predicated region
    $region2: #{aol_2c2f_forward.1} parent=1 // pred_check
      _
    $region3: #{aol_2c2f_forward.1} parent=1 // pred_check_branch
      %16 = sbr.rel (0) target = $region5
    $region4: #{aol_2c2f_forward.1} parent=1 // pred_region
      _
    $region5: #{aol_2c2f_forward.1} parent=1 // pred_fallthru
      _
    // Predicated region
    $region6: #{aol_2c2f_forward.1} parent=1 // pred_check
      _
    $region7: #{aol_2c2f_forward.1} parent=1 // pred_check_branch
      %18 = sbr.rel (0) target = $region9
    $region8: #{aol_2c2f_forward.1} parent=1 // pred_region
      _
    $region9: #{aol_2c2f_forward.1} parent=1 // pred_fallthru
      _
    // Predicated region
    $region10: #{aol_2c2f_forward.1} parent=1 // pred_check
      _
    $region11: #{aol_2c2f_forward.1} parent=1 // pred_check_branch
      %20 = sbr.rel (0) target = $region13
    $region12: #{aol_2c2f_forward.1} parent=1 // pred_region
      _
    $region13: #{aol_2c2f_forward.1} parent=1 // pred_fallthru
      _
    // Predicated region
    $region14: #{aol_2c2f_forward.1} parent=1 // pred_check
      _
    $region15: #{aol_2c2f_forward.1} parent=1 // pred_check_branch
      %22 = sbr.rel (0) target = $region17
    $region16: #{aol_2c2f_forward.1} parent=1 // pred_region
      _
    $region17: #{aol_2c2f_forward.1} parent=1 // pred_fallthru
      _
    // Predicated region
    $region18: #{aol_2c2f_forward.1} parent=1 // pred_check
      _
    $region19: #{aol_2c2f_forward.1} parent=1 // pred_check_branch
      %24 = sbr.rel (0) target = $region21
    $region20: #{aol_2c2f_forward.1} parent=1 // pred_region
      _
    $region21: #{aol_2c2f_forward.1} parent=1 // pred_fallthru
      _
    // Predicated region
    $region22: #{aol_2c2f_forward.1} parent=1 // pred_check
      _
    $region23: #{aol_2c2f_forward.1} parent=1 // pred_check_branch
      %26 = sbr.rel (0) target = $region25
    $region24: #{aol_2c2f_forward.1} parent=1 // pred_region
      _
    $region25: #{aol_2c2f_forward.1} parent=1 // pred_fallthru
      _
    // Predicated region
    $region26: #{aol_2c2f_forward.1} parent=1 // pred_check
      _
    $region27: #{aol_2c2f_forward.1} parent=1 // pred_check_branch
      %28 = sbr.rel (0) target = $region29
    $region28: #{aol_2c2f_forward.1} parent=1 // pred_region
      _
    $region29: #{aol_2c2f_forward.1} parent=1 // pred_fallthru
      _
    // Predicated region
    $region30: #{aol_2c2f_forward.1} parent=1 // pred_check
      _
    $region31: #{aol_2c2f_forward.1} parent=1 // pred_check_branch
      %30 = sbr.rel (0) target = $region33
    $region32: #{aol_2c2f_forward.1} parent=1 // pred_region
      _
    $region33: #{aol_2c2f_forward.1} parent=1 // pred_fallthru
      _
    // Predicated region
    $region34: #{aol_2c2f_forward.1} parent=1 // pred_check
      _
    $region35: #{aol_2c2f_forward.1} parent=1 // pred_check_branch
      %32 = sbr.rel (0) target = $region37
    $region36: #{aol_2c2f_forward.1} parent=1 // pred_region
      _
    $region37: #{aol_2c2f_forward.1} parent=1 // pred_fallthru
      _
    %vm33 = vcmask 31744
    %34 = vst.msk [vmem:[#allocation2] sm:$0xff] %vm33, 0.0
    %35 = vst.msk [vmem:[#allocation2 + $0x8] sm:$0xff] %vm33, 0.0
    %vm36 = vcmask 26624
    %37 = vst.msk [vmem:[#allocation2 + $0x10] sm:$0x7] %vm36, 0.0
    %38 = vst.msk [vmem:[#allocation2 + $0x18] sm:$0xff] %vm33, 0.0
    %39 = vst.msk [vmem:[#allocation2 + $0x20] sm:$0xff] %vm33, 0.0
    %40 = vst.msk [vmem:[#allocation2 + $0x28] sm:$0x7] %vm36, 0.0
    %41 = vst.msk [vmem:[#allocation2 + $0x30] sm:$0xff] %vm33, 0.0
    %42 = vst.msk [vmem:[#allocation2 + $0x38] sm:$0xff] %vm33, 0.0
    %43 = vst.msk [vmem:[#allocation2 + $0x40] sm:$0x7] %vm36, 0.0
    %44 = vst.msk [vmem:[#allocation2 + $0x48] sm:$0xff] %vm33, 0.0
    %45 = vst.msk [vmem:[#allocation2 + $0x50] sm:$0xff] %vm33, 0.0
    %46 = vst.msk [vmem:[#allocation2 + $0x58] sm:$0x7] %vm36, 0.0
    %47 = vst.msk [vmem:[#allocation2 + $0x60] sm:$0xff] %vm33, 0.0
    %48 = vst.msk [vmem:[#allocation2 + $0x68] sm:$0xff] %vm33, 0.0
    %49 = vst.msk [vmem:[#allocation2 + $0x70] sm:$0x7] %vm36, 0.0
    %50 = vst.msk [vmem:[#allocation2 + $0x78] sm:$0xff] %vm33, 0.0
    %51 = vst.msk [vmem:[#allocation2 + $0x80] sm:$0xff] %vm33, 0.0
    %52 = vst.msk [vmem:[#allocation2 + $0x88] sm:$0x7] %vm36, 0.0
    %53 = vst.msk [vmem:[#allocation2 + $0x90] sm:$0xff] %vm33, 0.0
    %54 = vst.msk [vmem:[#allocation2 + $0x98] sm:$0xff] %vm33, 0.0
    %55 = vst.msk [vmem:[#allocation2 + $0xa0] sm:$0x7] %vm36, 0.0
    %56 = vst.msk [vmem:[#allocation2 + $0xa8] sm:$0xff] %vm33, 0.0
    %57 = vst.msk [vmem:[#allocation2 + $0xb0] sm:$0xff] %vm33, 0.0
    %58 = vst.msk [vmem:[#allocation2 + $0xb8] sm:$0x7] %vm36, 0.0
    %59 = vst.msk [vmem:[#allocation2 + $0xc0] sm:$0xff] %vm33, 0.0
    %60 = vst.msk [vmem:[#allocation2 + $0xc8] sm:$0xff] %vm33, 0.0
    %61 = vst.msk [vmem:[#allocation2 + $0xd0] sm:$0x7] %vm36, 0.0
    %62 = vst.msk [vmem:[#allocation2 + $0xd8] sm:$0xff] %vm33, 0.0
    %63 = vst.msk [vmem:[#allocation2 + $0xe0] sm:$0xff] %vm33, 0.0
    %64 = vst.msk [vmem:[#allocation2 + $0xe8] sm:$0x7] %vm36, 0.0
    %65 = vst.msk [vmem:[#allocation2 + $0xf0] sm:$0xff] %vm33, 0.0
    %66 = vst.msk [vmem:[#allocation2 + $0xf8] sm:$0xff] %vm33, 0.0
    %67 = vst.msk [vmem:[#allocation2 + $0x100] sm:$0x7] %vm36, 0.0
    %68 = vst.msk [vmem:[#allocation2 + $0x108] sm:$0xff] %vm33, 0.0
    %69 = vst.msk [vmem:[#allocation2 + $0x110] sm:$0xff] %vm33, 0.0
    %70 = vst.msk [vmem:[#allocation2 + $0x118] sm:$0x7] %vm36, 0.0
    %71 = vst.msk [vmem:[#allocation2 + $0x120] sm:$0xff] %vm33, 0.0
    %72 = vst.msk [vmem:[#allocation2 + $0x128] sm:$0xff] %vm33, 0.0
    %73 = vst.msk [vmem:[#allocation2 + $0x130] sm:$0x7] %vm36, 0.0
    %74 = vst.msk [vmem:[#allocation2 + $0x138] sm:$0xff] %vm33, 0.0
    %75 = vst.msk [vmem:[#allocation2 + $0x140] sm:$0xff] %vm33, 0.0
    %76 = vst.msk [vmem:[#allocation2 + $0x148] sm:$0x7] %vm36, 0.0
    %77 = vst.msk [vmem:[#allocation2 + $0x150] sm:$0xff] %vm33, 0.0
    %78 = vst.msk [vmem:[#allocation2 + $0x158] sm:$0xff] %vm33, 0.0
    %79 = vst.msk [vmem:[#allocation2 + $0x160] sm:$0x7] %vm36, 0.0
    %80 = vst.msk [vmem:[#allocation2 + $0x168] sm:$0xff] %vm33, 0.0
    %81 = vst.msk [vmem:[#allocation2 + $0x170] sm:$0xff] %vm33, 0.0
    %82 = vst.msk [vmem:[#allocation2 + $0x178] sm:$0x7] %vm36, 0.0
    %83 = vst.msk [vmem:[#allocation2 + $0x180] sm:$0xff] %vm33, 0.0
    %84 = vst.msk [vmem:[#allocation2 + $0x188] sm:$0xff] %vm33, 0.0
    %85 = vst.msk [vmem:[#allocation2 + $0x190] sm:$0x7] %vm36, 0.0
    %86 = vst.msk [vmem:[#allocation2 + $0x198] sm:$0xff] %vm33, 0.0
    %87 = vst.msk [vmem:[#allocation2 + $0x1a0] sm:$0xff] %vm33, 0.0
    %88 = vst.msk [vmem:[#allocation2 + $0x1a8] sm:$0x7] %vm36, 0.0
    %89 = vst.msk [vmem:[#allocation2 + $0x1b0] sm:$0xff] %vm33, 0.0
    %90 = vst.msk [vmem:[#allocation2 + $0x1b8] sm:$0xff] %vm33, 0.0
    %91 = vst.msk [vmem:[#allocation2 + $0x1c0] sm:$0x7] %vm36, 0.0
    %92 = vst.msk [vmem:[#allocation2 + $0x1c8] sm:$0xff] %vm33, 0.0
    %93 = vst.msk [vmem:[#allocation2 + $0x1d0] sm:$0xff] %vm33, 0.0
    %94 = vst.msk [vmem:[#allocation2 + $0x1d8] sm:$0x7] %vm36, 0.0
    %95 = vst.msk [vmem:[#allocation2 + $0x1e0] sm:$0xff] %vm33, 0.0
    %96 = vst.msk [vmem:[#allocation2 + $0x1e8] sm:$0xff] %vm33, 0.0
    %97 = vst.msk [vmem:[#allocation2 + $0x1f0] sm:$0x7] %vm36, 0.0
    %98 = vst.msk [vmem:[#allocation2 + $0x1f8] sm:$0xff] %vm33, 0.0
    %99 = vst.msk [vmem:[#allocation2 + $0x200] sm:$0xff] %vm33, 0.0
    %100 = vst.msk [vmem:[#allocation2 + $0x208] sm:$0x7] %vm36, 0.0
    %101 = vst.msk [vmem:[#allocation2 + $0x210] sm:$0xff] %vm33, 0.0
    %102 = vst.msk [vmem:[#allocation2 + $0x218] sm:$0xff] %vm33, 0.0
    %103 = vst.msk [vmem:[#allocation2 + $0x220] sm:$0x7] %vm36, 0.0
    %104 = vst.msk [vmem:[#allocation2 + $0x228] sm:$0xff] %vm33, 0.0
    %105 = vst.msk [vmem:[#allocation2 + $0x230] sm:$0xff] %vm33, 0.0
    %106 = vst.msk [vmem:[#allocation2 + $0x238] sm:$0x7] %vm36, 0.0
    %107 = vst.msk [vmem:[#allocation2 + $0x240] sm:$0xff] %vm33, 0.0
    %108 = vst.msk [vmem:[#allocation2 + $0x248] sm:$0xff] %vm33, 0.0
    %109 = vst.msk [vmem:[#allocation2 + $0x250] sm:$0x7] %vm36, 0.0
    %110 = vst.msk [vmem:[#allocation2 + $0x258] sm:$0xff] %vm33, 0.0
    %111 = vst.msk [vmem:[#allocation2 + $0x260] sm:$0xff] %vm33, 0.0
    %112 = vst.msk [vmem:[#allocation2 + $0x268] sm:$0x7] %vm36, 0.0
    %113 = vst.msk [vmem:[#allocation2 + $0x270] sm:$0xff] %vm33, 0.0
    %114 = vst.msk [vmem:[#allocation2 + $0x278] sm:$0xff] %vm33, 0.0
    %115 = vst.msk [vmem:[#allocation2 + $0x280] sm:$0x7] %vm36, 0.0
    %116 = vst.msk [vmem:[#allocation2 + $0x288] sm:$0xff] %vm33, 0.0
    %117 = vst.msk [vmem:[#allocation2 + $0x290] sm:$0xff] %vm33, 0.0
    %118 = vst.msk [vmem:[#allocation2 + $0x298] sm:$0x7] %vm36, 0.0
    %119 = vst.msk [vmem:[#allocation2 + $0x2a0] sm:$0xff] %vm33, 0.0
    %120 = vst.msk [vmem:[#allocation2 + $0x2a8] sm:$0xff] %vm33, 0.0
    %121 = vst.msk [vmem:[#allocation2 + $0x2b0] sm:$0x7] %vm36, 0.0
    %122 = vst.msk [vmem:[#allocation2 + $0x2b8] sm:$0xff] %vm33, 0.0
    %123 = vst.msk [vmem:[#allocation2 + $0x2c0] sm:$0xff] %vm33, 0.0
    %124 = vst.msk [vmem:[#allocation2 + $0x2c8] sm:$0x7] %vm36, 0.0
    %125 = vst.msk [vmem:[#allocation2 + $0x2d0] sm:$0xff] %vm33, 0.0
    %126 = vst.msk [vmem:[#allocation2 + $0x2d8] sm:$0xff] %vm33, 0.0
    %127 = vst.msk [vmem:[#allocation2 + $0x2e0] sm:$0x7] %vm36, 0.0
    %128 = vst.msk [vmem:[#allocation2 + $0x2e8] sm:$0xff] %vm33, 0.0
    %129 = vst.msk [vmem:[#allocation2 + $0x2f0] sm:$0xff] %vm33, 0.0
    %130 = vst.msk [vmem:[#allocation2 + $0x2f8] sm:$0x7] %vm36, 0.0
    %131 = vst.msk [vmem:[#allocation2 + $0x300] sm:$0xff] %vm33, 0.0
    %132 = vst.msk [vmem:[#allocation2 + $0x308] sm:$0xff] %vm33, 0.0
    %133 = vst.msk [vmem:[#allocation2 + $0x310] sm:$0x7] %vm36, 0.0
    %134 = vst.msk [vmem:[#allocation2 + $0x318] sm:$0xff] %vm33, 0.0
    %135 = vst.msk [vmem:[#allocation2 + $0x320] sm:$0xff] %vm33, 0.0
    %136 = vst.msk [vmem:[#allocation2 + $0x328] sm:$0x7] %vm36, 0.0
    %137 = vst.msk [vmem:[#allocation2 + $0x330] sm:$0xff] %vm33, 0.0
    %138 = vst.msk [vmem:[#allocation2 + $0x338] sm:$0xff] %vm33, 0.0
    %139 = vst.msk [vmem:[#allocation2 + $0x340] sm:$0x7] %vm36, 0.0
    %140 = vst.msk [vmem:[#allocation2 + $0x348] sm:$0xff] %vm33, 0.0
    %141 = vst.msk [vmem:[#allocation2 + $0x350] sm:$0xff] %vm33, 0.0
    %142 = vst.msk [vmem:[#allocation2 + $0x358] sm:$0x7] %vm36, 0.0
    %143 = vst.msk [vmem:[#allocation2 + $0x360] sm:$0xff] %vm33, 0.0
    %144 = vst.msk [vmem:[#allocation2 + $0x368] sm:$0xff] %vm33, 0.0
    %145 = vst.msk [vmem:[#allocation2 + $0x370] sm:$0x7] %vm36, 0.0
    %146 = vst.msk [vmem:[#allocation2 + $0x378] sm:$0xff] %vm33, 0.0
    %147 = vst.msk [vmem:[#allocation2 + $0x380] sm:$0xff] %vm33, 0.0
    %148 = vst.msk [vmem:[#allocation2 + $0x388] sm:$0x7] %vm36, 0.0
    %v149 = vld [vmem:[%s0] sm:$0xff]
    %v150 = vld [vmem:[%s0 + $0x8] sm:$0xff]
    %v151 = vld [vmem:[%s0 + $0x10] sm:$0xff]
    %v152 = vld [vmem:[%s0 + $0x18] sm:$0xff]
    %v153 = vld [vmem:[%s0 + $0x20] sm:$0xff]
    %v154 = vld [vmem:[%s0 + $0x28] sm:$0xff]
    %v155 = vld [vmem:[%s0 + $0x30] sm:$0xff]
    %v156 = vld [vmem:[%s0 + $0x38] sm:$0xff]
    %v157 = vld [vmem:[%s0 + $0x40] sm:$0xff]
    %v158 = vld [vmem:[%s0 + $0x48] sm:$0xff]
    %v159 = vld [vmem:[%s0 + $0x50] sm:$0xff]
    %v160 = vld [vmem:[%s0 + $0x58] sm:$0xff]
    %v161 = vld [vmem:[%s0 + $0x60] sm:$0xff]
    %v162 = vld [vmem:[%s0 + $0x68] sm:$0xff]
    %v163 = vld [vmem:[%s0 + $0x70] sm:$0xff]
    %v164 = vld [vmem:[%s0 + $0x78] sm:$0xff]
    %v165 = vld [vmem:[%s0 + $0x80] sm:$0xff]
    %v166 = vld [vmem:[%s0 + $0x88] sm:$0xff]
    %v167 = vld [vmem:[%s0 + $0x90] sm:$0xff]
    %v168 = vld [vmem:[%s0 + $0x98] sm:$0xff]
    %v169 = vld [vmem:[%s0 + $0xa0] sm:$0xff]
    %v170 = vld [vmem:[%s0 + $0xa8] sm:$0xff]
    %v171 = vld [vmem:[%s0 + $0xb0] sm:$0xff]
    %v172 = vld [vmem:[%s0 + $0xb8] sm:$0xff]
    %v173 = vld [vmem:[%s0 + $0xc0] sm:$0xff]
    %v174 = vld [vmem:[%s0 + $0xc8] sm:$0xff]
    %v175 = vld [vmem:[%s0 + $0xd0] sm:$0xff]
    %v176 = vld [vmem:[%s0 + $0xd8] sm:$0xff]
    %v177 = vld [vmem:[%s0 + $0xe0] sm:$0xff]
    %v178 = vld [vmem:[%s0 + $0xe8] sm:$0xff]
    %v179 = vld [vmem:[%s0 + $0xf0] sm:$0xff]
    %v180 = vld [vmem:[%s0 + $0xf8] sm:$0xff]
    %v181 = vld [vmem:[%s0 + $0x100] sm:$0xff]
    %v182 = vld [vmem:[%s0 + $0x108] sm:$0xff]
    %v183 = vld [vmem:[%s0 + $0x110] sm:$0xff]
    %v184 = vld [vmem:[%s0 + $0x118] sm:$0xff]
    %v185 = vld [vmem:[%s0 + $0x120] sm:$0xff]
    %v186 = vld [vmem:[%s0 + $0x128] sm:$0xff]
    %v187 = vld [vmem:[%s0 + $0x130] sm:$0xff]
    %v188 = vld [vmem:[%s0 + $0x138] sm:$0xff]
    %v189 = vld [vmem:[%s0 + $0x140] sm:$0xff]
    %v190 = vld [vmem:[%s0 + $0x148] sm:$0xff]
    %v191 = vld [vmem:[%s0 + $0x150] sm:$0xff]
    %v192 = vld [vmem:[%s0 + $0x158] sm:$0xff]
    %v193 = vld [vmem:[%s0 + $0x160] sm:$0xff]
    %v194 = vld [vmem:[%s0 + $0x168] sm:$0xff]
    %v195 = vld [vmem:[%s0 + $0x170] sm:$0xff]
    %v196 = vld [vmem:[%s0 + $0x178] sm:$0xff]
    %v197 = vld [vmem:[%s0 + $0x180] sm:$0xff]
    %v198 = vld [vmem:[%s0 + $0x188] sm:$0xff]
    %v199 = vld [vmem:[%s0 + $0x190] sm:$0xff]
    %v200 = vld [vmem:[%s0 + $0x198] sm:$0xff]
    %v201 = vld [vmem:[%s0 + $0x1a0] sm:$0xff]
    %v202 = vld [vmem:[%s0 + $0x1a8] sm:$0xff]
    %v203 = vld [vmem:[%s0 + $0x1b0] sm:$0xff]
    %v204 = vld [vmem:[%s0 + $0x1b8] sm:$0xff]
    %v205 = vld [vmem:[%s0 + $0x1c0] sm:$0xff]
    %v206 = vld [vmem:[%s0 + $0x1c8] sm:$0xff]
    %v207 = vld [vmem:[%s0 + $0x1d0] sm:$0xff]
    %v208 = vld [vmem:[%s0 + $0x1d8] sm:$0xff]
    %v209 = vld [vmem:[%s0 + $0x1e0] sm:$0xff]
    %v210 = vld [vmem:[%s0 + $0x1e8] sm:$0xff]
    %v211 = vld [vmem:[%s0 + $0x1f0] sm:$0xff]
    %v212 = vld [vmem:[%s0 + $0x1f8] sm:$0xff]
    %s213 = scalar_lea.vmem [#allocation2], 48
    %214 = vst.msk [vmem:[%s213 + $0x2] sm:$0xff] %vm33, %v149
    %215 = vst.msk [vmem:[%s213 + $0xa] sm:$0xff] %vm33, %v150
    %216 = vst.msk [vmem:[%s213 + $0x1a] sm:$0xff] %vm33, %v151
    %217 = vst.msk [vmem:[%s213 + $0x22] sm:$0xff] %vm33, %v152
    %218 = vst.msk [vmem:[%s213 + $0x32] sm:$0xff] %vm33, %v153
    %219 = vst.msk [vmem:[%s213 + $0x3a] sm:$0xff] %vm33, %v154
    %220 = vst.msk [vmem:[%s213 + $0x4a] sm:$0xff] %vm33, %v155
    %221 = vst.msk [vmem:[%s213 + $0x52] sm:$0xff] %vm33, %v156
    %222 = vst.msk [vmem:[%s213 + $0x62] sm:$0xff] %vm33, %v157
    %223 = vst.msk [vmem:[%s213 + $0x6a] sm:$0xff] %vm33, %v158
    %224 = vst.msk [vmem:[%s213 + $0x7a] sm:$0xff] %vm33, %v159
    %225 = vst.msk [vmem:[%s213 + $0x82] sm:$0xff] %vm33, %v160
    %226 = vst.msk [vmem:[%s213 + $0x92] sm:$0xff] %vm33, %v161
    %227 = vst.msk [vmem:[%s213 + $0x9a] sm:$0xff] %vm33, %v162
    %228 = vst.msk [vmem:[%s213 + $0xaa] sm:$0xff] %vm33, %v163
    %229 = vst.msk [vmem:[%s213 + $0xb2] sm:$0xff] %vm33, %v164
    %230 = vst.msk [vmem:[%s213 + $0xc2] sm:$0xff] %vm33, %v165
    %231 = vst.msk [vmem:[%s213 + $0xca] sm:$0xff] %vm33, %v166
    %232 = vst.msk [vmem:[%s213 + $0xda] sm:$0xff] %vm33, %v167
    %233 = vst.msk [vmem:[%s213 + $0xe2] sm:$0xff] %vm33, %v168
    %234 = vst.msk [vmem:[%s213 + $0xf2] sm:$0xff] %vm33, %v169
    %235 = vst.msk [vmem:[%s213 + $0xfa] sm:$0xff] %vm33, %v170
    %236 = vst.msk [vmem:[%s213 + $0x10a] sm:$0xff] %vm33, %v171
    %237 = vst.msk [vmem:[%s213 + $0x112] sm:$0xff] %vm33, %v172
    %238 = vst.msk [vmem:[%s213 + $0x122] sm:$0xff] %vm33, %v173
    %239 = vst.msk [vmem:[%s213 + $0x12a] sm:$0xff] %vm33, %v174
    %240 = vst.msk [vmem:[%s213 + $0x13a] sm:$0xff] %vm33, %v175
    %241 = vst.msk [vmem:[%s213 + $0x142] sm:$0xff] %vm33, %v176
    %242 = vst.msk [vmem:[%s213 + $0x152] sm:$0xff] %vm33, %v177
    %243 = vst.msk [vmem:[%s213 + $0x15a] sm:$0xff] %vm33, %v178
    %244 = vst.msk [vmem:[%s213 + $0x16a] sm:$0xff] %vm33, %v179
    %245 = vst.msk [vmem:[%s213 + $0x172] sm:$0xff] %vm33, %v180
    %246 = vst.msk [vmem:[%s213 + $0x1ca] sm:$0xff] %vm33, %v181
    %247 = vst.msk [vmem:[%s213 + $0x1d2] sm:$0xff] %vm33, %v182
    %248 = vst.msk [vmem:[%s213 + $0x1e2] sm:$0xff] %vm33, %v183
    %249 = vst.msk [vmem:[%s213 + $0x1ea] sm:$0xff] %vm33, %v184
    %250 = vst.msk [vmem:[%s213 + $0x1fa] sm:$0xff] %vm33, %v185
    %251 = vst.msk [vmem:[%s213 + $0x202] sm:$0xff] %vm33, %v186
    %252 = vst.msk [vmem:[%s213 + $0x212] sm:$0xff] %vm33, %v187
    %253 = vst.msk [vmem:[%s213 + $0x21a] sm:$0xff] %vm33, %v188
    %254 = vst.msk [vmem:[%s213 + $0x22a] sm:$0xff] %vm33, %v189
    %255 = vst.msk [vmem:[%s213 + $0x232] sm:$0xff] %vm33, %v190
    %256 = vst.msk [vmem:[%s213 + $0x242] sm:$0xff] %vm33, %v191
    %257 = vst.msk [vmem:[%s213 + $0x24a] sm:$0xff] %vm33, %v192
    %258 = vst.msk [vmem:[%s213 + $0x25a] sm:$0xff] %vm33, %v193
    %259 = vst.msk [vmem:[%s213 + $0x262] sm:$0xff] %vm33, %v194
    %260 = vst.msk [vmem:[%s213 + $0x272] sm:$0xff] %vm33, %v195
    %261 = vst.msk [vmem:[%s213 + $0x27a] sm:$0xff] %vm33, %v196
    %262 = vst.msk [vmem:[%s213 + $0x28a] sm:$0xff] %vm33, %v197
    %263 = vst.msk [vmem:[%s213 + $0x292] sm:$0xff] %vm33, %v198
    %264 = vst.msk [vmem:[%s213 + $0x2a2] sm:$0xff] %vm33, %v199
    %265 = vst.msk [vmem:[%s213 + $0x2aa] sm:$0xff] %vm33, %v200
    %266 = vst.msk [vmem:[%s213 + $0x2ba] sm:$0xff] %vm33, %v201
    %267 = vst.msk [vmem:[%s213 + $0x2c2] sm:$0xff] %vm33, %v202
    %268 = vst.msk [vmem:[%s213 + $0x2d2] sm:$0xff] %vm33, %v203
    %269 = vst.msk [vmem:[%s213 + $0x2da] sm:$0xff] %vm33, %v204
    %270 = vst.msk [vmem:[%s213 + $0x2ea] sm:$0xff] %vm33, %v205
    %271 = vst.msk [vmem:[%s213 + $0x2f2] sm:$0xff] %vm33, %v206
    %272 = vst.msk [vmem:[%s213 + $0x302] sm:$0xff] %vm33, %v207
    %273 = vst.msk [vmem:[%s213 + $0x30a] sm:$0xff] %vm33, %v208
    %274 = vst.msk [vmem:[%s213 + $0x31a] sm:$0xff] %vm33, %v209
    %275 = vst.msk [vmem:[%s213 + $0x322] sm:$0xff] %vm33, %v210
    %276 = vst.msk [vmem:[%s213 + $0x332] sm:$0xff] %vm33, %v211
    %277 = vst.msk [vmem:[%s213 + $0x33a] sm:$0xff] %vm33, %v212
    %v278 = vld [vmem:[#allocation2] sm:$0xff]
    %v279 = vld [vmem:[#allocation2 + $0x8] sm:$0xff]
    %v280 = vld [vmem:[#allocation2 + $0x18] sm:$0xff]
    %v281 = vld [vmem:[#allocation2 + $0x20] sm:$0xff]
    %v282 = vld [vmem:[#allocation2 + $0x30] sm:$0xff]
    %v283 = vld [vmem:[#allocation2 + $0x38] sm:$0xff]
    %v284 = vld [vmem:[#allocation2 + $0x48] sm:$0xff]
    %v285 = vld [vmem:[#allocation2 + $0x50] sm:$0xff]
    %v286 = vld [vmem:[#allocation2 + $0x60] sm:$0xff]
    %v287 = vld [vmem:[#allocation2 + $0x68] sm:$0xff]
    %v288 = vld [vmem:[#allocation2 + $0x78] sm:$0xff]
    %v289 = vld [vmem:[#allocation2 + $0x80] sm:$0xff]
    %v290 = vld [vmem:[#allocation2 + $0x90] sm:$0xff]
    %v291 = vld [vmem:[#allocation2 + $0x98] sm:$0xff]
    %v292 = vld [vmem:[#allocation2 + $0xa8] sm:$0xff]
    %v293 = vld [vmem:[#allocation2 + $0xb0] sm:$0xff]
    %v294 = vld [vmem:[#allocation2 + $0xc0] sm:$0xff]
    %v295 = vld [vmem:[#allocation2 + $0xc8] sm:$0xff]
    %v296 = vld [vmem:[#allocation2 + $0xd8] sm:$0xff]
    %v297 = vld [vmem:[#allocation2 + $0xe0] sm:$0xff]
    %v298 = vld [vmem:[#allocation2 + $0xf0] sm:$0xff]
    %v299 = vld [vmem:[#allocation2 + $0xf8] sm:$0xff]
    %v300 = vld [vmem:[#allocation2 + $0x108] sm:$0xff]
    %v301 = vld [vmem:[#allocation2 + $0x110] sm:$0xff]
    %v302 = vld [vmem:[#allocation2 + $0x120] sm:$0xff]
    %v303 = vld [vmem:[#allocation2 + $0x128] sm:$0xff]
    %v304 = vld [vmem:[#allocation2 + $0x138] sm:$0xff]
    %v305 = vld [vmem:[#allocation2 + $0x140] sm:$0xff]
    %v306 = vld [vmem:[#allocation2 + $0x150] sm:$0xff]
    %v307 = vld [vmem:[#allocation2 + $0x158] sm:$0xff]
    %v308 = vld [vmem:[#allocation2 + $0x168] sm:$0xff]
    %v309 = vld [vmem:[#allocation2 + $0x170] sm:$0xff]
    %v310 = vld [vmem:[#allocation2 + $0x1c8] sm:$0xff]
    %v311 = vld [vmem:[#allocation2 + $0x1d0] sm:$0xff]
    %v312 = vld [vmem:[#allocation2 + $0x1e0] sm:$0xff]
    %v313 = vld [vmem:[#allocation2 + $0x1e8] sm:$0xff]
    %v314 = vld [vmem:[#allocation2 + $0x1f8] sm:$0xff]
    %v315 = vld [vmem:[#allocation2 + $0x200] sm:$0xff]
    %v316 = vld [vmem:[#allocation2 + $0x210] sm:$0xff]
    %v317 = vld [vmem:[#allocation2 + $0x218] sm:$0xff]
    %v318 = vld [vmem:[#allocation2 + $0x228] sm:$0xff]
    %v319 = vld [vmem:[#allocation2 + $0x230] sm:$0xff]
    %v320 = vld [vmem:[#allocation2 + $0x240] sm:$0xff]
    %v321 = vld [vmem:[#allocation2 + $0x248] sm:$0xff]
    %v322 = vld [vmem:[#allocation2 + $0x258] sm:$0xff]
    %v323 = vld [vmem:[#allocation2 + $0x260] sm:$0xff]
    %v324 = vld [vmem:[#allocation2 + $0x270] sm:$0xff]
    %v325 = vld [vmem:[#allocation2 + $0x278] sm:$0xff]
    %v326 = vld [vmem:[#allocation2 + $0x288] sm:$0xff]
    %v327 = vld [vmem:[#allocation2 + $0x290] sm:$0xff]
    %v328 = vld [vmem:[#allocation2 + $0x2a0] sm:$0xff]
    %v329 = vld [vmem:[#allocation2 + $0x2a8] sm:$0xff]
    %v330 = vld [vmem:[#allocation2 + $0x2b8] sm:$0xff]
    %v331 = vld [vmem:[#allocation2 + $0x2c0] sm:$0xff]
    %v332 = vld [vmem:[#allocation2 + $0x2d0] sm:$0xff]
    %v333 = vld [vmem:[#allocation2 + $0x2d8] sm:$0xff]
    %v334 = vld [vmem:[#allocation2 + $0x2e8] sm:$0xff]
    %v335 = vld [vmem:[#allocation2 + $0x2f0] sm:$0xff]
    %v336 = vld [vmem:[#allocation2 + $0x300] sm:$0xff]
    %v337 = vld [vmem:[#allocation2 + $0x308] sm:$0xff]
    %v338 = vld [vmem:[#allocation2 + $0x318] sm:$0xff]
    %v339 = vld [vmem:[#allocation2 + $0x320] sm:$0xff]
    %v340 = vld [vmem:[#allocation2 + $0x330] sm:$0xff]
    %v341 = vld [vmem:[#allocation2 + $0x338] sm:$0xff]
    %342 = vst.msk [vmem:[#allocation3] sm:$0xff] %vm33, %v278
    %343 = vst.msk [vmem:[#allocation3 + $0x8] sm:$0xff] %vm33, %v279
    %344 = vst.msk [vmem:[#allocation3 + $0x10] sm:$0xff] %vm33, %v280
    %345 = vst.msk [vmem:[#allocation3 + $0x18] sm:$0xff] %vm33, %v281
    %346 = vst.msk [vmem:[#allocation3 + $0x20] sm:$0xff] %vm33, %v282
    %347 = vst.msk [vmem:[#allocation3 + $0x28] sm:$0xff] %vm33, %v283
    %348 = vst.msk [vmem:[#allocation3 + $0x30] sm:$0xff] %vm33, %v284
    %349 = vst.msk [vmem:[#allocation3 + $0x38] sm:$0xff] %vm33, %v285
    %350 = vst.msk [vmem:[#allocation3 + $0x40] sm:$0xff] %vm33, %v286
    %351 = vst.msk [vmem:[#allocation3 + $0x48] sm:$0xff] %vm33, %v287
    %352 = vst.msk [vmem:[#allocation3 + $0x50] sm:$0xff] %vm33, %v288
    %353 = vst.msk [vmem:[#allocation3 + $0x58] sm:$0xff] %vm33, %v289
    %354 = vst.msk [vmem:[#allocation3 + $0x60] sm:$0xff] %vm33, %v290
    %355 = vst.msk [vmem:[#allocation3 + $0x68] sm:$0xff] %vm33, %v291
    %356 = vst.msk [vmem:[#allocation3 + $0x70] sm:$0xff] %vm33, %v292
    %357 = vst.msk [vmem:[#allocation3 + $0x78] sm:$0xff] %vm33, %v293
    %358 = vst.msk [vmem:[#allocation3 + $0x80] sm:$0xff] %vm33, %v294
    %359 = vst.msk [vmem:[#allocation3 + $0x88] sm:$0xff] %vm33, %v295
    %360 = vst.msk [vmem:[#allocation3 + $0x90] sm:$0xff] %vm33, %v296
    %361 = vst.msk [vmem:[#allocation3 + $0x98] sm:$0xff] %vm33, %v297
    %362 = vst.msk [vmem:[#allocation3 + $0xa0] sm:$0xff] %vm33, %v298
    %363 = vst.msk [vmem:[#allocation3 + $0xa8] sm:$0xff] %vm33, %v299
    %364 = vst.msk [vmem:[#allocation3 + $0xb0] sm:$0xff] %vm33, %v300
    %365 = vst.msk [vmem:[#allocation3 + $0xb8] sm:$0xff] %vm33, %v301
    %366 = vst.msk [vmem:[#allocation3 + $0xc0] sm:$0xff] %vm33, %v302
    %367 = vst.msk [vmem:[#allocation3 + $0xc8] sm:$0xff] %vm33, %v303
    %368 = vst.msk [vmem:[#allocation3 + $0xd0] sm:$0xff] %vm33, %v304
    %369 = vst.msk [vmem:[#allocation3 + $0xd8] sm:$0xff] %vm33, %v305
    %370 = vst.msk [vmem:[#allocation3 + $0xe0] sm:$0xff] %vm33, %v306
    %371 = vst.msk [vmem:[#allocation3 + $0xe8] sm:$0xff] %vm33, %v307
    %372 = vst.msk [vmem:[#allocation3 + $0xf0] sm:$0xff] %vm33, %v308
    %373 = vst.msk [vmem:[#allocation3 + $0xf8] sm:$0xff] %vm33, %v309
    %374 = vst.msk [vmem:[#allocation3 + $0x100] sm:$0xff] %vm33, %v310
    %375 = vst.msk [vmem:[#allocation3 + $0x108] sm:$0xff] %vm33, %v311
    %376 = vst.msk [vmem:[#allocation3 + $0x110] sm:$0xff] %vm33, %v312
    %377 = vst.msk [vmem:[#allocation3 + $0x118] sm:$0xff] %vm33, %v313
    %378 = vst.msk [vmem:[#allocation3 + $0x120] sm:$0xff] %vm33, %v314
    %379 = vst.msk [vmem:[#allocation3 + $0x128] sm:$0xff] %vm33, %v315
    %380 = vst.msk [vmem:[#allocation3 + $0x130] sm:$0xff] %vm33, %v316
    %381 = vst.msk [vmem:[#allocation3 + $0x138] sm:$0xff] %vm33, %v317
    %382 = vst.msk [vmem:[#allocation3 + $0x140] sm:$0xff] %vm33, %v318
    %383 = vst.msk [vmem:[#allocation3 + $0x148] sm:$0xff] %vm33, %v319
    %384 = vst.msk [vmem:[#allocation3 + $0x150] sm:$0xff] %vm33, %v320
    %385 = vst.msk [vmem:[#allocation3 + $0x158] sm:$0xff] %vm33, %v321
    %386 = vst.msk [vmem:[#allocation3 + $0x160] sm:$0xff] %vm33, %v322
    %387 = vst.msk [vmem:[#allocation3 + $0x168] sm:$0xff] %vm33, %v323
    %388 = vst.msk [vmem:[#allocation3 + $0x170] sm:$0xff] %vm33, %v324
    %389 = vst.msk [vmem:[#allocation3 + $0x178] sm:$0xff] %vm33, %v325
    %390 = vst.msk [vmem:[#allocation3 + $0x180] sm:$0xff] %vm33, %v326
    %391 = vst.msk [vmem:[#allocation3 + $0x188] sm:$0xff] %vm33, %v327
    %392 = vst.msk [vmem:[#allocation3 + $0x190] sm:$0xff] %vm33, %v328
    %393 = vst.msk [vmem:[#allocation3 + $0x198] sm:$0xff] %vm33, %v329
    %394 = vst.msk [vmem:[#allocation3 + $0x1a0] sm:$0xff] %vm33, %v330
    %395 = vst.msk [vmem:[#allocation3 + $0x1a8] sm:$0xff] %vm33, %v331
    %396 = vst.msk [vmem:[#allocation3 + $0x1b0] sm:$0xff] %vm33, %v332
    %397 = vst.msk [vmem:[#allocation3 + $0x1b8] sm:$0xff] %vm33, %v333
    %398 = vst.msk [vmem:[#allocation3 + $0x1c0] sm:$0xff] %vm33, %v334
    %399 = vst.msk [vmem:[#allocation3 + $0x1c8] sm:$0xff] %vm33, %v335
    %400 = vst.msk [vmem:[#allocation3 + $0x1d0] sm:$0xff] %vm33, %v336
    %401 = vst.msk [vmem:[#allocation3 + $0x1d8] sm:$0xff] %vm33, %v337
    %402 = vst.msk [vmem:[#allocation3 + $0x1e0] sm:$0xff] %vm33, %v338
    %403 = vst.msk [vmem:[#allocation3 + $0x1e8] sm:$0xff] %vm33, %v339
    %404 = vst.msk [vmem:[#allocation3 + $0x1f0] sm:$0xff] %vm33, %v340
    %405 = vst.msk [vmem:[#allocation3 + $0x1f8] sm:$0xff] %vm33, %v341
    %v406 = vld [vmem:[#allocation2 + $0x1] sm:$0xff]
    %v407 = vld [vmem:[#allocation2 + $0x9] sm:$0xff]
    %v408 = vld [vmem:[#allocation2 + $0x19] sm:$0xff]
    %v409 = vld [vmem:[#allocation2 + $0x21] sm:$0xff]
    %v410 = vld [vmem:[#allocation2 + $0x31] sm:$0xff]
    %v411 = vld [vmem:[#allocation2 + $0x39] sm:$0xff]
    %v412 = vld [vmem:[#allocation2 + $0x49] sm:$0xff]
    %v413 = vld [vmem:[#allocation2 + $0x51] sm:$0xff]
    %v414 = vld [vmem:[#allocation2 + $0x61] sm:$0xff]
    %v415 = vld [vmem:[#allocation2 + $0x69] sm:$0xff]
    %v416 = vld [vmem:[#allocation2 + $0x79] sm:$0xff]
    %v417 = vld [vmem:[#allocation2 + $0x81] sm:$0xff]
    %v418 = vld [vmem:[#allocation2 + $0x91] sm:$0xff]
    %v419 = vld [vmem:[#allocation2 + $0x99] sm:$0xff]
    %v420 = vld [vmem:[#allocation2 + $0xa9] sm:$0xff]
    %v421 = vld [vmem:[#allocation2 + $0xb1] sm:$0xff]
    %v422 = vld [vmem:[#allocation2 + $0xc1] sm:$0xff]
    %v423 = vld [vmem:[#allocation2 + $0xc9] sm:$0xff]
    %v424 = vld [vmem:[#allocation2 + $0xd9] sm:$0xff]
    %v425 = vld [vmem:[#allocation2 + $0xe1] sm:$0xff]
    %v426 = vld [vmem:[#allocation2 + $0xf1] sm:$0xff]
    %v427 = vld [vmem:[#allocation2 + $0xf9] sm:$0xff]
    %v428 = vld [vmem:[#allocation2 + $0x109] sm:$0xff]
    %v429 = vld [vmem:[#allocation2 + $0x111] sm:$0xff]
    %v430 = vld [vmem:[#allocation2 + $0x121] sm:$0xff]
    %v431 = vld [vmem:[#allocation2 + $0x129] sm:$0xff]
    %v432 = vld [vmem:[#allocation2 + $0x139] sm:$0xff]
    %v433 = vld [vmem:[#allocation2 + $0x141] sm:$0xff]
    %v434 = vld [vmem:[#allocation2 + $0x151] sm:$0xff]
    %v435 = vld [vmem:[#allocation2 + $0x159] sm:$0xff]
    %v436 = vld [vmem:[#allocation2 + $0x169] sm:$0xff]
    %v437 = vld [vmem:[#allocation2 + $0x171] sm:$0xff]
    %v438 = vld [vmem:[#allocation2 + $0x1c9] sm:$0xff]
    %v439 = vld [vmem:[#allocation2 + $0x1d1] sm:$0xff]
    %v440 = vld [vmem:[#allocation2 + $0x1e1] sm:$0xff]
    %v441 = vld [vmem:[#allocation2 + $0x1e9] sm:$0xff]
    %v442 = vld [vmem:[#allocation2 + $0x1f9] sm:$0xff]
    %v443 = vld [vmem:[#allocation2 + $0x201] sm:$0xff]
    %v444 = vld [vmem:[#allocation2 + $0x211] sm:$0xff]
    %v445 = vld [vmem:[#allocation2 + $0x219] sm:$0xff]
    %v446 = vld [vmem:[#allocation2 + $0x229] sm:$0xff]
    %v447 = vld [vmem:[#allocation2 + $0x231] sm:$0xff]
    %v448 = vld [vmem:[#allocation2 + $0x241] sm:$0xff]
    %v449 = vld [vmem:[#allocation2 + $0x249] sm:$0xff]
    %v450 = vld [vmem:[#allocation2 + $0x259] sm:$0xff]
    %v451 = vld [vmem:[#allocation2 + $0x261] sm:$0xff]
    %v452 = vld [vmem:[#allocation2 + $0x271] sm:$0xff]
    %v453 = vld [vmem:[#allocation2 + $0x279] sm:$0xff]
    %v454 = vld [vmem:[#allocation2 + $0x289] sm:$0xff]
    %v455 = vld [vmem:[#allocation2 + $0x291] sm:$0xff]
    %v456 = vld [vmem:[#allocation2 + $0x2a1] sm:$0xff]
    %v457 = vld [vmem:[#allocation2 + $0x2a9] sm:$0xff]
    %v458 = vld [vmem:[#allocation2 + $0x2b9] sm:$0xff]
    %v459 = vld [vmem:[#allocation2 + $0x2c1] sm:$0xff]
    %v460 = vld [vmem:[#allocation2 + $0x2d1] sm:$0xff]
    %v461 = vld [vmem:[#allocation2 + $0x2d9] sm:$0xff]
    %v462 = vld [vmem:[#allocation2 + $0x2e9] sm:$0xff]
    %v463 = vld [vmem:[#allocation2 + $0x2f1] sm:$0xff]
    %v464 = vld [vmem:[#allocation2 + $0x301] sm:$0xff]
    %v465 = vld [vmem:[#allocation2 + $0x309] sm:$0xff]
    %v466 = vld [vmem:[#allocation2 + $0x319] sm:$0xff]
    %v467 = vld [vmem:[#allocation2 + $0x321] sm:$0xff]
    %v468 = vld [vmem:[#allocation2 + $0x331] sm:$0xff]
    %v469 = vld [vmem:[#allocation2 + $0x339] sm:$0xff]
    %534 = vrot.lane.b32.xlu0 %v406, 4
    %v535 = vpop.permute.xlu0 %534
    %536 = vrot.lane.b32.xlu0 %v407, 4
    %v537 = vpop.permute.xlu0 %536
    %538 = vrot.lane.b32.xlu0 %v408, 4
    %v539 = vpop.permute.xlu0 %538
    %540 = vrot.lane.b32.xlu0 %v409, 4
    %v541 = vpop.permute.xlu0 %540
    %542 = vrot.lane.b32.xlu0 %v410, 4
    %v543 = vpop.permute.xlu0 %542
    %544 = vrot.lane.b32.xlu0 %v411, 4
    %v545 = vpop.permute.xlu0 %544
    %546 = vrot.lane.b32.xlu0 %v412, 4
    %v547 = vpop.permute.xlu0 %546
    %548 = vrot.lane.b32.xlu0 %v413, 4
    %v549 = vpop.permute.xlu0 %548
    %550 = vrot.lane.b32.xlu0 %v414, 4
    %v551 = vpop.permute.xlu0 %550
    %552 = vrot.lane.b32.xlu0 %v415, 4
    %v553 = vpop.permute.xlu0 %552
    %554 = vrot.lane.b32.xlu0 %v416, 4
    %v555 = vpop.permute.xlu0 %554
    %556 = vrot.lane.b32.xlu0 %v417, 4
    %v557 = vpop.permute.xlu0 %556
    %558 = vrot.lane.b32.xlu0 %v418, 4
    %v559 = vpop.permute.xlu0 %558
    %560 = vrot.lane.b32.xlu0 %v419, 4
    %v561 = vpop.permute.xlu0 %560
    %562 = vrot.lane.b32.xlu0 %v420, 4
    %v563 = vpop.permute.xlu0 %562
    %564 = vrot.lane.b32.xlu0 %v421, 4
    %v565 = vpop.permute.xlu0 %564
    %566 = vrot.lane.b32.xlu0 %v422, 4
    %v567 = vpop.permute.xlu0 %566
    %568 = vrot.lane.b32.xlu0 %v423, 4
    %v569 = vpop.permute.xlu0 %568
    %570 = vrot.lane.b32.xlu0 %v424, 4
    %v571 = vpop.permute.xlu0 %570
    %572 = vrot.lane.b32.xlu0 %v425, 4
    %v573 = vpop.permute.xlu0 %572
    %574 = vrot.lane.b32.xlu0 %v426, 4
    %v575 = vpop.permute.xlu0 %574
    %576 = vrot.lane.b32.xlu0 %v427, 4
    %v577 = vpop.permute.xlu0 %576
    %578 = vrot.lane.b32.xlu0 %v428, 4
    %v579 = vpop.permute.xlu0 %578
    %580 = vrot.lane.b32.xlu0 %v429, 4
    %v581 = vpop.permute.xlu0 %580
    %582 = vrot.lane.b32.xlu0 %v430, 4
    %v583 = vpop.permute.xlu0 %582
    %584 = vrot.lane.b32.xlu0 %v431, 4
    %v585 = vpop.permute.xlu0 %584
    %586 = vrot.lane.b32.xlu0 %v432, 4
    %v587 = vpop.permute.xlu0 %586
    %588 = vrot.lane.b32.xlu0 %v433, 4
    %v589 = vpop.permute.xlu0 %588
    %590 = vrot.lane.b32.xlu0 %v434, 4
    %v591 = vpop.permute.xlu0 %590
    %592 = vrot.lane.b32.xlu0 %v435, 4
    %v593 = vpop.permute.xlu0 %592
    %594 = vrot.lane.b32.xlu0 %v436, 4
    %v595 = vpop.permute.xlu0 %594
    %596 = vrot.lane.b32.xlu0 %v437, 4
    %v597 = vpop.permute.xlu0 %596
    %598 = vrot.lane.b32.xlu0 %v438, 4
    %v599 = vpop.permute.xlu0 %598
    %600 = vrot.lane.b32.xlu0 %v439, 4
    %v601 = vpop.permute.xlu0 %600
    %602 = vrot.lane.b32.xlu0 %v440, 4
    %v603 = vpop.permute.xlu0 %602
    %604 = vrot.lane.b32.xlu0 %v441, 4
    %v605 = vpop.permute.xlu0 %604
    %606 = vrot.lane.b32.xlu0 %v442, 4
    %v607 = vpop.permute.xlu0 %606
    %608 = vrot.lane.b32.xlu0 %v443, 4
    %v609 = vpop.permute.xlu0 %608
    %610 = vrot.lane.b32.xlu0 %v444, 4
    %v611 = vpop.permute.xlu0 %610
    %612 = vrot.lane.b32.xlu0 %v445, 4
    %v613 = vpop.permute.xlu0 %612
    %614 = vrot.lane.b32.xlu0 %v446, 4
    %v615 = vpop.permute.xlu0 %614
    %616 = vrot.lane.b32.xlu0 %v447, 4
    %v617 = vpop.permute.xlu0 %616
    %618 = vrot.lane.b32.xlu0 %v448, 4
    %v619 = vpop.permute.xlu0 %618
    %620 = vrot.lane.b32.xlu0 %v449, 4
    %v621 = vpop.permute.xlu0 %620
    %622 = vrot.lane.b32.xlu0 %v450, 4
    %v623 = vpop.permute.xlu0 %622
    %624 = vrot.lane.b32.xlu0 %v451, 4
    %v625 = vpop.permute.xlu0 %624
    %626 = vrot.lane.b32.xlu0 %v452, 4
    %v627 = vpop.permute.xlu0 %626
    %628 = vrot.lane.b32.xlu0 %v453, 4
    %v629 = vpop.permute.xlu0 %628
    %630 = vrot.lane.b32.xlu0 %v454, 4
    %v631 = vpop.permute.xlu0 %630
    %632 = vrot.lane.b32.xlu0 %v455, 4
    %v633 = vpop.permute.xlu0 %632
    %634 = vrot.lane.b32.xlu0 %v456, 4
    %v635 = vpop.permute.xlu0 %634
    %636 = vrot.lane.b32.xlu0 %v457, 4
    %v637 = vpop.permute.xlu0 %636
    %638 = vrot.lane.b32.xlu0 %v458, 4
    %v639 = vpop.permute.xlu0 %638
    %640 = vrot.lane.b32.xlu0 %v459, 4
    %v641 = vpop.permute.xlu0 %640
    %642 = vrot.lane.b32.xlu0 %v460, 4
    %v643 = vpop.permute.xlu0 %642
    %644 = vrot.lane.b32.xlu0 %v461, 4
    %v645 = vpop.permute.xlu0 %644
    %646 = vrot.lane.b32.xlu0 %v462, 4
    %v647 = vpop.permute.xlu0 %646
    %648 = vrot.lane.b32.xlu0 %v463, 4
    %v649 = vpop.permute.xlu0 %648
    %650 = vrot.lane.b32.xlu0 %v464, 4
    %v651 = vpop.permute.xlu0 %650
    %652 = vrot.lane.b32.xlu0 %v465, 4
    %v653 = vpop.permute.xlu0 %652
    %654 = vrot.lane.b32.xlu0 %v466, 4
    %v655 = vpop.permute.xlu0 %654
    %656 = vrot.lane.b32.xlu0 %v467, 4
    %v657 = vpop.permute.xlu0 %656
    %658 = vrot.lane.b32.xlu0 %v468, 4
    %v659 = vpop.permute.xlu0 %658
    %660 = vrot.lane.b32.xlu0 %v469, 4
    %v661 = vpop.permute.xlu0 %660
    %vm726 = vcmask 64544
    %727 = vst.msk [vmem:[#allocation3] sm:$0xff] %vm726, %v535
    %728 = vst.msk [vmem:[#allocation3 + $0x8] sm:$0xff] %vm726, %v537
    %729 = vst.msk [vmem:[#allocation3 + $0x10] sm:$0xff] %vm726, %v539
    %730 = vst.msk [vmem:[#allocation3 + $0x18] sm:$0xff] %vm726, %v541
    %731 = vst.msk [vmem:[#allocation3 + $0x20] sm:$0xff] %vm726, %v543
    %732 = vst.msk [vmem:[#allocation3 + $0x28] sm:$0xff] %vm726, %v545
    %733 = vst.msk [vmem:[#allocation3 + $0x30] sm:$0xff] %vm726, %v547
    %734 = vst.msk [vmem:[#allocation3 + $0x38] sm:$0xff] %vm726, %v549
    %735 = vst.msk [vmem:[#allocation3 + $0x40] sm:$0xff] %vm726, %v551
    %736 = vst.msk [vmem:[#allocation3 + $0x48] sm:$0xff] %vm726, %v553
    %737 = vst.msk [vmem:[#allocation3 + $0x50] sm:$0xff] %vm726, %v555
    %738 = vst.msk [vmem:[#allocation3 + $0x58] sm:$0xff] %vm726, %v557
    %739 = vst.msk [vmem:[#allocation3 + $0x60] sm:$0xff] %vm726, %v559
    %740 = vst.msk [vmem:[#allocation3 + $0x68] sm:$0xff] %vm726, %v561
    %741 = vst.msk [vmem:[#allocation3 + $0x70] sm:$0xff] %vm726, %v563
    %742 = vst.msk [vmem:[#allocation3 + $0x78] sm:$0xff] %vm726, %v565
    %743 = vst.msk [vmem:[#allocation3 + $0x80] sm:$0xff] %vm726, %v567
    %744 = vst.msk [vmem:[#allocation3 + $0x88] sm:$0xff] %vm726, %v569
    %745 = vst.msk [vmem:[#allocation3 + $0x90] sm:$0xff] %vm726, %v571
    %746 = vst.msk [vmem:[#allocation3 + $0x98] sm:$0xff] %vm726, %v573
    %747 = vst.msk [vmem:[#allocation3 + $0xa0] sm:$0xff] %vm726, %v575
    %748 = vst.msk [vmem:[#allocation3 + $0xa8] sm:$0xff] %vm726, %v577
    %749 = vst.msk [vmem:[#allocation3 + $0xb0] sm:$0xff] %vm726, %v579
    %750 = vst.msk [vmem:[#allocation3 + $0xb8] sm:$0xff] %vm726, %v581
    %751 = vst.msk [vmem:[#allocation3 + $0xc0] sm:$0xff] %vm726, %v583
    %752 = vst.msk [vmem:[#allocation3 + $0xc8] sm:$0xff] %vm726, %v585
    %753 = vst.msk [vmem:[#allocation3 + $0xd0] sm:$0xff] %vm726, %v587
    %754 = vst.msk [vmem:[#allocation3 + $0xd8] sm:$0xff] %vm726, %v589
    %755 = vst.msk [vmem:[#allocation3 + $0xe0] sm:$0xff] %vm726, %v591
    %756 = vst.msk [vmem:[#allocation3 + $0xe8] sm:$0xff] %vm726, %v593
    %757 = vst.msk [vmem:[#allocation3 + $0xf0] sm:$0xff] %vm726, %v595
    %758 = vst.msk [vmem:[#allocation3 + $0xf8] sm:$0xff] %vm726, %v597
    %759 = vst.msk [vmem:[#allocation3 + $0x100] sm:$0xff] %vm726, %v599
    %760 = vst.msk [vmem:[#allocation3 + $0x108] sm:$0xff] %vm726, %v601
    %761 = vst.msk [vmem:[#allocation3 + $0x110] sm:$0xff] %vm726, %v603
    %762 = vst.msk [vmem:[#allocation3 + $0x118] sm:$0xff] %vm726, %v605
    %763 = vst.msk [vmem:[#allocation3 + $0x120] sm:$0xff] %vm726, %v607
    %764 = vst.msk [vmem:[#allocation3 + $0x128] sm:$0xff] %vm726, %v609
    %765 = vst.msk [vmem:[#allocation3 + $0x130] sm:$0xff] %vm726, %v611
    %766 = vst.msk [vmem:[#allocation3 + $0x138] sm:$0xff] %vm726, %v613
    %767 = vst.msk [vmem:[#allocation3 + $0x140] sm:$0xff] %vm726, %v615
    %768 = vst.msk [vmem:[#allocation3 + $0x148] sm:$0xff] %vm726, %v617
    %769 = vst.msk [vmem:[#allocation3 + $0x150] sm:$0xff] %vm726, %v619
    %770 = vst.msk [vmem:[#allocation3 + $0x158] sm:$0xff] %vm726, %v621
    %771 = vst.msk [vmem:[#allocation3 + $0x160] sm:$0xff] %vm726, %v623
    %772 = vst.msk [vmem:[#allocation3 + $0x168] sm:$0xff] %vm726, %v625
    %773 = vst.msk [vmem:[#allocation3 + $0x170] sm:$0xff] %vm726, %v627
    %774 = vst.msk [vmem:[#allocation3 + $0x178] sm:$0xff] %vm726, %v629
    %775 = vst.msk [vmem:[#allocation3 + $0x180] sm:$0xff] %vm726, %v631
    %776 = vst.msk [vmem:[#allocation3 + $0x188] sm:$0xff] %vm726, %v633
    %777 = vst.msk [vmem:[#allocation3 + $0x190] sm:$0xff] %vm726, %v635
    %778 = vst.msk [vmem:[#allocation3 + $0x198] sm:$0xff] %vm726, %v637
    %779 = vst.msk [vmem:[#allocation3 + $0x1a0] sm:$0xff] %vm726, %v639
    %780 = vst.msk [vmem:[#allocation3 + $0x1a8] sm:$0xff] %vm726, %v641
    %781 = vst.msk [vmem:[#allocation3 + $0x1b0] sm:$0xff] %vm726, %v643
    %782 = vst.msk [vmem:[#allocation3 + $0x1b8] sm:$0xff] %vm726, %v645
    %783 = vst.msk [vmem:[#allocation3 + $0x1c0] sm:$0xff] %vm726, %v647
    %784 = vst.msk [vmem:[#allocation3 + $0x1c8] sm:$0xff] %vm726, %v649
    %785 = vst.msk [vmem:[#allocation3 + $0x1d0] sm:$0xff] %vm726, %v651
    %786 = vst.msk [vmem:[#allocation3 + $0x1d8] sm:$0xff] %vm726, %v653
    %787 = vst.msk [vmem:[#allocation3 + $0x1e0] sm:$0xff] %vm726, %v655
    %788 = vst.msk [vmem:[#allocation3 + $0x1e8] sm:$0xff] %vm726, %v657
    %789 = vst.msk [vmem:[#allocation3 + $0x1f0] sm:$0xff] %vm726, %v659
    %790 = vst.msk [vmem:[#allocation3 + $0x1f8] sm:$0xff] %vm726, %v661
    %v791 = vld [vmem:[#allocation2 + $0x2] sm:$0xff]
    %v792 = vld [vmem:[#allocation2 + $0xa] sm:$0xff]
    %v793 = vld [vmem:[#allocation2 + $0x1a] sm:$0xff]
    %v794 = vld [vmem:[#allocation2 + $0x22] sm:$0xff]
    %v795 = vld [vmem:[#allocation2 + $0x32] sm:$0xff]
    %v796 = vld [vmem:[#allocation2 + $0x3a] sm:$0xff]
    %v797 = vld [vmem:[#allocation2 + $0x4a] sm:$0xff]
    %v798 = vld [vmem:[#allocation2 + $0x52] sm:$0xff]
    %v799 = vld [vmem:[#allocation2 + $0x62] sm:$0xff]
    %v800 = vld [vmem:[#allocation2 + $0x6a] sm:$0xff]
    %v801 = vld [vmem:[#allocation2 + $0x7a] sm:$0xff]
    %v802 = vld [vmem:[#allocation2 + $0x82] sm:$0xff]
    %v803 = vld [vmem:[#allocation2 + $0x92] sm:$0xff]
    %v804 = vld [vmem:[#allocation2 + $0x9a] sm:$0xff]
    %v805 = vld [vmem:[#allocation2 + $0xaa] sm:$0xff]
    %v806 = vld [vmem:[#allocation2 + $0xb2] sm:$0xff]
    %v807 = vld [vmem:[#allocation2 + $0xc2] sm:$0xff]
    %v808 = vld [vmem:[#allocation2 + $0xca] sm:$0xff]
    %v809 = vld [vmem:[#allocation2 + $0xda] sm:$0xff]
    %v810 = vld [vmem:[#allocation2 + $0xe2] sm:$0xff]
    %v811 = vld [vmem:[#allocation2 + $0xf2] sm:$0xff]
    %v812 = vld [vmem:[#allocation2 + $0xfa] sm:$0xff]
    %v813 = vld [vmem:[#allocation2 + $0x10a] sm:$0xff]
    %v814 = vld [vmem:[#allocation2 + $0x112] sm:$0xff]
    %v815 = vld [vmem:[#allocation2 + $0x122] sm:$0xff]
    %v816 = vld [vmem:[#allocation2 + $0x12a] sm:$0xff]
    %v817 = vld [vmem:[#allocation2 + $0x13a] sm:$0xff]
    %v818 = vld [vmem:[#allocation2 + $0x142] sm:$0xff]
    %v819 = vld [vmem:[#allocation2 + $0x152] sm:$0xff]
    %v820 = vld [vmem:[#allocation2 + $0x15a] sm:$0xff]
    %v821 = vld [vmem:[#allocation2 + $0x16a] sm:$0xff]
    %v822 = vld [vmem:[#allocation2 + $0x172] sm:$0xff]
    %v823 = vld [vmem:[#allocation2 + $0x1ca] sm:$0xff]
    %v824 = vld [vmem:[#allocation2 + $0x1d2] sm:$0xff]
    %v825 = vld [vmem:[#allocation2 + $0x1e2] sm:$0xff]
    %v826 = vld [vmem:[#allocation2 + $0x1ea] sm:$0xff]
    %v827 = vld [vmem:[#allocation2 + $0x1fa] sm:$0xff]
    %v828 = vld [vmem:[#allocation2 + $0x202] sm:$0xff]
    %v829 = vld [vmem:[#allocation2 + $0x212] sm:$0xff]
    %v830 = vld [vmem:[#allocation2 + $0x21a] sm:$0xff]
    %v831 = vld [vmem:[#allocation2 + $0x22a] sm:$0xff]
    %v832 = vld [vmem:[#allocation2 + $0x232] sm:$0xff]
    %v833 = vld [vmem:[#allocation2 + $0x242] sm:$0xff]
    %v834 = vld [vmem:[#allocation2 + $0x24a] sm:$0xff]
    %v835 = vld [vmem:[#allocation2 + $0x25a] sm:$0xff]
    %v836 = vld [vmem:[#allocation2 + $0x262] sm:$0xff]
    %v837 = vld [vmem:[#allocation2 + $0x272] sm:$0xff]
    %v838 = vld [vmem:[#allocation2 + $0x27a] sm:$0xff]
    %v839 = vld [vmem:[#allocation2 + $0x28a] sm:$0xff]
    %v840 = vld [vmem:[#allocation2 + $0x292] sm:$0xff]
    %v841 = vld [vmem:[#allocation2 + $0x2a2] sm:$0xff]
    %v842 = vld [vmem:[#allocation2 + $0x2aa] sm:$0xff]
    %v843 = vld [vmem:[#allocation2 + $0x2ba] sm:$0xff]
    %v844 = vld [vmem:[#allocation2 + $0x2c2] sm:$0xff]
    %v845 = vld [vmem:[#allocation2 + $0x2d2] sm:$0xff]
    %v846 = vld [vmem:[#allocation2 + $0x2da] sm:$0xff]
    %v847 = vld [vmem:[#allocation2 + $0x2ea] sm:$0xff]
    %v848 = vld [vmem:[#allocation2 + $0x2f2] sm:$0xff]
    %v849 = vld [vmem:[#allocation2 + $0x302] sm:$0xff]
    %v850 = vld [vmem:[#allocation2 + $0x30a] sm:$0xff]
    %v851 = vld [vmem:[#allocation2 + $0x31a] sm:$0xff]
    %v852 = vld [vmem:[#allocation2 + $0x322] sm:$0xff]
    %v853 = vld [vmem:[#allocation2 + $0x332] sm:$0xff]
    %v854 = vld [vmem:[#allocation2 + $0x33a] sm:$0xff]
    %919 = vrot.lane.b32.xlu0 %v791, 8
    %v920 = vpop.permute.xlu0 %919
    %921 = vrot.lane.b32.xlu0 %v792, 8
    %v922 = vpop.permute.xlu0 %921
    %923 = vrot.lane.b32.xlu0 %v793, 8
    %v924 = vpop.permute.xlu0 %923
    %925 = vrot.lane.b32.xlu0 %v794, 8
    %v926 = vpop.permute.xlu0 %925
    %927 = vrot.lane.b32.xlu0 %v795, 8
    %v928 = vpop.permute.xlu0 %927
    %929 = vrot.lane.b32.xlu0 %v796, 8
    %v930 = vpop.permute.xlu0 %929
    %931 = vrot.lane.b32.xlu0 %v797, 8
    %v932 = vpop.permute.xlu0 %931
    %933 = vrot.lane.b32.xlu0 %v798, 8
    %v934 = vpop.permute.xlu0 %933
    %935 = vrot.lane.b32.xlu0 %v799, 8
    %v936 = vpop.permute.xlu0 %935
    %937 = vrot.lane.b32.xlu0 %v800, 8
    %v938 = vpop.permute.xlu0 %937
    %939 = vrot.lane.b32.xlu0 %v801, 8
    %v940 = vpop.permute.xlu0 %939
    %941 = vrot.lane.b32.xlu0 %v802, 8
    %v942 = vpop.permute.xlu0 %941
    %943 = vrot.lane.b32.xlu0 %v803, 8
    %v944 = vpop.permute.xlu0 %943
    %945 = vrot.lane.b32.xlu0 %v804, 8
    %v946 = vpop.permute.xlu0 %945
    %947 = vrot.lane.b32.xlu0 %v805, 8
    %v948 = vpop.permute.xlu0 %947
    %949 = vrot.lane.b32.xlu0 %v806, 8
    %v950 = vpop.permute.xlu0 %949
    %951 = vrot.lane.b32.xlu0 %v807, 8
    %v952 = vpop.permute.xlu0 %951
    %953 = vrot.lane.b32.xlu0 %v808, 8
    %v954 = vpop.permute.xlu0 %953
    %955 = vrot.lane.b32.xlu0 %v809, 8
    %v956 = vpop.permute.xlu0 %955
    %957 = vrot.lane.b32.xlu0 %v810, 8
    %v958 = vpop.permute.xlu0 %957
    %959 = vrot.lane.b32.xlu0 %v811, 8
    %v960 = vpop.permute.xlu0 %959
    %961 = vrot.lane.b32.xlu0 %v812, 8
    %v962 = vpop.permute.xlu0 %961
    %963 = vrot.lane.b32.xlu0 %v813, 8
    %v964 = vpop.permute.xlu0 %963
    %965 = vrot.lane.b32.xlu0 %v814, 8
    %v966 = vpop.permute.xlu0 %965
    %967 = vrot.lane.b32.xlu0 %v815, 8
    %v968 = vpop.permute.xlu0 %967
    %969 = vrot.lane.b32.xlu0 %v816, 8
    %v970 = vpop.permute.xlu0 %969
    %971 = vrot.lane.b32.xlu0 %v817, 8
    %v972 = vpop.permute.xlu0 %971
    %973 = vrot.lane.b32.xlu0 %v818, 8
    %v974 = vpop.permute.xlu0 %973
    %975 = vrot.lane.b32.xlu0 %v819, 8
    %v976 = vpop.permute.xlu0 %975
    %977 = vrot.lane.b32.xlu0 %v820, 8
    %v978 = vpop.permute.xlu0 %977
    %979 = vrot.lane.b32.xlu0 %v821, 8
    %v980 = vpop.permute.xlu0 %979
    %981 = vrot.lane.b32.xlu0 %v822, 8
    %v982 = vpop.permute.xlu0 %981
    %983 = vrot.lane.b32.xlu0 %v823, 8
    %v984 = vpop.permute.xlu0 %983
    %985 = vrot.lane.b32.xlu0 %v824, 8
    %v986 = vpop.permute.xlu0 %985
    %987 = vrot.lane.b32.xlu0 %v825, 8
    %v988 = vpop.permute.xlu0 %987
    %989 = vrot.lane.b32.xlu0 %v826, 8
    %v990 = vpop.permute.xlu0 %989
    %991 = vrot.lane.b32.xlu0 %v827, 8
    %v992 = vpop.permute.xlu0 %991
    %993 = vrot.lane.b32.xlu0 %v828, 8
    %v994 = vpop.permute.xlu0 %993
    %995 = vrot.lane.b32.xlu0 %v829, 8
    %v996 = vpop.permute.xlu0 %995
    %997 = vrot.lane.b32.xlu0 %v830, 8
    %v998 = vpop.permute.xlu0 %997
    %999 = vrot.lane.b32.xlu0 %v831, 8
    %v1000 = vpop.permute.xlu0 %999
    %1001 = vrot.lane.b32.xlu0 %v832, 8
    %v1002 = vpop.permute.xlu0 %1001
    %1003 = vrot.lane.b32.xlu0 %v833, 8
    %v1004 = vpop.permute.xlu0 %1003
    %1005 = vrot.lane.b32.xlu0 %v834, 8
    %v1006 = vpop.permute.xlu0 %1005
    %1007 = vrot.lane.b32.xlu0 %v835, 8
    %v1008 = vpop.permute.xlu0 %1007
    %1009 = vrot.lane.b32.xlu0 %v836, 8
    %v1010 = vpop.permute.xlu0 %1009
    %1011 = vrot.lane.b32.xlu0 %v837, 8
    %v1012 = vpop.permute.xlu0 %1011
    %1013 = vrot.lane.b32.xlu0 %v838, 8
    %v1014 = vpop.permute.xlu0 %1013
    %1015 = vrot.lane.b32.xlu0 %v839, 8
    %v1016 = vpop.permute.xlu0 %1015
    %1017 = vrot.lane.b32.xlu0 %v840, 8
    %v1018 = vpop.permute.xlu0 %1017
    %1019 = vrot.lane.b32.xlu0 %v841, 8
    %v1020 = vpop.permute.xlu0 %1019
    %1021 = vrot.lane.b32.xlu0 %v842, 8
    %v1022 = vpop.permute.xlu0 %1021
    %1023 = vrot.lane.b32.xlu0 %v843, 8
    %v1024 = vpop.permute.xlu0 %1023
    %1025 = vrot.lane.b32.xlu0 %v844, 8
    %v1026 = vpop.permute.xlu0 %1025
    %1027 = vrot.lane.b32.xlu0 %v845, 8
    %v1028 = vpop.permute.xlu0 %1027
    %1029 = vrot.lane.b32.xlu0 %v846, 8
    %v1030 = vpop.permute.xlu0 %1029
    %1031 = vrot.lane.b32.xlu0 %v847, 8
    %v1032 = vpop.permute.xlu0 %1031
    %1033 = vrot.lane.b32.xlu0 %v848, 8
    %v1034 = vpop.permute.xlu0 %1033
    %1035 = vrot.lane.b32.xlu0 %v849, 8
    %v1036 = vpop.permute.xlu0 %1035
    %1037 = vrot.lane.b32.xlu0 %v850, 8
    %v1038 = vpop.permute.xlu0 %1037
    %1039 = vrot.lane.b32.xlu0 %v851, 8
    %v1040 = vpop.permute.xlu0 %1039
    %1041 = vrot.lane.b32.xlu0 %v852, 8
    %v1042 = vpop.permute.xlu0 %1041
    %1043 = vrot.lane.b32.xlu0 %v853, 8
    %v1044 = vpop.permute.xlu0 %1043
    %1045 = vrot.lane.b32.xlu0 %v854, 8
    %v1046 = vpop.permute.xlu0 %1045
    %vm1111 = vcmask 97344
    %1112 = vst.msk [vmem:[#allocation3] sm:$0xff] %vm1111, %v920
    %1113 = vst.msk [vmem:[#allocation3 + $0x8] sm:$0xff] %vm1111, %v922
    %1114 = vst.msk [vmem:[#allocation3 + $0x10] sm:$0xff] %vm1111, %v924
    %1115 = vst.msk [vmem:[#allocation3 + $0x18] sm:$0xff] %vm1111, %v926
    %1116 = vst.msk [vmem:[#allocation3 + $0x20] sm:$0xff] %vm1111, %v928
    %1117 = vst.msk [vmem:[#allocation3 + $0x28] sm:$0xff] %vm1111, %v930
    %1118 = vst.msk [vmem:[#allocation3 + $0x30] sm:$0xff] %vm1111, %v932
    %1119 = vst.msk [vmem:[#allocation3 + $0x38] sm:$0xff] %vm1111, %v934
    %1120 = vst.msk [vmem:[#allocation3 + $0x40] sm:$0xff] %vm1111, %v936
    %1121 = vst.msk [vmem:[#allocation3 + $0x48] sm:$0xff] %vm1111, %v938
    %1122 = vst.msk [vmem:[#allocation3 + $0x50] sm:$0xff] %vm1111, %v940
    %1123 = vst.msk [vmem:[#allocation3 + $0x58] sm:$0xff] %vm1111, %v942
    %1124 = vst.msk [vmem:[#allocation3 + $0x60] sm:$0xff] %vm1111, %v944
    %1125 = vst.msk [vmem:[#allocation3 + $0x68] sm:$0xff] %vm1111, %v946
    %1126 = vst.msk [vmem:[#allocation3 + $0x70] sm:$0xff] %vm1111, %v948
    %1127 = vst.msk [vmem:[#allocation3 + $0x78] sm:$0xff] %vm1111, %v950
    %1128 = vst.msk [vmem:[#allocation3 + $0x80] sm:$0xff] %vm1111, %v952
    %1129 = vst.msk [vmem:[#allocation3 + $0x88] sm:$0xff] %vm1111, %v954
    %1130 = vst.msk [vmem:[#allocation3 + $0x90] sm:$0xff] %vm1111, %v956
    %1131 = vst.msk [vmem:[#allocation3 + $0x98] sm:$0xff] %vm1111, %v958
    %1132 = vst.msk [vmem:[#allocation3 + $0xa0] sm:$0xff] %vm1111, %v960
    %1133 = vst.msk [vmem:[#allocation3 + $0xa8] sm:$0xff] %vm1111, %v962
    %1134 = vst.msk [vmem:[#allocation3 + $0xb0] sm:$0xff] %vm1111, %v964
    %1135 = vst.msk [vmem:[#allocation3 + $0xb8] sm:$0xff] %vm1111, %v966
    %1136 = vst.msk [vmem:[#allocation3 + $0xc0] sm:$0xff] %vm1111, %v968
    %1137 = vst.msk [vmem:[#allocation3 + $0xc8] sm:$0xff] %vm1111, %v970
    %1138 = vst.msk [vmem:[#allocation3 + $0xd0] sm:$0xff] %vm1111, %v972
    %1139 = vst.msk [vmem:[#allocation3 + $0xd8] sm:$0xff] %vm1111, %v974
    %1140 = vst.msk [vmem:[#allocation3 + $0xe0] sm:$0xff] %vm1111, %v976
    %1141 = vst.msk [vmem:[#allocation3 + $0xe8] sm:$0xff] %vm1111, %v978
    %1142 = vst.msk [vmem:[#allocation3 + $0xf0] sm:$0xff] %vm1111, %v980
    %1143 = vst.msk [vmem:[#allocation3 + $0xf8] sm:$0xff] %vm1111, %v982
    %1144 = vst.msk [vmem:[#allocation3 + $0x100] sm:$0xff] %vm1111, %v984
    %1145 = vst.msk [vmem:[#allocation3 + $0x108] sm:$0xff] %vm1111, %v986
    %1146 = vst.msk [vmem:[#allocation3 + $0x110] sm:$0xff] %vm1111, %v988
    %1147 = vst.msk [vmem:[#allocation3 + $0x118] sm:$0xff] %vm1111, %v990
    %1148 = vst.msk [vmem:[#allocation3 + $0x120] sm:$0xff] %vm1111, %v992
    %1149 = vst.msk [vmem:[#allocation3 + $0x128] sm:$0xff] %vm1111, %v994
    %1150 = vst.msk [vmem:[#allocation3 + $0x130] sm:$0xff] %vm1111, %v996
    %1151 = vst.msk [vmem:[#allocation3 + $0x138] sm:$0xff] %vm1111, %v998
    %1152 = vst.msk [vmem:[#allocation3 + $0x140] sm:$0xff] %vm1111, %v1000
    %1153 = vst.msk [vmem:[#allocation3 + $0x148] sm:$0xff] %vm1111, %v1002
    %1154 = vst.msk [vmem:[#allocation3 + $0x150] sm:$0xff] %vm1111, %v1004
    %1155 = vst.msk [vmem:[#allocation3 + $0x158] sm:$0xff] %vm1111, %v1006
    %1156 = vst.msk [vmem:[#allocation3 + $0x160] sm:$0xff] %vm1111, %v1008
    %1157 = vst.msk [vmem:[#allocation3 + $0x168] sm:$0xff] %vm1111, %v1010
    %1158 = vst.msk [vmem:[#allocation3 + $0x170] sm:$0xff] %vm1111, %v1012
    %1159 = vst.msk [vmem:[#allocation3 + $0x178] sm:$0xff] %vm1111, %v1014
    %1160 = vst.msk [vmem:[#allocation3 + $0x180] sm:$0xff] %vm1111, %v1016
    %1161 = vst.msk [vmem:[#allocation3 + $0x188] sm:$0xff] %vm1111, %v1018
    %1162 = vst.msk [vmem:[#allocation3 + $0x190] sm:$0xff] %vm1111, %v1020
    %1163 = vst.msk [vmem:[#allocation3 + $0x198] sm:$0xff] %vm1111, %v1022
    %1164 = vst.msk [vmem:[#allocation3 + $0x1a0] sm:$0xff] %vm1111, %v1024
    %1165 = vst.msk [vmem:[#allocation3 + $0x1a8] sm:$0xff] %vm1111, %v1026
    %1166 = vst.msk [vmem:[#allocation3 + $0x1b0] sm:$0xff] %vm1111, %v1028
    %1167 = vst.msk [vmem:[#allocation3 + $0x1b8] sm:$0xff] %vm1111, %v1030
    %1168 = vst.msk [vmem:[#allocation3 + $0x1c0] sm:$0xff] %vm1111, %v1032
    %1169 = vst.msk [vmem:[#allocation3 + $0x1c8] sm:$0xff] %vm1111, %v1034
    %1170 = vst.msk [vmem:[#allocation3 + $0x1d0] sm:$0xff] %vm1111, %v1036
    %1171 = vst.msk [vmem:[#allocation3 + $0x1d8] sm:$0xff] %vm1111, %v1038
    %1172 = vst.msk [vmem:[#allocation3 + $0x1e0] sm:$0xff] %vm1111, %v1040
    %1173 = vst.msk [vmem:[#allocation3 + $0x1e8] sm:$0xff] %vm1111, %v1042
    %1174 = vst.msk [vmem:[#allocation3 + $0x1f0] sm:$0xff] %vm1111, %v1044
    %1175 = vst.msk [vmem:[#allocation3 + $0x1f8] sm:$0xff] %vm1111, %v1046
    %v1176 = vld [vmem:[#allocation2 + $0x3] sm:$0xff]
    %v1177 = vld [vmem:[#allocation2 + $0xb] sm:$0xff]
    %v1178 = vld [vmem:[#allocation2 + $0x1b] sm:$0xff]
    %v1179 = vld [vmem:[#allocation2 + $0x23] sm:$0xff]
    %v1180 = vld [vmem:[#allocation2 + $0x33] sm:$0xff]
    %v1181 = vld [vmem:[#allocation2 + $0x3b] sm:$0xff]
    %v1182 = vld [vmem:[#allocation2 + $0x4b] sm:$0xff]
    %v1183 = vld [vmem:[#allocation2 + $0x53] sm:$0xff]
    %v1184 = vld [vmem:[#allocation2 + $0x63] sm:$0xff]
    %v1185 = vld [vmem:[#allocation2 + $0x6b] sm:$0xff]
    %v1186 = vld [vmem:[#allocation2 + $0x7b] sm:$0xff]
    %v1187 = vld [vmem:[#allocation2 + $0x83] sm:$0xff]
    %v1188 = vld [vmem:[#allocation2 + $0x93] sm:$0xff]
    %v1189 = vld [vmem:[#allocation2 + $0x9b] sm:$0xff]
    %v1190 = vld [vmem:[#allocation2 + $0xab] sm:$0xff]
    %v1191 = vld [vmem:[#allocation2 + $0xb3] sm:$0xff]
    %v1192 = vld [vmem:[#allocation2 + $0xc3] sm:$0xff]
    %v1193 = vld [vmem:[#allocation2 + $0xcb] sm:$0xff]
    %v1194 = vld [vmem:[#allocation2 + $0xdb] sm:$0xff]
    %v1195 = vld [vmem:[#allocation2 + $0xe3] sm:$0xff]
    %v1196 = vld [vmem:[#allocation2 + $0xf3] sm:$0xff]
    %v1197 = vld [vmem:[#allocation2 + $0xfb] sm:$0xff]
    %v1198 = vld [vmem:[#allocation2 + $0x10b] sm:$0xff]
    %v1199 = vld [vmem:[#allocation2 + $0x113] sm:$0xff]
    %v1200 = vld [vmem:[#allocation2 + $0x123] sm:$0xff]
    %v1201 = vld [vmem:[#allocation2 + $0x12b] sm:$0xff]
    %v1202 = vld [vmem:[#allocation2 + $0x13b] sm:$0xff]
    %v1203 = vld [vmem:[#allocation2 + $0x143] sm:$0xff]
    %v1204 = vld [vmem:[#allocation2 + $0x153] sm:$0xff]
    %v1205 = vld [vmem:[#allocation2 + $0x15b] sm:$0xff]
    %v1206 = vld [vmem:[#allocation2 + $0x16b] sm:$0xff]
    %v1207 = vld [vmem:[#allocation2 + $0x173] sm:$0xff]
    %v1208 = vld [vmem:[#allocation2 + $0x1cb] sm:$0xff]
    %v1209 = vld [vmem:[#allocation2 + $0x1d3] sm:$0xff]
    %v1210 = vld [vmem:[#allocation2 + $0x1e3] sm:$0xff]
    %v1211 = vld [vmem:[#allocation2 + $0x1eb] sm:$0xff]
    %v1212 = vld [vmem:[#allocation2 + $0x1fb] sm:$0xff]
    %v1213 = vld [vmem:[#allocation2 + $0x203] sm:$0xff]
    %v1214 = vld [vmem:[#allocation2 + $0x213] sm:$0xff]
    %v1215 = vld [vmem:[#allocation2 + $0x21b] sm:$0xff]
    %v1216 = vld [vmem:[#allocation2 + $0x22b] sm:$0xff]
    %v1217 = vld [vmem:[#allocation2 + $0x233] sm:$0xff]
    %v1218 = vld [vmem:[#allocation2 + $0x243] sm:$0xff]
    %v1219 = vld [vmem:[#allocation2 + $0x24b] sm:$0xff]
    %v1220 = vld [vmem:[#allocation2 + $0x25b] sm:$0xff]
    %v1221 = vld [vmem:[#allocation2 + $0x263] sm:$0xff]
    %v1222 = vld [vmem:[#allocation2 + $0x273] sm:$0xff]
    %v1223 = vld [vmem:[#allocation2 + $0x27b] sm:$0xff]
    %v1224 = vld [vmem:[#allocation2 + $0x28b] sm:$0xff]
    %v1225 = vld [vmem:[#allocation2 + $0x293] sm:$0xff]
    %v1226 = vld [vmem:[#allocation2 + $0x2a3] sm:$0xff]
    %v1227 = vld [vmem:[#allocation2 + $0x2ab] sm:$0xff]
    %v1228 = vld [vmem:[#allocation2 + $0x2bb] sm:$0xff]
    %v1229 = vld [vmem:[#allocation2 + $0x2c3] sm:$0xff]
    %v1230 = vld [vmem:[#allocation2 + $0x2d3] sm:$0xff]
    %v1231 = vld [vmem:[#allocation2 + $0x2db] sm:$0xff]
    %v1232 = vld [vmem:[#allocation2 + $0x2eb] sm:$0xff]
    %v1233 = vld [vmem:[#allocation2 + $0x2f3] sm:$0xff]
    %v1234 = vld [vmem:[#allocation2 + $0x303] sm:$0xff]
    %v1235 = vld [vmem:[#allocation2 + $0x30b] sm:$0xff]
    %v1236 = vld [vmem:[#allocation2 + $0x31b] sm:$0xff]
    %v1237 = vld [vmem:[#allocation2 + $0x323] sm:$0xff]
    %v1238 = vld [vmem:[#allocation2 + $0x333] sm:$0xff]
    %v1239 = vld [vmem:[#allocation2 + $0x33b] sm:$0xff]
    %1304 = vrot.lane.b32.xlu0 %v1176, 12
    %v1305 = vpop.permute.xlu0 %1304
    %1306 = vrot.lane.b32.xlu0 %v1177, 12
    %v1307 = vpop.permute.xlu0 %1306
    %1308 = vrot.lane.b32.xlu0 %v1178, 12
    %v1309 = vpop.permute.xlu0 %1308
    %1310 = vrot.lane.b32.xlu0 %v1179, 12
    %v1311 = vpop.permute.xlu0 %1310
    %1312 = vrot.lane.b32.xlu0 %v1180, 12
    %v1313 = vpop.permute.xlu0 %1312
    %1314 = vrot.lane.b32.xlu0 %v1181, 12
    %v1315 = vpop.permute.xlu0 %1314
    %1316 = vrot.lane.b32.xlu0 %v1182, 12
    %v1317 = vpop.permute.xlu0 %1316
    %1318 = vrot.lane.b32.xlu0 %v1183, 12
    %v1319 = vpop.permute.xlu0 %1318
    %1320 = vrot.lane.b32.xlu0 %v1184, 12
    %v1321 = vpop.permute.xlu0 %1320
    %1322 = vrot.lane.b32.xlu0 %v1185, 12
    %v1323 = vpop.permute.xlu0 %1322
    %1324 = vrot.lane.b32.xlu0 %v1186, 12
    %v1325 = vpop.permute.xlu0 %1324
    %1326 = vrot.lane.b32.xlu0 %v1187, 12
    %v1327 = vpop.permute.xlu0 %1326
    %1328 = vrot.lane.b32.xlu0 %v1188, 12
    %v1329 = vpop.permute.xlu0 %1328
    %1330 = vrot.lane.b32.xlu0 %v1189, 12
    %v1331 = vpop.permute.xlu0 %1330
    %1332 = vrot.lane.b32.xlu0 %v1190, 12
    %v1333 = vpop.permute.xlu0 %1332
    %1334 = vrot.lane.b32.xlu0 %v1191, 12
    %v1335 = vpop.permute.xlu0 %1334
    %1336 = vrot.lane.b32.xlu0 %v1192, 12
    %v1337 = vpop.permute.xlu0 %1336
    %1338 = vrot.lane.b32.xlu0 %v1193, 12
    %v1339 = vpop.permute.xlu0 %1338
    %1340 = vrot.lane.b32.xlu0 %v1194, 12
    %v1341 = vpop.permute.xlu0 %1340
    %1342 = vrot.lane.b32.xlu0 %v1195, 12
    %v1343 = vpop.permute.xlu0 %1342
    %1344 = vrot.lane.b32.xlu0 %v1196, 12
    %v1345 = vpop.permute.xlu0 %1344
    %1346 = vrot.lane.b32.xlu0 %v1197, 12
    %v1347 = vpop.permute.xlu0 %1346
    %1348 = vrot.lane.b32.xlu0 %v1198, 12
    %v1349 = vpop.permute.xlu0 %1348
    %1350 = vrot.lane.b32.xlu0 %v1199, 12
    %v1351 = vpop.permute.xlu0 %1350
    %1352 = vrot.lane.b32.xlu0 %v1200, 12
    %v1353 = vpop.permute.xlu0 %1352
    %1354 = vrot.lane.b32.xlu0 %v1201, 12
    %v1355 = vpop.permute.xlu0 %1354
    %1356 = vrot.lane.b32.xlu0 %v1202, 12
    %v1357 = vpop.permute.xlu0 %1356
    %1358 = vrot.lane.b32.xlu0 %v1203, 12
    %v1359 = vpop.permute.xlu0 %1358
    %1360 = vrot.lane.b32.xlu0 %v1204, 12
    %v1361 = vpop.permute.xlu0 %1360
    %1362 = vrot.lane.b32.xlu0 %v1205, 12
    %v1363 = vpop.permute.xlu0 %1362
    %1364 = vrot.lane.b32.xlu0 %v1206, 12
    %v1365 = vpop.permute.xlu0 %1364
    %1366 = vrot.lane.b32.xlu0 %v1207, 12
    %v1367 = vpop.permute.xlu0 %1366
    %1368 = vrot.lane.b32.xlu0 %v1208, 12
    %v1369 = vpop.permute.xlu0 %1368
    %1370 = vrot.lane.b32.xlu0 %v1209, 12
    %v1371 = vpop.permute.xlu0 %1370
    %1372 = vrot.lane.b32.xlu0 %v1210, 12
    %v1373 = vpop.permute.xlu0 %1372
    %1374 = vrot.lane.b32.xlu0 %v1211, 12
    %v1375 = vpop.permute.xlu0 %1374
    %1376 = vrot.lane.b32.xlu0 %v1212, 12
    %v1377 = vpop.permute.xlu0 %1376
    %1378 = vrot.lane.b32.xlu0 %v1213, 12
    %v1379 = vpop.permute.xlu0 %1378
    %1380 = vrot.lane.b32.xlu0 %v1214, 12
    %v1381 = vpop.permute.xlu0 %1380
    %1382 = vrot.lane.b32.xlu0 %v1215, 12
    %v1383 = vpop.permute.xlu0 %1382
    %1384 = vrot.lane.b32.xlu0 %v1216, 12
    %v1385 = vpop.permute.xlu0 %1384
    %1386 = vrot.lane.b32.xlu0 %v1217, 12
    %v1387 = vpop.permute.xlu0 %1386
    %1388 = vrot.lane.b32.xlu0 %v1218, 12
    %v1389 = vpop.permute.xlu0 %1388
    %1390 = vrot.lane.b32.xlu0 %v1219, 12
    %v1391 = vpop.permute.xlu0 %1390
    %1392 = vrot.lane.b32.xlu0 %v1220, 12
    %v1393 = vpop.permute.xlu0 %1392
    %1394 = vrot.lane.b32.xlu0 %v1221, 12
    %v1395 = vpop.permute.xlu0 %1394
    %1396 = vrot.lane.b32.xlu0 %v1222, 12
    %v1397 = vpop.permute.xlu0 %1396
    %1398 = vrot.lane.b32.xlu0 %v1223, 12
    %v1399 = vpop.permute.xlu0 %1398
    %1400 = vrot.lane.b32.xlu0 %v1224, 12
    %v1401 = vpop.permute.xlu0 %1400
    %1402 = vrot.lane.b32.xlu0 %v1225, 12
    %v1403 = vpop.permute.xlu0 %1402
    %1404 = vrot.lane.b32.xlu0 %v1226, 12
    %v1405 = vpop.permute.xlu0 %1404
    %1406 = vrot.lane.b32.xlu0 %v1227, 12
    %v1407 = vpop.permute.xlu0 %1406
    %1408 = vrot.lane.b32.xlu0 %v1228, 12
    %v1409 = vpop.permute.xlu0 %1408
    %1410 = vrot.lane.b32.xlu0 %v1229, 12
    %v1411 = vpop.permute.xlu0 %1410
    %1412 = vrot.lane.b32.xlu0 %v1230, 12
    %v1413 = vpop.permute.xlu0 %1412
    %1414 = vrot.lane.b32.xlu0 %v1231, 12
    %v1415 = vpop.permute.xlu0 %1414
    %1416 = vrot.lane.b32.xlu0 %v1232, 12
    %v1417 = vpop.permute.xlu0 %1416
    %1418 = vrot.lane.b32.xlu0 %v1233, 12
    %v1419 = vpop.permute.xlu0 %1418
    %1420 = vrot.lane.b32.xlu0 %v1234, 12
    %v1421 = vpop.permute.xlu0 %1420
    %1422 = vrot.lane.b32.xlu0 %v1235, 12
    %v1423 = vpop.permute.xlu0 %1422
    %1424 = vrot.lane.b32.xlu0 %v1236, 12
    %v1425 = vpop.permute.xlu0 %1424
    %1426 = vrot.lane.b32.xlu0 %v1237, 12
    %v1427 = vpop.permute.xlu0 %1426
    %1428 = vrot.lane.b32.xlu0 %v1238, 12
    %v1429 = vpop.permute.xlu0 %1428
    %1430 = vrot.lane.b32.xlu0 %v1239, 12
    %v1431 = vpop.permute.xlu0 %1430
    %vm1496 = vcmask 130144
    %1497 = vst.msk [vmem:[#allocation3] sm:$0xff] %vm1496, %v1305
    %1498 = vst.msk [vmem:[#allocation3 + $0x8] sm:$0xff] %vm1496, %v1307
    %1499 = vst.msk [vmem:[#allocation3 + $0x10] sm:$0xff] %vm1496, %v1309
    %1500 = vst.msk [vmem:[#allocation3 + $0x18] sm:$0xff] %vm1496, %v1311
    %1501 = vst.msk [vmem:[#allocation3 + $0x20] sm:$0xff] %vm1496, %v1313
    %1502 = vst.msk [vmem:[#allocation3 + $0x28] sm:$0xff] %vm1496, %v1315
    %1503 = vst.msk [vmem:[#allocation3 + $0x30] sm:$0xff] %vm1496, %v1317
    %1504 = vst.msk [vmem:[#allocation3 + $0x38] sm:$0xff] %vm1496, %v1319
    %1505 = vst.msk [vmem:[#allocation3 + $0x40] sm:$0xff] %vm1496, %v1321
    %1506 = vst.msk [vmem:[#allocation3 + $0x48] sm:$0xff] %vm1496, %v1323
    %1507 = vst.msk [vmem:[#allocation3 + $0x50] sm:$0xff] %vm1496, %v1325
    %1508 = vst.msk [vmem:[#allocation3 + $0x58] sm:$0xff] %vm1496, %v1327
    %1509 = vst.msk [vmem:[#allocation3 + $0x60] sm:$0xff] %vm1496, %v1329
    %1510 = vst.msk [vmem:[#allocation3 + $0x68] sm:$0xff] %vm1496, %v1331
    %1511 = vst.msk [vmem:[#allocation3 + $0x70] sm:$0xff] %vm1496, %v1333
    %1512 = vst.msk [vmem:[#allocation3 + $0x78] sm:$0xff] %vm1496, %v1335
    %1513 = vst.msk [vmem:[#allocation3 + $0x80] sm:$0xff] %vm1496, %v1337
    %1514 = vst.msk [vmem:[#allocation3 + $0x88] sm:$0xff] %vm1496, %v1339
    %1515 = vst.msk [vmem:[#allocation3 + $0x90] sm:$0xff] %vm1496, %v1341
    %1516 = vst.msk [vmem:[#allocation3 + $0x98] sm:$0xff] %vm1496, %v1343
    %1517 = vst.msk [vmem:[#allocation3 + $0xa0] sm:$0xff] %vm1496, %v1345
    %1518 = vst.msk [vmem:[#allocation3 + $0xa8] sm:$0xff] %vm1496, %v1347
    %1519 = vst.msk [vmem:[#allocation3 + $0xb0] sm:$0xff] %vm1496, %v1349
    %1520 = vst.msk [vmem:[#allocation3 + $0xb8] sm:$0xff] %vm1496, %v1351
    %1521 = vst.msk [vmem:[#allocation3 + $0xc0] sm:$0xff] %vm1496, %v1353
    %1522 = vst.msk [vmem:[#allocation3 + $0xc8] sm:$0xff] %vm1496, %v1355
    %1523 = vst.msk [vmem:[#allocation3 + $0xd0] sm:$0xff] %vm1496, %v1357
    %1524 = vst.msk [vmem:[#allocation3 + $0xd8] sm:$0xff] %vm1496, %v1359
    %1525 = vst.msk [vmem:[#allocation3 + $0xe0] sm:$0xff] %vm1496, %v1361
    %1526 = vst.msk [vmem:[#allocation3 + $0xe8] sm:$0xff] %vm1496, %v1363
    %1527 = vst.msk [vmem:[#allocation3 + $0xf0] sm:$0xff] %vm1496, %v1365
    %1528 = vst.msk [vmem:[#allocation3 + $0xf8] sm:$0xff] %vm1496, %v1367
    %1529 = vst.msk [vmem:[#allocation3 + $0x100] sm:$0xff] %vm1496, %v1369
    %1530 = vst.msk [vmem:[#allocation3 + $0x108] sm:$0xff] %vm1496, %v1371
    %1531 = vst.msk [vmem:[#allocation3 + $0x110] sm:$0xff] %vm1496, %v1373
    %1532 = vst.msk [vmem:[#allocation3 + $0x118] sm:$0xff] %vm1496, %v1375
    %1533 = vst.msk [vmem:[#allocation3 + $0x120] sm:$0xff] %vm1496, %v1377
    %1534 = vst.msk [vmem:[#allocation3 + $0x128] sm:$0xff] %vm1496, %v1379
    %1535 = vst.msk [vmem:[#allocation3 + $0x130] sm:$0xff] %vm1496, %v1381
    %1536 = vst.msk [vmem:[#allocation3 + $0x138] sm:$0xff] %vm1496, %v1383
    %1537 = vst.msk [vmem:[#allocation3 + $0x140] sm:$0xff] %vm1496, %v1385
    %1538 = vst.msk [vmem:[#allocation3 + $0x148] sm:$0xff] %vm1496, %v1387
    %1539 = vst.msk [vmem:[#allocation3 + $0x150] sm:$0xff] %vm1496, %v1389
    %1540 = vst.msk [vmem:[#allocation3 + $0x158] sm:$0xff] %vm1496, %v1391
    %1541 = vst.msk [vmem:[#allocation3 + $0x160] sm:$0xff] %vm1496, %v1393
    %1542 = vst.msk [vmem:[#allocation3 + $0x168] sm:$0xff] %vm1496, %v1395
    %1543 = vst.msk [vmem:[#allocation3 + $0x170] sm:$0xff] %vm1496, %v1397
    %1544 = vst.msk [vmem:[#allocation3 + $0x178] sm:$0xff] %vm1496, %v1399
    %1545 = vst.msk [vmem:[#allocation3 + $0x180] sm:$0xff] %vm1496, %v1401
    %1546 = vst.msk [vmem:[#allocation3 + $0x188] sm:$0xff] %vm1496, %v1403
    %1547 = vst.msk [vmem:[#allocation3 + $0x190] sm:$0xff] %vm1496, %v1405
    %1548 = vst.msk [vmem:[#allocation3 + $0x198] sm:$0xff] %vm1496, %v1407
    %1549 = vst.msk [vmem:[#allocation3 + $0x1a0] sm:$0xff] %vm1496, %v1409
    %1550 = vst.msk [vmem:[#allocation3 + $0x1a8] sm:$0xff] %vm1496, %v1411
    %1551 = vst.msk [vmem:[#allocation3 + $0x1b0] sm:$0xff] %vm1496, %v1413
    %1552 = vst.msk [vmem:[#allocation3 + $0x1b8] sm:$0xff] %vm1496, %v1415
    %1553 = vst.msk [vmem:[#allocation3 + $0x1c0] sm:$0xff] %vm1496, %v1417
    %1554 = vst.msk [vmem:[#allocation3 + $0x1c8] sm:$0xff] %vm1496, %v1419
    %1555 = vst.msk [vmem:[#allocation3 + $0x1d0] sm:$0xff] %vm1496, %v1421
    %1556 = vst.msk [vmem:[#allocation3 + $0x1d8] sm:$0xff] %vm1496, %v1423
    %1557 = vst.msk [vmem:[#allocation3 + $0x1e0] sm:$0xff] %vm1496, %v1425
    %1558 = vst.msk [vmem:[#allocation3 + $0x1e8] sm:$0xff] %vm1496, %v1427
    %1559 = vst.msk [vmem:[#allocation3 + $0x1f0] sm:$0xff] %vm1496, %v1429
    %1560 = vst.msk [vmem:[#allocation3 + $0x1f8] sm:$0xff] %vm1496, %v1431
    %s1561 = scalar_lea.vmem [#allocation2], 24
    %v1562 = vld [vmem:[%s1561] sm:$0xff]
    %v1563 = vld [vmem:[%s1561 + $0x8] sm:$0xff]
    %v1564 = vld [vmem:[%s1561 + $0x18] sm:$0xff]
    %v1565 = vld [vmem:[%s1561 + $0x20] sm:$0xff]
    %v1566 = vld [vmem:[%s1561 + $0x30] sm:$0xff]
    %v1567 = vld [vmem:[%s1561 + $0x38] sm:$0xff]
    %v1568 = vld [vmem:[%s1561 + $0x48] sm:$0xff]
    %v1569 = vld [vmem:[%s1561 + $0x50] sm:$0xff]
    %v1570 = vld [vmem:[%s1561 + $0x60] sm:$0xff]
    %v1571 = vld [vmem:[%s1561 + $0x68] sm:$0xff]
    %v1572 = vld [vmem:[%s1561 + $0x78] sm:$0xff]
    %v1573 = vld [vmem:[%s1561 + $0x80] sm:$0xff]
    %v1574 = vld [vmem:[%s1561 + $0x90] sm:$0xff]
    %v1575 = vld [vmem:[%s1561 + $0x98] sm:$0xff]
    %v1576 = vld [vmem:[%s1561 + $0xa8] sm:$0xff]
    %v1577 = vld [vmem:[%s1561 + $0xb0] sm:$0xff]
    %v1578 = vld [vmem:[%s1561 + $0xc0] sm:$0xff]
    %v1579 = vld [vmem:[%s1561 + $0xc8] sm:$0xff]
    %v1580 = vld [vmem:[%s1561 + $0xd8] sm:$0xff]
    %v1581 = vld [vmem:[%s1561 + $0xe0] sm:$0xff]
    %v1582 = vld [vmem:[%s1561 + $0xf0] sm:$0xff]
    %v1583 = vld [vmem:[%s1561 + $0xf8] sm:$0xff]
    %v1584 = vld [vmem:[%s1561 + $0x108] sm:$0xff]
    %v1585 = vld [vmem:[%s1561 + $0x110] sm:$0xff]
    %v1586 = vld [vmem:[%s1561 + $0x120] sm:$0xff]
    %v1587 = vld [vmem:[%s1561 + $0x128] sm:$0xff]
    %v1588 = vld [vmem:[%s1561 + $0x138] sm:$0xff]
    %v1589 = vld [vmem:[%s1561 + $0x140] sm:$0xff]
    %v1590 = vld [vmem:[%s1561 + $0x150] sm:$0xff]
    %v1591 = vld [vmem:[%s1561 + $0x158] sm:$0xff]
    %v1592 = vld [vmem:[%s1561 + $0x168] sm:$0xff]
    %v1593 = vld [vmem:[%s1561 + $0x170] sm:$0xff]
    %v1594 = vld [vmem:[%s1561 + $0x1c8] sm:$0xff]
    %v1595 = vld [vmem:[%s1561 + $0x1d0] sm:$0xff]
    %v1596 = vld [vmem:[%s1561 + $0x1e0] sm:$0xff]
    %v1597 = vld [vmem:[%s1561 + $0x1e8] sm:$0xff]
    %v1598 = vld [vmem:[%s1561 + $0x1f8] sm:$0xff]
    %v1599 = vld [vmem:[%s1561 + $0x200] sm:$0xff]
    %v1600 = vld [vmem:[%s1561 + $0x210] sm:$0xff]
    %v1601 = vld [vmem:[%s1561 + $0x218] sm:$0xff]
    %v1602 = vld [vmem:[%s1561 + $0x228] sm:$0xff]
    %v1603 = vld [vmem:[%s1561 + $0x230] sm:$0xff]
    %v1604 = vld [vmem:[%s1561 + $0x240] sm:$0xff]
    %v1605 = vld [vmem:[%s1561 + $0x248] sm:$0xff]
    %v1606 = vld [vmem:[%s1561 + $0x258] sm:$0xff]
    %v1607 = vld [vmem:[%s1561 + $0x260] sm:$0xff]
    %v1608 = vld [vmem:[%s1561 + $0x270] sm:$0xff]
    %v1609 = vld [vmem:[%s1561 + $0x278] sm:$0xff]
    %v1610 = vld [vmem:[%s1561 + $0x288] sm:$0xff]
    %v1611 = vld [vmem:[%s1561 + $0x290] sm:$0xff]
    %v1612 = vld [vmem:[%s1561 + $0x2a0] sm:$0xff]
    %v1613 = vld [vmem:[%s1561 + $0x2a8] sm:$0xff]
    %v1614 = vld [vmem:[%s1561 + $0x2b8] sm:$0xff]
    %v1615 = vld [vmem:[%s1561 + $0x2c0] sm:$0xff]
    %v1616 = vld [vmem:[%s1561 + $0x2d0] sm:$0xff]
    %v1617 = vld [vmem:[%s1561 + $0x2d8] sm:$0xff]
    %v1618 = vld [vmem:[%s1561 + $0x2e8] sm:$0xff]
    %v1619 = vld [vmem:[%s1561 + $0x2f0] sm:$0xff]
    %v1620 = vld [vmem:[%s1561 + $0x300] sm:$0xff]
    %v1621 = vld [vmem:[%s1561 + $0x308] sm:$0xff]
    %v1622 = vld [vmem:[%s1561 + $0x318] sm:$0xff]
    %v1623 = vld [vmem:[%s1561 + $0x320] sm:$0xff]
    %v1624 = vld [vmem:[%s1561 + $0x330] sm:$0xff]
    %v1625 = vld [vmem:[%s1561 + $0x338] sm:$0xff]
    %1690 = vrot.lane.b32.xlu0 %v1562, 16
    %v1691 = vpop.permute.xlu0 %1690
    %1692 = vrot.lane.b32.xlu0 %v1563, 16
    %v1693 = vpop.permute.xlu0 %1692
    %1694 = vrot.lane.b32.xlu0 %v1564, 16
    %v1695 = vpop.permute.xlu0 %1694
    %1696 = vrot.lane.b32.xlu0 %v1565, 16
    %v1697 = vpop.permute.xlu0 %1696
    %1698 = vrot.lane.b32.xlu0 %v1566, 16
    %v1699 = vpop.permute.xlu0 %1698
    %1700 = vrot.lane.b32.xlu0 %v1567, 16
    %v1701 = vpop.permute.xlu0 %1700
    %1702 = vrot.lane.b32.xlu0 %v1568, 16
    %v1703 = vpop.permute.xlu0 %1702
    %1704 = vrot.lane.b32.xlu0 %v1569, 16
    %v1705 = vpop.permute.xlu0 %1704
    %1706 = vrot.lane.b32.xlu0 %v1570, 16
    %v1707 = vpop.permute.xlu0 %1706
    %1708 = vrot.lane.b32.xlu0 %v1571, 16
    %v1709 = vpop.permute.xlu0 %1708
    %1710 = vrot.lane.b32.xlu0 %v1572, 16
    %v1711 = vpop.permute.xlu0 %1710
    %1712 = vrot.lane.b32.xlu0 %v1573, 16
    %v1713 = vpop.permute.xlu0 %1712
    %1714 = vrot.lane.b32.xlu0 %v1574, 16
    %v1715 = vpop.permute.xlu0 %1714
    %1716 = vrot.lane.b32.xlu0 %v1575, 16
    %v1717 = vpop.permute.xlu0 %1716
    %1718 = vrot.lane.b32.xlu0 %v1576, 16
    %v1719 = vpop.permute.xlu0 %1718
    %1720 = vrot.lane.b32.xlu0 %v1577, 16
    %v1721 = vpop.permute.xlu0 %1720
    %1722 = vrot.lane.b32.xlu0 %v1578, 16
    %v1723 = vpop.permute.xlu0 %1722
    %1724 = vrot.lane.b32.xlu0 %v1579, 16
    %v1725 = vpop.permute.xlu0 %1724
    %1726 = vrot.lane.b32.xlu0 %v1580, 16
    %v1727 = vpop.permute.xlu0 %1726
    %1728 = vrot.lane.b32.xlu0 %v1581, 16
    %v1729 = vpop.permute.xlu0 %1728
    %1730 = vrot.lane.b32.xlu0 %v1582, 16
    %v1731 = vpop.permute.xlu0 %1730
    %1732 = vrot.lane.b32.xlu0 %v1583, 16
    %v1733 = vpop.permute.xlu0 %1732
    %1734 = vrot.lane.b32.xlu0 %v1584, 16
    %v1735 = vpop.permute.xlu0 %1734
    %1736 = vrot.lane.b32.xlu0 %v1585, 16
    %v1737 = vpop.permute.xlu0 %1736
    %1738 = vrot.lane.b32.xlu0 %v1586, 16
    %v1739 = vpop.permute.xlu0 %1738
    %1740 = vrot.lane.b32.xlu0 %v1587, 16
    %v1741 = vpop.permute.xlu0 %1740
    %1742 = vrot.lane.b32.xlu0 %v1588, 16
    %v1743 = vpop.permute.xlu0 %1742
    %1744 = vrot.lane.b32.xlu0 %v1589, 16
    %v1745 = vpop.permute.xlu0 %1744
    %1746 = vrot.lane.b32.xlu0 %v1590, 16
    %v1747 = vpop.permute.xlu0 %1746
    %1748 = vrot.lane.b32.xlu0 %v1591, 16
    %v1749 = vpop.permute.xlu0 %1748
    %1750 = vrot.lane.b32.xlu0 %v1592, 16
    %v1751 = vpop.permute.xlu0 %1750
    %1752 = vrot.lane.b32.xlu0 %v1593, 16
    %v1753 = vpop.permute.xlu0 %1752
    %1754 = vrot.lane.b32.xlu0 %v1594, 16
    %v1755 = vpop.permute.xlu0 %1754
    %1756 = vrot.lane.b32.xlu0 %v1595, 16
    %v1757 = vpop.permute.xlu0 %1756
    %1758 = vrot.lane.b32.xlu0 %v1596, 16
    %v1759 = vpop.permute.xlu0 %1758
    %1760 = vrot.lane.b32.xlu0 %v1597, 16
    %v1761 = vpop.permute.xlu0 %1760
    %1762 = vrot.lane.b32.xlu0 %v1598, 16
    %v1763 = vpop.permute.xlu0 %1762
    %1764 = vrot.lane.b32.xlu0 %v1599, 16
    %v1765 = vpop.permute.xlu0 %1764
    %1766 = vrot.lane.b32.xlu0 %v1600, 16
    %v1767 = vpop.permute.xlu0 %1766
    %1768 = vrot.lane.b32.xlu0 %v1601, 16
    %v1769 = vpop.permute.xlu0 %1768
    %1770 = vrot.lane.b32.xlu0 %v1602, 16
    %v1771 = vpop.permute.xlu0 %1770
    %1772 = vrot.lane.b32.xlu0 %v1603, 16
    %v1773 = vpop.permute.xlu0 %1772
    %1774 = vrot.lane.b32.xlu0 %v1604, 16
    %v1775 = vpop.permute.xlu0 %1774
    %1776 = vrot.lane.b32.xlu0 %v1605, 16
    %v1777 = vpop.permute.xlu0 %1776
    %1778 = vrot.lane.b32.xlu0 %v1606, 16
    %v1779 = vpop.permute.xlu0 %1778
    %1780 = vrot.lane.b32.xlu0 %v1607, 16
    %v1781 = vpop.permute.xlu0 %1780
    %1782 = vrot.lane.b32.xlu0 %v1608, 16
    %v1783 = vpop.permute.xlu0 %1782
    %1784 = vrot.lane.b32.xlu0 %v1609, 16
    %v1785 = vpop.permute.xlu0 %1784
    %1786 = vrot.lane.b32.xlu0 %v1610, 16
    %v1787 = vpop.permute.xlu0 %1786
    %1788 = vrot.lane.b32.xlu0 %v1611, 16
    %v1789 = vpop.permute.xlu0 %1788
    %1790 = vrot.lane.b32.xlu0 %v1612, 16
    %v1791 = vpop.permute.xlu0 %1790
    %1792 = vrot.lane.b32.xlu0 %v1613, 16
    %v1793 = vpop.permute.xlu0 %1792
    %1794 = vrot.lane.b32.xlu0 %v1614, 16
    %v1795 = vpop.permute.xlu0 %1794
    %1796 = vrot.lane.b32.xlu0 %v1615, 16
    %v1797 = vpop.permute.xlu0 %1796
    %1798 = vrot.lane.b32.xlu0 %v1616, 16
    %v1799 = vpop.permute.xlu0 %1798
    %1800 = vrot.lane.b32.xlu0 %v1617, 16
    %v1801 = vpop.permute.xlu0 %1800
    %1802 = vrot.lane.b32.xlu0 %v1618, 16
    %v1803 = vpop.permute.xlu0 %1802
    %1804 = vrot.lane.b32.xlu0 %v1619, 16
    %v1805 = vpop.permute.xlu0 %1804
    %1806 = vrot.lane.b32.xlu0 %v1620, 16
    %v1807 = vpop.permute.xlu0 %1806
    %1808 = vrot.lane.b32.xlu0 %v1621, 16
    %v1809 = vpop.permute.xlu0 %1808
    %1810 = vrot.lane.b32.xlu0 %v1622, 16
    %v1811 = vpop.permute.xlu0 %1810
    %1812 = vrot.lane.b32.xlu0 %v1623, 16
    %v1813 = vpop.permute.xlu0 %1812
    %1814 = vrot.lane.b32.xlu0 %v1624, 16
    %v1815 = vpop.permute.xlu0 %1814
    %1816 = vrot.lane.b32.xlu0 %v1625, 16
    %v1817 = vpop.permute.xlu0 %1816
    %vm1882 = vcmask 162944
    %1883 = vst.msk [vmem:[#allocation3] sm:$0xff] %vm1882, %v1691
    %1884 = vst.msk [vmem:[#allocation3 + $0x8] sm:$0xff] %vm1882, %v1693
    %1885 = vst.msk [vmem:[#allocation3 + $0x10] sm:$0xff] %vm1882, %v1695
    %1886 = vst.msk [vmem:[#allocation3 + $0x18] sm:$0xff] %vm1882, %v1697
    %1887 = vst.msk [vmem:[#allocation3 + $0x20] sm:$0xff] %vm1882, %v1699
    %1888 = vst.msk [vmem:[#allocation3 + $0x28] sm:$0xff] %vm1882, %v1701
    %1889 = vst.msk [vmem:[#allocation3 + $0x30] sm:$0xff] %vm1882, %v1703
    %1890 = vst.msk [vmem:[#allocation3 + $0x38] sm:$0xff] %vm1882, %v1705
    %1891 = vst.msk [vmem:[#allocation3 + $0x40] sm:$0xff] %vm1882, %v1707
    %1892 = vst.msk [vmem:[#allocation3 + $0x48] sm:$0xff] %vm1882, %v1709
    %1893 = vst.msk [vmem:[#allocation3 + $0x50] sm:$0xff] %vm1882, %v1711
    %1894 = vst.msk [vmem:[#allocation3 + $0x58] sm:$0xff] %vm1882, %v1713
    %1895 = vst.msk [vmem:[#allocation3 + $0x60] sm:$0xff] %vm1882, %v1715
    %1896 = vst.msk [vmem:[#allocation3 + $0x68] sm:$0xff] %vm1882, %v1717
    %1897 = vst.msk [vmem:[#allocation3 + $0x70] sm:$0xff] %vm1882, %v1719
    %1898 = vst.msk [vmem:[#allocation3 + $0x78] sm:$0xff] %vm1882, %v1721
    %1899 = vst.msk [vmem:[#allocation3 + $0x80] sm:$0xff] %vm1882, %v1723
    %1900 = vst.msk [vmem:[#allocation3 + $0x88] sm:$0xff] %vm1882, %v1725
    %1901 = vst.msk [vmem:[#allocation3 + $0x90] sm:$0xff] %vm1882, %v1727
    %1902 = vst.msk [vmem:[#allocation3 + $0x98] sm:$0xff] %vm1882, %v1729
    %1903 = vst.msk [vmem:[#allocation3 + $0xa0] sm:$0xff] %vm1882, %v1731
    %1904 = vst.msk [vmem:[#allocation3 + $0xa8] sm:$0xff] %vm1882, %v1733
    %1905 = vst.msk [vmem:[#allocation3 + $0xb0] sm:$0xff] %vm1882, %v1735
    %1906 = vst.msk [vmem:[#allocation3 + $0xb8] sm:$0xff] %vm1882, %v1737
    %1907 = vst.msk [vmem:[#allocation3 + $0xc0] sm:$0xff] %vm1882, %v1739
    %1908 = vst.msk [vmem:[#allocation3 + $0xc8] sm:$0xff] %vm1882, %v1741
    %1909 = vst.msk [vmem:[#allocation3 + $0xd0] sm:$0xff] %vm1882, %v1743
    %1910 = vst.msk [vmem:[#allocation3 + $0xd8] sm:$0xff] %vm1882, %v1745
    %1911 = vst.msk [vmem:[#allocation3 + $0xe0] sm:$0xff] %vm1882, %v1747
    %1912 = vst.msk [vmem:[#allocation3 + $0xe8] sm:$0xff] %vm1882, %v1749
    %1913 = vst.msk [vmem:[#allocation3 + $0xf0] sm:$0xff] %vm1882, %v1751
    %1914 = vst.msk [vmem:[#allocation3 + $0xf8] sm:$0xff] %vm1882, %v1753
    %1915 = vst.msk [vmem:[#allocation3 + $0x100] sm:$0xff] %vm1882, %v1755
    %1916 = vst.msk [vmem:[#allocation3 + $0x108] sm:$0xff] %vm1882, %v1757
    %1917 = vst.msk [vmem:[#allocation3 + $0x110] sm:$0xff] %vm1882, %v1759
    %1918 = vst.msk [vmem:[#allocation3 + $0x118] sm:$0xff] %vm1882, %v1761
    %1919 = vst.msk [vmem:[#allocation3 + $0x120] sm:$0xff] %vm1882, %v1763
    %1920 = vst.msk [vmem:[#allocation3 + $0x128] sm:$0xff] %vm1882, %v1765
    %1921 = vst.msk [vmem:[#allocation3 + $0x130] sm:$0xff] %vm1882, %v1767
    %1922 = vst.msk [vmem:[#allocation3 + $0x138] sm:$0xff] %vm1882, %v1769
    %1923 = vst.msk [vmem:[#allocation3 + $0x140] sm:$0xff] %vm1882, %v1771
    %1924 = vst.msk [vmem:[#allocation3 + $0x148] sm:$0xff] %vm1882, %v1773
    %1925 = vst.msk [vmem:[#allocation3 + $0x150] sm:$0xff] %vm1882, %v1775
    %1926 = vst.msk [vmem:[#allocation3 + $0x158] sm:$0xff] %vm1882, %v1777
    %1927 = vst.msk [vmem:[#allocation3 + $0x160] sm:$0xff] %vm1882, %v1779
    %1928 = vst.msk [vmem:[#allocation3 + $0x168] sm:$0xff] %vm1882, %v1781
    %1929 = vst.msk [vmem:[#allocation3 + $0x170] sm:$0xff] %vm1882, %v1783
    %1930 = vst.msk [vmem:[#allocation3 + $0x178] sm:$0xff] %vm1882, %v1785
    %1931 = vst.msk [vmem:[#allocation3 + $0x180] sm:$0xff] %vm1882, %v1787
    %1932 = vst.msk [vmem:[#allocation3 + $0x188] sm:$0xff] %vm1882, %v1789
    %1933 = vst.msk [vmem:[#allocation3 + $0x190] sm:$0xff] %vm1882, %v1791
    %1934 = vst.msk [vmem:[#allocation3 + $0x198] sm:$0xff] %vm1882, %v1793
    %1935 = vst.msk [vmem:[#allocation3 + $0x1a0] sm:$0xff] %vm1882, %v1795
    %1936 = vst.msk [vmem:[#allocation3 + $0x1a8] sm:$0xff] %vm1882, %v1797
    %1937 = vst.msk [vmem:[#allocation3 + $0x1b0] sm:$0xff] %vm1882, %v1799
    %1938 = vst.msk [vmem:[#allocation3 + $0x1b8] sm:$0xff] %vm1882, %v1801
    %1939 = vst.msk [vmem:[#allocation3 + $0x1c0] sm:$0xff] %vm1882, %v1803
    %1940 = vst.msk [vmem:[#allocation3 + $0x1c8] sm:$0xff] %vm1882, %v1805
    %1941 = vst.msk [vmem:[#allocation3 + $0x1d0] sm:$0xff] %vm1882, %v1807
    %1942 = vst.msk [vmem:[#allocation3 + $0x1d8] sm:$0xff] %vm1882, %v1809
    %1943 = vst.msk [vmem:[#allocation3 + $0x1e0] sm:$0xff] %vm1882, %v1811
    %1944 = vst.msk [vmem:[#allocation3 + $0x1e8] sm:$0xff] %vm1882, %v1813
    %1945 = vst.msk [vmem:[#allocation3 + $0x1f0] sm:$0xff] %vm1882, %v1815
    %1946 = vst.msk [vmem:[#allocation3 + $0x1f8] sm:$0xff] %vm1882, %v1817
    %v1947 = vld [vmem:[%s1561 + $0x1] sm:$0xff]
    %v1948 = vld [vmem:[%s1561 + $0x9] sm:$0xff]
    %v1949 = vld [vmem:[%s1561 + $0x19] sm:$0xff]
    %v1950 = vld [vmem:[%s1561 + $0x21] sm:$0xff]
    %v1951 = vld [vmem:[%s1561 + $0x31] sm:$0xff]
    %v1952 = vld [vmem:[%s1561 + $0x39] sm:$0xff]
    %v1953 = vld [vmem:[%s1561 + $0x49] sm:$0xff]
    %v1954 = vld [vmem:[%s1561 + $0x51] sm:$0xff]
    %v1955 = vld [vmem:[%s1561 + $0x61] sm:$0xff]
    %v1956 = vld [vmem:[%s1561 + $0x69] sm:$0xff]
    %v1957 = vld [vmem:[%s1561 + $0x79] sm:$0xff]
    %v1958 = vld [vmem:[%s1561 + $0x81] sm:$0xff]
    %v1959 = vld [vmem:[%s1561 + $0x91] sm:$0xff]
    %v1960 = vld [vmem:[%s1561 + $0x99] sm:$0xff]
    %v1961 = vld [vmem:[%s1561 + $0xa9] sm:$0xff]
    %v1962 = vld [vmem:[%s1561 + $0xb1] sm:$0xff]
    %v1963 = vld [vmem:[%s1561 + $0xc1] sm:$0xff]
    %v1964 = vld [vmem:[%s1561 + $0xc9] sm:$0xff]
    %v1965 = vld [vmem:[%s1561 + $0xd9] sm:$0xff]
    %v1966 = vld [vmem:[%s1561 + $0xe1] sm:$0xff]
    %v1967 = vld [vmem:[%s1561 + $0xf1] sm:$0xff]
    %v1968 = vld [vmem:[%s1561 + $0xf9] sm:$0xff]
    %v1969 = vld [vmem:[%s1561 + $0x109] sm:$0xff]
    %v1970 = vld [vmem:[%s1561 + $0x111] sm:$0xff]
    %v1971 = vld [vmem:[%s1561 + $0x121] sm:$0xff]
    %v1972 = vld [vmem:[%s1561 + $0x129] sm:$0xff]
    %v1973 = vld [vmem:[%s1561 + $0x139] sm:$0xff]
    %v1974 = vld [vmem:[%s1561 + $0x141] sm:$0xff]
    %v1975 = vld [vmem:[%s1561 + $0x151] sm:$0xff]
    %v1976 = vld [vmem:[%s1561 + $0x159] sm:$0xff]
    %v1977 = vld [vmem:[%s1561 + $0x169] sm:$0xff]
    %v1978 = vld [vmem:[%s1561 + $0x171] sm:$0xff]
    %v1979 = vld [vmem:[%s1561 + $0x1c9] sm:$0xff]
    %v1980 = vld [vmem:[%s1561 + $0x1d1] sm:$0xff]
    %v1981 = vld [vmem:[%s1561 + $0x1e1] sm:$0xff]
    %v1982 = vld [vmem:[%s1561 + $0x1e9] sm:$0xff]
    %v1983 = vld [vmem:[%s1561 + $0x1f9] sm:$0xff]
    %v1984 = vld [vmem:[%s1561 + $0x201] sm:$0xff]
    %v1985 = vld [vmem:[%s1561 + $0x211] sm:$0xff]
    %v1986 = vld [vmem:[%s1561 + $0x219] sm:$0xff]
    %v1987 = vld [vmem:[%s1561 + $0x229] sm:$0xff]
    %v1988 = vld [vmem:[%s1561 + $0x231] sm:$0xff]
    %v1989 = vld [vmem:[%s1561 + $0x241] sm:$0xff]
    %v1990 = vld [vmem:[%s1561 + $0x249] sm:$0xff]
    %v1991 = vld [vmem:[%s1561 + $0x259] sm:$0xff]
    %v1992 = vld [vmem:[%s1561 + $0x261] sm:$0xff]
    %v1993 = vld [vmem:[%s1561 + $0x271] sm:$0xff]
    %v1994 = vld [vmem:[%s1561 + $0x279] sm:$0xff]
    %v1995 = vld [vmem:[%s1561 + $0x289] sm:$0xff]
    %v1996 = vld [vmem:[%s1561 + $0x291] sm:$0xff]
    %v1997 = vld [vmem:[%s1561 + $0x2a1] sm:$0xff]
    %v1998 = vld [vmem:[%s1561 + $0x2a9] sm:$0xff]
    %v1999 = vld [vmem:[%s1561 + $0x2b9] sm:$0xff]
    %v2000 = vld [vmem:[%s1561 + $0x2c1] sm:$0xff]
    %v2001 = vld [vmem:[%s1561 + $0x2d1] sm:$0xff]
    %v2002 = vld [vmem:[%s1561 + $0x2d9] sm:$0xff]
    %v2003 = vld [vmem:[%s1561 + $0x2e9] sm:$0xff]
    %v2004 = vld [vmem:[%s1561 + $0x2f1] sm:$0xff]
    %v2005 = vld [vmem:[%s1561 + $0x301] sm:$0xff]
    %v2006 = vld [vmem:[%s1561 + $0x309] sm:$0xff]
    %v2007 = vld [vmem:[%s1561 + $0x319] sm:$0xff]
    %v2008 = vld [vmem:[%s1561 + $0x321] sm:$0xff]
    %v2009 = vld [vmem:[%s1561 + $0x331] sm:$0xff]
    %v2010 = vld [vmem:[%s1561 + $0x339] sm:$0xff]
    %2075 = vrot.lane.b32.xlu0 %v1947, 20
    %v2076 = vpop.permute.xlu0 %2075
    %2077 = vrot.lane.b32.xlu0 %v1948, 20
    %v2078 = vpop.permute.xlu0 %2077
    %2079 = vrot.lane.b32.xlu0 %v1949, 20
    %v2080 = vpop.permute.xlu0 %2079
    %2081 = vrot.lane.b32.xlu0 %v1950, 20
    %v2082 = vpop.permute.xlu0 %2081
    %2083 = vrot.lane.b32.xlu0 %v1951, 20
    %v2084 = vpop.permute.xlu0 %2083
    %2085 = vrot.lane.b32.xlu0 %v1952, 20
    %v2086 = vpop.permute.xlu0 %2085
    %2087 = vrot.lane.b32.xlu0 %v1953, 20
    %v2088 = vpop.permute.xlu0 %2087
    %2089 = vrot.lane.b32.xlu0 %v1954, 20
    %v2090 = vpop.permute.xlu0 %2089
    %2091 = vrot.lane.b32.xlu0 %v1955, 20
    %v2092 = vpop.permute.xlu0 %2091
    %2093 = vrot.lane.b32.xlu0 %v1956, 20
    %v2094 = vpop.permute.xlu0 %2093
    %2095 = vrot.lane.b32.xlu0 %v1957, 20
    %v2096 = vpop.permute.xlu0 %2095
    %2097 = vrot.lane.b32.xlu0 %v1958, 20
    %v2098 = vpop.permute.xlu0 %2097
    %2099 = vrot.lane.b32.xlu0 %v1959, 20
    %v2100 = vpop.permute.xlu0 %2099
    %2101 = vrot.lane.b32.xlu0 %v1960, 20
    %v2102 = vpop.permute.xlu0 %2101
    %2103 = vrot.lane.b32.xlu0 %v1961, 20
    %v2104 = vpop.permute.xlu0 %2103
    %2105 = vrot.lane.b32.xlu0 %v1962, 20
    %v2106 = vpop.permute.xlu0 %2105
    %2107 = vrot.lane.b32.xlu0 %v1963, 20
    %v2108 = vpop.permute.xlu0 %2107
    %2109 = vrot.lane.b32.xlu0 %v1964, 20
    %v2110 = vpop.permute.xlu0 %2109
    %2111 = vrot.lane.b32.xlu0 %v1965, 20
    %v2112 = vpop.permute.xlu0 %2111
    %2113 = vrot.lane.b32.xlu0 %v1966, 20
    %v2114 = vpop.permute.xlu0 %2113
    %2115 = vrot.lane.b32.xlu0 %v1967, 20
    %v2116 = vpop.permute.xlu0 %2115
    %2117 = vrot.lane.b32.xlu0 %v1968, 20
    %v2118 = vpop.permute.xlu0 %2117
    %2119 = vrot.lane.b32.xlu0 %v1969, 20
    %v2120 = vpop.permute.xlu0 %2119
    %2121 = vrot.lane.b32.xlu0 %v1970, 20
    %v2122 = vpop.permute.xlu0 %2121
    %2123 = vrot.lane.b32.xlu0 %v1971, 20
    %v2124 = vpop.permute.xlu0 %2123
    %2125 = vrot.lane.b32.xlu0 %v1972, 20
    %v2126 = vpop.permute.xlu0 %2125
    %2127 = vrot.lane.b32.xlu0 %v1973, 20
    %v2128 = vpop.permute.xlu0 %2127
    %2129 = vrot.lane.b32.xlu0 %v1974, 20
    %v2130 = vpop.permute.xlu0 %2129
    %2131 = vrot.lane.b32.xlu0 %v1975, 20
    %v2132 = vpop.permute.xlu0 %2131
    %2133 = vrot.lane.b32.xlu0 %v1976, 20
    %v2134 = vpop.permute.xlu0 %2133
    %2135 = vrot.lane.b32.xlu0 %v1977, 20
    %v2136 = vpop.permute.xlu0 %2135
    %2137 = vrot.lane.b32.xlu0 %v1978, 20
    %v2138 = vpop.permute.xlu0 %2137
    %2139 = vrot.lane.b32.xlu0 %v1979, 20
    %v2140 = vpop.permute.xlu0 %2139
    %2141 = vrot.lane.b32.xlu0 %v1980, 20
    %v2142 = vpop.permute.xlu0 %2141
    %2143 = vrot.lane.b32.xlu0 %v1981, 20
    %v2144 = vpop.permute.xlu0 %2143
    %2145 = vrot.lane.b32.xlu0 %v1982, 20
    %v2146 = vpop.permute.xlu0 %2145
    %2147 = vrot.lane.b32.xlu0 %v1983, 20
    %v2148 = vpop.permute.xlu0 %2147
    %2149 = vrot.lane.b32.xlu0 %v1984, 20
    %v2150 = vpop.permute.xlu0 %2149
    %2151 = vrot.lane.b32.xlu0 %v1985, 20
    %v2152 = vpop.permute.xlu0 %2151
    %2153 = vrot.lane.b32.xlu0 %v1986, 20
    %v2154 = vpop.permute.xlu0 %2153
    %2155 = vrot.lane.b32.xlu0 %v1987, 20
    %v2156 = vpop.permute.xlu0 %2155
    %2157 = vrot.lane.b32.xlu0 %v1988, 20
    %v2158 = vpop.permute.xlu0 %2157
    %2159 = vrot.lane.b32.xlu0 %v1989, 20
    %v2160 = vpop.permute.xlu0 %2159
    %2161 = vrot.lane.b32.xlu0 %v1990, 20
    %v2162 = vpop.permute.xlu0 %2161
    %2163 = vrot.lane.b32.xlu0 %v1991, 20
    %v2164 = vpop.permute.xlu0 %2163
    %2165 = vrot.lane.b32.xlu0 %v1992, 20
    %v2166 = vpop.permute.xlu0 %2165
    %2167 = vrot.lane.b32.xlu0 %v1993, 20
    %v2168 = vpop.permute.xlu0 %2167
    %2169 = vrot.lane.b32.xlu0 %v1994, 20
    %v2170 = vpop.permute.xlu0 %2169
    %2171 = vrot.lane.b32.xlu0 %v1995, 20
    %v2172 = vpop.permute.xlu0 %2171
    %2173 = vrot.lane.b32.xlu0 %v1996, 20
    %v2174 = vpop.permute.xlu0 %2173
    %2175 = vrot.lane.b32.xlu0 %v1997, 20
    %v2176 = vpop.permute.xlu0 %2175
    %2177 = vrot.lane.b32.xlu0 %v1998, 20
    %v2178 = vpop.permute.xlu0 %2177
    %2179 = vrot.lane.b32.xlu0 %v1999, 20
    %v2180 = vpop.permute.xlu0 %2179
    %2181 = vrot.lane.b32.xlu0 %v2000, 20
    %v2182 = vpop.permute.xlu0 %2181
    %2183 = vrot.lane.b32.xlu0 %v2001, 20
    %v2184 = vpop.permute.xlu0 %2183
    %2185 = vrot.lane.b32.xlu0 %v2002, 20
    %v2186 = vpop.permute.xlu0 %2185
    %2187 = vrot.lane.b32.xlu0 %v2003, 20
    %v2188 = vpop.permute.xlu0 %2187
    %2189 = vrot.lane.b32.xlu0 %v2004, 20
    %v2190 = vpop.permute.xlu0 %2189
    %2191 = vrot.lane.b32.xlu0 %v2005, 20
    %v2192 = vpop.permute.xlu0 %2191
    %2193 = vrot.lane.b32.xlu0 %v2006, 20
    %v2194 = vpop.permute.xlu0 %2193
    %2195 = vrot.lane.b32.xlu0 %v2007, 20
    %v2196 = vpop.permute.xlu0 %2195
    %2197 = vrot.lane.b32.xlu0 %v2008, 20
    %v2198 = vpop.permute.xlu0 %2197
    %2199 = vrot.lane.b32.xlu0 %v2009, 20
    %v2200 = vpop.permute.xlu0 %2199
    %2201 = vrot.lane.b32.xlu0 %v2010, 20
    %v2202 = vpop.permute.xlu0 %2201
    %vm2267 = vcmask 195744
    %2268 = vst.msk [vmem:[#allocation3] sm:$0xff] %vm2267, %v2076
    %2269 = vst.msk [vmem:[#allocation3 + $0x8] sm:$0xff] %vm2267, %v2078
    %2270 = vst.msk [vmem:[#allocation3 + $0x10] sm:$0xff] %vm2267, %v2080
    %2271 = vst.msk [vmem:[#allocation3 + $0x18] sm:$0xff] %vm2267, %v2082
    %2272 = vst.msk [vmem:[#allocation3 + $0x20] sm:$0xff] %vm2267, %v2084
    %2273 = vst.msk [vmem:[#allocation3 + $0x28] sm:$0xff] %vm2267, %v2086
    %2274 = vst.msk [vmem:[#allocation3 + $0x30] sm:$0xff] %vm2267, %v2088
    %2275 = vst.msk [vmem:[#allocation3 + $0x38] sm:$0xff] %vm2267, %v2090
    %2276 = vst.msk [vmem:[#allocation3 + $0x40] sm:$0xff] %vm2267, %v2092
    %2277 = vst.msk [vmem:[#allocation3 + $0x48] sm:$0xff] %vm2267, %v2094
    %2278 = vst.msk [vmem:[#allocation3 + $0x50] sm:$0xff] %vm2267, %v2096
    %2279 = vst.msk [vmem:[#allocation3 + $0x58] sm:$0xff] %vm2267, %v2098
    %2280 = vst.msk [vmem:[#allocation3 + $0x60] sm:$0xff] %vm2267, %v2100
    %2281 = vst.msk [vmem:[#allocation3 + $0x68] sm:$0xff] %vm2267, %v2102
    %2282 = vst.msk [vmem:[#allocation3 + $0x70] sm:$0xff] %vm2267, %v2104
    %2283 = vst.msk [vmem:[#allocation3 + $0x78] sm:$0xff] %vm2267, %v2106
    %2284 = vst.msk [vmem:[#allocation3 + $0x80] sm:$0xff] %vm2267, %v2108
    %2285 = vst.msk [vmem:[#allocation3 + $0x88] sm:$0xff] %vm2267, %v2110
    %2286 = vst.msk [vmem:[#allocation3 + $0x90] sm:$0xff] %vm2267, %v2112
    %2287 = vst.msk [vmem:[#allocation3 + $0x98] sm:$0xff] %vm2267, %v2114
    %2288 = vst.msk [vmem:[#allocation3 + $0xa0] sm:$0xff] %vm2267, %v2116
    %2289 = vst.msk [vmem:[#allocation3 + $0xa8] sm:$0xff] %vm2267, %v2118
    %2290 = vst.msk [vmem:[#allocation3 + $0xb0] sm:$0xff] %vm2267, %v2120
    %2291 = vst.msk [vmem:[#allocation3 + $0xb8] sm:$0xff] %vm2267, %v2122
    %2292 = vst.msk [vmem:[#allocation3 + $0xc0] sm:$0xff] %vm2267, %v2124
    %2293 = vst.msk [vmem:[#allocation3 + $0xc8] sm:$0xff] %vm2267, %v2126
    %2294 = vst.msk [vmem:[#allocation3 + $0xd0] sm:$0xff] %vm2267, %v2128
    %2295 = vst.msk [vmem:[#allocation3 + $0xd8] sm:$0xff] %vm2267, %v2130
    %2296 = vst.msk [vmem:[#allocation3 + $0xe0] sm:$0xff] %vm2267, %v2132
    %2297 = vst.msk [vmem:[#allocation3 + $0xe8] sm:$0xff] %vm2267, %v2134
    %2298 = vst.msk [vmem:[#allocation3 + $0xf0] sm:$0xff] %vm2267, %v2136
    %2299 = vst.msk [vmem:[#allocation3 + $0xf8] sm:$0xff] %vm2267, %v2138
    %2300 = vst.msk [vmem:[#allocation3 + $0x100] sm:$0xff] %vm2267, %v2140
    %2301 = vst.msk [vmem:[#allocation3 + $0x108] sm:$0xff] %vm2267, %v2142
    %2302 = vst.msk [vmem:[#allocation3 + $0x110] sm:$0xff] %vm2267, %v2144
    %2303 = vst.msk [vmem:[#allocation3 + $0x118] sm:$0xff] %vm2267, %v2146
    %2304 = vst.msk [vmem:[#allocation3 + $0x120] sm:$0xff] %vm2267, %v2148
    %2305 = vst.msk [vmem:[#allocation3 + $0x128] sm:$0xff] %vm2267, %v2150
    %2306 = vst.msk [vmem:[#allocation3 + $0x130] sm:$0xff] %vm2267, %v2152
    %2307 = vst.msk [vmem:[#allocation3 + $0x138] sm:$0xff] %vm2267, %v2154
    %2308 = vst.msk [vmem:[#allocation3 + $0x140] sm:$0xff] %vm2267, %v2156
    %2309 = vst.msk [vmem:[#allocation3 + $0x148] sm:$0xff] %vm2267, %v2158
    %2310 = vst.msk [vmem:[#allocation3 + $0x150] sm:$0xff] %vm2267, %v2160
    %2311 = vst.msk [vmem:[#allocation3 + $0x158] sm:$0xff] %vm2267, %v2162
    %2312 = vst.msk [vmem:[#allocation3 + $0x160] sm:$0xff] %vm2267, %v2164
    %2313 = vst.msk [vmem:[#allocation3 + $0x168] sm:$0xff] %vm2267, %v2166
    %2314 = vst.msk [vmem:[#allocation3 + $0x170] sm:$0xff] %vm2267, %v2168
    %2315 = vst.msk [vmem:[#allocation3 + $0x178] sm:$0xff] %vm2267, %v2170
    %2316 = vst.msk [vmem:[#allocation3 + $0x180] sm:$0xff] %vm2267, %v2172
    %2317 = vst.msk [vmem:[#allocation3 + $0x188] sm:$0xff] %vm2267, %v2174
    %2318 = vst.msk [vmem:[#allocation3 + $0x190] sm:$0xff] %vm2267, %v2176
    %2319 = vst.msk [vmem:[#allocation3 + $0x198] sm:$0xff] %vm2267, %v2178
    %2320 = vst.msk [vmem:[#allocation3 + $0x1a0] sm:$0xff] %vm2267, %v2180
    %2321 = vst.msk [vmem:[#allocation3 + $0x1a8] sm:$0xff] %vm2267, %v2182
    %2322 = vst.msk [vmem:[#allocation3 + $0x1b0] sm:$0xff] %vm2267, %v2184
    %2323 = vst.msk [vmem:[#allocation3 + $0x1b8] sm:$0xff] %vm2267, %v2186
    %2324 = vst.msk [vmem:[#allocation3 + $0x1c0] sm:$0xff] %vm2267, %v2188
    %2325 = vst.msk [vmem:[#allocation3 + $0x1c8] sm:$0xff] %vm2267, %v2190
    %2326 = vst.msk [vmem:[#allocation3 + $0x1d0] sm:$0xff] %vm2267, %v2192
    %2327 = vst.msk [vmem:[#allocation3 + $0x1d8] sm:$0xff] %vm2267, %v2194
    %2328 = vst.msk [vmem:[#allocation3 + $0x1e0] sm:$0xff] %vm2267, %v2196
    %2329 = vst.msk [vmem:[#allocation3 + $0x1e8] sm:$0xff] %vm2267, %v2198
    %2330 = vst.msk [vmem:[#allocation3 + $0x1f0] sm:$0xff] %vm2267, %v2200
    %2331 = vst.msk [vmem:[#allocation3 + $0x1f8] sm:$0xff] %vm2267, %v2202
    %v2332 = vld [vmem:[%s1561 + $0x2] sm:$0xff]
    %v2333 = vld [vmem:[%s1561 + $0xa] sm:$0xff]
    %v2334 = vld [vmem:[%s1561 + $0x1a] sm:$0xff]
    %v2335 = vld [vmem:[%s1561 + $0x22] sm:$0xff]
    %v2336 = vld [vmem:[%s1561 + $0x32] sm:$0xff]
    %v2337 = vld [vmem:[%s1561 + $0x3a] sm:$0xff]
    %v2338 = vld [vmem:[%s1561 + $0x4a] sm:$0xff]
    %v2339 = vld [vmem:[%s1561 + $0x52] sm:$0xff]
    %v2340 = vld [vmem:[%s1561 + $0x62] sm:$0xff]
    %v2341 = vld [vmem:[%s1561 + $0x6a] sm:$0xff]
    %v2342 = vld [vmem:[%s1561 + $0x7a] sm:$0xff]
    %v2343 = vld [vmem:[%s1561 + $0x82] sm:$0xff]
    %v2344 = vld [vmem:[%s1561 + $0x92] sm:$0xff]
    %v2345 = vld [vmem:[%s1561 + $0x9a] sm:$0xff]
    %v2346 = vld [vmem:[%s1561 + $0xaa] sm:$0xff]
    %v2347 = vld [vmem:[%s1561 + $0xb2] sm:$0xff]
    %v2348 = vld [vmem:[%s1561 + $0xc2] sm:$0xff]
    %v2349 = vld [vmem:[%s1561 + $0xca] sm:$0xff]
    %v2350 = vld [vmem:[%s1561 + $0xda] sm:$0xff]
    %v2351 = vld [vmem:[%s1561 + $0xe2] sm:$0xff]
    %v2352 = vld [vmem:[%s1561 + $0xf2] sm:$0xff]
    %v2353 = vld [vmem:[%s1561 + $0xfa] sm:$0xff]
    %v2354 = vld [vmem:[%s1561 + $0x10a] sm:$0xff]
    %v2355 = vld [vmem:[%s1561 + $0x112] sm:$0xff]
    %v2356 = vld [vmem:[%s1561 + $0x122] sm:$0xff]
    %v2357 = vld [vmem:[%s1561 + $0x12a] sm:$0xff]
    %v2358 = vld [vmem:[%s1561 + $0x13a] sm:$0xff]
    %v2359 = vld [vmem:[%s1561 + $0x142] sm:$0xff]
    %v2360 = vld [vmem:[%s1561 + $0x152] sm:$0xff]
    %v2361 = vld [vmem:[%s1561 + $0x15a] sm:$0xff]
    %v2362 = vld [vmem:[%s1561 + $0x16a] sm:$0xff]
    %v2363 = vld [vmem:[%s1561 + $0x172] sm:$0xff]
    %v2364 = vld [vmem:[%s1561 + $0x1ca] sm:$0xff]
    %v2365 = vld [vmem:[%s1561 + $0x1d2] sm:$0xff]
    %v2366 = vld [vmem:[%s1561 + $0x1e2] sm:$0xff]
    %v2367 = vld [vmem:[%s1561 + $0x1ea] sm:$0xff]
    %v2368 = vld [vmem:[%s1561 + $0x1fa] sm:$0xff]
    %v2369 = vld [vmem:[%s1561 + $0x202] sm:$0xff]
    %v2370 = vld [vmem:[%s1561 + $0x212] sm:$0xff]
    %v2371 = vld [vmem:[%s1561 + $0x21a] sm:$0xff]
    %v2372 = vld [vmem:[%s1561 + $0x22a] sm:$0xff]
    %v2373 = vld [vmem:[%s1561 + $0x232] sm:$0xff]
    %v2374 = vld [vmem:[%s1561 + $0x242] sm:$0xff]
    %v2375 = vld [vmem:[%s1561 + $0x24a] sm:$0xff]
    %v2376 = vld [vmem:[%s1561 + $0x25a] sm:$0xff]
    %v2377 = vld [vmem:[%s1561 + $0x262] sm:$0xff]
    %v2378 = vld [vmem:[%s1561 + $0x272] sm:$0xff]
    %v2379 = vld [vmem:[%s1561 + $0x27a] sm:$0xff]
    %v2380 = vld [vmem:[%s1561 + $0x28a] sm:$0xff]
    %v2381 = vld [vmem:[%s1561 + $0x292] sm:$0xff]
    %v2382 = vld [vmem:[%s1561 + $0x2a2] sm:$0xff]
    %v2383 = vld [vmem:[%s1561 + $0x2aa] sm:$0xff]
    %v2384 = vld [vmem:[%s1561 + $0x2ba] sm:$0xff]
    %v2385 = vld [vmem:[%s1561 + $0x2c2] sm:$0xff]
    %v2386 = vld [vmem:[%s1561 + $0x2d2] sm:$0xff]
    %v2387 = vld [vmem:[%s1561 + $0x2da] sm:$0xff]
    %v2388 = vld [vmem:[%s1561 + $0x2ea] sm:$0xff]
    %v2389 = vld [vmem:[%s1561 + $0x2f2] sm:$0xff]
    %v2390 = vld [vmem:[%s1561 + $0x302] sm:$0xff]
    %v2391 = vld [vmem:[%s1561 + $0x30a] sm:$0xff]
    %v2392 = vld [vmem:[%s1561 + $0x31a] sm:$0xff]
    %v2393 = vld [vmem:[%s1561 + $0x322] sm:$0xff]
    %v2394 = vld [vmem:[%s1561 + $0x332] sm:$0xff]
    %v2395 = vld [vmem:[%s1561 + $0x33a] sm:$0xff]
    %2460 = vrot.lane.b32.xlu0 %v2332, 24
    %v2461 = vpop.permute.xlu0 %2460
    %2462 = vrot.lane.b32.xlu0 %v2333, 24
    %v2463 = vpop.permute.xlu0 %2462
    %2464 = vrot.lane.b32.xlu0 %v2334, 24
    %v2465 = vpop.permute.xlu0 %2464
    %2466 = vrot.lane.b32.xlu0 %v2335, 24
    %v2467 = vpop.permute.xlu0 %2466
    %2468 = vrot.lane.b32.xlu0 %v2336, 24
    %v2469 = vpop.permute.xlu0 %2468
    %2470 = vrot.lane.b32.xlu0 %v2337, 24
    %v2471 = vpop.permute.xlu0 %2470
    %2472 = vrot.lane.b32.xlu0 %v2338, 24
    %v2473 = vpop.permute.xlu0 %2472
    %2474 = vrot.lane.b32.xlu0 %v2339, 24
    %v2475 = vpop.permute.xlu0 %2474
    %2476 = vrot.lane.b32.xlu0 %v2340, 24
    %v2477 = vpop.permute.xlu0 %2476
    %2478 = vrot.lane.b32.xlu0 %v2341, 24
    %v2479 = vpop.permute.xlu0 %2478
    %2480 = vrot.lane.b32.xlu0 %v2342, 24
    %v2481 = vpop.permute.xlu0 %2480
    %2482 = vrot.lane.b32.xlu0 %v2343, 24
    %v2483 = vpop.permute.xlu0 %2482
    %2484 = vrot.lane.b32.xlu0 %v2344, 24
    %v2485 = vpop.permute.xlu0 %2484
    %2486 = vrot.lane.b32.xlu0 %v2345, 24
    %v2487 = vpop.permute.xlu0 %2486
    %2488 = vrot.lane.b32.xlu0 %v2346, 24
    %v2489 = vpop.permute.xlu0 %2488
    %2490 = vrot.lane.b32.xlu0 %v2347, 24
    %v2491 = vpop.permute.xlu0 %2490
    %2492 = vrot.lane.b32.xlu0 %v2348, 24
    %v2493 = vpop.permute.xlu0 %2492
    %2494 = vrot.lane.b32.xlu0 %v2349, 24
    %v2495 = vpop.permute.xlu0 %2494
    %2496 = vrot.lane.b32.xlu0 %v2350, 24
    %v2497 = vpop.permute.xlu0 %2496
    %2498 = vrot.lane.b32.xlu0 %v2351, 24
    %v2499 = vpop.permute.xlu0 %2498
    %2500 = vrot.lane.b32.xlu0 %v2352, 24
    %v2501 = vpop.permute.xlu0 %2500
    %2502 = vrot.lane.b32.xlu0 %v2353, 24
    %v2503 = vpop.permute.xlu0 %2502
    %2504 = vrot.lane.b32.xlu0 %v2354, 24
    %v2505 = vpop.permute.xlu0 %2504
    %2506 = vrot.lane.b32.xlu0 %v2355, 24
    %v2507 = vpop.permute.xlu0 %2506
    %2508 = vrot.lane.b32.xlu0 %v2356, 24
    %v2509 = vpop.permute.xlu0 %2508
    %2510 = vrot.lane.b32.xlu0 %v2357, 24
    %v2511 = vpop.permute.xlu0 %2510
    %2512 = vrot.lane.b32.xlu0 %v2358, 24
    %v2513 = vpop.permute.xlu0 %2512
    %2514 = vrot.lane.b32.xlu0 %v2359, 24
    %v2515 = vpop.permute.xlu0 %2514
    %2516 = vrot.lane.b32.xlu0 %v2360, 24
    %v2517 = vpop.permute.xlu0 %2516
    %2518 = vrot.lane.b32.xlu0 %v2361, 24
    %v2519 = vpop.permute.xlu0 %2518
    %2520 = vrot.lane.b32.xlu0 %v2362, 24
    %v2521 = vpop.permute.xlu0 %2520
    %2522 = vrot.lane.b32.xlu0 %v2363, 24
    %v2523 = vpop.permute.xlu0 %2522
    %2524 = vrot.lane.b32.xlu0 %v2364, 24
    %v2525 = vpop.permute.xlu0 %2524
    %2526 = vrot.lane.b32.xlu0 %v2365, 24
    %v2527 = vpop.permute.xlu0 %2526
    %2528 = vrot.lane.b32.xlu0 %v2366, 24
    %v2529 = vpop.permute.xlu0 %2528
    %2530 = vrot.lane.b32.xlu0 %v2367, 24
    %v2531 = vpop.permute.xlu0 %2530
    %2532 = vrot.lane.b32.xlu0 %v2368, 24
    %v2533 = vpop.permute.xlu0 %2532
    %2534 = vrot.lane.b32.xlu0 %v2369, 24
    %v2535 = vpop.permute.xlu0 %2534
    %2536 = vrot.lane.b32.xlu0 %v2370, 24
    %v2537 = vpop.permute.xlu0 %2536
    %2538 = vrot.lane.b32.xlu0 %v2371, 24
    %v2539 = vpop.permute.xlu0 %2538
    %2540 = vrot.lane.b32.xlu0 %v2372, 24
    %v2541 = vpop.permute.xlu0 %2540
    %2542 = vrot.lane.b32.xlu0 %v2373, 24
    %v2543 = vpop.permute.xlu0 %2542
    %2544 = vrot.lane.b32.xlu0 %v2374, 24
    %v2545 = vpop.permute.xlu0 %2544
    %2546 = vrot.lane.b32.xlu0 %v2375, 24
    %v2547 = vpop.permute.xlu0 %2546
    %2548 = vrot.lane.b32.xlu0 %v2376, 24
    %v2549 = vpop.permute.xlu0 %2548
    %2550 = vrot.lane.b32.xlu0 %v2377, 24
    %v2551 = vpop.permute.xlu0 %2550
    %2552 = vrot.lane.b32.xlu0 %v2378, 24
    %v2553 = vpop.permute.xlu0 %2552
    %2554 = vrot.lane.b32.xlu0 %v2379, 24
    %v2555 = vpop.permute.xlu0 %2554
    %2556 = vrot.lane.b32.xlu0 %v2380, 24
    %v2557 = vpop.permute.xlu0 %2556
    %2558 = vrot.lane.b32.xlu0 %v2381, 24
    %v2559 = vpop.permute.xlu0 %2558
    %2560 = vrot.lane.b32.xlu0 %v2382, 24
    %v2561 = vpop.permute.xlu0 %2560
    %2562 = vrot.lane.b32.xlu0 %v2383, 24
    %v2563 = vpop.permute.xlu0 %2562
    %2564 = vrot.lane.b32.xlu0 %v2384, 24
    %v2565 = vpop.permute.xlu0 %2564
    %2566 = vrot.lane.b32.xlu0 %v2385, 24
    %v2567 = vpop.permute.xlu0 %2566
    %2568 = vrot.lane.b32.xlu0 %v2386, 24
    %v2569 = vpop.permute.xlu0 %2568
    %2570 = vrot.lane.b32.xlu0 %v2387, 24
    %v2571 = vpop.permute.xlu0 %2570
    %2572 = vrot.lane.b32.xlu0 %v2388, 24
    %v2573 = vpop.permute.xlu0 %2572
    %2574 = vrot.lane.b32.xlu0 %v2389, 24
    %v2575 = vpop.permute.xlu0 %2574
    %2576 = vrot.lane.b32.xlu0 %v2390, 24
    %v2577 = vpop.permute.xlu0 %2576
    %2578 = vrot.lane.b32.xlu0 %v2391, 24
    %v2579 = vpop.permute.xlu0 %2578
    %2580 = vrot.lane.b32.xlu0 %v2392, 24
    %v2581 = vpop.permute.xlu0 %2580
    %2582 = vrot.lane.b32.xlu0 %v2393, 24
    %v2583 = vpop.permute.xlu0 %2582
    %2584 = vrot.lane.b32.xlu0 %v2394, 24
    %v2585 = vpop.permute.xlu0 %2584
    %2586 = vrot.lane.b32.xlu0 %v2395, 24
    %v2587 = vpop.permute.xlu0 %2586
    %vm2652 = vcmask 228544
    %2653 = vst.msk [vmem:[#allocation3] sm:$0xff] %vm2652, %v2461
    %2654 = vst.msk [vmem:[#allocation3 + $0x8] sm:$0xff] %vm2652, %v2463
    %2655 = vst.msk [vmem:[#allocation3 + $0x10] sm:$0xff] %vm2652, %v2465
    %2656 = vst.msk [vmem:[#allocation3 + $0x18] sm:$0xff] %vm2652, %v2467
    %2657 = vst.msk [vmem:[#allocation3 + $0x20] sm:$0xff] %vm2652, %v2469
    %2658 = vst.msk [vmem:[#allocation3 + $0x28] sm:$0xff] %vm2652, %v2471
    %2659 = vst.msk [vmem:[#allocation3 + $0x30] sm:$0xff] %vm2652, %v2473
    %2660 = vst.msk [vmem:[#allocation3 + $0x38] sm:$0xff] %vm2652, %v2475
    %2661 = vst.msk [vmem:[#allocation3 + $0x40] sm:$0xff] %vm2652, %v2477
    %2662 = vst.msk [vmem:[#allocation3 + $0x48] sm:$0xff] %vm2652, %v2479
    %2663 = vst.msk [vmem:[#allocation3 + $0x50] sm:$0xff] %vm2652, %v2481
    %2664 = vst.msk [vmem:[#allocation3 + $0x58] sm:$0xff] %vm2652, %v2483
    %2665 = vst.msk [vmem:[#allocation3 + $0x60] sm:$0xff] %vm2652, %v2485
    %2666 = vst.msk [vmem:[#allocation3 + $0x68] sm:$0xff] %vm2652, %v2487
    %2667 = vst.msk [vmem:[#allocation3 + $0x70] sm:$0xff] %vm2652, %v2489
    %2668 = vst.msk [vmem:[#allocation3 + $0x78] sm:$0xff] %vm2652, %v2491
    %2669 = vst.msk [vmem:[#allocation3 + $0x80] sm:$0xff] %vm2652, %v2493
    %2670 = vst.msk [vmem:[#allocation3 + $0x88] sm:$0xff] %vm2652, %v2495
    %2671 = vst.msk [vmem:[#allocation3 + $0x90] sm:$0xff] %vm2652, %v2497
    %2672 = vst.msk [vmem:[#allocation3 + $0x98] sm:$0xff] %vm2652, %v2499
    %2673 = vst.msk [vmem:[#allocation3 + $0xa0] sm:$0xff] %vm2652, %v2501
    %2674 = vst.msk [vmem:[#allocation3 + $0xa8] sm:$0xff] %vm2652, %v2503
    %2675 = vst.msk [vmem:[#allocation3 + $0xb0] sm:$0xff] %vm2652, %v2505
    %2676 = vst.msk [vmem:[#allocation3 + $0xb8] sm:$0xff] %vm2652, %v2507
    %2677 = vst.msk [vmem:[#allocation3 + $0xc0] sm:$0xff] %vm2652, %v2509
    %2678 = vst.msk [vmem:[#allocation3 + $0xc8] sm:$0xff] %vm2652, %v2511
    %2679 = vst.msk [vmem:[#allocation3 + $0xd0] sm:$0xff] %vm2652, %v2513
    %2680 = vst.msk [vmem:[#allocation3 + $0xd8] sm:$0xff] %vm2652, %v2515
    %2681 = vst.msk [vmem:[#allocation3 + $0xe0] sm:$0xff] %vm2652, %v2517
    %2682 = vst.msk [vmem:[#allocation3 + $0xe8] sm:$0xff] %vm2652, %v2519
    %2683 = vst.msk [vmem:[#allocation3 + $0xf0] sm:$0xff] %vm2652, %v2521
    %2684 = vst.msk [vmem:[#allocation3 + $0xf8] sm:$0xff] %vm2652, %v2523
    %2685 = vst.msk [vmem:[#allocation3 + $0x100] sm:$0xff] %vm2652, %v2525
    %2686 = vst.msk [vmem:[#allocation3 + $0x108] sm:$0xff] %vm2652, %v2527
    %2687 = vst.msk [vmem:[#allocation3 + $0x110] sm:$0xff] %vm2652, %v2529
    %2688 = vst.msk [vmem:[#allocation3 + $0x118] sm:$0xff] %vm2652, %v2531
    %2689 = vst.msk [vmem:[#allocation3 + $0x120] sm:$0xff] %vm2652, %v2533
    %2690 = vst.msk [vmem:[#allocation3 + $0x128] sm:$0xff] %vm2652, %v2535
    %2691 = vst.msk [vmem:[#allocation3 + $0x130] sm:$0xff] %vm2652, %v2537
    %2692 = vst.msk [vmem:[#allocation3 + $0x138] sm:$0xff] %vm2652, %v2539
    %2693 = vst.msk [vmem:[#allocation3 + $0x140] sm:$0xff] %vm2652, %v2541
    %2694 = vst.msk [vmem:[#allocation3 + $0x148] sm:$0xff] %vm2652, %v2543
    %2695 = vst.msk [vmem:[#allocation3 + $0x150] sm:$0xff] %vm2652, %v2545
    %2696 = vst.msk [vmem:[#allocation3 + $0x158] sm:$0xff] %vm2652, %v2547
    %2697 = vst.msk [vmem:[#allocation3 + $0x160] sm:$0xff] %vm2652, %v2549
    %2698 = vst.msk [vmem:[#allocation3 + $0x168] sm:$0xff] %vm2652, %v2551
    %2699 = vst.msk [vmem:[#allocation3 + $0x170] sm:$0xff] %vm2652, %v2553
    %2700 = vst.msk [vmem:[#allocation3 + $0x178] sm:$0xff] %vm2652, %v2555
    %2701 = vst.msk [vmem:[#allocation3 + $0x180] sm:$0xff] %vm2652, %v2557
    %2702 = vst.msk [vmem:[#allocation3 + $0x188] sm:$0xff] %vm2652, %v2559
    %2703 = vst.msk [vmem:[#allocation3 + $0x190] sm:$0xff] %vm2652, %v2561
    %2704 = vst.msk [vmem:[#allocation3 + $0x198] sm:$0xff] %vm2652, %v2563
    %2705 = vst.msk [vmem:[#allocation3 + $0x1a0] sm:$0xff] %vm2652, %v2565
    %2706 = vst.msk [vmem:[#allocation3 + $0x1a8] sm:$0xff] %vm2652, %v2567
    %2707 = vst.msk [vmem:[#allocation3 + $0x1b0] sm:$0xff] %vm2652, %v2569
    %2708 = vst.msk [vmem:[#allocation3 + $0x1b8] sm:$0xff] %vm2652, %v2571
    %2709 = vst.msk [vmem:[#allocation3 + $0x1c0] sm:$0xff] %vm2652, %v2573
    %2710 = vst.msk [vmem:[#allocation3 + $0x1c8] sm:$0xff] %vm2652, %v2575
    %2711 = vst.msk [vmem:[#allocation3 + $0x1d0] sm:$0xff] %vm2652, %v2577
    %2712 = vst.msk [vmem:[#allocation3 + $0x1d8] sm:$0xff] %vm2652, %v2579
    %2713 = vst.msk [vmem:[#allocation3 + $0x1e0] sm:$0xff] %vm2652, %v2581
    %2714 = vst.msk [vmem:[#allocation3 + $0x1e8] sm:$0xff] %vm2652, %v2583
    %2715 = vst.msk [vmem:[#allocation3 + $0x1f0] sm:$0xff] %vm2652, %v2585
    %2716 = vst.msk [vmem:[#allocation3 + $0x1f8] sm:$0xff] %vm2652, %v2587
    %v2717 = vld [vmem:[%s1561 + $0x3] sm:$0xff]
    %v2718 = vld [vmem:[%s1561 + $0xb] sm:$0xff]
    %v2719 = vld [vmem:[%s1561 + $0x1b] sm:$0xff]
    %v2720 = vld [vmem:[%s1561 + $0x23] sm:$0xff]
    %v2721 = vld [vmem:[%s1561 + $0x33] sm:$0xff]
    %v2722 = vld [vmem:[%s1561 + $0x3b] sm:$0xff]
    %v2723 = vld [vmem:[%s1561 + $0x4b] sm:$0xff]
    %v2724 = vld [vmem:[%s1561 + $0x53] sm:$0xff]
    %v2725 = vld [vmem:[%s1561 + $0x63] sm:$0xff]
    %v2726 = vld [vmem:[%s1561 + $0x6b] sm:$0xff]
    %v2727 = vld [vmem:[%s1561 + $0x7b] sm:$0xff]
    %v2728 = vld [vmem:[%s1561 + $0x83] sm:$0xff]
    %v2729 = vld [vmem:[%s1561 + $0x93] sm:$0xff]
    %v2730 = vld [vmem:[%s1561 + $0x9b] sm:$0xff]
    %v2731 = vld [vmem:[%s1561 + $0xab] sm:$0xff]
    %v2732 = vld [vmem:[%s1561 + $0xb3] sm:$0xff]
    %v2733 = vld [vmem:[%s1561 + $0xc3] sm:$0xff]
    %v2734 = vld [vmem:[%s1561 + $0xcb] sm:$0xff]
    %v2735 = vld [vmem:[%s1561 + $0xdb] sm:$0xff]
    %v2736 = vld [vmem:[%s1561 + $0xe3] sm:$0xff]
    %v2737 = vld [vmem:[%s1561 + $0xf3] sm:$0xff]
    %v2738 = vld [vmem:[%s1561 + $0xfb] sm:$0xff]
    %v2739 = vld [vmem:[%s1561 + $0x10b] sm:$0xff]
    %v2740 = vld [vmem:[%s1561 + $0x113] sm:$0xff]
    %v2741 = vld [vmem:[%s1561 + $0x123] sm:$0xff]
    %v2742 = vld [vmem:[%s1561 + $0x12b] sm:$0xff]
    %v2743 = vld [vmem:[%s1561 + $0x13b] sm:$0xff]
    %v2744 = vld [vmem:[%s1561 + $0x143] sm:$0xff]
    %v2745 = vld [vmem:[%s1561 + $0x153] sm:$0xff]
    %v2746 = vld [vmem:[%s1561 + $0x15b] sm:$0xff]
    %v2747 = vld [vmem:[%s1561 + $0x16b] sm:$0xff]
    %v2748 = vld [vmem:[%s1561 + $0x173] sm:$0xff]
    %v2749 = vld [vmem:[%s1561 + $0x1cb] sm:$0xff]
    %v2750 = vld [vmem:[%s1561 + $0x1d3] sm:$0xff]
    %v2751 = vld [vmem:[%s1561 + $0x1e3] sm:$0xff]
    %v2752 = vld [vmem:[%s1561 + $0x1eb] sm:$0xff]
    %v2753 = vld [vmem:[%s1561 + $0x1fb] sm:$0xff]
    %v2754 = vld [vmem:[%s1561 + $0x203] sm:$0xff]
    %v2755 = vld [vmem:[%s1561 + $0x213] sm:$0xff]
    %v2756 = vld [vmem:[%s1561 + $0x21b] sm:$0xff]
    %v2757 = vld [vmem:[%s1561 + $0x22b] sm:$0xff]
    %v2758 = vld [vmem:[%s1561 + $0x233] sm:$0xff]
    %v2759 = vld [vmem:[%s1561 + $0x243] sm:$0xff]
    %v2760 = vld [vmem:[%s1561 + $0x24b] sm:$0xff]
    %v2761 = vld [vmem:[%s1561 + $0x25b] sm:$0xff]
    %v2762 = vld [vmem:[%s1561 + $0x263] sm:$0xff]
    %v2763 = vld [vmem:[%s1561 + $0x273] sm:$0xff]
    %v2764 = vld [vmem:[%s1561 + $0x27b] sm:$0xff]
    %v2765 = vld [vmem:[%s1561 + $0x28b] sm:$0xff]
    %v2766 = vld [vmem:[%s1561 + $0x293] sm:$0xff]
    %v2767 = vld [vmem:[%s1561 + $0x2a3] sm:$0xff]
    %v2768 = vld [vmem:[%s1561 + $0x2ab] sm:$0xff]
    %v2769 = vld [vmem:[%s1561 + $0x2bb] sm:$0xff]
    %v2770 = vld [vmem:[%s1561 + $0x2c3] sm:$0xff]
    %v2771 = vld [vmem:[%s1561 + $0x2d3] sm:$0xff]
    %v2772 = vld [vmem:[%s1561 + $0x2db] sm:$0xff]
    %v2773 = vld [vmem:[%s1561 + $0x2eb] sm:$0xff]
    %v2774 = vld [vmem:[%s1561 + $0x2f3] sm:$0xff]
    %v2775 = vld [vmem:[%s1561 + $0x303] sm:$0xff]
    %v2776 = vld [vmem:[%s1561 + $0x30b] sm:$0xff]
    %v2777 = vld [vmem:[%s1561 + $0x31b] sm:$0xff]
    %v2778 = vld [vmem:[%s1561 + $0x323] sm:$0xff]
    %v2779 = vld [vmem:[%s1561 + $0x333] sm:$0xff]
    %v2780 = vld [vmem:[%s1561 + $0x33b] sm:$0xff]
    %2845 = vrot.lane.b32.xlu0 %v2717, 28
    %v2846 = vpop.permute.xlu0 %2845
    %2847 = vrot.lane.b32.xlu0 %v2718, 28
    %v2848 = vpop.permute.xlu0 %2847
    %2849 = vrot.lane.b32.xlu0 %v2719, 28
    %v2850 = vpop.permute.xlu0 %2849
    %2851 = vrot.lane.b32.xlu0 %v2720, 28
    %v2852 = vpop.permute.xlu0 %2851
    %2853 = vrot.lane.b32.xlu0 %v2721, 28
    %v2854 = vpop.permute.xlu0 %2853
    %2855 = vrot.lane.b32.xlu0 %v2722, 28
    %v2856 = vpop.permute.xlu0 %2855
    %2857 = vrot.lane.b32.xlu0 %v2723, 28
    %v2858 = vpop.permute.xlu0 %2857
    %2859 = vrot.lane.b32.xlu0 %v2724, 28
    %v2860 = vpop.permute.xlu0 %2859
    %2861 = vrot.lane.b32.xlu0 %v2725, 28
    %v2862 = vpop.permute.xlu0 %2861
    %2863 = vrot.lane.b32.xlu0 %v2726, 28
    %v2864 = vpop.permute.xlu0 %2863
    %2865 = vrot.lane.b32.xlu0 %v2727, 28
    %v2866 = vpop.permute.xlu0 %2865
    %2867 = vrot.lane.b32.xlu0 %v2728, 28
    %v2868 = vpop.permute.xlu0 %2867
    %2869 = vrot.lane.b32.xlu0 %v2729, 28
    %v2870 = vpop.permute.xlu0 %2869
    %2871 = vrot.lane.b32.xlu0 %v2730, 28
    %v2872 = vpop.permute.xlu0 %2871
    %2873 = vrot.lane.b32.xlu0 %v2731, 28
    %v2874 = vpop.permute.xlu0 %2873
    %2875 = vrot.lane.b32.xlu0 %v2732, 28
    %v2876 = vpop.permute.xlu0 %2875
    %2877 = vrot.lane.b32.xlu0 %v2733, 28
    %v2878 = vpop.permute.xlu0 %2877
    %2879 = vrot.lane.b32.xlu0 %v2734, 28
    %v2880 = vpop.permute.xlu0 %2879
    %2881 = vrot.lane.b32.xlu0 %v2735, 28
    %v2882 = vpop.permute.xlu0 %2881
    %2883 = vrot.lane.b32.xlu0 %v2736, 28
    %v2884 = vpop.permute.xlu0 %2883
    %2885 = vrot.lane.b32.xlu0 %v2737, 28
    %v2886 = vpop.permute.xlu0 %2885
    %2887 = vrot.lane.b32.xlu0 %v2738, 28
    %v2888 = vpop.permute.xlu0 %2887
    %2889 = vrot.lane.b32.xlu0 %v2739, 28
    %v2890 = vpop.permute.xlu0 %2889
    %2891 = vrot.lane.b32.xlu0 %v2740, 28
    %v2892 = vpop.permute.xlu0 %2891
    %2893 = vrot.lane.b32.xlu0 %v2741, 28
    %v2894 = vpop.permute.xlu0 %2893
    %2895 = vrot.lane.b32.xlu0 %v2742, 28
    %v2896 = vpop.permute.xlu0 %2895
    %2897 = vrot.lane.b32.xlu0 %v2743, 28
    %v2898 = vpop.permute.xlu0 %2897
    %2899 = vrot.lane.b32.xlu0 %v2744, 28
    %v2900 = vpop.permute.xlu0 %2899
    %2901 = vrot.lane.b32.xlu0 %v2745, 28
    %v2902 = vpop.permute.xlu0 %2901
    %2903 = vrot.lane.b32.xlu0 %v2746, 28
    %v2904 = vpop.permute.xlu0 %2903
    %2905 = vrot.lane.b32.xlu0 %v2747, 28
    %v2906 = vpop.permute.xlu0 %2905
    %2907 = vrot.lane.b32.xlu0 %v2748, 28
    %v2908 = vpop.permute.xlu0 %2907
    %2909 = vrot.lane.b32.xlu0 %v2749, 28
    %v2910 = vpop.permute.xlu0 %2909
    %2911 = vrot.lane.b32.xlu0 %v2750, 28
    %v2912 = vpop.permute.xlu0 %2911
    %2913 = vrot.lane.b32.xlu0 %v2751, 28
    %v2914 = vpop.permute.xlu0 %2913
    %2915 = vrot.lane.b32.xlu0 %v2752, 28
    %v2916 = vpop.permute.xlu0 %2915
    %2917 = vrot.lane.b32.xlu0 %v2753, 28
    %v2918 = vpop.permute.xlu0 %2917
    %2919 = vrot.lane.b32.xlu0 %v2754, 28
    %v2920 = vpop.permute.xlu0 %2919
    %2921 = vrot.lane.b32.xlu0 %v2755, 28
    %v2922 = vpop.permute.xlu0 %2921
    %2923 = vrot.lane.b32.xlu0 %v2756, 28
    %v2924 = vpop.permute.xlu0 %2923
    %2925 = vrot.lane.b32.xlu0 %v2757, 28
    %v2926 = vpop.permute.xlu0 %2925
    %2927 = vrot.lane.b32.xlu0 %v2758, 28
    %v2928 = vpop.permute.xlu0 %2927
    %2929 = vrot.lane.b32.xlu0 %v2759, 28
    %v2930 = vpop.permute.xlu0 %2929
    %2931 = vrot.lane.b32.xlu0 %v2760, 28
    %v2932 = vpop.permute.xlu0 %2931
    %2933 = vrot.lane.b32.xlu0 %v2761, 28
    %v2934 = vpop.permute.xlu0 %2933
    %2935 = vrot.lane.b32.xlu0 %v2762, 28
    %v2936 = vpop.permute.xlu0 %2935
    %2937 = vrot.lane.b32.xlu0 %v2763, 28
    %v2938 = vpop.permute.xlu0 %2937
    %2939 = vrot.lane.b32.xlu0 %v2764, 28
    %v2940 = vpop.permute.xlu0 %2939
    %2941 = vrot.lane.b32.xlu0 %v2765, 28
    %v2942 = vpop.permute.xlu0 %2941
    %2943 = vrot.lane.b32.xlu0 %v2766, 28
    %v2944 = vpop.permute.xlu0 %2943
    %2945 = vrot.lane.b32.xlu0 %v2767, 28
    %v2946 = vpop.permute.xlu0 %2945
    %2947 = vrot.lane.b32.xlu0 %v2768, 28
    %v2948 = vpop.permute.xlu0 %2947
    %2949 = vrot.lane.b32.xlu0 %v2769, 28
    %v2950 = vpop.permute.xlu0 %2949
    %2951 = vrot.lane.b32.xlu0 %v2770, 28
    %v2952 = vpop.permute.xlu0 %2951
    %2953 = vrot.lane.b32.xlu0 %v2771, 28
    %v2954 = vpop.permute.xlu0 %2953
    %2955 = vrot.lane.b32.xlu0 %v2772, 28
    %v2956 = vpop.permute.xlu0 %2955
    %2957 = vrot.lane.b32.xlu0 %v2773, 28
    %v2958 = vpop.permute.xlu0 %2957
    %2959 = vrot.lane.b32.xlu0 %v2774, 28
    %v2960 = vpop.permute.xlu0 %2959
    %2961 = vrot.lane.b32.xlu0 %v2775, 28
    %v2962 = vpop.permute.xlu0 %2961
    %2963 = vrot.lane.b32.xlu0 %v2776, 28
    %v2964 = vpop.permute.xlu0 %2963
    %2965 = vrot.lane.b32.xlu0 %v2777, 28
    %v2966 = vpop.permute.xlu0 %2965
    %2967 = vrot.lane.b32.xlu0 %v2778, 28
    %v2968 = vpop.permute.xlu0 %2967
    %2969 = vrot.lane.b32.xlu0 %v2779, 28
    %v2970 = vpop.permute.xlu0 %2969
    %2971 = vrot.lane.b32.xlu0 %v2780, 28
    %v2972 = vpop.permute.xlu0 %2971
    %vm3037 = vcmask 261344
    %3038 = vst.msk [vmem:[#allocation3] sm:$0xff] %vm3037, %v2846
    %3039 = vst.msk [vmem:[#allocation3 + $0x8] sm:$0xff] %vm3037, %v2848
    %3040 = vst.msk [vmem:[#allocation3 + $0x10] sm:$0xff] %vm3037, %v2850
    %3041 = vst.msk [vmem:[#allocation3 + $0x18] sm:$0xff] %vm3037, %v2852
    %3042 = vst.msk [vmem:[#allocation3 + $0x20] sm:$0xff] %vm3037, %v2854
    %3043 = vst.msk [vmem:[#allocation3 + $0x28] sm:$0xff] %vm3037, %v2856
    %3044 = vst.msk [vmem:[#allocation3 + $0x30] sm:$0xff] %vm3037, %v2858
    %3045 = vst.msk [vmem:[#allocation3 + $0x38] sm:$0xff] %vm3037, %v2860
    %3046 = vst.msk [vmem:[#allocation3 + $0x40] sm:$0xff] %vm3037, %v2862
    %3047 = vst.msk [vmem:[#allocation3 + $0x48] sm:$0xff] %vm3037, %v2864
    %3048 = vst.msk [vmem:[#allocation3 + $0x50] sm:$0xff] %vm3037, %v2866
    %3049 = vst.msk [vmem:[#allocation3 + $0x58] sm:$0xff] %vm3037, %v2868
    %3050 = vst.msk [vmem:[#allocation3 + $0x60] sm:$0xff] %vm3037, %v2870
    %3051 = vst.msk [vmem:[#allocation3 + $0x68] sm:$0xff] %vm3037, %v2872
    %3052 = vst.msk [vmem:[#allocation3 + $0x70] sm:$0xff] %vm3037, %v2874
    %3053 = vst.msk [vmem:[#allocation3 + $0x78] sm:$0xff] %vm3037, %v2876
    %3054 = vst.msk [vmem:[#allocation3 + $0x80] sm:$0xff] %vm3037, %v2878
    %3055 = vst.msk [vmem:[#allocation3 + $0x88] sm:$0xff] %vm3037, %v2880
    %3056 = vst.msk [vmem:[#allocation3 + $0x90] sm:$0xff] %vm3037, %v2882
    %3057 = vst.msk [vmem:[#allocation3 + $0x98] sm:$0xff] %vm3037, %v2884
    %3058 = vst.msk [vmem:[#allocation3 + $0xa0] sm:$0xff] %vm3037, %v2886
    %3059 = vst.msk [vmem:[#allocation3 + $0xa8] sm:$0xff] %vm3037, %v2888
    %3060 = vst.msk [vmem:[#allocation3 + $0xb0] sm:$0xff] %vm3037, %v2890
    %3061 = vst.msk [vmem:[#allocation3 + $0xb8] sm:$0xff] %vm3037, %v2892
    %3062 = vst.msk [vmem:[#allocation3 + $0xc0] sm:$0xff] %vm3037, %v2894
    %3063 = vst.msk [vmem:[#allocation3 + $0xc8] sm:$0xff] %vm3037, %v2896
    %3064 = vst.msk [vmem:[#allocation3 + $0xd0] sm:$0xff] %vm3037, %v2898
    %3065 = vst.msk [vmem:[#allocation3 + $0xd8] sm:$0xff] %vm3037, %v2900
    %3066 = vst.msk [vmem:[#allocation3 + $0xe0] sm:$0xff] %vm3037, %v2902
    %3067 = vst.msk [vmem:[#allocation3 + $0xe8] sm:$0xff] %vm3037, %v2904
    %3068 = vst.msk [vmem:[#allocation3 + $0xf0] sm:$0xff] %vm3037, %v2906
    %3069 = vst.msk [vmem:[#allocation3 + $0xf8] sm:$0xff] %vm3037, %v2908
    %3070 = vst.msk [vmem:[#allocation3 + $0x100] sm:$0xff] %vm3037, %v2910
    %3071 = vst.msk [vmem:[#allocation3 + $0x108] sm:$0xff] %vm3037, %v2912
    %3072 = vst.msk [vmem:[#allocation3 + $0x110] sm:$0xff] %vm3037, %v2914
    %3073 = vst.msk [vmem:[#allocation3 + $0x118] sm:$0xff] %vm3037, %v2916
    %3074 = vst.msk [vmem:[#allocation3 + $0x120] sm:$0xff] %vm3037, %v2918
    %3075 = vst.msk [vmem:[#allocation3 + $0x128] sm:$0xff] %vm3037, %v2920
    %3076 = vst.msk [vmem:[#allocation3 + $0x130] sm:$0xff] %vm3037, %v2922
    %3077 = vst.msk [vmem:[#allocation3 + $0x138] sm:$0xff] %vm3037, %v2924
    %3078 = vst.msk [vmem:[#allocation3 + $0x140] sm:$0xff] %vm3037, %v2926
    %3079 = vst.msk [vmem:[#allocation3 + $0x148] sm:$0xff] %vm3037, %v2928
    %3080 = vst.msk [vmem:[#allocation3 + $0x150] sm:$0xff] %vm3037, %v2930
    %3081 = vst.msk [vmem:[#allocation3 + $0x158] sm:$0xff] %vm3037, %v2932
    %3082 = vst.msk [vmem:[#allocation3 + $0x160] sm:$0xff] %vm3037, %v2934
    %3083 = vst.msk [vmem:[#allocation3 + $0x168] sm:$0xff] %vm3037, %v2936
    %3084 = vst.msk [vmem:[#allocation3 + $0x170] sm:$0xff] %vm3037, %v2938
    %3085 = vst.msk [vmem:[#allocation3 + $0x178] sm:$0xff] %vm3037, %v2940
    %3086 = vst.msk [vmem:[#allocation3 + $0x180] sm:$0xff] %vm3037, %v2942
    %3087 = vst.msk [vmem:[#allocation3 + $0x188] sm:$0xff] %vm3037, %v2944
    %3088 = vst.msk [vmem:[#allocation3 + $0x190] sm:$0xff] %vm3037, %v2946
    %3089 = vst.msk [vmem:[#allocation3 + $0x198] sm:$0xff] %vm3037, %v2948
    %3090 = vst.msk [vmem:[#allocation3 + $0x1a0] sm:$0xff] %vm3037, %v2950
    %3091 = vst.msk [vmem:[#allocation3 + $0x1a8] sm:$0xff] %vm3037, %v2952
    %3092 = vst.msk [vmem:[#allocation3 + $0x1b0] sm:$0xff] %vm3037, %v2954
    %3093 = vst.msk [vmem:[#allocation3 + $0x1b8] sm:$0xff] %vm3037, %v2956
    %3094 = vst.msk [vmem:[#allocation3 + $0x1c0] sm:$0xff] %vm3037, %v2958
    %3095 = vst.msk [vmem:[#allocation3 + $0x1c8] sm:$0xff] %vm3037, %v2960
    %3096 = vst.msk [vmem:[#allocation3 + $0x1d0] sm:$0xff] %vm3037, %v2962
    %3097 = vst.msk [vmem:[#allocation3 + $0x1d8] sm:$0xff] %vm3037, %v2964
    %3098 = vst.msk [vmem:[#allocation3 + $0x1e0] sm:$0xff] %vm3037, %v2966
    %3099 = vst.msk [vmem:[#allocation3 + $0x1e8] sm:$0xff] %vm3037, %v2968
    %3100 = vst.msk [vmem:[#allocation3 + $0x1f0] sm:$0xff] %vm3037, %v2970
    %3101 = vst.msk [vmem:[#allocation3 + $0x1f8] sm:$0xff] %vm3037, %v2972
    %v3102 = vld [vmem:[%s213] sm:$0xff]
    %v3103 = vld [vmem:[%s213 + $0x8] sm:$0xff]
    %v3104 = vld [vmem:[%s213 + $0x18] sm:$0xff]
    %v3105 = vld [vmem:[%s213 + $0x20] sm:$0xff]
    %v3106 = vld [vmem:[%s213 + $0x30] sm:$0xff]
    %v3107 = vld [vmem:[%s213 + $0x38] sm:$0xff]
    %v3108 = vld [vmem:[%s213 + $0x48] sm:$0xff]
    %v3109 = vld [vmem:[%s213 + $0x50] sm:$0xff]
    %v3110 = vld [vmem:[%s213 + $0x60] sm:$0xff]
    %v3111 = vld [vmem:[%s213 + $0x68] sm:$0xff]
    %v3112 = vld [vmem:[%s213 + $0x78] sm:$0xff]
    %v3113 = vld [vmem:[%s213 + $0x80] sm:$0xff]
    %v3114 = vld [vmem:[%s213 + $0x90] sm:$0xff]
    %v3115 = vld [vmem:[%s213 + $0x98] sm:$0xff]
    %v3116 = vld [vmem:[%s213 + $0xa8] sm:$0xff]
    %v3117 = vld [vmem:[%s213 + $0xb0] sm:$0xff]
    %v3118 = vld [vmem:[%s213 + $0xc0] sm:$0xff]
    %v3119 = vld [vmem:[%s213 + $0xc8] sm:$0xff]
    %v3120 = vld [vmem:[%s213 + $0xd8] sm:$0xff]
    %v3121 = vld [vmem:[%s213 + $0xe0] sm:$0xff]
    %v3122 = vld [vmem:[%s213 + $0xf0] sm:$0xff]
    %v3123 = vld [vmem:[%s213 + $0xf8] sm:$0xff]
    %v3124 = vld [vmem:[%s213 + $0x108] sm:$0xff]
    %v3125 = vld [vmem:[%s213 + $0x110] sm:$0xff]
    %v3126 = vld [vmem:[%s213 + $0x120] sm:$0xff]
    %v3127 = vld [vmem:[%s213 + $0x128] sm:$0xff]
    %v3128 = vld [vmem:[%s213 + $0x138] sm:$0xff]
    %v3129 = vld [vmem:[%s213 + $0x140] sm:$0xff]
    %v3130 = vld [vmem:[%s213 + $0x150] sm:$0xff]
    %v3131 = vld [vmem:[%s213 + $0x158] sm:$0xff]
    %v3132 = vld [vmem:[%s213 + $0x168] sm:$0xff]
    %v3133 = vld [vmem:[%s213 + $0x170] sm:$0xff]
    %v3134 = vld [vmem:[%s213 + $0x1c8] sm:$0xff]
    %v3135 = vld [vmem:[%s213 + $0x1d0] sm:$0xff]
    %v3136 = vld [vmem:[%s213 + $0x1e0] sm:$0xff]
    %v3137 = vld [vmem:[%s213 + $0x1e8] sm:$0xff]
    %v3138 = vld [vmem:[%s213 + $0x1f8] sm:$0xff]
    %v3139 = vld [vmem:[%s213 + $0x200] sm:$0xff]
    %v3140 = vld [vmem:[%s213 + $0x210] sm:$0xff]
    %v3141 = vld [vmem:[%s213 + $0x218] sm:$0xff]
    %v3142 = vld [vmem:[%s213 + $0x228] sm:$0xff]
    %v3143 = vld [vmem:[%s213 + $0x230] sm:$0xff]
    %v3144 = vld [vmem:[%s213 + $0x240] sm:$0xff]
    %v3145 = vld [vmem:[%s213 + $0x248] sm:$0xff]
    %v3146 = vld [vmem:[%s213 + $0x258] sm:$0xff]
    %v3147 = vld [vmem:[%s213 + $0x260] sm:$0xff]
    %v3148 = vld [vmem:[%s213 + $0x270] sm:$0xff]
    %v3149 = vld [vmem:[%s213 + $0x278] sm:$0xff]
    %v3150 = vld [vmem:[%s213 + $0x288] sm:$0xff]
    %v3151 = vld [vmem:[%s213 + $0x290] sm:$0xff]
    %v3152 = vld [vmem:[%s213 + $0x2a0] sm:$0xff]
    %v3153 = vld [vmem:[%s213 + $0x2a8] sm:$0xff]
    %v3154 = vld [vmem:[%s213 + $0x2b8] sm:$0xff]
    %v3155 = vld [vmem:[%s213 + $0x2c0] sm:$0xff]
    %v3156 = vld [vmem:[%s213 + $0x2d0] sm:$0xff]
    %v3157 = vld [vmem:[%s213 + $0x2d8] sm:$0xff]
    %v3158 = vld [vmem:[%s213 + $0x2e8] sm:$0xff]
    %v3159 = vld [vmem:[%s213 + $0x2f0] sm:$0xff]
    %v3160 = vld [vmem:[%s213 + $0x300] sm:$0xff]
    %v3161 = vld [vmem:[%s213 + $0x308] sm:$0xff]
    %v3162 = vld [vmem:[%s213 + $0x318] sm:$0xff]
    %v3163 = vld [vmem:[%s213 + $0x320] sm:$0xff]
    %v3164 = vld [vmem:[%s213 + $0x330] sm:$0xff]
    %v3165 = vld [vmem:[%s213 + $0x338] sm:$0xff]
    %3230 = vrot.lane.b32.xlu0 %v3102, 32
    %v3231 = vpop.permute.xlu0 %3230
    %3232 = vrot.lane.b32.xlu0 %v3103, 32
    %v3233 = vpop.permute.xlu0 %3232
    %3234 = vrot.lane.b32.xlu0 %v3104, 32
    %v3235 = vpop.permute.xlu0 %3234
    %3236 = vrot.lane.b32.xlu0 %v3105, 32
    %v3237 = vpop.permute.xlu0 %3236
    %3238 = vrot.lane.b32.xlu0 %v3106, 32
    %v3239 = vpop.permute.xlu0 %3238
    %3240 = vrot.lane.b32.xlu0 %v3107, 32
    %v3241 = vpop.permute.xlu0 %3240
    %3242 = vrot.lane.b32.xlu0 %v3108, 32
    %v3243 = vpop.permute.xlu0 %3242
    %3244 = vrot.lane.b32.xlu0 %v3109, 32
    %v3245 = vpop.permute.xlu0 %3244
    %3246 = vrot.lane.b32.xlu0 %v3110, 32
    %v3247 = vpop.permute.xlu0 %3246
    %3248 = vrot.lane.b32.xlu0 %v3111, 32
    %v3249 = vpop.permute.xlu0 %3248
    %3250 = vrot.lane.b32.xlu0 %v3112, 32
    %v3251 = vpop.permute.xlu0 %3250
    %3252 = vrot.lane.b32.xlu0 %v3113, 32
    %v3253 = vpop.permute.xlu0 %3252
    %3254 = vrot.lane.b32.xlu0 %v3114, 32
    %v3255 = vpop.permute.xlu0 %3254
    %3256 = vrot.lane.b32.xlu0 %v3115, 32
    %v3257 = vpop.permute.xlu0 %3256
    %3258 = vrot.lane.b32.xlu0 %v3116, 32
    %v3259 = vpop.permute.xlu0 %3258
    %3260 = vrot.lane.b32.xlu0 %v3117, 32
    %v3261 = vpop.permute.xlu0 %3260
    %3262 = vrot.lane.b32.xlu0 %v3118, 32
    %v3263 = vpop.permute.xlu0 %3262
    %3264 = vrot.lane.b32.xlu0 %v3119, 32
    %v3265 = vpop.permute.xlu0 %3264
    %3266 = vrot.lane.b32.xlu0 %v3120, 32
    %v3267 = vpop.permute.xlu0 %3266
    %3268 = vrot.lane.b32.xlu0 %v3121, 32
    %v3269 = vpop.permute.xlu0 %3268
    %3270 = vrot.lane.b32.xlu0 %v3122, 32
    %v3271 = vpop.permute.xlu0 %3270
    %3272 = vrot.lane.b32.xlu0 %v3123, 32
    %v3273 = vpop.permute.xlu0 %3272
    %3274 = vrot.lane.b32.xlu0 %v3124, 32
    %v3275 = vpop.permute.xlu0 %3274
    %3276 = vrot.lane.b32.xlu0 %v3125, 32
    %v3277 = vpop.permute.xlu0 %3276
    %3278 = vrot.lane.b32.xlu0 %v3126, 32
    %v3279 = vpop.permute.xlu0 %3278
    %3280 = vrot.lane.b32.xlu0 %v3127, 32
    %v3281 = vpop.permute.xlu0 %3280
    %3282 = vrot.lane.b32.xlu0 %v3128, 32
    %v3283 = vpop.permute.xlu0 %3282
    %3284 = vrot.lane.b32.xlu0 %v3129, 32
    %v3285 = vpop.permute.xlu0 %3284
    %3286 = vrot.lane.b32.xlu0 %v3130, 32
    %v3287 = vpop.permute.xlu0 %3286
    %3288 = vrot.lane.b32.xlu0 %v3131, 32
    %v3289 = vpop.permute.xlu0 %3288
    %3290 = vrot.lane.b32.xlu0 %v3132, 32
    %v3291 = vpop.permute.xlu0 %3290
    %3292 = vrot.lane.b32.xlu0 %v3133, 32
    %v3293 = vpop.permute.xlu0 %3292
    %3294 = vrot.lane.b32.xlu0 %v3134, 32
    %v3295 = vpop.permute.xlu0 %3294
    %3296 = vrot.lane.b32.xlu0 %v3135, 32
    %v3297 = vpop.permute.xlu0 %3296
    %3298 = vrot.lane.b32.xlu0 %v3136, 32
    %v3299 = vpop.permute.xlu0 %3298
    %3300 = vrot.lane.b32.xlu0 %v3137, 32
    %v3301 = vpop.permute.xlu0 %3300
    %3302 = vrot.lane.b32.xlu0 %v3138, 32
    %v3303 = vpop.permute.xlu0 %3302
    %3304 = vrot.lane.b32.xlu0 %v3139, 32
    %v3305 = vpop.permute.xlu0 %3304
    %3306 = vrot.lane.b32.xlu0 %v3140, 32
    %v3307 = vpop.permute.xlu0 %3306
    %3308 = vrot.lane.b32.xlu0 %v3141, 32
    %v3309 = vpop.permute.xlu0 %3308
    %3310 = vrot.lane.b32.xlu0 %v3142, 32
    %v3311 = vpop.permute.xlu0 %3310
    %3312 = vrot.lane.b32.xlu0 %v3143, 32
    %v3313 = vpop.permute.xlu0 %3312
    %3314 = vrot.lane.b32.xlu0 %v3144, 32
    %v3315 = vpop.permute.xlu0 %3314
    %3316 = vrot.lane.b32.xlu0 %v3145, 32
    %v3317 = vpop.permute.xlu0 %3316
    %3318 = vrot.lane.b32.xlu0 %v3146, 32
    %v3319 = vpop.permute.xlu0 %3318
    %3320 = vrot.lane.b32.xlu0 %v3147, 32
    %v3321 = vpop.permute.xlu0 %3320
    %3322 = vrot.lane.b32.xlu0 %v3148, 32
    %v3323 = vpop.permute.xlu0 %3322
    %3324 = vrot.lane.b32.xlu0 %v3149, 32
    %v3325 = vpop.permute.xlu0 %3324
    %3326 = vrot.lane.b32.xlu0 %v3150, 32
    %v3327 = vpop.permute.xlu0 %3326
    %3328 = vrot.lane.b32.xlu0 %v3151, 32
    %v3329 = vpop.permute.xlu0 %3328
    %3330 = vrot.lane.b32.xlu0 %v3152, 32
    %v3331 = vpop.permute.xlu0 %3330
    %3332 = vrot.lane.b32.xlu0 %v3153, 32
    %v3333 = vpop.permute.xlu0 %3332
    %3334 = vrot.lane.b32.xlu0 %v3154, 32
    %v3335 = vpop.permute.xlu0 %3334
    %3336 = vrot.lane.b32.xlu0 %v3155, 32
    %v3337 = vpop.permute.xlu0 %3336
    %3338 = vrot.lane.b32.xlu0 %v3156, 32
    %v3339 = vpop.permute.xlu0 %3338
    %3340 = vrot.lane.b32.xlu0 %v3157, 32
    %v3341 = vpop.permute.xlu0 %3340
    %3342 = vrot.lane.b32.xlu0 %v3158, 32
    %v3343 = vpop.permute.xlu0 %3342
    %3344 = vrot.lane.b32.xlu0 %v3159, 32
    %v3345 = vpop.permute.xlu0 %3344
    %3346 = vrot.lane.b32.xlu0 %v3160, 32
    %v3347 = vpop.permute.xlu0 %3346
    %3348 = vrot.lane.b32.xlu0 %v3161, 32
    %v3349 = vpop.permute.xlu0 %3348
    %3350 = vrot.lane.b32.xlu0 %v3162, 32
    %v3351 = vpop.permute.xlu0 %3350
    %3352 = vrot.lane.b32.xlu0 %v3163, 32
    %v3353 = vpop.permute.xlu0 %3352
    %3354 = vrot.lane.b32.xlu0 %v3164, 32
    %v3355 = vpop.permute.xlu0 %3354
    %3356 = vrot.lane.b32.xlu0 %v3165, 32
    %v3357 = vpop.permute.xlu0 %3356
    %vm3422 = vcmask 294144
    %3423 = vst.msk [vmem:[#allocation3] sm:$0xff] %vm3422, %v3231
    %3424 = vst.msk [vmem:[#allocation3 + $0x8] sm:$0xff] %vm3422, %v3233
    %3425 = vst.msk [vmem:[#allocation3 + $0x10] sm:$0xff] %vm3422, %v3235
    %3426 = vst.msk [vmem:[#allocation3 + $0x18] sm:$0xff] %vm3422, %v3237
    %3427 = vst.msk [vmem:[#allocation3 + $0x20] sm:$0xff] %vm3422, %v3239
    %3428 = vst.msk [vmem:[#allocation3 + $0x28] sm:$0xff] %vm3422, %v3241
    %3429 = vst.msk [vmem:[#allocation3 + $0x30] sm:$0xff] %vm3422, %v3243
    %3430 = vst.msk [vmem:[#allocation3 + $0x38] sm:$0xff] %vm3422, %v3245
    %3431 = vst.msk [vmem:[#allocation3 + $0x40] sm:$0xff] %vm3422, %v3247
    %3432 = vst.msk [vmem:[#allocation3 + $0x48] sm:$0xff] %vm3422, %v3249
    %3433 = vst.msk [vmem:[#allocation3 + $0x50] sm:$0xff] %vm3422, %v3251
    %3434 = vst.msk [vmem:[#allocation3 + $0x58] sm:$0xff] %vm3422, %v3253
    %3435 = vst.msk [vmem:[#allocation3 + $0x60] sm:$0xff] %vm3422, %v3255
    %3436 = vst.msk [vmem:[#allocation3 + $0x68] sm:$0xff] %vm3422, %v3257
    %3437 = vst.msk [vmem:[#allocation3 + $0x70] sm:$0xff] %vm3422, %v3259
    %3438 = vst.msk [vmem:[#allocation3 + $0x78] sm:$0xff] %vm3422, %v3261
    %3439 = vst.msk [vmem:[#allocation3 + $0x80] sm:$0xff] %vm3422, %v3263
    %3440 = vst.msk [vmem:[#allocation3 + $0x88] sm:$0xff] %vm3422, %v3265
    %3441 = vst.msk [vmem:[#allocation3 + $0x90] sm:$0xff] %vm3422, %v3267
    %3442 = vst.msk [vmem:[#allocation3 + $0x98] sm:$0xff] %vm3422, %v3269
    %3443 = vst.msk [vmem:[#allocation3 + $0xa0] sm:$0xff] %vm3422, %v3271
    %3444 = vst.msk [vmem:[#allocation3 + $0xa8] sm:$0xff] %vm3422, %v3273
    %3445 = vst.msk [vmem:[#allocation3 + $0xb0] sm:$0xff] %vm3422, %v3275
    %3446 = vst.msk [vmem:[#allocation3 + $0xb8] sm:$0xff] %vm3422, %v3277
    %3447 = vst.msk [vmem:[#allocation3 + $0xc0] sm:$0xff] %vm3422, %v3279
    %3448 = vst.msk [vmem:[#allocation3 + $0xc8] sm:$0xff] %vm3422, %v3281
    %3449 = vst.msk [vmem:[#allocation3 + $0xd0] sm:$0xff] %vm3422, %v3283
    %3450 = vst.msk [vmem:[#allocation3 + $0xd8] sm:$0xff] %vm3422, %v3285
    %3451 = vst.msk [vmem:[#allocation3 + $0xe0] sm:$0xff] %vm3422, %v3287
    %3452 = vst.msk [vmem:[#allocation3 + $0xe8] sm:$0xff] %vm3422, %v3289
    %3453 = vst.msk [vmem:[#allocation3 + $0xf0] sm:$0xff] %vm3422, %v3291
    %3454 = vst.msk [vmem:[#allocation3 + $0xf8] sm:$0xff] %vm3422, %v3293
    %3455 = vst.msk [vmem:[#allocation3 + $0x100] sm:$0xff] %vm3422, %v3295
    %3456 = vst.msk [vmem:[#allocation3 + $0x108] sm:$0xff] %vm3422, %v3297
    %3457 = vst.msk [vmem:[#allocation3 + $0x110] sm:$0xff] %vm3422, %v3299
    %3458 = vst.msk [vmem:[#allocation3 + $0x118] sm:$0xff] %vm3422, %v3301
    %3459 = vst.msk [vmem:[#allocation3 + $0x120] sm:$0xff] %vm3422, %v3303
    %3460 = vst.msk [vmem:[#allocation3 + $0x128] sm:$0xff] %vm3422, %v3305
    %3461 = vst.msk [vmem:[#allocation3 + $0x130] sm:$0xff] %vm3422, %v3307
    %3462 = vst.msk [vmem:[#allocation3 + $0x138] sm:$0xff] %vm3422, %v3309
    %3463 = vst.msk [vmem:[#allocation3 + $0x140] sm:$0xff] %vm3422, %v3311
    %3464 = vst.msk [vmem:[#allocation3 + $0x148] sm:$0xff] %vm3422, %v3313
    %3465 = vst.msk [vmem:[#allocation3 + $0x150] sm:$0xff] %vm3422, %v3315
    %3466 = vst.msk [vmem:[#allocation3 + $0x158] sm:$0xff] %vm3422, %v3317
    %3467 = vst.msk [vmem:[#allocation3 + $0x160] sm:$0xff] %vm3422, %v3319
    %3468 = vst.msk [vmem:[#allocation3 + $0x168] sm:$0xff] %vm3422, %v3321
    %3469 = vst.msk [vmem:[#allocation3 + $0x170] sm:$0xff] %vm3422, %v3323
    %3470 = vst.msk [vmem:[#allocation3 + $0x178] sm:$0xff] %vm3422, %v3325
    %3471 = vst.msk [vmem:[#allocation3 + $0x180] sm:$0xff] %vm3422, %v3327
    %3472 = vst.msk [vmem:[#allocation3 + $0x188] sm:$0xff] %vm3422, %v3329
    %3473 = vst.msk [vmem:[#allocation3 + $0x190] sm:$0xff] %vm3422, %v3331
    %3474 = vst.msk [vmem:[#allocation3 + $0x198] sm:$0xff] %vm3422, %v3333
    %3475 = vst.msk [vmem:[#allocation3 + $0x1a0] sm:$0xff] %vm3422, %v3335
    %3476 = vst.msk [vmem:[#allocation3 + $0x1a8] sm:$0xff] %vm3422, %v3337
    %3477 = vst.msk [vmem:[#allocation3 + $0x1b0] sm:$0xff] %vm3422, %v3339
    %3478 = vst.msk [vmem:[#allocation3 + $0x1b8] sm:$0xff] %vm3422, %v3341
    %3479 = vst.msk [vmem:[#allocation3 + $0x1c0] sm:$0xff] %vm3422, %v3343
    %3480 = vst.msk [vmem:[#allocation3 + $0x1c8] sm:$0xff] %vm3422, %v3345
    %3481 = vst.msk [vmem:[#allocation3 + $0x1d0] sm:$0xff] %vm3422, %v3347
    %3482 = vst.msk [vmem:[#allocation3 + $0x1d8] sm:$0xff] %vm3422, %v3349
    %3483 = vst.msk [vmem:[#allocation3 + $0x1e0] sm:$0xff] %vm3422, %v3351
    %3484 = vst.msk [vmem:[#allocation3 + $0x1e8] sm:$0xff] %vm3422, %v3353
    %3485 = vst.msk [vmem:[#allocation3 + $0x1f0] sm:$0xff] %vm3422, %v3355
    %3486 = vst.msk [vmem:[#allocation3 + $0x1f8] sm:$0xff] %vm3422, %v3357
    %v3487 = vld [vmem:[%s213 + $0x1] sm:$0xff]
    %v3488 = vld [vmem:[%s213 + $0x9] sm:$0xff]
    %v3489 = vld [vmem:[%s213 + $0x19] sm:$0xff]
    %v3490 = vld [vmem:[%s213 + $0x21] sm:$0xff]
    %v3491 = vld [vmem:[%s213 + $0x31] sm:$0xff]
    %v3492 = vld [vmem:[%s213 + $0x39] sm:$0xff]
    %v3493 = vld [vmem:[%s213 + $0x49] sm:$0xff]
    %v3494 = vld [vmem:[%s213 + $0x51] sm:$0xff]
    %v3495 = vld [vmem:[%s213 + $0x61] sm:$0xff]
    %v3496 = vld [vmem:[%s213 + $0x69] sm:$0xff]
    %v3497 = vld [vmem:[%s213 + $0x79] sm:$0xff]
    %v3498 = vld [vmem:[%s213 + $0x81] sm:$0xff]
    %v3499 = vld [vmem:[%s213 + $0x91] sm:$0xff]
    %v3500 = vld [vmem:[%s213 + $0x99] sm:$0xff]
    %v3501 = vld [vmem:[%s213 + $0xa9] sm:$0xff]
    %v3502 = vld [vmem:[%s213 + $0xb1] sm:$0xff]
    %v3503 = vld [vmem:[%s213 + $0xc1] sm:$0xff]
    %v3504 = vld [vmem:[%s213 + $0xc9] sm:$0xff]
    %v3505 = vld [vmem:[%s213 + $0xd9] sm:$0xff]
    %v3506 = vld [vmem:[%s213 + $0xe1] sm:$0xff]
    %v3507 = vld [vmem:[%s213 + $0xf1] sm:$0xff]
    %v3508 = vld [vmem:[%s213 + $0xf9] sm:$0xff]
    %v3509 = vld [vmem:[%s213 + $0x109] sm:$0xff]
    %v3510 = vld [vmem:[%s213 + $0x111] sm:$0xff]
    %v3511 = vld [vmem:[%s213 + $0x121] sm:$0xff]
    %v3512 = vld [vmem:[%s213 + $0x129] sm:$0xff]
    %v3513 = vld [vmem:[%s213 + $0x139] sm:$0xff]
    %v3514 = vld [vmem:[%s213 + $0x141] sm:$0xff]
    %v3515 = vld [vmem:[%s213 + $0x151] sm:$0xff]
    %v3516 = vld [vmem:[%s213 + $0x159] sm:$0xff]
    %v3517 = vld [vmem:[%s213 + $0x169] sm:$0xff]
    %v3518 = vld [vmem:[%s213 + $0x171] sm:$0xff]
    %v3519 = vld [vmem:[%s213 + $0x1c9] sm:$0xff]
    %v3520 = vld [vmem:[%s213 + $0x1d1] sm:$0xff]
    %v3521 = vld [vmem:[%s213 + $0x1e1] sm:$0xff]
    %v3522 = vld [vmem:[%s213 + $0x1e9] sm:$0xff]
    %v3523 = vld [vmem:[%s213 + $0x1f9] sm:$0xff]
    %v3524 = vld [vmem:[%s213 + $0x201] sm:$0xff]
    %v3525 = vld [vmem:[%s213 + $0x211] sm:$0xff]
    %v3526 = vld [vmem:[%s213 + $0x219] sm:$0xff]
    %v3527 = vld [vmem:[%s213 + $0x229] sm:$0xff]
    %v3528 = vld [vmem:[%s213 + $0x231] sm:$0xff]
    %v3529 = vld [vmem:[%s213 + $0x241] sm:$0xff]
    %v3530 = vld [vmem:[%s213 + $0x249] sm:$0xff]
    %v3531 = vld [vmem:[%s213 + $0x259] sm:$0xff]
    %v3532 = vld [vmem:[%s213 + $0x261] sm:$0xff]
    %v3533 = vld [vmem:[%s213 + $0x271] sm:$0xff]
    %v3534 = vld [vmem:[%s213 + $0x279] sm:$0xff]
    %v3535 = vld [vmem:[%s213 + $0x289] sm:$0xff]
    %v3536 = vld [vmem:[%s213 + $0x291] sm:$0xff]
    %v3537 = vld [vmem:[%s213 + $0x2a1] sm:$0xff]
    %v3538 = vld [vmem:[%s213 + $0x2a9] sm:$0xff]
    %v3539 = vld [vmem:[%s213 + $0x2b9] sm:$0xff]
    %v3540 = vld [vmem:[%s213 + $0x2c1] sm:$0xff]
    %v3541 = vld [vmem:[%s213 + $0x2d1] sm:$0xff]
    %v3542 = vld [vmem:[%s213 + $0x2d9] sm:$0xff]
    %v3543 = vld [vmem:[%s213 + $0x2e9] sm:$0xff]
    %v3544 = vld [vmem:[%s213 + $0x2f1] sm:$0xff]
    %v3545 = vld [vmem:[%s213 + $0x301] sm:$0xff]
    %v3546 = vld [vmem:[%s213 + $0x309] sm:$0xff]
    %v3547 = vld [vmem:[%s213 + $0x319] sm:$0xff]
    %v3548 = vld [vmem:[%s213 + $0x321] sm:$0xff]
    %v3549 = vld [vmem:[%s213 + $0x331] sm:$0xff]
    %v3550 = vld [vmem:[%s213 + $0x339] sm:$0xff]
    %3615 = vrot.lane.b32.xlu0 %v3487, 36
    %v3616 = vpop.permute.xlu0 %3615
    %3617 = vrot.lane.b32.xlu0 %v3488, 36
    %v3618 = vpop.permute.xlu0 %3617
    %3619 = vrot.lane.b32.xlu0 %v3489, 36
    %v3620 = vpop.permute.xlu0 %3619
    %3621 = vrot.lane.b32.xlu0 %v3490, 36
    %v3622 = vpop.permute.xlu0 %3621
    %3623 = vrot.lane.b32.xlu0 %v3491, 36
    %v3624 = vpop.permute.xlu0 %3623
    %3625 = vrot.lane.b32.xlu0 %v3492, 36
    %v3626 = vpop.permute.xlu0 %3625
    %3627 = vrot.lane.b32.xlu0 %v3493, 36
    %v3628 = vpop.permute.xlu0 %3627
    %3629 = vrot.lane.b32.xlu0 %v3494, 36
    %v3630 = vpop.permute.xlu0 %3629
    %3631 = vrot.lane.b32.xlu0 %v3495, 36
    %v3632 = vpop.permute.xlu0 %3631
    %3633 = vrot.lane.b32.xlu0 %v3496, 36
    %v3634 = vpop.permute.xlu0 %3633
    %3635 = vrot.lane.b32.xlu0 %v3497, 36
    %v3636 = vpop.permute.xlu0 %3635
    %3637 = vrot.lane.b32.xlu0 %v3498, 36
    %v3638 = vpop.permute.xlu0 %3637
    %3639 = vrot.lane.b32.xlu0 %v3499, 36
    %v3640 = vpop.permute.xlu0 %3639
    %3641 = vrot.lane.b32.xlu0 %v3500, 36
    %v3642 = vpop.permute.xlu0 %3641
    %3643 = vrot.lane.b32.xlu0 %v3501, 36
    %v3644 = vpop.permute.xlu0 %3643
    %3645 = vrot.lane.b32.xlu0 %v3502, 36
    %v3646 = vpop.permute.xlu0 %3645
    %3647 = vrot.lane.b32.xlu0 %v3503, 36
    %v3648 = vpop.permute.xlu0 %3647
    %3649 = vrot.lane.b32.xlu0 %v3504, 36
    %v3650 = vpop.permute.xlu0 %3649
    %3651 = vrot.lane.b32.xlu0 %v3505, 36
    %v3652 = vpop.permute.xlu0 %3651
    %3653 = vrot.lane.b32.xlu0 %v3506, 36
    %v3654 = vpop.permute.xlu0 %3653
    %3655 = vrot.lane.b32.xlu0 %v3507, 36
    %v3656 = vpop.permute.xlu0 %3655
    %3657 = vrot.lane.b32.xlu0 %v3508, 36
    %v3658 = vpop.permute.xlu0 %3657
    %3659 = vrot.lane.b32.xlu0 %v3509, 36
    %v3660 = vpop.permute.xlu0 %3659
    %3661 = vrot.lane.b32.xlu0 %v3510, 36
    %v3662 = vpop.permute.xlu0 %3661
    %3663 = vrot.lane.b32.xlu0 %v3511, 36
    %v3664 = vpop.permute.xlu0 %3663
    %3665 = vrot.lane.b32.xlu0 %v3512, 36
    %v3666 = vpop.permute.xlu0 %3665
    %3667 = vrot.lane.b32.xlu0 %v3513, 36
    %v3668 = vpop.permute.xlu0 %3667
    %3669 = vrot.lane.b32.xlu0 %v3514, 36
    %v3670 = vpop.permute.xlu0 %3669
    %3671 = vrot.lane.b32.xlu0 %v3515, 36
    %v3672 = vpop.permute.xlu0 %3671
    %3673 = vrot.lane.b32.xlu0 %v3516, 36
    %v3674 = vpop.permute.xlu0 %3673
    %3675 = vrot.lane.b32.xlu0 %v3517, 36
    %v3676 = vpop.permute.xlu0 %3675
    %3677 = vrot.lane.b32.xlu0 %v3518, 36
    %v3678 = vpop.permute.xlu0 %3677
    %3679 = vrot.lane.b32.xlu0 %v3519, 36
    %v3680 = vpop.permute.xlu0 %3679
    %3681 = vrot.lane.b32.xlu0 %v3520, 36
    %v3682 = vpop.permute.xlu0 %3681
    %3683 = vrot.lane.b32.xlu0 %v3521, 36
    %v3684 = vpop.permute.xlu0 %3683
    %3685 = vrot.lane.b32.xlu0 %v3522, 36
    %v3686 = vpop.permute.xlu0 %3685
    %3687 = vrot.lane.b32.xlu0 %v3523, 36
    %v3688 = vpop.permute.xlu0 %3687
    %3689 = vrot.lane.b32.xlu0 %v3524, 36
    %v3690 = vpop.permute.xlu0 %3689
    %3691 = vrot.lane.b32.xlu0 %v3525, 36
    %v3692 = vpop.permute.xlu0 %3691
    %3693 = vrot.lane.b32.xlu0 %v3526, 36
    %v3694 = vpop.permute.xlu0 %3693
    %3695 = vrot.lane.b32.xlu0 %v3527, 36
    %v3696 = vpop.permute.xlu0 %3695
    %3697 = vrot.lane.b32.xlu0 %v3528, 36
    %v3698 = vpop.permute.xlu0 %3697
    %3699 = vrot.lane.b32.xlu0 %v3529, 36
    %v3700 = vpop.permute.xlu0 %3699
    %3701 = vrot.lane.b32.xlu0 %v3530, 36
    %v3702 = vpop.permute.xlu0 %3701
    %3703 = vrot.lane.b32.xlu0 %v3531, 36
    %v3704 = vpop.permute.xlu0 %3703
    %3705 = vrot.lane.b32.xlu0 %v3532, 36
    %v3706 = vpop.permute.xlu0 %3705
    %3707 = vrot.lane.b32.xlu0 %v3533, 36
    %v3708 = vpop.permute.xlu0 %3707
    %3709 = vrot.lane.b32.xlu0 %v3534, 36
    %v3710 = vpop.permute.xlu0 %3709
    %3711 = vrot.lane.b32.xlu0 %v3535, 36
    %v3712 = vpop.permute.xlu0 %3711
    %3713 = vrot.lane.b32.xlu0 %v3536, 36
    %v3714 = vpop.permute.xlu0 %3713
    %3715 = vrot.lane.b32.xlu0 %v3537, 36
    %v3716 = vpop.permute.xlu0 %3715
    %3717 = vrot.lane.b32.xlu0 %v3538, 36
    %v3718 = vpop.permute.xlu0 %3717
    %3719 = vrot.lane.b32.xlu0 %v3539, 36
    %v3720 = vpop.permute.xlu0 %3719
    %3721 = vrot.lane.b32.xlu0 %v3540, 36
    %v3722 = vpop.permute.xlu0 %3721
    %3723 = vrot.lane.b32.xlu0 %v3541, 36
    %v3724 = vpop.permute.xlu0 %3723
    %3725 = vrot.lane.b32.xlu0 %v3542, 36
    %v3726 = vpop.permute.xlu0 %3725
    %3727 = vrot.lane.b32.xlu0 %v3543, 36
    %v3728 = vpop.permute.xlu0 %3727
    %3729 = vrot.lane.b32.xlu0 %v3544, 36
    %v3730 = vpop.permute.xlu0 %3729
    %3731 = vrot.lane.b32.xlu0 %v3545, 36
    %v3732 = vpop.permute.xlu0 %3731
    %3733 = vrot.lane.b32.xlu0 %v3546, 36
    %v3734 = vpop.permute.xlu0 %3733
    %3735 = vrot.lane.b32.xlu0 %v3547, 36
    %v3736 = vpop.permute.xlu0 %3735
    %3737 = vrot.lane.b32.xlu0 %v3548, 36
    %v3738 = vpop.permute.xlu0 %3737
    %3739 = vrot.lane.b32.xlu0 %v3549, 36
    %v3740 = vpop.permute.xlu0 %3739
    %3741 = vrot.lane.b32.xlu0 %v3550, 36
    %v3742 = vpop.permute.xlu0 %3741
    %vm3807 = vcmask 326944
    %3808 = vst.msk [vmem:[#allocation3] sm:$0xff] %vm3807, %v3616
    %3809 = vst.msk [vmem:[#allocation3 + $0x8] sm:$0xff] %vm3807, %v3618
    %3810 = vst.msk [vmem:[#allocation3 + $0x10] sm:$0xff] %vm3807, %v3620
    %3811 = vst.msk [vmem:[#allocation3 + $0x18] sm:$0xff] %vm3807, %v3622
    %3812 = vst.msk [vmem:[#allocation3 + $0x20] sm:$0xff] %vm3807, %v3624
    %3813 = vst.msk [vmem:[#allocation3 + $0x28] sm:$0xff] %vm3807, %v3626
    %3814 = vst.msk [vmem:[#allocation3 + $0x30] sm:$0xff] %vm3807, %v3628
    %3815 = vst.msk [vmem:[#allocation3 + $0x38] sm:$0xff] %vm3807, %v3630
    %3816 = vst.msk [vmem:[#allocation3 + $0x40] sm:$0xff] %vm3807, %v3632
    %3817 = vst.msk [vmem:[#allocation3 + $0x48] sm:$0xff] %vm3807, %v3634
    %3818 = vst.msk [vmem:[#allocation3 + $0x50] sm:$0xff] %vm3807, %v3636
    %3819 = vst.msk [vmem:[#allocation3 + $0x58] sm:$0xff] %vm3807, %v3638
    %3820 = vst.msk [vmem:[#allocation3 + $0x60] sm:$0xff] %vm3807, %v3640
    %3821 = vst.msk [vmem:[#allocation3 + $0x68] sm:$0xff] %vm3807, %v3642
    %3822 = vst.msk [vmem:[#allocation3 + $0x70] sm:$0xff] %vm3807, %v3644
    %3823 = vst.msk [vmem:[#allocation3 + $0x78] sm:$0xff] %vm3807, %v3646
    %3824 = vst.msk [vmem:[#allocation3 + $0x80] sm:$0xff] %vm3807, %v3648
    %3825 = vst.msk [vmem:[#allocation3 + $0x88] sm:$0xff] %vm3807, %v3650
    %3826 = vst.msk [vmem:[#allocation3 + $0x90] sm:$0xff] %vm3807, %v3652
    %3827 = vst.msk [vmem:[#allocation3 + $0x98] sm:$0xff] %vm3807, %v3654
    %3828 = vst.msk [vmem:[#allocation3 + $0xa0] sm:$0xff] %vm3807, %v3656
    %3829 = vst.msk [vmem:[#allocation3 + $0xa8] sm:$0xff] %vm3807, %v3658
    %3830 = vst.msk [vmem:[#allocation3 + $0xb0] sm:$0xff] %vm3807, %v3660
    %3831 = vst.msk [vmem:[#allocation3 + $0xb8] sm:$0xff] %vm3807, %v3662
    %3832 = vst.msk [vmem:[#allocation3 + $0xc0] sm:$0xff] %vm3807, %v3664
    %3833 = vst.msk [vmem:[#allocation3 + $0xc8] sm:$0xff] %vm3807, %v3666
    %3834 = vst.msk [vmem:[#allocation3 + $0xd0] sm:$0xff] %vm3807, %v3668
    %3835 = vst.msk [vmem:[#allocation3 + $0xd8] sm:$0xff] %vm3807, %v3670
    %3836 = vst.msk [vmem:[#allocation3 + $0xe0] sm:$0xff] %vm3807, %v3672
    %3837 = vst.msk [vmem:[#allocation3 + $0xe8] sm:$0xff] %vm3807, %v3674
    %3838 = vst.msk [vmem:[#allocation3 + $0xf0] sm:$0xff] %vm3807, %v3676
    %3839 = vst.msk [vmem:[#allocation3 + $0xf8] sm:$0xff] %vm3807, %v3678
    %3840 = vst.msk [vmem:[#allocation3 + $0x100] sm:$0xff] %vm3807, %v3680
    %3841 = vst.msk [vmem:[#allocation3 + $0x108] sm:$0xff] %vm3807, %v3682
    %3842 = vst.msk [vmem:[#allocation3 + $0x110] sm:$0xff] %vm3807, %v3684
    %3843 = vst.msk [vmem:[#allocation3 + $0x118] sm:$0xff] %vm3807, %v3686
    %3844 = vst.msk [vmem:[#allocation3 + $0x120] sm:$0xff] %vm3807, %v3688
    %3845 = vst.msk [vmem:[#allocation3 + $0x128] sm:$0xff] %vm3807, %v3690
    %3846 = vst.msk [vmem:[#allocation3 + $0x130] sm:$0xff] %vm3807, %v3692
    %3847 = vst.msk [vmem:[#allocation3 + $0x138] sm:$0xff] %vm3807, %v3694
    %3848 = vst.msk [vmem:[#allocation3 + $0x140] sm:$0xff] %vm3807, %v3696
    %3849 = vst.msk [vmem:[#allocation3 + $0x148] sm:$0xff] %vm3807, %v3698
    %3850 = vst.msk [vmem:[#allocation3 + $0x150] sm:$0xff] %vm3807, %v3700
    %3851 = vst.msk [vmem:[#allocation3 + $0x158] sm:$0xff] %vm3807, %v3702
    %3852 = vst.msk [vmem:[#allocation3 + $0x160] sm:$0xff] %vm3807, %v3704
    %3853 = vst.msk [vmem:[#allocation3 + $0x168] sm:$0xff] %vm3807, %v3706
    %3854 = vst.msk [vmem:[#allocation3 + $0x170] sm:$0xff] %vm3807, %v3708
    %3855 = vst.msk [vmem:[#allocation3 + $0x178] sm:$0xff] %vm3807, %v3710
    %3856 = vst.msk [vmem:[#allocation3 + $0x180] sm:$0xff] %vm3807, %v3712
    %3857 = vst.msk [vmem:[#allocation3 + $0x188] sm:$0xff] %vm3807, %v3714
    %3858 = vst.msk [vmem:[#allocation3 + $0x190] sm:$0xff] %vm3807, %v3716
    %3859 = vst.msk [vmem:[#allocation3 + $0x198] sm:$0xff] %vm3807, %v3718
    %3860 = vst.msk [vmem:[#allocation3 + $0x1a0] sm:$0xff] %vm3807, %v3720
    %3861 = vst.msk [vmem:[#allocation3 + $0x1a8] sm:$0xff] %vm3807, %v3722
    %3862 = vst.msk [vmem:[#allocation3 + $0x1b0] sm:$0xff] %vm3807, %v3724
    %3863 = vst.msk [vmem:[#allocation3 + $0x1b8] sm:$0xff] %vm3807, %v3726
    %3864 = vst.msk [vmem:[#allocation3 + $0x1c0] sm:$0xff] %vm3807, %v3728
    %3865 = vst.msk [vmem:[#allocation3 + $0x1c8] sm:$0xff] %vm3807, %v3730
    %3866 = vst.msk [vmem:[#allocation3 + $0x1d0] sm:$0xff] %vm3807, %v3732
    %3867 = vst.msk [vmem:[#allocation3 + $0x1d8] sm:$0xff] %vm3807, %v3734
    %3868 = vst.msk [vmem:[#allocation3 + $0x1e0] sm:$0xff] %vm3807, %v3736
    %3869 = vst.msk [vmem:[#allocation3 + $0x1e8] sm:$0xff] %vm3807, %v3738
    %3870 = vst.msk [vmem:[#allocation3 + $0x1f0] sm:$0xff] %vm3807, %v3740
    %3871 = vst.msk [vmem:[#allocation3 + $0x1f8] sm:$0xff] %vm3807, %v3742
    %v3872 = vld [vmem:[%s213 + $0x2] sm:$0xff]
    %v3873 = vld [vmem:[%s213 + $0xa] sm:$0xff]
    %v3874 = vld [vmem:[%s213 + $0x1a] sm:$0xff]
    %v3875 = vld [vmem:[%s213 + $0x22] sm:$0xff]
    %v3876 = vld [vmem:[%s213 + $0x32] sm:$0xff]
    %v3877 = vld [vmem:[%s213 + $0x3a] sm:$0xff]
    %v3878 = vld [vmem:[%s213 + $0x4a] sm:$0xff]
    %v3879 = vld [vmem:[%s213 + $0x52] sm:$0xff]
    %v3880 = vld [vmem:[%s213 + $0x62] sm:$0xff]
    %v3881 = vld [vmem:[%s213 + $0x6a] sm:$0xff]
    %v3882 = vld [vmem:[%s213 + $0x7a] sm:$0xff]
    %v3883 = vld [vmem:[%s213 + $0x82] sm:$0xff]
    %v3884 = vld [vmem:[%s213 + $0x92] sm:$0xff]
    %v3885 = vld [vmem:[%s213 + $0x9a] sm:$0xff]
    %v3886 = vld [vmem:[%s213 + $0xaa] sm:$0xff]
    %v3887 = vld [vmem:[%s213 + $0xb2] sm:$0xff]
    %v3888 = vld [vmem:[%s213 + $0xc2] sm:$0xff]
    %v3889 = vld [vmem:[%s213 + $0xca] sm:$0xff]
    %v3890 = vld [vmem:[%s213 + $0xda] sm:$0xff]
    %v3891 = vld [vmem:[%s213 + $0xe2] sm:$0xff]
    %v3892 = vld [vmem:[%s213 + $0xf2] sm:$0xff]
    %v3893 = vld [vmem:[%s213 + $0xfa] sm:$0xff]
    %v3894 = vld [vmem:[%s213 + $0x10a] sm:$0xff]
    %v3895 = vld [vmem:[%s213 + $0x112] sm:$0xff]
    %v3896 = vld [vmem:[%s213 + $0x122] sm:$0xff]
    %v3897 = vld [vmem:[%s213 + $0x12a] sm:$0xff]
    %v3898 = vld [vmem:[%s213 + $0x13a] sm:$0xff]
    %v3899 = vld [vmem:[%s213 + $0x142] sm:$0xff]
    %v3900 = vld [vmem:[%s213 + $0x152] sm:$0xff]
    %v3901 = vld [vmem:[%s213 + $0x15a] sm:$0xff]
    %v3902 = vld [vmem:[%s213 + $0x16a] sm:$0xff]
    %v3903 = vld [vmem:[%s213 + $0x172] sm:$0xff]
    %v3904 = vld [vmem:[%s213 + $0x1ca] sm:$0xff]
    %v3905 = vld [vmem:[%s213 + $0x1d2] sm:$0xff]
    %v3906 = vld [vmem:[%s213 + $0x1e2] sm:$0xff]
    %v3907 = vld [vmem:[%s213 + $0x1ea] sm:$0xff]
    %v3908 = vld [vmem:[%s213 + $0x1fa] sm:$0xff]
    %v3909 = vld [vmem:[%s213 + $0x202] sm:$0xff]
    %v3910 = vld [vmem:[%s213 + $0x212] sm:$0xff]
    %v3911 = vld [vmem:[%s213 + $0x21a] sm:$0xff]
    %v3912 = vld [vmem:[%s213 + $0x22a] sm:$0xff]
    %v3913 = vld [vmem:[%s213 + $0x232] sm:$0xff]
    %v3914 = vld [vmem:[%s213 + $0x242] sm:$0xff]
    %v3915 = vld [vmem:[%s213 + $0x24a] sm:$0xff]
    %v3916 = vld [vmem:[%s213 + $0x25a] sm:$0xff]
    %v3917 = vld [vmem:[%s213 + $0x262] sm:$0xff]
    %v3918 = vld [vmem:[%s213 + $0x272] sm:$0xff]
    %v3919 = vld [vmem:[%s213 + $0x27a] sm:$0xff]
    %v3920 = vld [vmem:[%s213 + $0x28a] sm:$0xff]
    %v3921 = vld [vmem:[%s213 + $0x292] sm:$0xff]
    %v3922 = vld [vmem:[%s213 + $0x2a2] sm:$0xff]
    %v3923 = vld [vmem:[%s213 + $0x2aa] sm:$0xff]
    %v3924 = vld [vmem:[%s213 + $0x2ba] sm:$0xff]
    %v3925 = vld [vmem:[%s213 + $0x2c2] sm:$0xff]
    %v3926 = vld [vmem:[%s213 + $0x2d2] sm:$0xff]
    %v3927 = vld [vmem:[%s213 + $0x2da] sm:$0xff]
    %v3928 = vld [vmem:[%s213 + $0x2ea] sm:$0xff]
    %v3929 = vld [vmem:[%s213 + $0x2f2] sm:$0xff]
    %v3930 = vld [vmem:[%s213 + $0x302] sm:$0xff]
    %v3931 = vld [vmem:[%s213 + $0x30a] sm:$0xff]
    %v3932 = vld [vmem:[%s213 + $0x31a] sm:$0xff]
    %v3933 = vld [vmem:[%s213 + $0x322] sm:$0xff]
    %v3934 = vld [vmem:[%s213 + $0x332] sm:$0xff]
    %v3935 = vld [vmem:[%s213 + $0x33a] sm:$0xff]
    %4000 = vrot.lane.b32.xlu0 %v3872, 40
    %v4001 = vpop.permute.xlu0 %4000
    %4002 = vrot.lane.b32.xlu0 %v3873, 40
    %v4003 = vpop.permute.xlu0 %4002
    %4004 = vrot.lane.b32.xlu0 %v3874, 40
    %v4005 = vpop.permute.xlu0 %4004
    %4006 = vrot.lane.b32.xlu0 %v3875, 40
    %v4007 = vpop.permute.xlu0 %4006
    %4008 = vrot.lane.b32.xlu0 %v3876, 40
    %v4009 = vpop.permute.xlu0 %4008
    %4010 = vrot.lane.b32.xlu0 %v3877, 40
    %v4011 = vpop.permute.xlu0 %4010
    %4012 = vrot.lane.b32.xlu0 %v3878, 40
    %v4013 = vpop.permute.xlu0 %4012
    %4014 = vrot.lane.b32.xlu0 %v3879, 40
    %v4015 = vpop.permute.xlu0 %4014
    %4016 = vrot.lane.b32.xlu0 %v3880, 40
    %v4017 = vpop.permute.xlu0 %4016
    %4018 = vrot.lane.b32.xlu0 %v3881, 40
    %v4019 = vpop.permute.xlu0 %4018
    %4020 = vrot.lane.b32.xlu0 %v3882, 40
    %v4021 = vpop.permute.xlu0 %4020
    %4022 = vrot.lane.b32.xlu0 %v3883, 40
    %v4023 = vpop.permute.xlu0 %4022
    %4024 = vrot.lane.b32.xlu0 %v3884, 40
    %v4025 = vpop.permute.xlu0 %4024
    %4026 = vrot.lane.b32.xlu0 %v3885, 40
    %v4027 = vpop.permute.xlu0 %4026
    %4028 = vrot.lane.b32.xlu0 %v3886, 40
    %v4029 = vpop.permute.xlu0 %4028
    %4030 = vrot.lane.b32.xlu0 %v3887, 40
    %v4031 = vpop.permute.xlu0 %4030
    %4032 = vrot.lane.b32.xlu0 %v3888, 40
    %v4033 = vpop.permute.xlu0 %4032
    %4034 = vrot.lane.b32.xlu0 %v3889, 40
    %v4035 = vpop.permute.xlu0 %4034
    %4036 = vrot.lane.b32.xlu0 %v3890, 40
    %v4037 = vpop.permute.xlu0 %4036
    %4038 = vrot.lane.b32.xlu0 %v3891, 40
    %v4039 = vpop.permute.xlu0 %4038
    %4040 = vrot.lane.b32.xlu0 %v3892, 40
    %v4041 = vpop.permute.xlu0 %4040
    %4042 = vrot.lane.b32.xlu0 %v3893, 40
    %v4043 = vpop.permute.xlu0 %4042
    %4044 = vrot.lane.b32.xlu0 %v3894, 40
    %v4045 = vpop.permute.xlu0 %4044
    %4046 = vrot.lane.b32.xlu0 %v3895, 40
    %v4047 = vpop.permute.xlu0 %4046
    %4048 = vrot.lane.b32.xlu0 %v3896, 40
    %v4049 = vpop.permute.xlu0 %4048
    %4050 = vrot.lane.b32.xlu0 %v3897, 40
    %v4051 = vpop.permute.xlu0 %4050
    %4052 = vrot.lane.b32.xlu0 %v3898, 40
    %v4053 = vpop.permute.xlu0 %4052
    %4054 = vrot.lane.b32.xlu0 %v3899, 40
    %v4055 = vpop.permute.xlu0 %4054
    %4056 = vrot.lane.b32.xlu0 %v3900, 40
    %v4057 = vpop.permute.xlu0 %4056
    %4058 = vrot.lane.b32.xlu0 %v3901, 40
    %v4059 = vpop.permute.xlu0 %4058
    %4060 = vrot.lane.b32.xlu0 %v3902, 40
    %v4061 = vpop.permute.xlu0 %4060
    %4062 = vrot.lane.b32.xlu0 %v3903, 40
    %v4063 = vpop.permute.xlu0 %4062
    %4064 = vrot.lane.b32.xlu0 %v3904, 40
    %v4065 = vpop.permute.xlu0 %4064
    %4066 = vrot.lane.b32.xlu0 %v3905, 40
    %v4067 = vpop.permute.xlu0 %4066
    %4068 = vrot.lane.b32.xlu0 %v3906, 40
    %v4069 = vpop.permute.xlu0 %4068
    %4070 = vrot.lane.b32.xlu0 %v3907, 40
    %v4071 = vpop.permute.xlu0 %4070
    %4072 = vrot.lane.b32.xlu0 %v3908, 40
    %v4073 = vpop.permute.xlu0 %4072
    %4074 = vrot.lane.b32.xlu0 %v3909, 40
    %v4075 = vpop.permute.xlu0 %4074
    %4076 = vrot.lane.b32.xlu0 %v3910, 40
    %v4077 = vpop.permute.xlu0 %4076
    %4078 = vrot.lane.b32.xlu0 %v3911, 40
    %v4079 = vpop.permute.xlu0 %4078
    %4080 = vrot.lane.b32.xlu0 %v3912, 40
    %v4081 = vpop.permute.xlu0 %4080
    %4082 = vrot.lane.b32.xlu0 %v3913, 40
    %v4083 = vpop.permute.xlu0 %4082
    %4084 = vrot.lane.b32.xlu0 %v3914, 40
    %v4085 = vpop.permute.xlu0 %4084
    %4086 = vrot.lane.b32.xlu0 %v3915, 40
    %v4087 = vpop.permute.xlu0 %4086
    %4088 = vrot.lane.b32.xlu0 %v3916, 40
    %v4089 = vpop.permute.xlu0 %4088
    %4090 = vrot.lane.b32.xlu0 %v3917, 40
    %v4091 = vpop.permute.xlu0 %4090
    %4092 = vrot.lane.b32.xlu0 %v3918, 40
    %v4093 = vpop.permute.xlu0 %4092
    %4094 = vrot.lane.b32.xlu0 %v3919, 40
    %v4095 = vpop.permute.xlu0 %4094
    %4096 = vrot.lane.b32.xlu0 %v3920, 40
    %v4097 = vpop.permute.xlu0 %4096
    %4098 = vrot.lane.b32.xlu0 %v3921, 40
    %v4099 = vpop.permute.xlu0 %4098
    %4100 = vrot.lane.b32.xlu0 %v3922, 40
    %v4101 = vpop.permute.xlu0 %4100
    %4102 = vrot.lane.b32.xlu0 %v3923, 40
    %v4103 = vpop.permute.xlu0 %4102
    %4104 = vrot.lane.b32.xlu0 %v3924, 40
    %v4105 = vpop.permute.xlu0 %4104
    %4106 = vrot.lane.b32.xlu0 %v3925, 40
    %v4107 = vpop.permute.xlu0 %4106
    %4108 = vrot.lane.b32.xlu0 %v3926, 40
    %v4109 = vpop.permute.xlu0 %4108
    %4110 = vrot.lane.b32.xlu0 %v3927, 40
    %v4111 = vpop.permute.xlu0 %4110
    %4112 = vrot.lane.b32.xlu0 %v3928, 40
    %v4113 = vpop.permute.xlu0 %4112
    %4114 = vrot.lane.b32.xlu0 %v3929, 40
    %v4115 = vpop.permute.xlu0 %4114
    %4116 = vrot.lane.b32.xlu0 %v3930, 40
    %v4117 = vpop.permute.xlu0 %4116
    %4118 = vrot.lane.b32.xlu0 %v3931, 40
    %v4119 = vpop.permute.xlu0 %4118
    %4120 = vrot.lane.b32.xlu0 %v3932, 40
    %v4121 = vpop.permute.xlu0 %4120
    %4122 = vrot.lane.b32.xlu0 %v3933, 40
    %v4123 = vpop.permute.xlu0 %4122
    %4124 = vrot.lane.b32.xlu0 %v3934, 40
    %v4125 = vpop.permute.xlu0 %4124
    %4126 = vrot.lane.b32.xlu0 %v3935, 40
    %v4127 = vpop.permute.xlu0 %4126
    %vm4192 = vcmask 359744
    %4193 = vst.msk [vmem:[#allocation3] sm:$0xff] %vm4192, %v4001
    %4194 = vst.msk [vmem:[#allocation3 + $0x8] sm:$0xff] %vm4192, %v4003
    %4195 = vst.msk [vmem:[#allocation3 + $0x10] sm:$0xff] %vm4192, %v4005
    %4196 = vst.msk [vmem:[#allocation3 + $0x18] sm:$0xff] %vm4192, %v4007
    %4197 = vst.msk [vmem:[#allocation3 + $0x20] sm:$0xff] %vm4192, %v4009
    %4198 = vst.msk [vmem:[#allocation3 + $0x28] sm:$0xff] %vm4192, %v4011
    %4199 = vst.msk [vmem:[#allocation3 + $0x30] sm:$0xff] %vm4192, %v4013
    %4200 = vst.msk [vmem:[#allocation3 + $0x38] sm:$0xff] %vm4192, %v4015
    %4201 = vst.msk [vmem:[#allocation3 + $0x40] sm:$0xff] %vm4192, %v4017
    %4202 = vst.msk [vmem:[#allocation3 + $0x48] sm:$0xff] %vm4192, %v4019
    %4203 = vst.msk [vmem:[#allocation3 + $0x50] sm:$0xff] %vm4192, %v4021
    %4204 = vst.msk [vmem:[#allocation3 + $0x58] sm:$0xff] %vm4192, %v4023
    %4205 = vst.msk [vmem:[#allocation3 + $0x60] sm:$0xff] %vm4192, %v4025
    %4206 = vst.msk [vmem:[#allocation3 + $0x68] sm:$0xff] %vm4192, %v4027
    %4207 = vst.msk [vmem:[#allocation3 + $0x70] sm:$0xff] %vm4192, %v4029
    %4208 = vst.msk [vmem:[#allocation3 + $0x78] sm:$0xff] %vm4192, %v4031
    %4209 = vst.msk [vmem:[#allocation3 + $0x80] sm:$0xff] %vm4192, %v4033
    %4210 = vst.msk [vmem:[#allocation3 + $0x88] sm:$0xff] %vm4192, %v4035
    %4211 = vst.msk [vmem:[#allocation3 + $0x90] sm:$0xff] %vm4192, %v4037
    %4212 = vst.msk [vmem:[#allocation3 + $0x98] sm:$0xff] %vm4192, %v4039
    %4213 = vst.msk [vmem:[#allocation3 + $0xa0] sm:$0xff] %vm4192, %v4041
    %4214 = vst.msk [vmem:[#allocation3 + $0xa8] sm:$0xff] %vm4192, %v4043
    %4215 = vst.msk [vmem:[#allocation3 + $0xb0] sm:$0xff] %vm4192, %v4045
    %4216 = vst.msk [vmem:[#allocation3 + $0xb8] sm:$0xff] %vm4192, %v4047
    %4217 = vst.msk [vmem:[#allocation3 + $0xc0] sm:$0xff] %vm4192, %v4049
    %4218 = vst.msk [vmem:[#allocation3 + $0xc8] sm:$0xff] %vm4192, %v4051
    %4219 = vst.msk [vmem:[#allocation3 + $0xd0] sm:$0xff] %vm4192, %v4053
    %4220 = vst.msk [vmem:[#allocation3 + $0xd8] sm:$0xff] %vm4192, %v4055
    %4221 = vst.msk [vmem:[#allocation3 + $0xe0] sm:$0xff] %vm4192, %v4057
    %4222 = vst.msk [vmem:[#allocation3 + $0xe8] sm:$0xff] %vm4192, %v4059
    %4223 = vst.msk [vmem:[#allocation3 + $0xf0] sm:$0xff] %vm4192, %v4061
    %4224 = vst.msk [vmem:[#allocation3 + $0xf8] sm:$0xff] %vm4192, %v4063
    %4225 = vst.msk [vmem:[#allocation3 + $0x100] sm:$0xff] %vm4192, %v4065
    %4226 = vst.msk [vmem:[#allocation3 + $0x108] sm:$0xff] %vm4192, %v4067
    %4227 = vst.msk [vmem:[#allocation3 + $0x110] sm:$0xff] %vm4192, %v4069
    %4228 = vst.msk [vmem:[#allocation3 + $0x118] sm:$0xff] %vm4192, %v4071
    %4229 = vst.msk [vmem:[#allocation3 + $0x120] sm:$0xff] %vm4192, %v4073
    %4230 = vst.msk [vmem:[#allocation3 + $0x128] sm:$0xff] %vm4192, %v4075
    %4231 = vst.msk [vmem:[#allocation3 + $0x130] sm:$0xff] %vm4192, %v4077
    %4232 = vst.msk [vmem:[#allocation3 + $0x138] sm:$0xff] %vm4192, %v4079
    %4233 = vst.msk [vmem:[#allocation3 + $0x140] sm:$0xff] %vm4192, %v4081
    %4234 = vst.msk [vmem:[#allocation3 + $0x148] sm:$0xff] %vm4192, %v4083
    %4235 = vst.msk [vmem:[#allocation3 + $0x150] sm:$0xff] %vm4192, %v4085
    %4236 = vst.msk [vmem:[#allocation3 + $0x158] sm:$0xff] %vm4192, %v4087
    %4237 = vst.msk [vmem:[#allocation3 + $0x160] sm:$0xff] %vm4192, %v4089
    %4238 = vst.msk [vmem:[#allocation3 + $0x168] sm:$0xff] %vm4192, %v4091
    %4239 = vst.msk [vmem:[#allocation3 + $0x170] sm:$0xff] %vm4192, %v4093
    %4240 = vst.msk [vmem:[#allocation3 + $0x178] sm:$0xff] %vm4192, %v4095
    %4241 = vst.msk [vmem:[#allocation3 + $0x180] sm:$0xff] %vm4192, %v4097
    %4242 = vst.msk [vmem:[#allocation3 + $0x188] sm:$0xff] %vm4192, %v4099
    %4243 = vst.msk [vmem:[#allocation3 + $0x190] sm:$0xff] %vm4192, %v4101
    %4244 = vst.msk [vmem:[#allocation3 + $0x198] sm:$0xff] %vm4192, %v4103
    %4245 = vst.msk [vmem:[#allocation3 + $0x1a0] sm:$0xff] %vm4192, %v4105
    %4246 = vst.msk [vmem:[#allocation3 + $0x1a8] sm:$0xff] %vm4192, %v4107
    %4247 = vst.msk [vmem:[#allocation3 + $0x1b0] sm:$0xff] %vm4192, %v4109
    %4248 = vst.msk [vmem:[#allocation3 + $0x1b8] sm:$0xff] %vm4192, %v4111
    %4249 = vst.msk [vmem:[#allocation3 + $0x1c0] sm:$0xff] %vm4192, %v4113
    %4250 = vst.msk [vmem:[#allocation3 + $0x1c8] sm:$0xff] %vm4192, %v4115
    %4251 = vst.msk [vmem:[#allocation3 + $0x1d0] sm:$0xff] %vm4192, %v4117
    %4252 = vst.msk [vmem:[#allocation3 + $0x1d8] sm:$0xff] %vm4192, %v4119
    %4253 = vst.msk [vmem:[#allocation3 + $0x1e0] sm:$0xff] %vm4192, %v4121
    %4254 = vst.msk [vmem:[#allocation3 + $0x1e8] sm:$0xff] %vm4192, %v4123
    %4255 = vst.msk [vmem:[#allocation3 + $0x1f0] sm:$0xff] %vm4192, %v4125
    %4256 = vst.msk [vmem:[#allocation3 + $0x1f8] sm:$0xff] %vm4192, %v4127
    %v4257 = vld [vmem:[%s213 + $0x3] sm:$0xff]
    %v4258 = vld [vmem:[%s213 + $0xb] sm:$0xff]
    %v4259 = vld [vmem:[%s213 + $0x1b] sm:$0xff]
    %v4260 = vld [vmem:[%s213 + $0x23] sm:$0xff]
    %v4261 = vld [vmem:[%s213 + $0x33] sm:$0xff]
    %v4262 = vld [vmem:[%s213 + $0x3b] sm:$0xff]
    %v4263 = vld [vmem:[%s213 + $0x4b] sm:$0xff]
    %v4264 = vld [vmem:[%s213 + $0x53] sm:$0xff]
    %v4265 = vld [vmem:[%s213 + $0x63] sm:$0xff]
    %v4266 = vld [vmem:[%s213 + $0x6b] sm:$0xff]
    %v4267 = vld [vmem:[%s213 + $0x7b] sm:$0xff]
    %v4268 = vld [vmem:[%s213 + $0x83] sm:$0xff]
    %v4269 = vld [vmem:[%s213 + $0x93] sm:$0xff]
    %v4270 = vld [vmem:[%s213 + $0x9b] sm:$0xff]
    %v4271 = vld [vmem:[%s213 + $0xab] sm:$0xff]
    %v4272 = vld [vmem:[%s213 + $0xb3] sm:$0xff]
    %v4273 = vld [vmem:[%s213 + $0xc3] sm:$0xff]
    %v4274 = vld [vmem:[%s213 + $0xcb] sm:$0xff]
    %v4275 = vld [vmem:[%s213 + $0xdb] sm:$0xff]
    %v4276 = vld [vmem:[%s213 + $0xe3] sm:$0xff]
    %v4277 = vld [vmem:[%s213 + $0xf3] sm:$0xff]
    %v4278 = vld [vmem:[%s213 + $0xfb] sm:$0xff]
    %v4279 = vld [vmem:[%s213 + $0x10b] sm:$0xff]
    %v4280 = vld [vmem:[%s213 + $0x113] sm:$0xff]
    %v4281 = vld [vmem:[%s213 + $0x123] sm:$0xff]
    %v4282 = vld [vmem:[%s213 + $0x12b] sm:$0xff]
    %v4283 = vld [vmem:[%s213 + $0x13b] sm:$0xff]
    %v4284 = vld [vmem:[%s213 + $0x143] sm:$0xff]
    %v4285 = vld [vmem:[%s213 + $0x153] sm:$0xff]
    %v4286 = vld [vmem:[%s213 + $0x15b] sm:$0xff]
    %v4287 = vld [vmem:[%s213 + $0x16b] sm:$0xff]
    %v4288 = vld [vmem:[%s213 + $0x173] sm:$0xff]
    %v4289 = vld [vmem:[%s213 + $0x1cb] sm:$0xff]
    %v4290 = vld [vmem:[%s213 + $0x1d3] sm:$0xff]
    %v4291 = vld [vmem:[%s213 + $0x1e3] sm:$0xff]
    %v4292 = vld [vmem:[%s213 + $0x1eb] sm:$0xff]
    %v4293 = vld [vmem:[%s213 + $0x1fb] sm:$0xff]
    %v4294 = vld [vmem:[%s213 + $0x203] sm:$0xff]
    %v4295 = vld [vmem:[%s213 + $0x213] sm:$0xff]
    %v4296 = vld [vmem:[%s213 + $0x21b] sm:$0xff]
    %v4297 = vld [vmem:[%s213 + $0x22b] sm:$0xff]
    %v4298 = vld [vmem:[%s213 + $0x233] sm:$0xff]
    %v4299 = vld [vmem:[%s213 + $0x243] sm:$0xff]
    %v4300 = vld [vmem:[%s213 + $0x24b] sm:$0xff]
    %v4301 = vld [vmem:[%s213 + $0x25b] sm:$0xff]
    %v4302 = vld [vmem:[%s213 + $0x263] sm:$0xff]
    %v4303 = vld [vmem:[%s213 + $0x273] sm:$0xff]
    %v4304 = vld [vmem:[%s213 + $0x27b] sm:$0xff]
    %v4305 = vld [vmem:[%s213 + $0x28b] sm:$0xff]
    %v4306 = vld [vmem:[%s213 + $0x293] sm:$0xff]
    %v4307 = vld [vmem:[%s213 + $0x2a3] sm:$0xff]
    %v4308 = vld [vmem:[%s213 + $0x2ab] sm:$0xff]
    %v4309 = vld [vmem:[%s213 + $0x2bb] sm:$0xff]
    %v4310 = vld [vmem:[%s213 + $0x2c3] sm:$0xff]
    %v4311 = vld [vmem:[%s213 + $0x2d3] sm:$0xff]
    %v4312 = vld [vmem:[%s213 + $0x2db] sm:$0xff]
    %v4313 = vld [vmem:[%s213 + $0x2eb] sm:$0xff]
    %v4314 = vld [vmem:[%s213 + $0x2f3] sm:$0xff]
    %v4315 = vld [vmem:[%s213 + $0x303] sm:$0xff]
    %v4316 = vld [vmem:[%s213 + $0x30b] sm:$0xff]
    %v4317 = vld [vmem:[%s213 + $0x31b] sm:$0xff]
    %v4318 = vld [vmem:[%s213 + $0x323] sm:$0xff]
    %v4319 = vld [vmem:[%s213 + $0x333] sm:$0xff]
    %v4320 = vld [vmem:[%s213 + $0x33b] sm:$0xff]
    %4385 = vrot.lane.b32.xlu0 %v4257, 44
    %v4386 = vpop.permute.xlu0 %4385
    %4387 = vrot.lane.b32.xlu0 %v4258, 44
    %v4388 = vpop.permute.xlu0 %4387
    %4389 = vrot.lane.b32.xlu0 %v4259, 44
    %v4390 = vpop.permute.xlu0 %4389
    %4391 = vrot.lane.b32.xlu0 %v4260, 44
    %v4392 = vpop.permute.xlu0 %4391
    %4393 = vrot.lane.b32.xlu0 %v4261, 44
    %v4394 = vpop.permute.xlu0 %4393
    %4395 = vrot.lane.b32.xlu0 %v4262, 44
    %v4396 = vpop.permute.xlu0 %4395
    %4397 = vrot.lane.b32.xlu0 %v4263, 44
    %v4398 = vpop.permute.xlu0 %4397
    %4399 = vrot.lane.b32.xlu0 %v4264, 44
    %v4400 = vpop.permute.xlu0 %4399
    %4401 = vrot.lane.b32.xlu0 %v4265, 44
    %v4402 = vpop.permute.xlu0 %4401
    %4403 = vrot.lane.b32.xlu0 %v4266, 44
    %v4404 = vpop.permute.xlu0 %4403
    %4405 = vrot.lane.b32.xlu0 %v4267, 44
    %v4406 = vpop.permute.xlu0 %4405
    %4407 = vrot.lane.b32.xlu0 %v4268, 44
    %v4408 = vpop.permute.xlu0 %4407
    %4409 = vrot.lane.b32.xlu0 %v4269, 44
    %v4410 = vpop.permute.xlu0 %4409
    %4411 = vrot.lane.b32.xlu0 %v4270, 44
    %v4412 = vpop.permute.xlu0 %4411
    %4413 = vrot.lane.b32.xlu0 %v4271, 44
    %v4414 = vpop.permute.xlu0 %4413
    %4415 = vrot.lane.b32.xlu0 %v4272, 44
    %v4416 = vpop.permute.xlu0 %4415
    %4417 = vrot.lane.b32.xlu0 %v4273, 44
    %v4418 = vpop.permute.xlu0 %4417
    %4419 = vrot.lane.b32.xlu0 %v4274, 44
    %v4420 = vpop.permute.xlu0 %4419
    %4421 = vrot.lane.b32.xlu0 %v4275, 44
    %v4422 = vpop.permute.xlu0 %4421
    %4423 = vrot.lane.b32.xlu0 %v4276, 44
    %v4424 = vpop.permute.xlu0 %4423
    %4425 = vrot.lane.b32.xlu0 %v4277, 44
    %v4426 = vpop.permute.xlu0 %4425
    %4427 = vrot.lane.b32.xlu0 %v4278, 44
    %v4428 = vpop.permute.xlu0 %4427
    %4429 = vrot.lane.b32.xlu0 %v4279, 44
    %v4430 = vpop.permute.xlu0 %4429
    %4431 = vrot.lane.b32.xlu0 %v4280, 44
    %v4432 = vpop.permute.xlu0 %4431
    %4433 = vrot.lane.b32.xlu0 %v4281, 44
    %v4434 = vpop.permute.xlu0 %4433
    %4435 = vrot.lane.b32.xlu0 %v4282, 44
    %v4436 = vpop.permute.xlu0 %4435
    %4437 = vrot.lane.b32.xlu0 %v4283, 44
    %v4438 = vpop.permute.xlu0 %4437
    %4439 = vrot.lane.b32.xlu0 %v4284, 44
    %v4440 = vpop.permute.xlu0 %4439
    %4441 = vrot.lane.b32.xlu0 %v4285, 44
    %v4442 = vpop.permute.xlu0 %4441
    %4443 = vrot.lane.b32.xlu0 %v4286, 44
    %v4444 = vpop.permute.xlu0 %4443
    %4445 = vrot.lane.b32.xlu0 %v4287, 44
    %v4446 = vpop.permute.xlu0 %4445
    %4447 = vrot.lane.b32.xlu0 %v4288, 44
    %v4448 = vpop.permute.xlu0 %4447
    %4449 = vrot.lane.b32.xlu0 %v4289, 44
    %v4450 = vpop.permute.xlu0 %4449
    %4451 = vrot.lane.b32.xlu0 %v4290, 44
    %v4452 = vpop.permute.xlu0 %4451
    %4453 = vrot.lane.b32.xlu0 %v4291, 44
    %v4454 = vpop.permute.xlu0 %4453
    %4455 = vrot.lane.b32.xlu0 %v4292, 44
    %v4456 = vpop.permute.xlu0 %4455
    %4457 = vrot.lane.b32.xlu0 %v4293, 44
    %v4458 = vpop.permute.xlu0 %4457
    %4459 = vrot.lane.b32.xlu0 %v4294, 44
    %v4460 = vpop.permute.xlu0 %4459
    %4461 = vrot.lane.b32.xlu0 %v4295, 44
    %v4462 = vpop.permute.xlu0 %4461
    %4463 = vrot.lane.b32.xlu0 %v4296, 44
    %v4464 = vpop.permute.xlu0 %4463
    %4465 = vrot.lane.b32.xlu0 %v4297, 44
    %v4466 = vpop.permute.xlu0 %4465
    %4467 = vrot.lane.b32.xlu0 %v4298, 44
    %v4468 = vpop.permute.xlu0 %4467
    %4469 = vrot.lane.b32.xlu0 %v4299, 44
    %v4470 = vpop.permute.xlu0 %4469
    %4471 = vrot.lane.b32.xlu0 %v4300, 44
    %v4472 = vpop.permute.xlu0 %4471
    %4473 = vrot.lane.b32.xlu0 %v4301, 44
    %v4474 = vpop.permute.xlu0 %4473
    %4475 = vrot.lane.b32.xlu0 %v4302, 44
    %v4476 = vpop.permute.xlu0 %4475
    %4477 = vrot.lane.b32.xlu0 %v4303, 44
    %v4478 = vpop.permute.xlu0 %4477
    %4479 = vrot.lane.b32.xlu0 %v4304, 44
    %v4480 = vpop.permute.xlu0 %4479
    %4481 = vrot.lane.b32.xlu0 %v4305, 44
    %v4482 = vpop.permute.xlu0 %4481
    %4483 = vrot.lane.b32.xlu0 %v4306, 44
    %v4484 = vpop.permute.xlu0 %4483
    %4485 = vrot.lane.b32.xlu0 %v4307, 44
    %v4486 = vpop.permute.xlu0 %4485
    %4487 = vrot.lane.b32.xlu0 %v4308, 44
    %v4488 = vpop.permute.xlu0 %4487
    %4489 = vrot.lane.b32.xlu0 %v4309, 44
    %v4490 = vpop.permute.xlu0 %4489
    %4491 = vrot.lane.b32.xlu0 %v4310, 44
    %v4492 = vpop.permute.xlu0 %4491
    %4493 = vrot.lane.b32.xlu0 %v4311, 44
    %v4494 = vpop.permute.xlu0 %4493
    %4495 = vrot.lane.b32.xlu0 %v4312, 44
    %v4496 = vpop.permute.xlu0 %4495
    %4497 = vrot.lane.b32.xlu0 %v4313, 44
    %v4498 = vpop.permute.xlu0 %4497
    %4499 = vrot.lane.b32.xlu0 %v4314, 44
    %v4500 = vpop.permute.xlu0 %4499
    %4501 = vrot.lane.b32.xlu0 %v4315, 44
    %v4502 = vpop.permute.xlu0 %4501
    %4503 = vrot.lane.b32.xlu0 %v4316, 44
    %v4504 = vpop.permute.xlu0 %4503
    %4505 = vrot.lane.b32.xlu0 %v4317, 44
    %v4506 = vpop.permute.xlu0 %4505
    %4507 = vrot.lane.b32.xlu0 %v4318, 44
    %v4508 = vpop.permute.xlu0 %4507
    %4509 = vrot.lane.b32.xlu0 %v4319, 44
    %v4510 = vpop.permute.xlu0 %4509
    %4511 = vrot.lane.b32.xlu0 %v4320, 44
    %v4512 = vpop.permute.xlu0 %4511
    %vm4577 = vcmask 392544
    %4578 = vst.msk [vmem:[#allocation3] sm:$0xff] %vm4577, %v4386
    %4579 = vst.msk [vmem:[#allocation3 + $0x8] sm:$0xff] %vm4577, %v4388
    %4580 = vst.msk [vmem:[#allocation3 + $0x10] sm:$0xff] %vm4577, %v4390
    %4581 = vst.msk [vmem:[#allocation3 + $0x18] sm:$0xff] %vm4577, %v4392
    %4582 = vst.msk [vmem:[#allocation3 + $0x20] sm:$0xff] %vm4577, %v4394
    %4583 = vst.msk [vmem:[#allocation3 + $0x28] sm:$0xff] %vm4577, %v4396
    %4584 = vst.msk [vmem:[#allocation3 + $0x30] sm:$0xff] %vm4577, %v4398
    %4585 = vst.msk [vmem:[#allocation3 + $0x38] sm:$0xff] %vm4577, %v4400
    %4586 = vst.msk [vmem:[#allocation3 + $0x40] sm:$0xff] %vm4577, %v4402
    %4587 = vst.msk [vmem:[#allocation3 + $0x48] sm:$0xff] %vm4577, %v4404
    %4588 = vst.msk [vmem:[#allocation3 + $0x50] sm:$0xff] %vm4577, %v4406
    %4589 = vst.msk [vmem:[#allocation3 + $0x58] sm:$0xff] %vm4577, %v4408
    %4590 = vst.msk [vmem:[#allocation3 + $0x60] sm:$0xff] %vm4577, %v4410
    %4591 = vst.msk [vmem:[#allocation3 + $0x68] sm:$0xff] %vm4577, %v4412
    %4592 = vst.msk [vmem:[#allocation3 + $0x70] sm:$0xff] %vm4577, %v4414
    %4593 = vst.msk [vmem:[#allocation3 + $0x78] sm:$0xff] %vm4577, %v4416
    %4594 = vst.msk [vmem:[#allocation3 + $0x80] sm:$0xff] %vm4577, %v4418
    %4595 = vst.msk [vmem:[#allocation3 + $0x88] sm:$0xff] %vm4577, %v4420
    %4596 = vst.msk [vmem:[#allocation3 + $0x90] sm:$0xff] %vm4577, %v4422
    %4597 = vst.msk [vmem:[#allocation3 + $0x98] sm:$0xff] %vm4577, %v4424
    %4598 = vst.msk [vmem:[#allocation3 + $0xa0] sm:$0xff] %vm4577, %v4426
    %4599 = vst.msk [vmem:[#allocation3 + $0xa8] sm:$0xff] %vm4577, %v4428
    %4600 = vst.msk [vmem:[#allocation3 + $0xb0] sm:$0xff] %vm4577, %v4430
    %4601 = vst.msk [vmem:[#allocation3 + $0xb8] sm:$0xff] %vm4577, %v4432
    %4602 = vst.msk [vmem:[#allocation3 + $0xc0] sm:$0xff] %vm4577, %v4434
    %4603 = vst.msk [vmem:[#allocation3 + $0xc8] sm:$0xff] %vm4577, %v4436
    %4604 = vst.msk [vmem:[#allocation3 + $0xd0] sm:$0xff] %vm4577, %v4438
    %4605 = vst.msk [vmem:[#allocation3 + $0xd8] sm:$0xff] %vm4577, %v4440
    %4606 = vst.msk [vmem:[#allocation3 + $0xe0] sm:$0xff] %vm4577, %v4442
    %4607 = vst.msk [vmem:[#allocation3 + $0xe8] sm:$0xff] %vm4577, %v4444
    %4608 = vst.msk [vmem:[#allocation3 + $0xf0] sm:$0xff] %vm4577, %v4446
    %4609 = vst.msk [vmem:[#allocation3 + $0xf8] sm:$0xff] %vm4577, %v4448
    %4610 = vst.msk [vmem:[#allocation3 + $0x100] sm:$0xff] %vm4577, %v4450
    %4611 = vst.msk [vmem:[#allocation3 + $0x108] sm:$0xff] %vm4577, %v4452
    %4612 = vst.msk [vmem:[#allocation3 + $0x110] sm:$0xff] %vm4577, %v4454
    %4613 = vst.msk [vmem:[#allocation3 + $0x118] sm:$0xff] %vm4577, %v4456
    %4614 = vst.msk [vmem:[#allocation3 + $0x120] sm:$0xff] %vm4577, %v4458
    %4615 = vst.msk [vmem:[#allocation3 + $0x128] sm:$0xff] %vm4577, %v4460
    %4616 = vst.msk [vmem:[#allocation3 + $0x130] sm:$0xff] %vm4577, %v4462
    %4617 = vst.msk [vmem:[#allocation3 + $0x138] sm:$0xff] %vm4577, %v4464
    %4618 = vst.msk [vmem:[#allocation3 + $0x140] sm:$0xff] %vm4577, %v4466
    %4619 = vst.msk [vmem:[#allocation3 + $0x148] sm:$0xff] %vm4577, %v4468
    %4620 = vst.msk [vmem:[#allocation3 + $0x150] sm:$0xff] %vm4577, %v4470
    %4621 = vst.msk [vmem:[#allocation3 + $0x158] sm:$0xff] %vm4577, %v4472
    %4622 = vst.msk [vmem:[#allocation3 + $0x160] sm:$0xff] %vm4577, %v4474
    %4623 = vst.msk [vmem:[#allocation3 + $0x168] sm:$0xff] %vm4577, %v4476
    %4624 = vst.msk [vmem:[#allocation3 + $0x170] sm:$0xff] %vm4577, %v4478
    %4625 = vst.msk [vmem:[#allocation3 + $0x178] sm:$0xff] %vm4577, %v4480
    %4626 = vst.msk [vmem:[#allocation3 + $0x180] sm:$0xff] %vm4577, %v4482
    %4627 = vst.msk [vmem:[#allocation3 + $0x188] sm:$0xff] %vm4577, %v4484
    %4628 = vst.msk [vmem:[#allocation3 + $0x190] sm:$0xff] %vm4577, %v4486
    %4629 = vst.msk [vmem:[#allocation3 + $0x198] sm:$0xff] %vm4577, %v4488
    %4630 = vst.msk [vmem:[#allocation3 + $0x1a0] sm:$0xff] %vm4577, %v4490
    %4631 = vst.msk [vmem:[#allocation3 + $0x1a8] sm:$0xff] %vm4577, %v4492
    %4632 = vst.msk [vmem:[#allocation3 + $0x1b0] sm:$0xff] %vm4577, %v4494
    %4633 = vst.msk [vmem:[#allocation3 + $0x1b8] sm:$0xff] %vm4577, %v4496
    %4634 = vst.msk [vmem:[#allocation3 + $0x1c0] sm:$0xff] %vm4577, %v4498
    %4635 = vst.msk [vmem:[#allocation3 + $0x1c8] sm:$0xff] %vm4577, %v4500
    %4636 = vst.msk [vmem:[#allocation3 + $0x1d0] sm:$0xff] %vm4577, %v4502
    %4637 = vst.msk [vmem:[#allocation3 + $0x1d8] sm:$0xff] %vm4577, %v4504
    %4638 = vst.msk [vmem:[#allocation3 + $0x1e0] sm:$0xff] %vm4577, %v4506
    %4639 = vst.msk [vmem:[#allocation3 + $0x1e8] sm:$0xff] %vm4577, %v4508
    %4640 = vst.msk [vmem:[#allocation3 + $0x1f0] sm:$0xff] %vm4577, %v4510
    %4641 = vst.msk [vmem:[#allocation3 + $0x1f8] sm:$0xff] %vm4577, %v4512
    %s4642 = scalar_lea.vmem [#allocation2], 72
    %v4643 = vld [vmem:[%s4642] sm:$0xff]
    %v4644 = vld [vmem:[%s4642 + $0x8] sm:$0xff]
    %v4645 = vld [vmem:[%s4642 + $0x18] sm:$0xff]
    %v4646 = vld [vmem:[%s4642 + $0x20] sm:$0xff]
    %v4647 = vld [vmem:[%s4642 + $0x30] sm:$0xff]
    %v4648 = vld [vmem:[%s4642 + $0x38] sm:$0xff]
    %v4649 = vld [vmem:[%s4642 + $0x48] sm:$0xff]
    %v4650 = vld [vmem:[%s4642 + $0x50] sm:$0xff]
    %v4651 = vld [vmem:[%s4642 + $0x60] sm:$0xff]
    %v4652 = vld [vmem:[%s4642 + $0x68] sm:$0xff]
    %v4653 = vld [vmem:[%s4642 + $0x78] sm:$0xff]
    %v4654 = vld [vmem:[%s4642 + $0x80] sm:$0xff]
    %v4655 = vld [vmem:[%s4642 + $0x90] sm:$0xff]
    %v4656 = vld [vmem:[%s4642 + $0x98] sm:$0xff]
    %v4657 = vld [vmem:[%s4642 + $0xa8] sm:$0xff]
    %v4658 = vld [vmem:[%s4642 + $0xb0] sm:$0xff]
    %v4659 = vld [vmem:[%s4642 + $0xc0] sm:$0xff]
    %v4660 = vld [vmem:[%s4642 + $0xc8] sm:$0xff]
    %v4661 = vld [vmem:[%s4642 + $0xd8] sm:$0xff]
    %v4662 = vld [vmem:[%s4642 + $0xe0] sm:$0xff]
    %v4663 = vld [vmem:[%s4642 + $0xf0] sm:$0xff]
    %v4664 = vld [vmem:[%s4642 + $0xf8] sm:$0xff]
    %v4665 = vld [vmem:[%s4642 + $0x108] sm:$0xff]
    %v4666 = vld [vmem:[%s4642 + $0x110] sm:$0xff]
    %v4667 = vld [vmem:[%s4642 + $0x120] sm:$0xff]
    %v4668 = vld [vmem:[%s4642 + $0x128] sm:$0xff]
    %v4669 = vld [vmem:[%s4642 + $0x138] sm:$0xff]
    %v4670 = vld [vmem:[%s4642 + $0x140] sm:$0xff]
    %v4671 = vld [vmem:[%s4642 + $0x150] sm:$0xff]
    %v4672 = vld [vmem:[%s4642 + $0x158] sm:$0xff]
    %v4673 = vld [vmem:[%s4642 + $0x168] sm:$0xff]
    %v4674 = vld [vmem:[%s4642 + $0x170] sm:$0xff]
    %v4675 = vld [vmem:[%s4642 + $0x1c8] sm:$0xff]
    %v4676 = vld [vmem:[%s4642 + $0x1d0] sm:$0xff]
    %v4677 = vld [vmem:[%s4642 + $0x1e0] sm:$0xff]
    %v4678 = vld [vmem:[%s4642 + $0x1e8] sm:$0xff]
    %v4679 = vld [vmem:[%s4642 + $0x1f8] sm:$0xff]
    %v4680 = vld [vmem:[%s4642 + $0x200] sm:$0xff]
    %v4681 = vld [vmem:[%s4642 + $0x210] sm:$0xff]
    %v4682 = vld [vmem:[%s4642 + $0x218] sm:$0xff]
    %v4683 = vld [vmem:[%s4642 + $0x228] sm:$0xff]
    %v4684 = vld [vmem:[%s4642 + $0x230] sm:$0xff]
    %v4685 = vld [vmem:[%s4642 + $0x240] sm:$0xff]
    %v4686 = vld [vmem:[%s4642 + $0x248] sm:$0xff]
    %v4687 = vld [vmem:[%s4642 + $0x258] sm:$0xff]
    %v4688 = vld [vmem:[%s4642 + $0x260] sm:$0xff]
    %v4689 = vld [vmem:[%s4642 + $0x270] sm:$0xff]
    %v4690 = vld [vmem:[%s4642 + $0x278] sm:$0xff]
    %v4691 = vld [vmem:[%s4642 + $0x288] sm:$0xff]
    %v4692 = vld [vmem:[%s4642 + $0x290] sm:$0xff]
    %v4693 = vld [vmem:[%s4642 + $0x2a0] sm:$0xff]
    %v4694 = vld [vmem:[%s4642 + $0x2a8] sm:$0xff]
    %v4695 = vld [vmem:[%s4642 + $0x2b8] sm:$0xff]
    %v4696 = vld [vmem:[%s4642 + $0x2c0] sm:$0xff]
    %v4697 = vld [vmem:[%s4642 + $0x2d0] sm:$0xff]
    %v4698 = vld [vmem:[%s4642 + $0x2d8] sm:$0xff]
    %v4699 = vld [vmem:[%s4642 + $0x2e8] sm:$0xff]
    %v4700 = vld [vmem:[%s4642 + $0x2f0] sm:$0xff]
    %v4701 = vld [vmem:[%s4642 + $0x300] sm:$0xff]
    %v4702 = vld [vmem:[%s4642 + $0x308] sm:$0xff]
    %v4703 = vld [vmem:[%s4642 + $0x318] sm:$0xff]
    %v4704 = vld [vmem:[%s4642 + $0x320] sm:$0xff]
    %v4705 = vld [vmem:[%s4642 + $0x330] sm:$0xff]
    %v4706 = vld [vmem:[%s4642 + $0x338] sm:$0xff]
    %4771 = vrot.lane.b32.xlu0 %v4643, 48
    %v4772 = vpop.permute.xlu0 %4771
    %4773 = vrot.lane.b32.xlu0 %v4644, 48
    %v4774 = vpop.permute.xlu0 %4773
    %4775 = vrot.lane.b32.xlu0 %v4645, 48
    %v4776 = vpop.permute.xlu0 %4775
    %4777 = vrot.lane.b32.xlu0 %v4646, 48
    %v4778 = vpop.permute.xlu0 %4777
    %4779 = vrot.lane.b32.xlu0 %v4647, 48
    %v4780 = vpop.permute.xlu0 %4779
    %4781 = vrot.lane.b32.xlu0 %v4648, 48
    %v4782 = vpop.permute.xlu0 %4781
    %4783 = vrot.lane.b32.xlu0 %v4649, 48
    %v4784 = vpop.permute.xlu0 %4783
    %4785 = vrot.lane.b32.xlu0 %v4650, 48
    %v4786 = vpop.permute.xlu0 %4785
    %4787 = vrot.lane.b32.xlu0 %v4651, 48
    %v4788 = vpop.permute.xlu0 %4787
    %4789 = vrot.lane.b32.xlu0 %v4652, 48
    %v4790 = vpop.permute.xlu0 %4789
    %4791 = vrot.lane.b32.xlu0 %v4653, 48
    %v4792 = vpop.permute.xlu0 %4791
    %4793 = vrot.lane.b32.xlu0 %v4654, 48
    %v4794 = vpop.permute.xlu0 %4793
    %4795 = vrot.lane.b32.xlu0 %v4655, 48
    %v4796 = vpop.permute.xlu0 %4795
    %4797 = vrot.lane.b32.xlu0 %v4656, 48
    %v4798 = vpop.permute.xlu0 %4797
    %4799 = vrot.lane.b32.xlu0 %v4657, 48
    %v4800 = vpop.permute.xlu0 %4799
    %4801 = vrot.lane.b32.xlu0 %v4658, 48
    %v4802 = vpop.permute.xlu0 %4801
    %4803 = vrot.lane.b32.xlu0 %v4659, 48
    %v4804 = vpop.permute.xlu0 %4803
    %4805 = vrot.lane.b32.xlu0 %v4660, 48
    %v4806 = vpop.permute.xlu0 %4805
    %4807 = vrot.lane.b32.xlu0 %v4661, 48
    %v4808 = vpop.permute.xlu0 %4807
    %4809 = vrot.lane.b32.xlu0 %v4662, 48
    %v4810 = vpop.permute.xlu0 %4809
    %4811 = vrot.lane.b32.xlu0 %v4663, 48
    %v4812 = vpop.permute.xlu0 %4811
    %4813 = vrot.lane.b32.xlu0 %v4664, 48
    %v4814 = vpop.permute.xlu0 %4813
    %4815 = vrot.lane.b32.xlu0 %v4665, 48
    %v4816 = vpop.permute.xlu0 %4815
    %4817 = vrot.lane.b32.xlu0 %v4666, 48
    %v4818 = vpop.permute.xlu0 %4817
    %4819 = vrot.lane.b32.xlu0 %v4667, 48
    %v4820 = vpop.permute.xlu0 %4819
    %4821 = vrot.lane.b32.xlu0 %v4668, 48
    %v4822 = vpop.permute.xlu0 %4821
    %4823 = vrot.lane.b32.xlu0 %v4669, 48
    %v4824 = vpop.permute.xlu0 %4823
    %4825 = vrot.lane.b32.xlu0 %v4670, 48
    %v4826 = vpop.permute.xlu0 %4825
    %4827 = vrot.lane.b32.xlu0 %v4671, 48
    %v4828 = vpop.permute.xlu0 %4827
    %4829 = vrot.lane.b32.xlu0 %v4672, 48
    %v4830 = vpop.permute.xlu0 %4829
    %4831 = vrot.lane.b32.xlu0 %v4673, 48
    %v4832 = vpop.permute.xlu0 %4831
    %4833 = vrot.lane.b32.xlu0 %v4674, 48
    %v4834 = vpop.permute.xlu0 %4833
    %4835 = vrot.lane.b32.xlu0 %v4675, 48
    %v4836 = vpop.permute.xlu0 %4835
    %4837 = vrot.lane.b32.xlu0 %v4676, 48
    %v4838 = vpop.permute.xlu0 %4837
    %4839 = vrot.lane.b32.xlu0 %v4677, 48
    %v4840 = vpop.permute.xlu0 %4839
    %4841 = vrot.lane.b32.xlu0 %v4678, 48
    %v4842 = vpop.permute.xlu0 %4841
    %4843 = vrot.lane.b32.xlu0 %v4679, 48
    %v4844 = vpop.permute.xlu0 %4843
    %4845 = vrot.lane.b32.xlu0 %v4680, 48
    %v4846 = vpop.permute.xlu0 %4845
    %4847 = vrot.lane.b32.xlu0 %v4681, 48
    %v4848 = vpop.permute.xlu0 %4847
    %4849 = vrot.lane.b32.xlu0 %v4682, 48
    %v4850 = vpop.permute.xlu0 %4849
    %4851 = vrot.lane.b32.xlu0 %v4683, 48
    %v4852 = vpop.permute.xlu0 %4851
    %4853 = vrot.lane.b32.xlu0 %v4684, 48
    %v4854 = vpop.permute.xlu0 %4853
    %4855 = vrot.lane.b32.xlu0 %v4685, 48
    %v4856 = vpop.permute.xlu0 %4855
    %4857 = vrot.lane.b32.xlu0 %v4686, 48
    %v4858 = vpop.permute.xlu0 %4857
    %4859 = vrot.lane.b32.xlu0 %v4687, 48
    %v4860 = vpop.permute.xlu0 %4859
    %4861 = vrot.lane.b32.xlu0 %v4688, 48
    %v4862 = vpop.permute.xlu0 %4861
    %4863 = vrot.lane.b32.xlu0 %v4689, 48
    %v4864 = vpop.permute.xlu0 %4863
    %4865 = vrot.lane.b32.xlu0 %v4690, 48
    %v4866 = vpop.permute.xlu0 %4865
    %4867 = vrot.lane.b32.xlu0 %v4691, 48
    %v4868 = vpop.permute.xlu0 %4867
    %4869 = vrot.lane.b32.xlu0 %v4692, 48
    %v4870 = vpop.permute.xlu0 %4869
    %4871 = vrot.lane.b32.xlu0 %v4693, 48
    %v4872 = vpop.permute.xlu0 %4871
    %4873 = vrot.lane.b32.xlu0 %v4694, 48
    %v4874 = vpop.permute.xlu0 %4873
    %4875 = vrot.lane.b32.xlu0 %v4695, 48
    %v4876 = vpop.permute.xlu0 %4875
    %4877 = vrot.lane.b32.xlu0 %v4696, 48
    %v4878 = vpop.permute.xlu0 %4877
    %4879 = vrot.lane.b32.xlu0 %v4697, 48
    %v4880 = vpop.permute.xlu0 %4879
    %4881 = vrot.lane.b32.xlu0 %v4698, 48
    %v4882 = vpop.permute.xlu0 %4881
    %4883 = vrot.lane.b32.xlu0 %v4699, 48
    %v4884 = vpop.permute.xlu0 %4883
    %4885 = vrot.lane.b32.xlu0 %v4700, 48
    %v4886 = vpop.permute.xlu0 %4885
    %4887 = vrot.lane.b32.xlu0 %v4701, 48
    %v4888 = vpop.permute.xlu0 %4887
    %4889 = vrot.lane.b32.xlu0 %v4702, 48
    %v4890 = vpop.permute.xlu0 %4889
    %4891 = vrot.lane.b32.xlu0 %v4703, 48
    %v4892 = vpop.permute.xlu0 %4891
    %4893 = vrot.lane.b32.xlu0 %v4704, 48
    %v4894 = vpop.permute.xlu0 %4893
    %4895 = vrot.lane.b32.xlu0 %v4705, 48
    %v4896 = vpop.permute.xlu0 %4895
    %4897 = vrot.lane.b32.xlu0 %v4706, 48
    %v4898 = vpop.permute.xlu0 %4897
    %vm4963 = vcmask 425344
    %4964 = vst.msk [vmem:[#allocation3] sm:$0xff] %vm4963, %v4772
    %4965 = vst.msk [vmem:[#allocation3 + $0x8] sm:$0xff] %vm4963, %v4774
    %4966 = vst.msk [vmem:[#allocation3 + $0x10] sm:$0xff] %vm4963, %v4776
    %4967 = vst.msk [vmem:[#allocation3 + $0x18] sm:$0xff] %vm4963, %v4778
    %4968 = vst.msk [vmem:[#allocation3 + $0x20] sm:$0xff] %vm4963, %v4780
    %4969 = vst.msk [vmem:[#allocation3 + $0x28] sm:$0xff] %vm4963, %v4782
    %4970 = vst.msk [vmem:[#allocation3 + $0x30] sm:$0xff] %vm4963, %v4784
    %4971 = vst.msk [vmem:[#allocation3 + $0x38] sm:$0xff] %vm4963, %v4786
    %4972 = vst.msk [vmem:[#allocation3 + $0x40] sm:$0xff] %vm4963, %v4788
    %4973 = vst.msk [vmem:[#allocation3 + $0x48] sm:$0xff] %vm4963, %v4790
    %4974 = vst.msk [vmem:[#allocation3 + $0x50] sm:$0xff] %vm4963, %v4792
    %4975 = vst.msk [vmem:[#allocation3 + $0x58] sm:$0xff] %vm4963, %v4794
    %4976 = vst.msk [vmem:[#allocation3 + $0x60] sm:$0xff] %vm4963, %v4796
    %4977 = vst.msk [vmem:[#allocation3 + $0x68] sm:$0xff] %vm4963, %v4798
    %4978 = vst.msk [vmem:[#allocation3 + $0x70] sm:$0xff] %vm4963, %v4800
    %4979 = vst.msk [vmem:[#allocation3 + $0x78] sm:$0xff] %vm4963, %v4802
    %4980 = vst.msk [vmem:[#allocation3 + $0x80] sm:$0xff] %vm4963, %v4804
    %4981 = vst.msk [vmem:[#allocation3 + $0x88] sm:$0xff] %vm4963, %v4806
    %4982 = vst.msk [vmem:[#allocation3 + $0x90] sm:$0xff] %vm4963, %v4808
    %4983 = vst.msk [vmem:[#allocation3 + $0x98] sm:$0xff] %vm4963, %v4810
    %4984 = vst.msk [vmem:[#allocation3 + $0xa0] sm:$0xff] %vm4963, %v4812
    %4985 = vst.msk [vmem:[#allocation3 + $0xa8] sm:$0xff] %vm4963, %v4814
    %4986 = vst.msk [vmem:[#allocation3 + $0xb0] sm:$0xff] %vm4963, %v4816
    %4987 = vst.msk [vmem:[#allocation3 + $0xb8] sm:$0xff] %vm4963, %v4818
    %4988 = vst.msk [vmem:[#allocation3 + $0xc0] sm:$0xff] %vm4963, %v4820
    %4989 = vst.msk [vmem:[#allocation3 + $0xc8] sm:$0xff] %vm4963, %v4822
    %4990 = vst.msk [vmem:[#allocation3 + $0xd0] sm:$0xff] %vm4963, %v4824
    %4991 = vst.msk [vmem:[#allocation3 + $0xd8] sm:$0xff] %vm4963, %v4826
    %4992 = vst.msk [vmem:[#allocation3 + $0xe0] sm:$0xff] %vm4963, %v4828
    %4993 = vst.msk [vmem:[#allocation3 + $0xe8] sm:$0xff] %vm4963, %v4830
    %4994 = vst.msk [vmem:[#allocation3 + $0xf0] sm:$0xff] %vm4963, %v4832
    %4995 = vst.msk [vmem:[#allocation3 + $0xf8] sm:$0xff] %vm4963, %v4834
    %4996 = vst.msk [vmem:[#allocation3 + $0x100] sm:$0xff] %vm4963, %v4836
    %4997 = vst.msk [vmem:[#allocation3 + $0x108] sm:$0xff] %vm4963, %v4838
    %4998 = vst.msk [vmem:[#allocation3 + $0x110] sm:$0xff] %vm4963, %v4840
    %4999 = vst.msk [vmem:[#allocation3 + $0x118] sm:$0xff] %vm4963, %v4842
    %5000 = vst.msk [vmem:[#allocation3 + $0x120] sm:$0xff] %vm4963, %v4844
    %5001 = vst.msk [vmem:[#allocation3 + $0x128] sm:$0xff] %vm4963, %v4846
    %5002 = vst.msk [vmem:[#allocation3 + $0x130] sm:$0xff] %vm4963, %v4848
    %5003 = vst.msk [vmem:[#allocation3 + $0x138] sm:$0xff] %vm4963, %v4850
    %5004 = vst.msk [vmem:[#allocation3 + $0x140] sm:$0xff] %vm4963, %v4852
    %5005 = vst.msk [vmem:[#allocation3 + $0x148] sm:$0xff] %vm4963, %v4854
    %5006 = vst.msk [vmem:[#allocation3 + $0x150] sm:$0xff] %vm4963, %v4856
    %5007 = vst.msk [vmem:[#allocation3 + $0x158] sm:$0xff] %vm4963, %v4858
    %5008 = vst.msk [vmem:[#allocation3 + $0x160] sm:$0xff] %vm4963, %v4860
    %5009 = vst.msk [vmem:[#allocation3 + $0x168] sm:$0xff] %vm4963, %v4862
    %5010 = vst.msk [vmem:[#allocation3 + $0x170] sm:$0xff] %vm4963, %v4864
    %5011 = vst.msk [vmem:[#allocation3 + $0x178] sm:$0xff] %vm4963, %v4866
    %5012 = vst.msk [vmem:[#allocation3 + $0x180] sm:$0xff] %vm4963, %v4868
    %5013 = vst.msk [vmem:[#allocation3 + $0x188] sm:$0xff] %vm4963, %v4870
    %5014 = vst.msk [vmem:[#allocation3 + $0x190] sm:$0xff] %vm4963, %v4872
    %5015 = vst.msk [vmem:[#allocation3 + $0x198] sm:$0xff] %vm4963, %v4874
    %5016 = vst.msk [vmem:[#allocation3 + $0x1a0] sm:$0xff] %vm4963, %v4876
    %5017 = vst.msk [vmem:[#allocation3 + $0x1a8] sm:$0xff] %vm4963, %v4878
    %5018 = vst.msk [vmem:[#allocation3 + $0x1b0] sm:$0xff] %vm4963, %v4880
    %5019 = vst.msk [vmem:[#allocation3 + $0x1b8] sm:$0xff] %vm4963, %v4882
    %5020 = vst.msk [vmem:[#allocation3 + $0x1c0] sm:$0xff] %vm4963, %v4884
    %5021 = vst.msk [vmem:[#allocation3 + $0x1c8] sm:$0xff] %vm4963, %v4886
    %5022 = vst.msk [vmem:[#allocation3 + $0x1d0] sm:$0xff] %vm4963, %v4888
    %5023 = vst.msk [vmem:[#allocation3 + $0x1d8] sm:$0xff] %vm4963, %v4890
    %5024 = vst.msk [vmem:[#allocation3 + $0x1e0] sm:$0xff] %vm4963, %v4892
    %5025 = vst.msk [vmem:[#allocation3 + $0x1e8] sm:$0xff] %vm4963, %v4894
    %5026 = vst.msk [vmem:[#allocation3 + $0x1f0] sm:$0xff] %vm4963, %v4896
    %5027 = vst.msk [vmem:[#allocation3 + $0x1f8] sm:$0xff] %vm4963, %v4898
    %v5028 = vld [vmem:[%s4642 + $0x1] sm:$0xff]
    %v5029 = vld [vmem:[%s4642 + $0x9] sm:$0xff]
    %v5030 = vld [vmem:[%s4642 + $0x19] sm:$0xff]
    %v5031 = vld [vmem:[%s4642 + $0x21] sm:$0xff]
    %v5032 = vld [vmem:[%s4642 + $0x31] sm:$0xff]
    %v5033 = vld [vmem:[%s4642 + $0x39] sm:$0xff]
    %v5034 = vld [vmem:[%s4642 + $0x49] sm:$0xff]
    %v5035 = vld [vmem:[%s4642 + $0x51] sm:$0xff]
    %v5036 = vld [vmem:[%s4642 + $0x61] sm:$0xff]
    %v5037 = vld [vmem:[%s4642 + $0x69] sm:$0xff]
    %v5038 = vld [vmem:[%s4642 + $0x79] sm:$0xff]
    %v5039 = vld [vmem:[%s4642 + $0x81] sm:$0xff]
    %v5040 = vld [vmem:[%s4642 + $0x91] sm:$0xff]
    %v5041 = vld [vmem:[%s4642 + $0x99] sm:$0xff]
    %v5042 = vld [vmem:[%s4642 + $0xa9] sm:$0xff]
    %v5043 = vld [vmem:[%s4642 + $0xb1] sm:$0xff]
    %v5044 = vld [vmem:[%s4642 + $0xc1] sm:$0xff]
    %v5045 = vld [vmem:[%s4642 + $0xc9] sm:$0xff]
    %v5046 = vld [vmem:[%s4642 + $0xd9] sm:$0xff]
    %v5047 = vld [vmem:[%s4642 + $0xe1] sm:$0xff]
    %v5048 = vld [vmem:[%s4642 + $0xf1] sm:$0xff]
    %v5049 = vld [vmem:[%s4642 + $0xf9] sm:$0xff]
    %v5050 = vld [vmem:[%s4642 + $0x109] sm:$0xff]
    %v5051 = vld [vmem:[%s4642 + $0x111] sm:$0xff]
    %v5052 = vld [vmem:[%s4642 + $0x121] sm:$0xff]
    %v5053 = vld [vmem:[%s4642 + $0x129] sm:$0xff]
    %v5054 = vld [vmem:[%s4642 + $0x139] sm:$0xff]
    %v5055 = vld [vmem:[%s4642 + $0x141] sm:$0xff]
    %v5056 = vld [vmem:[%s4642 + $0x151] sm:$0xff]
    %v5057 = vld [vmem:[%s4642 + $0x159] sm:$0xff]
    %v5058 = vld [vmem:[%s4642 + $0x169] sm:$0xff]
    %v5059 = vld [vmem:[%s4642 + $0x171] sm:$0xff]
    %v5060 = vld [vmem:[%s4642 + $0x1c9] sm:$0xff]
    %v5061 = vld [vmem:[%s4642 + $0x1d1] sm:$0xff]
    %v5062 = vld [vmem:[%s4642 + $0x1e1] sm:$0xff]
    %v5063 = vld [vmem:[%s4642 + $0x1e9] sm:$0xff]
    %v5064 = vld [vmem:[%s4642 + $0x1f9] sm:$0xff]
    %v5065 = vld [vmem:[%s4642 + $0x201] sm:$0xff]
    %v5066 = vld [vmem:[%s4642 + $0x211] sm:$0xff]
    %v5067 = vld [vmem:[%s4642 + $0x219] sm:$0xff]
    %v5068 = vld [vmem:[%s4642 + $0x229] sm:$0xff]
    %v5069 = vld [vmem:[%s4642 + $0x231] sm:$0xff]
    %v5070 = vld [vmem:[%s4642 + $0x241] sm:$0xff]
    %v5071 = vld [vmem:[%s4642 + $0x249] sm:$0xff]
    %v5072 = vld [vmem:[%s4642 + $0x259] sm:$0xff]
    %v5073 = vld [vmem:[%s4642 + $0x261] sm:$0xff]
    %v5074 = vld [vmem:[%s4642 + $0x271] sm:$0xff]
    %v5075 = vld [vmem:[%s4642 + $0x279] sm:$0xff]
    %v5076 = vld [vmem:[%s4642 + $0x289] sm:$0xff]
    %v5077 = vld [vmem:[%s4642 + $0x291] sm:$0xff]
    %v5078 = vld [vmem:[%s4642 + $0x2a1] sm:$0xff]
    %v5079 = vld [vmem:[%s4642 + $0x2a9] sm:$0xff]
    %v5080 = vld [vmem:[%s4642 + $0x2b9] sm:$0xff]
    %v5081 = vld [vmem:[%s4642 + $0x2c1] sm:$0xff]
    %v5082 = vld [vmem:[%s4642 + $0x2d1] sm:$0xff]
    %v5083 = vld [vmem:[%s4642 + $0x2d9] sm:$0xff]
    %v5084 = vld [vmem:[%s4642 + $0x2e9] sm:$0xff]
    %v5085 = vld [vmem:[%s4642 + $0x2f1] sm:$0xff]
    %v5086 = vld [vmem:[%s4642 + $0x301] sm:$0xff]
    %v5087 = vld [vmem:[%s4642 + $0x309] sm:$0xff]
    %v5088 = vld [vmem:[%s4642 + $0x319] sm:$0xff]
    %v5089 = vld [vmem:[%s4642 + $0x321] sm:$0xff]
    %v5090 = vld [vmem:[%s4642 + $0x331] sm:$0xff]
    %v5091 = vld [vmem:[%s4642 + $0x339] sm:$0xff]
    %5156 = vrot.lane.b32.xlu0 %v5028, 52
    %v5157 = vpop.permute.xlu0 %5156
    %5158 = vrot.lane.b32.xlu0 %v5029, 52
    %v5159 = vpop.permute.xlu0 %5158
    %5160 = vrot.lane.b32.xlu0 %v5030, 52
    %v5161 = vpop.permute.xlu0 %5160
    %5162 = vrot.lane.b32.xlu0 %v5031, 52
    %v5163 = vpop.permute.xlu0 %5162
    %5164 = vrot.lane.b32.xlu0 %v5032, 52
    %v5165 = vpop.permute.xlu0 %5164
    %5166 = vrot.lane.b32.xlu0 %v5033, 52
    %v5167 = vpop.permute.xlu0 %5166
    %5168 = vrot.lane.b32.xlu0 %v5034, 52
    %v5169 = vpop.permute.xlu0 %5168
    %5170 = vrot.lane.b32.xlu0 %v5035, 52
    %v5171 = vpop.permute.xlu0 %5170
    %5172 = vrot.lane.b32.xlu0 %v5036, 52
    %v5173 = vpop.permute.xlu0 %5172
    %5174 = vrot.lane.b32.xlu0 %v5037, 52
    %v5175 = vpop.permute.xlu0 %5174
    %5176 = vrot.lane.b32.xlu0 %v5038, 52
    %v5177 = vpop.permute.xlu0 %5176
    %5178 = vrot.lane.b32.xlu0 %v5039, 52
    %v5179 = vpop.permute.xlu0 %5178
    %5180 = vrot.lane.b32.xlu0 %v5040, 52
    %v5181 = vpop.permute.xlu0 %5180
    %5182 = vrot.lane.b32.xlu0 %v5041, 52
    %v5183 = vpop.permute.xlu0 %5182
    %5184 = vrot.lane.b32.xlu0 %v5042, 52
    %v5185 = vpop.permute.xlu0 %5184
    %5186 = vrot.lane.b32.xlu0 %v5043, 52
    %v5187 = vpop.permute.xlu0 %5186
    %5188 = vrot.lane.b32.xlu0 %v5044, 52
    %v5189 = vpop.permute.xlu0 %5188
    %5190 = vrot.lane.b32.xlu0 %v5045, 52
    %v5191 = vpop.permute.xlu0 %5190
    %5192 = vrot.lane.b32.xlu0 %v5046, 52
    %v5193 = vpop.permute.xlu0 %5192
    %5194 = vrot.lane.b32.xlu0 %v5047, 52
    %v5195 = vpop.permute.xlu0 %5194
    %5196 = vrot.lane.b32.xlu0 %v5048, 52
    %v5197 = vpop.permute.xlu0 %5196
    %5198 = vrot.lane.b32.xlu0 %v5049, 52
    %v5199 = vpop.permute.xlu0 %5198
    %5200 = vrot.lane.b32.xlu0 %v5050, 52
    %v5201 = vpop.permute.xlu0 %5200
    %5202 = vrot.lane.b32.xlu0 %v5051, 52
    %v5203 = vpop.permute.xlu0 %5202
    %5204 = vrot.lane.b32.xlu0 %v5052, 52
    %v5205 = vpop.permute.xlu0 %5204
    %5206 = vrot.lane.b32.xlu0 %v5053, 52
    %v5207 = vpop.permute.xlu0 %5206
    %5208 = vrot.lane.b32.xlu0 %v5054, 52
    %v5209 = vpop.permute.xlu0 %5208
    %5210 = vrot.lane.b32.xlu0 %v5055, 52
    %v5211 = vpop.permute.xlu0 %5210
    %5212 = vrot.lane.b32.xlu0 %v5056, 52
    %v5213 = vpop.permute.xlu0 %5212
    %5214 = vrot.lane.b32.xlu0 %v5057, 52
    %v5215 = vpop.permute.xlu0 %5214
    %5216 = vrot.lane.b32.xlu0 %v5058, 52
    %v5217 = vpop.permute.xlu0 %5216
    %5218 = vrot.lane.b32.xlu0 %v5059, 52
    %v5219 = vpop.permute.xlu0 %5218
    %5220 = vrot.lane.b32.xlu0 %v5060, 52
    %v5221 = vpop.permute.xlu0 %5220
    %5222 = vrot.lane.b32.xlu0 %v5061, 52
    %v5223 = vpop.permute.xlu0 %5222
    %5224 = vrot.lane.b32.xlu0 %v5062, 52
    %v5225 = vpop.permute.xlu0 %5224
    %5226 = vrot.lane.b32.xlu0 %v5063, 52
    %v5227 = vpop.permute.xlu0 %5226
    %5228 = vrot.lane.b32.xlu0 %v5064, 52
    %v5229 = vpop.permute.xlu0 %5228
    %5230 = vrot.lane.b32.xlu0 %v5065, 52
    %v5231 = vpop.permute.xlu0 %5230
    %5232 = vrot.lane.b32.xlu0 %v5066, 52
    %v5233 = vpop.permute.xlu0 %5232
    %5234 = vrot.lane.b32.xlu0 %v5067, 52
    %v5235 = vpop.permute.xlu0 %5234
    %5236 = vrot.lane.b32.xlu0 %v5068, 52
    %v5237 = vpop.permute.xlu0 %5236
    %5238 = vrot.lane.b32.xlu0 %v5069, 52
    %v5239 = vpop.permute.xlu0 %5238
    %5240 = vrot.lane.b32.xlu0 %v5070, 52
    %v5241 = vpop.permute.xlu0 %5240
    %5242 = vrot.lane.b32.xlu0 %v5071, 52
    %v5243 = vpop.permute.xlu0 %5242
    %5244 = vrot.lane.b32.xlu0 %v5072, 52
    %v5245 = vpop.permute.xlu0 %5244
    %5246 = vrot.lane.b32.xlu0 %v5073, 52
    %v5247 = vpop.permute.xlu0 %5246
    %5248 = vrot.lane.b32.xlu0 %v5074, 52
    %v5249 = vpop.permute.xlu0 %5248
    %5250 = vrot.lane.b32.xlu0 %v5075, 52
    %v5251 = vpop.permute.xlu0 %5250
    %5252 = vrot.lane.b32.xlu0 %v5076, 52
    %v5253 = vpop.permute.xlu0 %5252
    %5254 = vrot.lane.b32.xlu0 %v5077, 52
    %v5255 = vpop.permute.xlu0 %5254
    %5256 = vrot.lane.b32.xlu0 %v5078, 52
    %v5257 = vpop.permute.xlu0 %5256
    %5258 = vrot.lane.b32.xlu0 %v5079, 52
    %v5259 = vpop.permute.xlu0 %5258
    %5260 = vrot.lane.b32.xlu0 %v5080, 52
    %v5261 = vpop.permute.xlu0 %5260
    %5262 = vrot.lane.b32.xlu0 %v5081, 52
    %v5263 = vpop.permute.xlu0 %5262
    %5264 = vrot.lane.b32.xlu0 %v5082, 52
    %v5265 = vpop.permute.xlu0 %5264
    %5266 = vrot.lane.b32.xlu0 %v5083, 52
    %v5267 = vpop.permute.xlu0 %5266
    %5268 = vrot.lane.b32.xlu0 %v5084, 52
    %v5269 = vpop.permute.xlu0 %5268
    %5270 = vrot.lane.b32.xlu0 %v5085, 52
    %v5271 = vpop.permute.xlu0 %5270
    %5272 = vrot.lane.b32.xlu0 %v5086, 52
    %v5273 = vpop.permute.xlu0 %5272
    %5274 = vrot.lane.b32.xlu0 %v5087, 52
    %v5275 = vpop.permute.xlu0 %5274
    %5276 = vrot.lane.b32.xlu0 %v5088, 52
    %v5277 = vpop.permute.xlu0 %5276
    %5278 = vrot.lane.b32.xlu0 %v5089, 52
    %v5279 = vpop.permute.xlu0 %5278
    %5280 = vrot.lane.b32.xlu0 %v5090, 52
    %v5281 = vpop.permute.xlu0 %5280
    %5282 = vrot.lane.b32.xlu0 %v5091, 52
    %v5283 = vpop.permute.xlu0 %5282
    %vm5348 = vcmask 458144
    %5349 = vst.msk [vmem:[#allocation3] sm:$0xff] %vm5348, %v5157
    %5350 = vst.msk [vmem:[#allocation3 + $0x8] sm:$0xff] %vm5348, %v5159
    %5351 = vst.msk [vmem:[#allocation3 + $0x10] sm:$0xff] %vm5348, %v5161
    %5352 = vst.msk [vmem:[#allocation3 + $0x18] sm:$0xff] %vm5348, %v5163
    %5353 = vst.msk [vmem:[#allocation3 + $0x20] sm:$0xff] %vm5348, %v5165
    %5354 = vst.msk [vmem:[#allocation3 + $0x28] sm:$0xff] %vm5348, %v5167
    %5355 = vst.msk [vmem:[#allocation3 + $0x30] sm:$0xff] %vm5348, %v5169
    %5356 = vst.msk [vmem:[#allocation3 + $0x38] sm:$0xff] %vm5348, %v5171
    %5357 = vst.msk [vmem:[#allocation3 + $0x40] sm:$0xff] %vm5348, %v5173
    %5358 = vst.msk [vmem:[#allocation3 + $0x48] sm:$0xff] %vm5348, %v5175
    %5359 = vst.msk [vmem:[#allocation3 + $0x50] sm:$0xff] %vm5348, %v5177
    %5360 = vst.msk [vmem:[#allocation3 + $0x58] sm:$0xff] %vm5348, %v5179
    %5361 = vst.msk [vmem:[#allocation3 + $0x60] sm:$0xff] %vm5348, %v5181
    %5362 = vst.msk [vmem:[#allocation3 + $0x68] sm:$0xff] %vm5348, %v5183
    %5363 = vst.msk [vmem:[#allocation3 + $0x70] sm:$0xff] %vm5348, %v5185
    %5364 = vst.msk [vmem:[#allocation3 + $0x78] sm:$0xff] %vm5348, %v5187
    %5365 = vst.msk [vmem:[#allocation3 + $0x80] sm:$0xff] %vm5348, %v5189
    %5366 = vst.msk [vmem:[#allocation3 + $0x88] sm:$0xff] %vm5348, %v5191
    %5367 = vst.msk [vmem:[#allocation3 + $0x90] sm:$0xff] %vm5348, %v5193
    %5368 = vst.msk [vmem:[#allocation3 + $0x98] sm:$0xff] %vm5348, %v5195
    %5369 = vst.msk [vmem:[#allocation3 + $0xa0] sm:$0xff] %vm5348, %v5197
    %5370 = vst.msk [vmem:[#allocation3 + $0xa8] sm:$0xff] %vm5348, %v5199
    %5371 = vst.msk [vmem:[#allocation3 + $0xb0] sm:$0xff] %vm5348, %v5201
    %5372 = vst.msk [vmem:[#allocation3 + $0xb8] sm:$0xff] %vm5348, %v5203
    %5373 = vst.msk [vmem:[#allocation3 + $0xc0] sm:$0xff] %vm5348, %v5205
    %5374 = vst.msk [vmem:[#allocation3 + $0xc8] sm:$0xff] %vm5348, %v5207
    %5375 = vst.msk [vmem:[#allocation3 + $0xd0] sm:$0xff] %vm5348, %v5209
    %5376 = vst.msk [vmem:[#allocation3 + $0xd8] sm:$0xff] %vm5348, %v5211
    %5377 = vst.msk [vmem:[#allocation3 + $0xe0] sm:$0xff] %vm5348, %v5213
    %5378 = vst.msk [vmem:[#allocation3 + $0xe8] sm:$0xff] %vm5348, %v5215
    %5379 = vst.msk [vmem:[#allocation3 + $0xf0] sm:$0xff] %vm5348, %v5217
    %5380 = vst.msk [vmem:[#allocation3 + $0xf8] sm:$0xff] %vm5348, %v5219
    %5381 = vst.msk [vmem:[#allocation3 + $0x100] sm:$0xff] %vm5348, %v5221
    %5382 = vst.msk [vmem:[#allocation3 + $0x108] sm:$0xff] %vm5348, %v5223
    %5383 = vst.msk [vmem:[#allocation3 + $0x110] sm:$0xff] %vm5348, %v5225
    %5384 = vst.msk [vmem:[#allocation3 + $0x118] sm:$0xff] %vm5348, %v5227
    %5385 = vst.msk [vmem:[#allocation3 + $0x120] sm:$0xff] %vm5348, %v5229
    %5386 = vst.msk [vmem:[#allocation3 + $0x128] sm:$0xff] %vm5348, %v5231
    %5387 = vst.msk [vmem:[#allocation3 + $0x130] sm:$0xff] %vm5348, %v5233
    %5388 = vst.msk [vmem:[#allocation3 + $0x138] sm:$0xff] %vm5348, %v5235
    %5389 = vst.msk [vmem:[#allocation3 + $0x140] sm:$0xff] %vm5348, %v5237
    %5390 = vst.msk [vmem:[#allocation3 + $0x148] sm:$0xff] %vm5348, %v5239
    %5391 = vst.msk [vmem:[#allocation3 + $0x150] sm:$0xff] %vm5348, %v5241
    %5392 = vst.msk [vmem:[#allocation3 + $0x158] sm:$0xff] %vm5348, %v5243
    %5393 = vst.msk [vmem:[#allocation3 + $0x160] sm:$0xff] %vm5348, %v5245
    %5394 = vst.msk [vmem:[#allocation3 + $0x168] sm:$0xff] %vm5348, %v5247
    %5395 = vst.msk [vmem:[#allocation3 + $0x170] sm:$0xff] %vm5348, %v5249
    %5396 = vst.msk [vmem:[#allocation3 + $0x178] sm:$0xff] %vm5348, %v5251
    %5397 = vst.msk [vmem:[#allocation3 + $0x180] sm:$0xff] %vm5348, %v5253
    %5398 = vst.msk [vmem:[#allocation3 + $0x188] sm:$0xff] %vm5348, %v5255
    %5399 = vst.msk [vmem:[#allocation3 + $0x190] sm:$0xff] %vm5348, %v5257
    %5400 = vst.msk [vmem:[#allocation3 + $0x198] sm:$0xff] %vm5348, %v5259
    %5401 = vst.msk [vmem:[#allocation3 + $0x1a0] sm:$0xff] %vm5348, %v5261
    %5402 = vst.msk [vmem:[#allocation3 + $0x1a8] sm:$0xff] %vm5348, %v5263
    %5403 = vst.msk [vmem:[#allocation3 + $0x1b0] sm:$0xff] %vm5348, %v5265
    %5404 = vst.msk [vmem:[#allocation3 + $0x1b8] sm:$0xff] %vm5348, %v5267
    %5405 = vst.msk [vmem:[#allocation3 + $0x1c0] sm:$0xff] %vm5348, %v5269
    %5406 = vst.msk [vmem:[#allocation3 + $0x1c8] sm:$0xff] %vm5348, %v5271
    %5407 = vst.msk [vmem:[#allocation3 + $0x1d0] sm:$0xff] %vm5348, %v5273
    %5408 = vst.msk [vmem:[#allocation3 + $0x1d8] sm:$0xff] %vm5348, %v5275
    %5409 = vst.msk [vmem:[#allocation3 + $0x1e0] sm:$0xff] %vm5348, %v5277
    %5410 = vst.msk [vmem:[#allocation3 + $0x1e8] sm:$0xff] %vm5348, %v5279
    %5411 = vst.msk [vmem:[#allocation3 + $0x1f0] sm:$0xff] %vm5348, %v5281
    %5412 = vst.msk [vmem:[#allocation3 + $0x1f8] sm:$0xff] %vm5348, %v5283
    %v5413 = vld [vmem:[%s4642 + $0x2] sm:$0xff]
    %v5414 = vld [vmem:[%s4642 + $0xa] sm:$0xff]
    %v5415 = vld [vmem:[%s4642 + $0x1a] sm:$0xff]
    %v5416 = vld [vmem:[%s4642 + $0x22] sm:$0xff]
    %v5417 = vld [vmem:[%s4642 + $0x32] sm:$0xff]
    %v5418 = vld [vmem:[%s4642 + $0x3a] sm:$0xff]
    %v5419 = vld [vmem:[%s4642 + $0x4a] sm:$0xff]
    %v5420 = vld [vmem:[%s4642 + $0x52] sm:$0xff]
    %v5421 = vld [vmem:[%s4642 + $0x62] sm:$0xff]
    %v5422 = vld [vmem:[%s4642 + $0x6a] sm:$0xff]
    %v5423 = vld [vmem:[%s4642 + $0x7a] sm:$0xff]
    %v5424 = vld [vmem:[%s4642 + $0x82] sm:$0xff]
    %v5425 = vld [vmem:[%s4642 + $0x92] sm:$0xff]
    %v5426 = vld [vmem:[%s4642 + $0x9a] sm:$0xff]
    %v5427 = vld [vmem:[%s4642 + $0xaa] sm:$0xff]
    %v5428 = vld [vmem:[%s4642 + $0xb2] sm:$0xff]
    %v5429 = vld [vmem:[%s4642 + $0xc2] sm:$0xff]
    %v5430 = vld [vmem:[%s4642 + $0xca] sm:$0xff]
    %v5431 = vld [vmem:[%s4642 + $0xda] sm:$0xff]
    %v5432 = vld [vmem:[%s4642 + $0xe2] sm:$0xff]
    %v5433 = vld [vmem:[%s4642 + $0xf2] sm:$0xff]
    %v5434 = vld [vmem:[%s4642 + $0xfa] sm:$0xff]
    %v5435 = vld [vmem:[%s4642 + $0x10a] sm:$0xff]
    %v5436 = vld [vmem:[%s4642 + $0x112] sm:$0xff]
    %v5437 = vld [vmem:[%s4642 + $0x122] sm:$0xff]
    %v5438 = vld [vmem:[%s4642 + $0x12a] sm:$0xff]
    %v5439 = vld [vmem:[%s4642 + $0x13a] sm:$0xff]
    %v5440 = vld [vmem:[%s4642 + $0x142] sm:$0xff]
    %v5441 = vld [vmem:[%s4642 + $0x152] sm:$0xff]
    %v5442 = vld [vmem:[%s4642 + $0x15a] sm:$0xff]
    %v5443 = vld [vmem:[%s4642 + $0x16a] sm:$0xff]
    %v5444 = vld [vmem:[%s4642 + $0x172] sm:$0xff]
    %v5445 = vld [vmem:[%s4642 + $0x1ca] sm:$0xff]
    %v5446 = vld [vmem:[%s4642 + $0x1d2] sm:$0xff]
    %v5447 = vld [vmem:[%s4642 + $0x1e2] sm:$0xff]
    %v5448 = vld [vmem:[%s4642 + $0x1ea] sm:$0xff]
    %v5449 = vld [vmem:[%s4642 + $0x1fa] sm:$0xff]
    %v5450 = vld [vmem:[%s4642 + $0x202] sm:$0xff]
    %v5451 = vld [vmem:[%s4642 + $0x212] sm:$0xff]
    %v5452 = vld [vmem:[%s4642 + $0x21a] sm:$0xff]
    %v5453 = vld [vmem:[%s4642 + $0x22a] sm:$0xff]
    %v5454 = vld [vmem:[%s4642 + $0x232] sm:$0xff]
    %v5455 = vld [vmem:[%s4642 + $0x242] sm:$0xff]
    %v5456 = vld [vmem:[%s4642 + $0x24a] sm:$0xff]
    %v5457 = vld [vmem:[%s4642 + $0x25a] sm:$0xff]
    %v5458 = vld [vmem:[%s4642 + $0x262] sm:$0xff]
    %v5459 = vld [vmem:[%s4642 + $0x272] sm:$0xff]
    %v5460 = vld [vmem:[%s4642 + $0x27a] sm:$0xff]
    %v5461 = vld [vmem:[%s4642 + $0x28a] sm:$0xff]
    %v5462 = vld [vmem:[%s4642 + $0x292] sm:$0xff]
    %v5463 = vld [vmem:[%s4642 + $0x2a2] sm:$0xff]
    %v5464 = vld [vmem:[%s4642 + $0x2aa] sm:$0xff]
    %v5465 = vld [vmem:[%s4642 + $0x2ba] sm:$0xff]
    %v5466 = vld [vmem:[%s4642 + $0x2c2] sm:$0xff]
    %v5467 = vld [vmem:[%s4642 + $0x2d2] sm:$0xff]
    %v5468 = vld [vmem:[%s4642 + $0x2da] sm:$0xff]
    %v5469 = vld [vmem:[%s4642 + $0x2ea] sm:$0xff]
    %v5470 = vld [vmem:[%s4642 + $0x2f2] sm:$0xff]
    %v5471 = vld [vmem:[%s4642 + $0x302] sm:$0xff]
    %v5472 = vld [vmem:[%s4642 + $0x30a] sm:$0xff]
    %v5473 = vld [vmem:[%s4642 + $0x31a] sm:$0xff]
    %v5474 = vld [vmem:[%s4642 + $0x322] sm:$0xff]
    %v5475 = vld [vmem:[%s4642 + $0x332] sm:$0xff]
    %v5476 = vld [vmem:[%s4642 + $0x33a] sm:$0xff]
    %5541 = vrot.lane.b32.xlu0 %v5413, 56
    %v5542 = vpop.permute.xlu0 %5541
    %5543 = vrot.lane.b32.xlu0 %v5414, 56
    %v5544 = vpop.permute.xlu0 %5543
    %5545 = vrot.lane.b32.xlu0 %v5415, 56
    %v5546 = vpop.permute.xlu0 %5545
    %5547 = vrot.lane.b32.xlu0 %v5416, 56
    %v5548 = vpop.permute.xlu0 %5547
    %5549 = vrot.lane.b32.xlu0 %v5417, 56
    %v5550 = vpop.permute.xlu0 %5549
    %5551 = vrot.lane.b32.xlu0 %v5418, 56
    %v5552 = vpop.permute.xlu0 %5551
    %5553 = vrot.lane.b32.xlu0 %v5419, 56
    %v5554 = vpop.permute.xlu0 %5553
    %5555 = vrot.lane.b32.xlu0 %v5420, 56
    %v5556 = vpop.permute.xlu0 %5555
    %5557 = vrot.lane.b32.xlu0 %v5421, 56
    %v5558 = vpop.permute.xlu0 %5557
    %5559 = vrot.lane.b32.xlu0 %v5422, 56
    %v5560 = vpop.permute.xlu0 %5559
    %5561 = vrot.lane.b32.xlu0 %v5423, 56
    %v5562 = vpop.permute.xlu0 %5561
    %5563 = vrot.lane.b32.xlu0 %v5424, 56
    %v5564 = vpop.permute.xlu0 %5563
    %5565 = vrot.lane.b32.xlu0 %v5425, 56
    %v5566 = vpop.permute.xlu0 %5565
    %5567 = vrot.lane.b32.xlu0 %v5426, 56
    %v5568 = vpop.permute.xlu0 %5567
    %5569 = vrot.lane.b32.xlu0 %v5427, 56
    %v5570 = vpop.permute.xlu0 %5569
    %5571 = vrot.lane.b32.xlu0 %v5428, 56
    %v5572 = vpop.permute.xlu0 %5571
    %5573 = vrot.lane.b32.xlu0 %v5429, 56
    %v5574 = vpop.permute.xlu0 %5573
    %5575 = vrot.lane.b32.xlu0 %v5430, 56
    %v5576 = vpop.permute.xlu0 %5575
    %5577 = vrot.lane.b32.xlu0 %v5431, 56
    %v5578 = vpop.permute.xlu0 %5577
    %5579 = vrot.lane.b32.xlu0 %v5432, 56
    %v5580 = vpop.permute.xlu0 %5579
    %5581 = vrot.lane.b32.xlu0 %v5433, 56
    %v5582 = vpop.permute.xlu0 %5581
    %5583 = vrot.lane.b32.xlu0 %v5434, 56
    %v5584 = vpop.permute.xlu0 %5583
    %5585 = vrot.lane.b32.xlu0 %v5435, 56
    %v5586 = vpop.permute.xlu0 %5585
    %5587 = vrot.lane.b32.xlu0 %v5436, 56
    %v5588 = vpop.permute.xlu0 %5587
    %5589 = vrot.lane.b32.xlu0 %v5437, 56
    %v5590 = vpop.permute.xlu0 %5589
    %5591 = vrot.lane.b32.xlu0 %v5438, 56
    %v5592 = vpop.permute.xlu0 %5591
    %5593 = vrot.lane.b32.xlu0 %v5439, 56
    %v5594 = vpop.permute.xlu0 %5593
    %5595 = vrot.lane.b32.xlu0 %v5440, 56
    %v5596 = vpop.permute.xlu0 %5595
    %5597 = vrot.lane.b32.xlu0 %v5441, 56
    %v5598 = vpop.permute.xlu0 %5597
    %5599 = vrot.lane.b32.xlu0 %v5442, 56
    %v5600 = vpop.permute.xlu0 %5599
    %5601 = vrot.lane.b32.xlu0 %v5443, 56
    %v5602 = vpop.permute.xlu0 %5601
    %5603 = vrot.lane.b32.xlu0 %v5444, 56
    %v5604 = vpop.permute.xlu0 %5603
    %5605 = vrot.lane.b32.xlu0 %v5445, 56
    %v5606 = vpop.permute.xlu0 %5605
    %5607 = vrot.lane.b32.xlu0 %v5446, 56
    %v5608 = vpop.permute.xlu0 %5607
    %5609 = vrot.lane.b32.xlu0 %v5447, 56
    %v5610 = vpop.permute.xlu0 %5609
    %5611 = vrot.lane.b32.xlu0 %v5448, 56
    %v5612 = vpop.permute.xlu0 %5611
    %5613 = vrot.lane.b32.xlu0 %v5449, 56
    %v5614 = vpop.permute.xlu0 %5613
    %5615 = vrot.lane.b32.xlu0 %v5450, 56
    %v5616 = vpop.permute.xlu0 %5615
    %5617 = vrot.lane.b32.xlu0 %v5451, 56
    %v5618 = vpop.permute.xlu0 %5617
    %5619 = vrot.lane.b32.xlu0 %v5452, 56
    %v5620 = vpop.permute.xlu0 %5619
    %5621 = vrot.lane.b32.xlu0 %v5453, 56
    %v5622 = vpop.permute.xlu0 %5621
    %5623 = vrot.lane.b32.xlu0 %v5454, 56
    %v5624 = vpop.permute.xlu0 %5623
    %5625 = vrot.lane.b32.xlu0 %v5455, 56
    %v5626 = vpop.permute.xlu0 %5625
    %5627 = vrot.lane.b32.xlu0 %v5456, 56
    %v5628 = vpop.permute.xlu0 %5627
    %5629 = vrot.lane.b32.xlu0 %v5457, 56
    %v5630 = vpop.permute.xlu0 %5629
    %5631 = vrot.lane.b32.xlu0 %v5458, 56
    %v5632 = vpop.permute.xlu0 %5631
    %5633 = vrot.lane.b32.xlu0 %v5459, 56
    %v5634 = vpop.permute.xlu0 %5633
    %5635 = vrot.lane.b32.xlu0 %v5460, 56
    %v5636 = vpop.permute.xlu0 %5635
    %5637 = vrot.lane.b32.xlu0 %v5461, 56
    %v5638 = vpop.permute.xlu0 %5637
    %5639 = vrot.lane.b32.xlu0 %v5462, 56
    %v5640 = vpop.permute.xlu0 %5639
    %5641 = vrot.lane.b32.xlu0 %v5463, 56
    %v5642 = vpop.permute.xlu0 %5641
    %5643 = vrot.lane.b32.xlu0 %v5464, 56
    %v5644 = vpop.permute.xlu0 %5643
    %5645 = vrot.lane.b32.xlu0 %v5465, 56
    %v5646 = vpop.permute.xlu0 %5645
    %5647 = vrot.lane.b32.xlu0 %v5466, 56
    %v5648 = vpop.permute.xlu0 %5647
    %5649 = vrot.lane.b32.xlu0 %v5467, 56
    %v5650 = vpop.permute.xlu0 %5649
    %5651 = vrot.lane.b32.xlu0 %v5468, 56
    %v5652 = vpop.permute.xlu0 %5651
    %5653 = vrot.lane.b32.xlu0 %v5469, 56
    %v5654 = vpop.permute.xlu0 %5653
    %5655 = vrot.lane.b32.xlu0 %v5470, 56
    %v5656 = vpop.permute.xlu0 %5655
    %5657 = vrot.lane.b32.xlu0 %v5471, 56
    %v5658 = vpop.permute.xlu0 %5657
    %5659 = vrot.lane.b32.xlu0 %v5472, 56
    %v5660 = vpop.permute.xlu0 %5659
    %5661 = vrot.lane.b32.xlu0 %v5473, 56
    %v5662 = vpop.permute.xlu0 %5661
    %5663 = vrot.lane.b32.xlu0 %v5474, 56
    %v5664 = vpop.permute.xlu0 %5663
    %5665 = vrot.lane.b32.xlu0 %v5475, 56
    %v5666 = vpop.permute.xlu0 %5665
    %5667 = vrot.lane.b32.xlu0 %v5476, 56
    %v5668 = vpop.permute.xlu0 %5667
    %vm5733 = vcmask 490944
    %5734 = vst.msk [vmem:[#allocation3] sm:$0xff] %vm5733, %v5542
    %5735 = vst.msk [vmem:[#allocation3 + $0x8] sm:$0xff] %vm5733, %v5544
    %5736 = vst.msk [vmem:[#allocation3 + $0x10] sm:$0xff] %vm5733, %v5546
    %5737 = vst.msk [vmem:[#allocation3 + $0x18] sm:$0xff] %vm5733, %v5548
    %5738 = vst.msk [vmem:[#allocation3 + $0x20] sm:$0xff] %vm5733, %v5550
    %5739 = vst.msk [vmem:[#allocation3 + $0x28] sm:$0xff] %vm5733, %v5552
    %5740 = vst.msk [vmem:[#allocation3 + $0x30] sm:$0xff] %vm5733, %v5554
    %5741 = vst.msk [vmem:[#allocation3 + $0x38] sm:$0xff] %vm5733, %v5556
    %5742 = vst.msk [vmem:[#allocation3 + $0x40] sm:$0xff] %vm5733, %v5558
    %5743 = vst.msk [vmem:[#allocation3 + $0x48] sm:$0xff] %vm5733, %v5560
    %5744 = vst.msk [vmem:[#allocation3 + $0x50] sm:$0xff] %vm5733, %v5562
    %5745 = vst.msk [vmem:[#allocation3 + $0x58] sm:$0xff] %vm5733, %v5564
    %5746 = vst.msk [vmem:[#allocation3 + $0x60] sm:$0xff] %vm5733, %v5566
    %5747 = vst.msk [vmem:[#allocation3 + $0x68] sm:$0xff] %vm5733, %v5568
    %5748 = vst.msk [vmem:[#allocation3 + $0x70] sm:$0xff] %vm5733, %v5570
    %5749 = vst.msk [vmem:[#allocation3 + $0x78] sm:$0xff] %vm5733, %v5572
    %5750 = vst.msk [vmem:[#allocation3 + $0x80] sm:$0xff] %vm5733, %v5574
    %5751 = vst.msk [vmem:[#allocation3 + $0x88] sm:$0xff] %vm5733, %v5576
    %5752 = vst.msk [vmem:[#allocation3 + $0x90] sm:$0xff] %vm5733, %v5578
    %5753 = vst.msk [vmem:[#allocation3 + $0x98] sm:$0xff] %vm5733, %v5580
    %5754 = vst.msk [vmem:[#allocation3 + $0xa0] sm:$0xff] %vm5733, %v5582
    %5755 = vst.msk [vmem:[#allocation3 + $0xa8] sm:$0xff] %vm5733, %v5584
    %5756 = vst.msk [vmem:[#allocation3 + $0xb0] sm:$0xff] %vm5733, %v5586
    %5757 = vst.msk [vmem:[#allocation3 + $0xb8] sm:$0xff] %vm5733, %v5588
    %5758 = vst.msk [vmem:[#allocation3 + $0xc0] sm:$0xff] %vm5733, %v5590
    %5759 = vst.msk [vmem:[#allocation3 + $0xc8] sm:$0xff] %vm5733, %v5592
    %5760 = vst.msk [vmem:[#allocation3 + $0xd0] sm:$0xff] %vm5733, %v5594
    %5761 = vst.msk [vmem:[#allocation3 + $0xd8] sm:$0xff] %vm5733, %v5596
    %5762 = vst.msk [vmem:[#allocation3 + $0xe0] sm:$0xff] %vm5733, %v5598
    %5763 = vst.msk [vmem:[#allocation3 + $0xe8] sm:$0xff] %vm5733, %v5600
    %5764 = vst.msk [vmem:[#allocation3 + $0xf0] sm:$0xff] %vm5733, %v5602
    %5765 = vst.msk [vmem:[#allocation3 + $0xf8] sm:$0xff] %vm5733, %v5604
    %5766 = vst.msk [vmem:[#allocation3 + $0x100] sm:$0xff] %vm5733, %v5606
    %5767 = vst.msk [vmem:[#allocation3 + $0x108] sm:$0xff] %vm5733, %v5608
    %5768 = vst.msk [vmem:[#allocation3 + $0x110] sm:$0xff] %vm5733, %v5610
    %5769 = vst.msk [vmem:[#allocation3 + $0x118] sm:$0xff] %vm5733, %v5612
    %5770 = vst.msk [vmem:[#allocation3 + $0x120] sm:$0xff] %vm5733, %v5614
    %5771 = vst.msk [vmem:[#allocation3 + $0x128] sm:$0xff] %vm5733, %v5616
    %5772 = vst.msk [vmem:[#allocation3 + $0x130] sm:$0xff] %vm5733, %v5618
    %5773 = vst.msk [vmem:[#allocation3 + $0x138] sm:$0xff] %vm5733, %v5620
    %5774 = vst.msk [vmem:[#allocation3 + $0x140] sm:$0xff] %vm5733, %v5622
    %5775 = vst.msk [vmem:[#allocation3 + $0x148] sm:$0xff] %vm5733, %v5624
    %5776 = vst.msk [vmem:[#allocation3 + $0x150] sm:$0xff] %vm5733, %v5626
    %5777 = vst.msk [vmem:[#allocation3 + $0x158] sm:$0xff] %vm5733, %v5628
    %5778 = vst.msk [vmem:[#allocation3 + $0x160] sm:$0xff] %vm5733, %v5630
    %5779 = vst.msk [vmem:[#allocation3 + $0x168] sm:$0xff] %vm5733, %v5632
    %5780 = vst.msk [vmem:[#allocation3 + $0x170] sm:$0xff] %vm5733, %v5634
    %5781 = vst.msk [vmem:[#allocation3 + $0x178] sm:$0xff] %vm5733, %v5636
    %5782 = vst.msk [vmem:[#allocation3 + $0x180] sm:$0xff] %vm5733, %v5638
    %5783 = vst.msk [vmem:[#allocation3 + $0x188] sm:$0xff] %vm5733, %v5640
    %5784 = vst.msk [vmem:[#allocation3 + $0x190] sm:$0xff] %vm5733, %v5642
    %5785 = vst.msk [vmem:[#allocation3 + $0x198] sm:$0xff] %vm5733, %v5644
    %5786 = vst.msk [vmem:[#allocation3 + $0x1a0] sm:$0xff] %vm5733, %v5646
    %5787 = vst.msk [vmem:[#allocation3 + $0x1a8] sm:$0xff] %vm5733, %v5648
    %5788 = vst.msk [vmem:[#allocation3 + $0x1b0] sm:$0xff] %vm5733, %v5650
    %5789 = vst.msk [vmem:[#allocation3 + $0x1b8] sm:$0xff] %vm5733, %v5652
    %5790 = vst.msk [vmem:[#allocation3 + $0x1c0] sm:$0xff] %vm5733, %v5654
    %5791 = vst.msk [vmem:[#allocation3 + $0x1c8] sm:$0xff] %vm5733, %v5656
    %5792 = vst.msk [vmem:[#allocation3 + $0x1d0] sm:$0xff] %vm5733, %v5658
    %5793 = vst.msk [vmem:[#allocation3 + $0x1d8] sm:$0xff] %vm5733, %v5660
    %5794 = vst.msk [vmem:[#allocation3 + $0x1e0] sm:$0xff] %vm5733, %v5662
    %5795 = vst.msk [vmem:[#allocation3 + $0x1e8] sm:$0xff] %vm5733, %v5664
    %5796 = vst.msk [vmem:[#allocation3 + $0x1f0] sm:$0xff] %vm5733, %v5666
    %5797 = vst.msk [vmem:[#allocation3 + $0x1f8] sm:$0xff] %vm5733, %v5668
    %v5798 = vld [vmem:[%s4642 + $0x3] sm:$0xff]
    %v5799 = vld [vmem:[%s4642 + $0xb] sm:$0xff]
    %v5800 = vld [vmem:[%s4642 + $0x1b] sm:$0xff]
    %v5801 = vld [vmem:[%s4642 + $0x23] sm:$0xff]
    %v5802 = vld [vmem:[%s4642 + $0x33] sm:$0xff]
    %v5803 = vld [vmem:[%s4642 + $0x3b] sm:$0xff]
    %v5804 = vld [vmem:[%s4642 + $0x4b] sm:$0xff]
    %v5805 = vld [vmem:[%s4642 + $0x53] sm:$0xff]
    %v5806 = vld [vmem:[%s4642 + $0x63] sm:$0xff]
    %v5807 = vld [vmem:[%s4642 + $0x6b] sm:$0xff]
    %v5808 = vld [vmem:[%s4642 + $0x7b] sm:$0xff]
    %v5809 = vld [vmem:[%s4642 + $0x83] sm:$0xff]
    %v5810 = vld [vmem:[%s4642 + $0x93] sm:$0xff]
    %v5811 = vld [vmem:[%s4642 + $0x9b] sm:$0xff]
    %v5812 = vld [vmem:[%s4642 + $0xab] sm:$0xff]
    %v5813 = vld [vmem:[%s4642 + $0xb3] sm:$0xff]
    %v5814 = vld [vmem:[%s4642 + $0xc3] sm:$0xff]
    %v5815 = vld [vmem:[%s4642 + $0xcb] sm:$0xff]
    %v5816 = vld [vmem:[%s4642 + $0xdb] sm:$0xff]
    %v5817 = vld [vmem:[%s4642 + $0xe3] sm:$0xff]
    %v5818 = vld [vmem:[%s4642 + $0xf3] sm:$0xff]
    %v5819 = vld [vmem:[%s4642 + $0xfb] sm:$0xff]
    %v5820 = vld [vmem:[%s4642 + $0x10b] sm:$0xff]
    %v5821 = vld [vmem:[%s4642 + $0x113] sm:$0xff]
    %v5822 = vld [vmem:[%s4642 + $0x123] sm:$0xff]
    %v5823 = vld [vmem:[%s4642 + $0x12b] sm:$0xff]
    %v5824 = vld [vmem:[%s4642 + $0x13b] sm:$0xff]
    %v5825 = vld [vmem:[%s4642 + $0x143] sm:$0xff]
    %v5826 = vld [vmem:[%s4642 + $0x153] sm:$0xff]
    %v5827 = vld [vmem:[%s4642 + $0x15b] sm:$0xff]
    %v5828 = vld [vmem:[%s4642 + $0x16b] sm:$0xff]
    %v5829 = vld [vmem:[%s4642 + $0x173] sm:$0xff]
    %v5830 = vld [vmem:[%s4642 + $0x1cb] sm:$0xff]
    %v5831 = vld [vmem:[%s4642 + $0x1d3] sm:$0xff]
    %v5832 = vld [vmem:[%s4642 + $0x1e3] sm:$0xff]
    %v5833 = vld [vmem:[%s4642 + $0x1eb] sm:$0xff]
    %v5834 = vld [vmem:[%s4642 + $0x1fb] sm:$0xff]
    %v5835 = vld [vmem:[%s4642 + $0x203] sm:$0xff]
    %v5836 = vld [vmem:[%s4642 + $0x213] sm:$0xff]
    %v5837 = vld [vmem:[%s4642 + $0x21b] sm:$0xff]
    %v5838 = vld [vmem:[%s4642 + $0x22b] sm:$0xff]
    %v5839 = vld [vmem:[%s4642 + $0x233] sm:$0xff]
    %v5840 = vld [vmem:[%s4642 + $0x243] sm:$0xff]
    %v5841 = vld [vmem:[%s4642 + $0x24b] sm:$0xff]
    %v5842 = vld [vmem:[%s4642 + $0x25b] sm:$0xff]
    %v5843 = vld [vmem:[%s4642 + $0x263] sm:$0xff]
    %v5844 = vld [vmem:[%s4642 + $0x273] sm:$0xff]
    %v5845 = vld [vmem:[%s4642 + $0x27b] sm:$0xff]
    %v5846 = vld [vmem:[%s4642 + $0x28b] sm:$0xff]
    %v5847 = vld [vmem:[%s4642 + $0x293] sm:$0xff]
    %v5848 = vld [vmem:[%s4642 + $0x2a3] sm:$0xff]
    %v5849 = vld [vmem:[%s4642 + $0x2ab] sm:$0xff]
    %v5850 = vld [vmem:[%s4642 + $0x2bb] sm:$0xff]
    %v5851 = vld [vmem:[%s4642 + $0x2c3] sm:$0xff]
    %v5852 = vld [vmem:[%s4642 + $0x2d3] sm:$0xff]
    %v5853 = vld [vmem:[%s4642 + $0x2db] sm:$0xff]
    %v5854 = vld [vmem:[%s4642 + $0x2eb] sm:$0xff]
    %v5855 = vld [vmem:[%s4642 + $0x2f3] sm:$0xff]
    %v5856 = vld [vmem:[%s4642 + $0x303] sm:$0xff]
    %v5857 = vld [vmem:[%s4642 + $0x30b] sm:$0xff]
    %v5858 = vld [vmem:[%s4642 + $0x31b] sm:$0xff]
    %v5859 = vld [vmem:[%s4642 + $0x323] sm:$0xff]
    %v5860 = vld [vmem:[%s4642 + $0x333] sm:$0xff]
    %v5861 = vld [vmem:[%s4642 + $0x33b] sm:$0xff]
    %5926 = vrot.lane.b32.xlu0 %v5798, 60
    %v5927 = vpop.permute.xlu0 %5926
    %5928 = vrot.lane.b32.xlu0 %v5799, 60
    %v5929 = vpop.permute.xlu0 %5928
    %5930 = vrot.lane.b32.xlu0 %v5800, 60
    %v5931 = vpop.permute.xlu0 %5930
    %5932 = vrot.lane.b32.xlu0 %v5801, 60
    %v5933 = vpop.permute.xlu0 %5932
    %5934 = vrot.lane.b32.xlu0 %v5802, 60
    %v5935 = vpop.permute.xlu0 %5934
    %5936 = vrot.lane.b32.xlu0 %v5803, 60
    %v5937 = vpop.permute.xlu0 %5936
    %5938 = vrot.lane.b32.xlu0 %v5804, 60
    %v5939 = vpop.permute.xlu0 %5938
    %5940 = vrot.lane.b32.xlu0 %v5805, 60
    %v5941 = vpop.permute.xlu0 %5940
    %5942 = vrot.lane.b32.xlu0 %v5806, 60
    %v5943 = vpop.permute.xlu0 %5942
    %5944 = vrot.lane.b32.xlu0 %v5807, 60
    %v5945 = vpop.permute.xlu0 %5944
    %5946 = vrot.lane.b32.xlu0 %v5808, 60
    %v5947 = vpop.permute.xlu0 %5946
    %5948 = vrot.lane.b32.xlu0 %v5809, 60
    %v5949 = vpop.permute.xlu0 %5948
    %5950 = vrot.lane.b32.xlu0 %v5810, 60
    %v5951 = vpop.permute.xlu0 %5950
    %5952 = vrot.lane.b32.xlu0 %v5811, 60
    %v5953 = vpop.permute.xlu0 %5952
    %5954 = vrot.lane.b32.xlu0 %v5812, 60
    %v5955 = vpop.permute.xlu0 %5954
    %5956 = vrot.lane.b32.xlu0 %v5813, 60
    %v5957 = vpop.permute.xlu0 %5956
    %5958 = vrot.lane.b32.xlu0 %v5814, 60
    %v5959 = vpop.permute.xlu0 %5958
    %5960 = vrot.lane.b32.xlu0 %v5815, 60
    %v5961 = vpop.permute.xlu0 %5960
    %5962 = vrot.lane.b32.xlu0 %v5816, 60
    %v5963 = vpop.permute.xlu0 %5962
    %5964 = vrot.lane.b32.xlu0 %v5817, 60
    %v5965 = vpop.permute.xlu0 %5964
    %5966 = vrot.lane.b32.xlu0 %v5818, 60
    %v5967 = vpop.permute.xlu0 %5966
    %5968 = vrot.lane.b32.xlu0 %v5819, 60
    %v5969 = vpop.permute.xlu0 %5968
    %5970 = vrot.lane.b32.xlu0 %v5820, 60
    %v5971 = vpop.permute.xlu0 %5970
    %5972 = vrot.lane.b32.xlu0 %v5821, 60
    %v5973 = vpop.permute.xlu0 %5972
    %5974 = vrot.lane.b32.xlu0 %v5822, 60
    %v5975 = vpop.permute.xlu0 %5974
    %5976 = vrot.lane.b32.xlu0 %v5823, 60
    %v5977 = vpop.permute.xlu0 %5976
    %5978 = vrot.lane.b32.xlu0 %v5824, 60
    %v5979 = vpop.permute.xlu0 %5978
    %5980 = vrot.lane.b32.xlu0 %v5825, 60
    %v5981 = vpop.permute.xlu0 %5980
    %5982 = vrot.lane.b32.xlu0 %v5826, 60
    %v5983 = vpop.permute.xlu0 %5982
    %5984 = vrot.lane.b32.xlu0 %v5827, 60
    %v5985 = vpop.permute.xlu0 %5984
    %5986 = vrot.lane.b32.xlu0 %v5828, 60
    %v5987 = vpop.permute.xlu0 %5986
    %5988 = vrot.lane.b32.xlu0 %v5829, 60
    %v5989 = vpop.permute.xlu0 %5988
    %5990 = vrot.lane.b32.xlu0 %v5830, 60
    %v5991 = vpop.permute.xlu0 %5990
    %5992 = vrot.lane.b32.xlu0 %v5831, 60
    %v5993 = vpop.permute.xlu0 %5992
    %5994 = vrot.lane.b32.xlu0 %v5832, 60
    %v5995 = vpop.permute.xlu0 %5994
    %5996 = vrot.lane.b32.xlu0 %v5833, 60
    %v5997 = vpop.permute.xlu0 %5996
    %5998 = vrot.lane.b32.xlu0 %v5834, 60
    %v5999 = vpop.permute.xlu0 %5998
    %6000 = vrot.lane.b32.xlu0 %v5835, 60
    %v6001 = vpop.permute.xlu0 %6000
    %6002 = vrot.lane.b32.xlu0 %v5836, 60
    %v6003 = vpop.permute.xlu0 %6002
    %6004 = vrot.lane.b32.xlu0 %v5837, 60
    %v6005 = vpop.permute.xlu0 %6004
    %6006 = vrot.lane.b32.xlu0 %v5838, 60
    %v6007 = vpop.permute.xlu0 %6006
    %6008 = vrot.lane.b32.xlu0 %v5839, 60
    %v6009 = vpop.permute.xlu0 %6008
    %6010 = vrot.lane.b32.xlu0 %v5840, 60
    %v6011 = vpop.permute.xlu0 %6010
    %6012 = vrot.lane.b32.xlu0 %v5841, 60
    %v6013 = vpop.permute.xlu0 %6012
    %6014 = vrot.lane.b32.xlu0 %v5842, 60
    %v6015 = vpop.permute.xlu0 %6014
    %6016 = vrot.lane.b32.xlu0 %v5843, 60
    %v6017 = vpop.permute.xlu0 %6016
    %6018 = vrot.lane.b32.xlu0 %v5844, 60
    %v6019 = vpop.permute.xlu0 %6018
    %6020 = vrot.lane.b32.xlu0 %v5845, 60
    %v6021 = vpop.permute.xlu0 %6020
    %6022 = vrot.lane.b32.xlu0 %v5846, 60
    %v6023 = vpop.permute.xlu0 %6022
    %6024 = vrot.lane.b32.xlu0 %v5847, 60
    %v6025 = vpop.permute.xlu0 %6024
    %6026 = vrot.lane.b32.xlu0 %v5848, 60
    %v6027 = vpop.permute.xlu0 %6026
    %6028 = vrot.lane.b32.xlu0 %v5849, 60
    %v6029 = vpop.permute.xlu0 %6028
    %6030 = vrot.lane.b32.xlu0 %v5850, 60
    %v6031 = vpop.permute.xlu0 %6030
    %6032 = vrot.lane.b32.xlu0 %v5851, 60
    %v6033 = vpop.permute.xlu0 %6032
    %6034 = vrot.lane.b32.xlu0 %v5852, 60
    %v6035 = vpop.permute.xlu0 %6034
    %6036 = vrot.lane.b32.xlu0 %v5853, 60
    %v6037 = vpop.permute.xlu0 %6036
    %6038 = vrot.lane.b32.xlu0 %v5854, 60
    %v6039 = vpop.permute.xlu0 %6038
    %6040 = vrot.lane.b32.xlu0 %v5855, 60
    %v6041 = vpop.permute.xlu0 %6040
    %6042 = vrot.lane.b32.xlu0 %v5856, 60
    %v6043 = vpop.permute.xlu0 %6042
    %6044 = vrot.lane.b32.xlu0 %v5857, 60
    %v6045 = vpop.permute.xlu0 %6044
    %6046 = vrot.lane.b32.xlu0 %v5858, 60
    %v6047 = vpop.permute.xlu0 %6046
    %6048 = vrot.lane.b32.xlu0 %v5859, 60
    %v6049 = vpop.permute.xlu0 %6048
    %6050 = vrot.lane.b32.xlu0 %v5860, 60
    %v6051 = vpop.permute.xlu0 %6050
    %6052 = vrot.lane.b32.xlu0 %v5861, 60
    %v6053 = vpop.permute.xlu0 %6052
    %vm6118 = vcmask 523744
    %6119 = vst.msk [vmem:[#allocation3] sm:$0xff] %vm6118, %v5927
    %6120 = vst.msk [vmem:[#allocation3 + $0x8] sm:$0xff] %vm6118, %v5929
    %6121 = vst.msk [vmem:[#allocation3 + $0x10] sm:$0xff] %vm6118, %v5931
    %6122 = vst.msk [vmem:[#allocation3 + $0x18] sm:$0xff] %vm6118, %v5933
    %6123 = vst.msk [vmem:[#allocation3 + $0x20] sm:$0xff] %vm6118, %v5935
    %6124 = vst.msk [vmem:[#allocation3 + $0x28] sm:$0xff] %vm6118, %v5937
    %6125 = vst.msk [vmem:[#allocation3 + $0x30] sm:$0xff] %vm6118, %v5939
    %6126 = vst.msk [vmem:[#allocation3 + $0x38] sm:$0xff] %vm6118, %v5941
    %6127 = vst.msk [vmem:[#allocation3 + $0x40] sm:$0xff] %vm6118, %v5943
    %6128 = vst.msk [vmem:[#allocation3 + $0x48] sm:$0xff] %vm6118, %v5945
    %6129 = vst.msk [vmem:[#allocation3 + $0x50] sm:$0xff] %vm6118, %v5947
    %6130 = vst.msk [vmem:[#allocation3 + $0x58] sm:$0xff] %vm6118, %v5949
    %6131 = vst.msk [vmem:[#allocation3 + $0x60] sm:$0xff] %vm6118, %v5951
    %6132 = vst.msk [vmem:[#allocation3 + $0x68] sm:$0xff] %vm6118, %v5953
    %6133 = vst.msk [vmem:[#allocation3 + $0x70] sm:$0xff] %vm6118, %v5955
    %6134 = vst.msk [vmem:[#allocation3 + $0x78] sm:$0xff] %vm6118, %v5957
    %6135 = vst.msk [vmem:[#allocation3 + $0x80] sm:$0xff] %vm6118, %v5959
    %6136 = vst.msk [vmem:[#allocation3 + $0x88] sm:$0xff] %vm6118, %v5961
    %6137 = vst.msk [vmem:[#allocation3 + $0x90] sm:$0xff] %vm6118, %v5963
    %6138 = vst.msk [vmem:[#allocation3 + $0x98] sm:$0xff] %vm6118, %v5965
    %6139 = vst.msk [vmem:[#allocation3 + $0xa0] sm:$0xff] %vm6118, %v5967
    %6140 = vst.msk [vmem:[#allocation3 + $0xa8] sm:$0xff] %vm6118, %v5969
    %6141 = vst.msk [vmem:[#allocation3 + $0xb0] sm:$0xff] %vm6118, %v5971
    %6142 = vst.msk [vmem:[#allocation3 + $0xb8] sm:$0xff] %vm6118, %v5973
    %6143 = vst.msk [vmem:[#allocation3 + $0xc0] sm:$0xff] %vm6118, %v5975
    %6144 = vst.msk [vmem:[#allocation3 + $0xc8] sm:$0xff] %vm6118, %v5977
    %6145 = vst.msk [vmem:[#allocation3 + $0xd0] sm:$0xff] %vm6118, %v5979
    %6146 = vst.msk [vmem:[#allocation3 + $0xd8] sm:$0xff] %vm6118, %v5981
    %6147 = vst.msk [vmem:[#allocation3 + $0xe0] sm:$0xff] %vm6118, %v5983
    %6148 = vst.msk [vmem:[#allocation3 + $0xe8] sm:$0xff] %vm6118, %v5985
    %6149 = vst.msk [vmem:[#allocation3 + $0xf0] sm:$0xff] %vm6118, %v5987
    %6150 = vst.msk [vmem:[#allocation3 + $0xf8] sm:$0xff] %vm6118, %v5989
    %6151 = vst.msk [vmem:[#allocation3 + $0x100] sm:$0xff] %vm6118, %v5991
    %6152 = vst.msk [vmem:[#allocation3 + $0x108] sm:$0xff] %vm6118, %v5993
    %6153 = vst.msk [vmem:[#allocation3 + $0x110] sm:$0xff] %vm6118, %v5995
    %6154 = vst.msk [vmem:[#allocation3 + $0x118] sm:$0xff] %vm6118, %v5997
    %6155 = vst.msk [vmem:[#allocation3 + $0x120] sm:$0xff] %vm6118, %v5999
    %6156 = vst.msk [vmem:[#allocation3 + $0x128] sm:$0xff] %vm6118, %v6001
    %6157 = vst.msk [vmem:[#allocation3 + $0x130] sm:$0xff] %vm6118, %v6003
    %6158 = vst.msk [vmem:[#allocation3 + $0x138] sm:$0xff] %vm6118, %v6005
    %6159 = vst.msk [vmem:[#allocation3 + $0x140] sm:$0xff] %vm6118, %v6007
    %6160 = vst.msk [vmem:[#allocation3 + $0x148] sm:$0xff] %vm6118, %v6009
    %6161 = vst.msk [vmem:[#allocation3 + $0x150] sm:$0xff] %vm6118, %v6011
    %6162 = vst.msk [vmem:[#allocation3 + $0x158] sm:$0xff] %vm6118, %v6013
    %6163 = vst.msk [vmem:[#allocation3 + $0x160] sm:$0xff] %vm6118, %v6015
    %6164 = vst.msk [vmem:[#allocation3 + $0x168] sm:$0xff] %vm6118, %v6017
    %6165 = vst.msk [vmem:[#allocation3 + $0x170] sm:$0xff] %vm6118, %v6019
    %6166 = vst.msk [vmem:[#allocation3 + $0x178] sm:$0xff] %vm6118, %v6021
    %6167 = vst.msk [vmem:[#allocation3 + $0x180] sm:$0xff] %vm6118, %v6023
    %6168 = vst.msk [vmem:[#allocation3 + $0x188] sm:$0xff] %vm6118, %v6025
    %6169 = vst.msk [vmem:[#allocation3 + $0x190] sm:$0xff] %vm6118, %v6027
    %6170 = vst.msk [vmem:[#allocation3 + $0x198] sm:$0xff] %vm6118, %v6029
    %6171 = vst.msk [vmem:[#allocation3 + $0x1a0] sm:$0xff] %vm6118, %v6031
    %6172 = vst.msk [vmem:[#allocation3 + $0x1a8] sm:$0xff] %vm6118, %v6033
    %6173 = vst.msk [vmem:[#allocation3 + $0x1b0] sm:$0xff] %vm6118, %v6035
    %6174 = vst.msk [vmem:[#allocation3 + $0x1b8] sm:$0xff] %vm6118, %v6037
    %6175 = vst.msk [vmem:[#allocation3 + $0x1c0] sm:$0xff] %vm6118, %v6039
    %6176 = vst.msk [vmem:[#allocation3 + $0x1c8] sm:$0xff] %vm6118, %v6041
    %6177 = vst.msk [vmem:[#allocation3 + $0x1d0] sm:$0xff] %vm6118, %v6043
    %6178 = vst.msk [vmem:[#allocation3 + $0x1d8] sm:$0xff] %vm6118, %v6045
    %6179 = vst.msk [vmem:[#allocation3 + $0x1e0] sm:$0xff] %vm6118, %v6047
    %6180 = vst.msk [vmem:[#allocation3 + $0x1e8] sm:$0xff] %vm6118, %v6049
    %6181 = vst.msk [vmem:[#allocation3 + $0x1f0] sm:$0xff] %vm6118, %v6051
    %6182 = vst.msk [vmem:[#allocation3 + $0x1f8] sm:$0xff] %vm6118, %v6053
    %v6183 = vld [vmem:[#allocation3] sm:$0xff]
    %v6184 = vld [vmem:[#allocation3 + $0x8] sm:$0xff]
    %v6185 = vld [vmem:[#allocation3 + $0x10] sm:$0xff]
    %v6186 = vld [vmem:[#allocation3 + $0x18] sm:$0xff]
    %v6187 = vld [vmem:[#allocation3 + $0x20] sm:$0xff]
    %v6188 = vld [vmem:[#allocation3 + $0x28] sm:$0xff]
    %v6189 = vld [vmem:[#allocation3 + $0x30] sm:$0xff]
    %v6190 = vld [vmem:[#allocation3 + $0x38] sm:$0xff]
    %v6191 = vld [vmem:[#allocation3 + $0x40] sm:$0xff]
    %v6192 = vld [vmem:[#allocation3 + $0x48] sm:$0xff]
    %v6193 = vld [vmem:[#allocation3 + $0x50] sm:$0xff]
    %v6194 = vld [vmem:[#allocation3 + $0x58] sm:$0xff]
    %v6195 = vld [vmem:[#allocation3 + $0x60] sm:$0xff]
    %v6196 = vld [vmem:[#allocation3 + $0x68] sm:$0xff]
    %v6197 = vld [vmem:[#allocation3 + $0x70] sm:$0xff]
    %v6198 = vld [vmem:[#allocation3 + $0x78] sm:$0xff]
    %v6199 = vld [vmem:[#allocation3 + $0x80] sm:$0xff]
    %v6200 = vld [vmem:[#allocation3 + $0x88] sm:$0xff]
    %v6201 = vld [vmem:[#allocation3 + $0x90] sm:$0xff]
    %v6202 = vld [vmem:[#allocation3 + $0x98] sm:$0xff]
    %v6203 = vld [vmem:[#allocation3 + $0xa0] sm:$0xff]
    %v6204 = vld [vmem:[#allocation3 + $0xa8] sm:$0xff]
    %v6205 = vld [vmem:[#allocation3 + $0xb0] sm:$0xff]
    %v6206 = vld [vmem:[#allocation3 + $0xb8] sm:$0xff]
    %v6207 = vld [vmem:[#allocation3 + $0xc0] sm:$0xff]
    %v6208 = vld [vmem:[#allocation3 + $0xc8] sm:$0xff]
    %v6209 = vld [vmem:[#allocation3 + $0xd0] sm:$0xff]
    %v6210 = vld [vmem:[#allocation3 + $0xd8] sm:$0xff]
    %v6211 = vld [vmem:[#allocation3 + $0xe0] sm:$0xff]
    %v6212 = vld [vmem:[#allocation3 + $0xe8] sm:$0xff]
    %v6213 = vld [vmem:[#allocation3 + $0xf0] sm:$0xff]
    %v6214 = vld [vmem:[#allocation3 + $0xf8] sm:$0xff]
    %v6215 = vld [vmem:[#allocation3 + $0x100] sm:$0xff]
    %v6216 = vld [vmem:[#allocation3 + $0x108] sm:$0xff]
    %v6217 = vld [vmem:[#allocation3 + $0x110] sm:$0xff]
    %v6218 = vld [vmem:[#allocation3 + $0x118] sm:$0xff]
    %v6219 = vld [vmem:[#allocation3 + $0x120] sm:$0xff]
    %v6220 = vld [vmem:[#allocation3 + $0x128] sm:$0xff]
    %v6221 = vld [vmem:[#allocation3 + $0x130] sm:$0xff]
    %v6222 = vld [vmem:[#allocation3 + $0x138] sm:$0xff]
    %v6223 = vld [vmem:[#allocation3 + $0x140] sm:$0xff]
    %v6224 = vld [vmem:[#allocation3 + $0x148] sm:$0xff]
    %v6225 = vld [vmem:[#allocation3 + $0x150] sm:$0xff]
    %v6226 = vld [vmem:[#allocation3 + $0x158] sm:$0xff]
    %v6227 = vld [vmem:[#allocation3 + $0x160] sm:$0xff]
    %v6228 = vld [vmem:[#allocation3 + $0x168] sm:$0xff]
    %v6229 = vld [vmem:[#allocation3 + $0x170] sm:$0xff]
    %v6230 = vld [vmem:[#allocation3 + $0x178] sm:$0xff]
    %v6231 = vld [vmem:[#allocation3 + $0x180] sm:$0xff]
    %v6232 = vld [vmem:[#allocation3 + $0x188] sm:$0xff]
    %v6233 = vld [vmem:[#allocation3 + $0x190] sm:$0xff]
    %v6234 = vld [vmem:[#allocation3 + $0x198] sm:$0xff]
    %v6235 = vld [vmem:[#allocation3 + $0x1a0] sm:$0xff]
    %v6236 = vld [vmem:[#allocation3 + $0x1a8] sm:$0xff]
    %v6237 = vld [vmem:[#allocation3 + $0x1b0] sm:$0xff]
    %v6238 = vld [vmem:[#allocation3 + $0x1b8] sm:$0xff]
    %v6239 = vld [vmem:[#allocation3 + $0x1c0] sm:$0xff]
    %v6240 = vld [vmem:[#allocation3 + $0x1c8] sm:$0xff]
    %v6241 = vld [vmem:[#allocation3 + $0x1d0] sm:$0xff]
    %v6242 = vld [vmem:[#allocation3 + $0x1d8] sm:$0xff]
    %v6243 = vld [vmem:[#allocation3 + $0x1e0] sm:$0xff]
    %v6244 = vld [vmem:[#allocation3 + $0x1e8] sm:$0xff]
    %v6245 = vld [vmem:[#allocation3 + $0x1f0] sm:$0xff]
    %v6246 = vld [vmem:[#allocation3 + $0x1f8] sm:$0xff]
    %v6247 = vld [vmem:[%s1] sm:$0xff]
    %v6248 = vld [vmem:[%s1 + $0x8] sm:$0xff]
    %v6249 = vld [vmem:[%s1 + $0x10] sm:$0xff]
    %v6250 = vld [vmem:[%s1 + $0x18] sm:$0xff]
    %v6251 = vld [vmem:[%s1 + $0x20] sm:$0xff]
    %v6252 = vld [vmem:[%s1 + $0x28] sm:$0xff]
    %v6253 = vld [vmem:[%s1 + $0x30] sm:$0xff]
    %v6254 = vld [vmem:[%s1 + $0x38] sm:$0xff]
    %v6255 = vld [vmem:[%s2] sm:$0x1]
    %v6257 = vlaneseq
    %v6258 = vshrl.u32 %v6257, 7
    %v6259 = vsub.s32 0, %v6258
    %v6260 = vrot.slane %v6255, %v6259
    %vm6262 = vcmask 523264
    %v6264 = vsel %vm6262, %v6183, 0
    %v6267 = vsel %vm6262, %v6184, 0
    %v6270 = vsel %vm6262, %v6185, 0
    %v6273 = vsel %vm6262, %v6186, 0
    %v6276 = vsel %vm6262, %v6187, 0
    %v6279 = vsel %vm6262, %v6188, 0
    %v6282 = vsel %vm6262, %v6189, 0
    %v6285 = vsel %vm6262, %v6190, 0
    %v6288 = vsel %vm6262, %v6191, 0
    %v6291 = vsel %vm6262, %v6192, 0
    %v6294 = vsel %vm6262, %v6193, 0
    %v6297 = vsel %vm6262, %v6194, 0
    %v6300 = vsel %vm6262, %v6195, 0
    %v6303 = vsel %vm6262, %v6196, 0
    %v6306 = vsel %vm6262, %v6197, 0
    %v6309 = vsel %vm6262, %v6198, 0
    %v6312 = vsel %vm6262, %v6199, 0
    %v6315 = vsel %vm6262, %v6200, 0
    %v6318 = vsel %vm6262, %v6201, 0
    %v6321 = vsel %vm6262, %v6202, 0
    %v6324 = vsel %vm6262, %v6203, 0
    %v6327 = vsel %vm6262, %v6204, 0
    %v6330 = vsel %vm6262, %v6205, 0
    %v6333 = vsel %vm6262, %v6206, 0
    %v6336 = vsel %vm6262, %v6207, 0
    %v6339 = vsel %vm6262, %v6208, 0
    %v6342 = vsel %vm6262, %v6209, 0
    %v6345 = vsel %vm6262, %v6210, 0
    %v6348 = vsel %vm6262, %v6211, 0
    %v6351 = vsel %vm6262, %v6212, 0
    %v6354 = vsel %vm6262, %v6213, 0
    %v6357 = vsel %vm6262, %v6214, 0
    %v6360 = vsel %vm6262, %v6215, 0
    %v6363 = vsel %vm6262, %v6216, 0
    %v6366 = vsel %vm6262, %v6217, 0
    %v6369 = vsel %vm6262, %v6218, 0
    %v6372 = vsel %vm6262, %v6219, 0
    %v6375 = vsel %vm6262, %v6220, 0
    %v6378 = vsel %vm6262, %v6221, 0
    %v6381 = vsel %vm6262, %v6222, 0
    %v6384 = vsel %vm6262, %v6223, 0
    %v6387 = vsel %vm6262, %v6224, 0
    %v6390 = vsel %vm6262, %v6225, 0
    %v6393 = vsel %vm6262, %v6226, 0
    %v6396 = vsel %vm6262, %v6227, 0
    %v6399 = vsel %vm6262, %v6228, 0
    %v6402 = vsel %vm6262, %v6229, 0
    %v6405 = vsel %vm6262, %v6230, 0
    %v6408 = vsel %vm6262, %v6231, 0
    %v6411 = vsel %vm6262, %v6232, 0
    %v6414 = vsel %vm6262, %v6233, 0
    %v6417 = vsel %vm6262, %v6234, 0
    %v6420 = vsel %vm6262, %v6235, 0
    %v6423 = vsel %vm6262, %v6236, 0
    %v6426 = vsel %vm6262, %v6237, 0
    %v6429 = vsel %vm6262, %v6238, 0
    %v6432 = vsel %vm6262, %v6239, 0
    %v6435 = vsel %vm6262, %v6240, 0
    %v6438 = vsel %vm6262, %v6241, 0
    %v6441 = vsel %vm6262, %v6242, 0
    %v6444 = vsel %vm6262, %v6243, 0
    %v6447 = vsel %vm6262, %v6244, 0
    %v6450 = vsel %vm6262, %v6245, 0
    %v6453 = vsel %vm6262, %v6246, 0
    %6455 = vmatprep.subr.mxu0 0.0
    %6456 = vmatpush1.msra.mxu0 0.0
    %6457 = vmatprep.subr.mxu0 0.0
    %6458 = vmatpush1.msra.mxu0 0.0
    %6459 = vmatprep.subr.mxu0 0.0
    %6460 = vmatpush1.msra.mxu0 0.0
    %6461 = vmatprep.subr.mxu0 0.0
    %6462 = vmatpush1.msra.mxu0 0.0
    %6463 = vmatprep.subr.mxu0 0.0
    %6464 = vmatpush1.msra.mxu0 0.0
    %6465 = vmatprep.subr.mxu0 0.0
    %6466 = vmatpush1.msra.mxu0 0.0
    %6467 = vmatprep.subr.mxu0 0.0
    %6468 = vmatpush1.msra.mxu0 0.0
    %6469 = vmatprep.subr.mxu0 0.0
    %6470 = vmatpush1.msra.mxu0 0.0
    %6471 = vmatprep.subr.mxu0 0.0
    %6472 = vmatpush1.msra.mxu0 %v6254
    %6473 = vmatprep.subr.mxu0 0.0
    %6474 = vmatpush1.msra.mxu0 %v6253
    %6475 = vmatprep.subr.mxu0 0.0
    %6476 = vmatpush1.msra.mxu0 %v6252
    %6477 = vmatprep.subr.mxu0 0.0
    %6478 = vmatpush1.msra.mxu0 %v6251
    %6479 = vmatprep.subr.mxu0 0.0
    %6480 = vmatpush1.msra.mxu0 %v6250
    %6481 = vmatprep.subr.mxu0 0.0
    %6482 = vmatpush1.msra.mxu0 %v6249
    %6483 = vmatprep.subr.mxu0 0.0
    %6484 = vmatpush1.msra.mxu0 %v6248
    %6485 = vmatprep.subr.mxu0 0.0
    %6486 = vmatpush1.msra.mxu0 %v6247
    %6487 = vmatprep.subr.mxu0 0.0
    %6488 = vmatpush2.msra.mxu0 0.0
    %6489 = vmatprep.subr.mxu0 0.0
    %6490 = vmatpush2.msra.mxu0 0.0
    %6491 = vmatprep.subr.mxu0 0.0
    %6492 = vmatpush2.msra.mxu0 0.0
    %6493 = vmatprep.subr.mxu0 0.0
    %6494 = vmatpush2.msra.mxu0 0.0
    %6495 = vmatprep.subr.mxu0 0.0
    %6496 = vmatpush2.msra.mxu0 0.0
    %6497 = vmatprep.subr.mxu0 0.0
    %6498 = vmatpush2.msra.mxu0 0.0
    %6499 = vmatprep.subr.mxu0 0.0
    %6500 = vmatpush2.msra.mxu0 0.0
    %6501 = vmatprep.subr.mxu0 0.0
    %6502 = vmatpush2.msra.mxu0 0.0
    %6503 = vmatprep.subr.mxu0 0.0
    %6504 = vmatpush2.msra.mxu0 0.0
    %6505 = vmatprep.subr.mxu0 0.0
    %6506 = vmatpush2.msra.mxu0 0.0
    %6507 = vmatprep.subr.mxu0 0.0
    %6508 = vmatpush2.msra.mxu0 0.0
    %6509 = vmatprep.subr.mxu0 0.0
    %6510 = vmatpush2.msra.mxu0 0.0
    %6511 = vmatprep.subr.mxu0 0.0
    %6512 = vmatpush2.msra.mxu0 0.0
    %6513 = vmatprep.subr.mxu0 0.0
    %6514 = vmatpush2.msra.mxu0 0.0
    %6515 = vmatprep.subr.mxu0 0.0
    %6516 = vmatpush2.msra.mxu0 0.0
    %6517 = vmatprep.subr.mxu0 0.0
    %6518 = vmatpush2.msra.mxu0 0.0
    %6519 = vmatprep.mubr.f32.mxu0 0.0
    %6520 = vmatmul.mubr.f32.gmra.mxu0 %v6264
    %v6521 = vpop.f32.mrf.mxu0
    %v6522 = vadd.f32 %v6260, %v6521
    %v6523 = vpop.f32.mrf.mxu0
    %6524 = vmatprep.mubr.f32.mxu0 0.0
    %6525 = vmatmul.mubr.f32.gmra.mxu0 %v6267
    %v6526 = vpop.f32.mrf.mxu0
    %v6527 = vadd.f32 %v6260, %v6526
    %v6528 = vpop.f32.mrf.mxu0
    %6529 = vmatprep.mubr.f32.mxu0 0.0
    %6530 = vmatmul.mubr.f32.gmra.mxu0 %v6270
    %v6531 = vpop.f32.mrf.mxu0
    %v6532 = vadd.f32 %v6260, %v6531
    %v6533 = vpop.f32.mrf.mxu0
    %6534 = vmatprep.mubr.f32.mxu0 0.0
    %6535 = vmatmul.mubr.f32.gmra.mxu0 %v6273
    %v6536 = vpop.f32.mrf.mxu0
    %v6537 = vadd.f32 %v6260, %v6536
    %v6538 = vpop.f32.mrf.mxu0
    %6539 = vmatprep.mubr.f32.mxu0 0.0
    %6540 = vmatmul.mubr.f32.gmra.mxu0 %v6276
    %v6541 = vpop.f32.mrf.mxu0
    %v6542 = vadd.f32 %v6260, %v6541
    %v6543 = vpop.f32.mrf.mxu0
    %6544 = vmatprep.mubr.f32.mxu0 0.0
    %6545 = vmatmul.mubr.f32.gmra.mxu0 %v6279
    %v6546 = vpop.f32.mrf.mxu0
    %v6547 = vadd.f32 %v6260, %v6546
    %v6548 = vpop.f32.mrf.mxu0
    %6549 = vmatprep.mubr.f32.mxu0 0.0
    %6550 = vmatmul.mubr.f32.gmra.mxu0 %v6282
    %v6551 = vpop.f32.mrf.mxu0
    %v6552 = vadd.f32 %v6260, %v6551
    %v6553 = vpop.f32.mrf.mxu0
    %6554 = vmatprep.mubr.f32.mxu0 0.0
    %6555 = vmatmul.mubr.f32.gmra.mxu0 %v6285
    %v6556 = vpop.f32.mrf.mxu0
    %v6557 = vadd.f32 %v6260, %v6556
    %v6558 = vpop.f32.mrf.mxu0
    %6559 = vmatprep.mubr.f32.mxu0 0.0
    %6560 = vmatmul.mubr.f32.gmra.mxu0 %v6288
    %v6561 = vpop.f32.mrf.mxu0
    %v6562 = vadd.f32 %v6260, %v6561
    %v6563 = vpop.f32.mrf.mxu0
    %6564 = vmatprep.mubr.f32.mxu0 0.0
    %6565 = vmatmul.mubr.f32.gmra.mxu0 %v6291
    %v6566 = vpop.f32.mrf.mxu0
    %v6567 = vadd.f32 %v6260, %v6566
    %v6568 = vpop.f32.mrf.mxu0
    %6569 = vmatprep.mubr.f32.mxu0 0.0
    %6570 = vmatmul.mubr.f32.gmra.mxu0 %v6294
    %v6571 = vpop.f32.mrf.mxu0
    %v6572 = vadd.f32 %v6260, %v6571
    %v6573 = vpop.f32.mrf.mxu0
    %6574 = vmatprep.mubr.f32.mxu0 0.0
    %6575 = vmatmul.mubr.f32.gmra.mxu0 %v6297
    %v6576 = vpop.f32.mrf.mxu0
    %v6577 = vadd.f32 %v6260, %v6576
    %v6578 = vpop.f32.mrf.mxu0
    %6579 = vmatprep.mubr.f32.mxu0 0.0
    %6580 = vmatmul.mubr.f32.gmra.mxu0 %v6300
    %v6581 = vpop.f32.mrf.mxu0
    %v6582 = vadd.f32 %v6260, %v6581
    %v6583 = vpop.f32.mrf.mxu0
    %6584 = vmatprep.mubr.f32.mxu0 0.0
    %6585 = vmatmul.mubr.f32.gmra.mxu0 %v6303
    %v6586 = vpop.f32.mrf.mxu0
    %v6587 = vadd.f32 %v6260, %v6586
    %v6588 = vpop.f32.mrf.mxu0
    %6589 = vmatprep.mubr.f32.mxu0 0.0
    %6590 = vmatmul.mubr.f32.gmra.mxu0 %v6306
    %v6591 = vpop.f32.mrf.mxu0
    %v6592 = vadd.f32 %v6260, %v6591
    %v6593 = vpop.f32.mrf.mxu0
    %6594 = vmatprep.mubr.f32.mxu0 0.0
    %6595 = vmatmul.mubr.f32.gmra.mxu0 %v6309
    %v6596 = vpop.f32.mrf.mxu0
    %v6597 = vadd.f32 %v6260, %v6596
    %v6598 = vpop.f32.mrf.mxu0
    %6599 = vmatprep.mubr.f32.mxu0 0.0
    %6600 = vmatmul.mubr.f32.gmra.mxu0 %v6312
    %v6601 = vpop.f32.mrf.mxu0
    %v6602 = vadd.f32 %v6260, %v6601
    %v6603 = vpop.f32.mrf.mxu0
    %6604 = vmatprep.mubr.f32.mxu0 0.0
    %6605 = vmatmul.mubr.f32.gmra.mxu0 %v6315
    %v6606 = vpop.f32.mrf.mxu0
    %v6607 = vadd.f32 %v6260, %v6606
    %v6608 = vpop.f32.mrf.mxu0
    %6609 = vmatprep.mubr.f32.mxu0 0.0
    %6610 = vmatmul.mubr.f32.gmra.mxu0 %v6318
    %v6611 = vpop.f32.mrf.mxu0
    %v6612 = vadd.f32 %v6260, %v6611
    %v6613 = vpop.f32.mrf.mxu0
    %6614 = vmatprep.mubr.f32.mxu0 0.0
    %6615 = vmatmul.mubr.f32.gmra.mxu0 %v6321
    %v6616 = vpop.f32.mrf.mxu0
    %v6617 = vadd.f32 %v6260, %v6616
    %v6618 = vpop.f32.mrf.mxu0
    %6619 = vmatprep.mubr.f32.mxu0 0.0
    %6620 = vmatmul.mubr.f32.gmra.mxu0 %v6324
    %v6621 = vpop.f32.mrf.mxu0
    %v6622 = vadd.f32 %v6260, %v6621
    %v6623 = vpop.f32.mrf.mxu0
    %6624 = vmatprep.mubr.f32.mxu0 0.0
    %6625 = vmatmul.mubr.f32.gmra.mxu0 %v6327
    %v6626 = vpop.f32.mrf.mxu0
    %v6627 = vadd.f32 %v6260, %v6626
    %v6628 = vpop.f32.mrf.mxu0
    %6629 = vmatprep.mubr.f32.mxu0 0.0
    %6630 = vmatmul.mubr.f32.gmra.mxu0 %v6330
    %v6631 = vpop.f32.mrf.mxu0
    %v6632 = vadd.f32 %v6260, %v6631
    %v6633 = vpop.f32.mrf.mxu0
    %6634 = vmatprep.mubr.f32.mxu0 0.0
    %6635 = vmatmul.mubr.f32.gmra.mxu0 %v6333
    %v6636 = vpop.f32.mrf.mxu0
    %v6637 = vadd.f32 %v6260, %v6636
    %v6638 = vpop.f32.mrf.mxu0
    %6639 = vmatprep.mubr.f32.mxu0 0.0
    %6640 = vmatmul.mubr.f32.gmra.mxu0 %v6336
    %v6641 = vpop.f32.mrf.mxu0
    %v6642 = vadd.f32 %v6260, %v6641
    %v6643 = vpop.f32.mrf.mxu0
    %6644 = vmatprep.mubr.f32.mxu0 0.0
    %6645 = vmatmul.mubr.f32.gmra.mxu0 %v6339
    %v6646 = vpop.f32.mrf.mxu0
    %v6647 = vadd.f32 %v6260, %v6646
    %v6648 = vpop.f32.mrf.mxu0
    %6649 = vmatprep.mubr.f32.mxu0 0.0
    %6650 = vmatmul.mubr.f32.gmra.mxu0 %v6342
    %v6651 = vpop.f32.mrf.mxu0
    %v6652 = vadd.f32 %v6260, %v6651
    %v6653 = vpop.f32.mrf.mxu0
    %6654 = vmatprep.mubr.f32.mxu0 0.0
    %6655 = vmatmul.mubr.f32.gmra.mxu0 %v6345
    %v6656 = vpop.f32.mrf.mxu0
    %v6657 = vadd.f32 %v6260, %v6656
    %v6658 = vpop.f32.mrf.mxu0
    %6659 = vmatprep.mubr.f32.mxu0 0.0
    %6660 = vmatmul.mubr.f32.gmra.mxu0 %v6348
    %v6661 = vpop.f32.mrf.mxu0
    %v6662 = vadd.f32 %v6260, %v6661
    %v6663 = vpop.f32.mrf.mxu0
    %6664 = vmatprep.mubr.f32.mxu0 0.0
    %6665 = vmatmul.mubr.f32.gmra.mxu0 %v6351
    %v6666 = vpop.f32.mrf.mxu0
    %v6667 = vadd.f32 %v6260, %v6666
    %v6668 = vpop.f32.mrf.mxu0
    %6669 = vmatprep.mubr.f32.mxu0 0.0
    %6670 = vmatmul.mubr.f32.gmra.mxu0 %v6354
    %v6671 = vpop.f32.mrf.mxu0
    %v6672 = vadd.f32 %v6260, %v6671
    %v6673 = vpop.f32.mrf.mxu0
    %6674 = vmatprep.mubr.f32.mxu0 0.0
    %6675 = vmatmul.mubr.f32.gmra.mxu0 %v6357
    %v6676 = vpop.f32.mrf.mxu0
    %v6677 = vadd.f32 %v6260, %v6676
    %v6678 = vpop.f32.mrf.mxu0
    %6679 = vmatprep.mubr.f32.mxu0 0.0
    %6680 = vmatmul.mubr.f32.gmra.mxu0 %v6360
    %v6681 = vpop.f32.mrf.mxu0
    %v6682 = vadd.f32 %v6260, %v6681
    %v6683 = vpop.f32.mrf.mxu0
    %6684 = vmatprep.mubr.f32.mxu0 0.0
    %6685 = vmatmul.mubr.f32.gmra.mxu0 %v6363
    %v6686 = vpop.f32.mrf.mxu0
    %v6687 = vadd.f32 %v6260, %v6686
    %v6688 = vpop.f32.mrf.mxu0
    %6689 = vmatprep.mubr.f32.mxu0 0.0
    %6690 = vmatmul.mubr.f32.gmra.mxu0 %v6366
    %v6691 = vpop.f32.mrf.mxu0
    %v6692 = vadd.f32 %v6260, %v6691
    %v6693 = vpop.f32.mrf.mxu0
    %6694 = vmatprep.mubr.f32.mxu0 0.0
    %6695 = vmatmul.mubr.f32.gmra.mxu0 %v6369
    %v6696 = vpop.f32.mrf.mxu0
    %v6697 = vadd.f32 %v6260, %v6696
    %v6698 = vpop.f32.mrf.mxu0
    %6699 = vmatprep.mubr.f32.mxu0 0.0
    %6700 = vmatmul.mubr.f32.gmra.mxu0 %v6372
    %v6701 = vpop.f32.mrf.mxu0
    %v6702 = vadd.f32 %v6260, %v6701
    %v6703 = vpop.f32.mrf.mxu0
    %6704 = vmatprep.mubr.f32.mxu0 0.0
    %6705 = vmatmul.mubr.f32.gmra.mxu0 %v6375
    %v6706 = vpop.f32.mrf.mxu0
    %v6707 = vadd.f32 %v6260, %v6706
    %v6708 = vpop.f32.mrf.mxu0
    %6709 = vmatprep.mubr.f32.mxu0 0.0
    %6710 = vmatmul.mubr.f32.gmra.mxu0 %v6378
    %v6711 = vpop.f32.mrf.mxu0
    %v6712 = vadd.f32 %v6260, %v6711
    %v6713 = vpop.f32.mrf.mxu0
    %6714 = vmatprep.mubr.f32.mxu0 0.0
    %6715 = vmatmul.mubr.f32.gmra.mxu0 %v6381
    %v6716 = vpop.f32.mrf.mxu0
    %v6717 = vadd.f32 %v6260, %v6716
    %v6718 = vpop.f32.mrf.mxu0
    %6719 = vmatprep.mubr.f32.mxu0 0.0
    %6720 = vmatmul.mubr.f32.gmra.mxu0 %v6384
    %v6721 = vpop.f32.mrf.mxu0
    %v6722 = vadd.f32 %v6260, %v6721
    %v6723 = vpop.f32.mrf.mxu0
    %6724 = vmatprep.mubr.f32.mxu0 0.0
    %6725 = vmatmul.mubr.f32.gmra.mxu0 %v6387
    %v6726 = vpop.f32.mrf.mxu0
    %v6727 = vadd.f32 %v6260, %v6726
    %v6728 = vpop.f32.mrf.mxu0
    %6729 = vmatprep.mubr.f32.mxu0 0.0
    %6730 = vmatmul.mubr.f32.gmra.mxu0 %v6390
    %v6731 = vpop.f32.mrf.mxu0
    %v6732 = vadd.f32 %v6260, %v6731
    %v6733 = vpop.f32.mrf.mxu0
    %6734 = vmatprep.mubr.f32.mxu0 0.0
    %6735 = vmatmul.mubr.f32.gmra.mxu0 %v6393
    %v6736 = vpop.f32.mrf.mxu0
    %v6737 = vadd.f32 %v6260, %v6736
    %v6738 = vpop.f32.mrf.mxu0
    %6739 = vmatprep.mubr.f32.mxu0 0.0
    %6740 = vmatmul.mubr.f32.gmra.mxu0 %v6396
    %v6741 = vpop.f32.mrf.mxu0
    %v6742 = vadd.f32 %v6260, %v6741
    %v6743 = vpop.f32.mrf.mxu0
    %6744 = vmatprep.mubr.f32.mxu0 0.0
    %6745 = vmatmul.mubr.f32.gmra.mxu0 %v6399
    %v6746 = vpop.f32.mrf.mxu0
    %v6747 = vadd.f32 %v6260, %v6746
    %v6748 = vpop.f32.mrf.mxu0
    %6749 = vmatprep.mubr.f32.mxu0 0.0
    %6750 = vmatmul.mubr.f32.gmra.mxu0 %v6402
    %v6751 = vpop.f32.mrf.mxu0
    %v6752 = vadd.f32 %v6260, %v6751
    %v6753 = vpop.f32.mrf.mxu0
    %6754 = vmatprep.mubr.f32.mxu0 0.0
    %6755 = vmatmul.mubr.f32.gmra.mxu0 %v6405
    %v6756 = vpop.f32.mrf.mxu0
    %v6757 = vadd.f32 %v6260, %v6756
    %v6758 = vpop.f32.mrf.mxu0
    %6759 = vmatprep.mubr.f32.mxu0 0.0
    %6760 = vmatmul.mubr.f32.gmra.mxu0 %v6408
    %v6761 = vpop.f32.mrf.mxu0
    %v6762 = vadd.f32 %v6260, %v6761
    %v6763 = vpop.f32.mrf.mxu0
    %6764 = vmatprep.mubr.f32.mxu0 0.0
    %6765 = vmatmul.mubr.f32.gmra.mxu0 %v6411
    %v6766 = vpop.f32.mrf.mxu0
    %v6767 = vadd.f32 %v6260, %v6766
    %v6768 = vpop.f32.mrf.mxu0
    %6769 = vmatprep.mubr.f32.mxu0 0.0
    %6770 = vmatmul.mubr.f32.gmra.mxu0 %v6414
    %v6771 = vpop.f32.mrf.mxu0
    %v6772 = vadd.f32 %v6260, %v6771
    %v6773 = vpop.f32.mrf.mxu0
    %6774 = vmatprep.mubr.f32.mxu0 0.0
    %6775 = vmatmul.mubr.f32.gmra.mxu0 %v6417
    %v6776 = vpop.f32.mrf.mxu0
    %v6777 = vadd.f32 %v6260, %v6776
    %v6778 = vpop.f32.mrf.mxu0
    %6779 = vmatprep.mubr.f32.mxu0 0.0
    %6780 = vmatmul.mubr.f32.gmra.mxu0 %v6420
    %v6781 = vpop.f32.mrf.mxu0
    %v6782 = vadd.f32 %v6260, %v6781
    %v6783 = vpop.f32.mrf.mxu0
    %6784 = vmatprep.mubr.f32.mxu0 0.0
    %6785 = vmatmul.mubr.f32.gmra.mxu0 %v6423
    %v6786 = vpop.f32.mrf.mxu0
    %v6787 = vadd.f32 %v6260, %v6786
    %v6788 = vpop.f32.mrf.mxu0
    %6789 = vmatprep.mubr.f32.mxu0 0.0
    %6790 = vmatmul.mubr.f32.gmra.mxu0 %v6426
    %v6791 = vpop.f32.mrf.mxu0
    %v6792 = vadd.f32 %v6260, %v6791
    %v6793 = vpop.f32.mrf.mxu0
    %6794 = vmatprep.mubr.f32.mxu0 0.0
    %6795 = vmatmul.mubr.f32.gmra.mxu0 %v6429
    %v6796 = vpop.f32.mrf.mxu0
    %v6797 = vadd.f32 %v6260, %v6796
    %v6798 = vpop.f32.mrf.mxu0
    %6799 = vmatprep.mubr.f32.mxu0 0.0
    %6800 = vmatmul.mubr.f32.gmra.mxu0 %v6432
    %v6801 = vpop.f32.mrf.mxu0
    %v6802 = vadd.f32 %v6260, %v6801
    %v6803 = vpop.f32.mrf.mxu0
    %6804 = vmatprep.mubr.f32.mxu0 0.0
    %6805 = vmatmul.mubr.f32.gmra.mxu0 %v6435
    %v6806 = vpop.f32.mrf.mxu0
    %v6807 = vadd.f32 %v6260, %v6806
    %v6808 = vpop.f32.mrf.mxu0
    %6809 = vmatprep.mubr.f32.mxu0 0.0
    %6810 = vmatmul.mubr.f32.gmra.mxu0 %v6438
    %v6811 = vpop.f32.mrf.mxu0
    %v6812 = vadd.f32 %v6260, %v6811
    %v6813 = vpop.f32.mrf.mxu0
    %6814 = vmatprep.mubr.f32.mxu0 0.0
    %6815 = vmatmul.mubr.f32.gmra.mxu0 %v6441
    %v6816 = vpop.f32.mrf.mxu0
    %v6817 = vadd.f32 %v6260, %v6816
    %v6818 = vpop.f32.mrf.mxu0
    %6819 = vmatprep.mubr.f32.mxu0 0.0
    %6820 = vmatmul.mubr.f32.gmra.mxu0 %v6444
    %v6821 = vpop.f32.mrf.mxu0
    %v6822 = vadd.f32 %v6260, %v6821
    %v6823 = vpop.f32.mrf.mxu0
    %6824 = vmatprep.mubr.f32.mxu0 0.0
    %6825 = vmatmul.mubr.f32.gmra.mxu0 %v6447
    %v6826 = vpop.f32.mrf.mxu0
    %v6827 = vadd.f32 %v6260, %v6826
    %v6828 = vpop.f32.mrf.mxu0
    %6829 = vmatprep.mubr.f32.mxu0 0.0
    %6830 = vmatmul.mubr.f32.gmra.mxu0 %v6450
    %v6831 = vpop.f32.mrf.mxu0
    %v6832 = vadd.f32 %v6260, %v6831
    %v6833 = vpop.f32.mrf.mxu0
    %6834 = vmatprep.mubr.f32.mxu0 0.0
    %6835 = vmatmul.mubr.f32.gmra.mxu0 %v6453
    %v6836 = vpop.f32.mrf.mxu0
    %v6837 = vadd.f32 %v6260, %v6836
    %v6838 = vpop.f32.mrf.mxu0
    %6839 = vdwg.mxu0
    %v6840 = vmax.f32 %v6522, 0.0
    %v6841 = vmax.f32 %v6527, 0.0
    %v6842 = vmax.f32 %v6532, 0.0
    %v6843 = vmax.f32 %v6537, 0.0
    %v6844 = vmax.f32 %v6542, 0.0
    %v6845 = vmax.f32 %v6547, 0.0
    %v6846 = vmax.f32 %v6552, 0.0
    %v6847 = vmax.f32 %v6557, 0.0
    %v6848 = vmax.f32 %v6562, 0.0
    %v6849 = vmax.f32 %v6567, 0.0
    %v6850 = vmax.f32 %v6572, 0.0
    %v6851 = vmax.f32 %v6577, 0.0
    %v6852 = vmax.f32 %v6582, 0.0
    %v6853 = vmax.f32 %v6587, 0.0
    %v6854 = vmax.f32 %v6592, 0.0
    %v6855 = vmax.f32 %v6597, 0.0
    %v6856 = vmax.f32 %v6602, 0.0
    %v6857 = vmax.f32 %v6607, 0.0
    %v6858 = vmax.f32 %v6612, 0.0
    %v6859 = vmax.f32 %v6617, 0.0
    %v6860 = vmax.f32 %v6622, 0.0
    %v6861 = vmax.f32 %v6627, 0.0
    %v6862 = vmax.f32 %v6632, 0.0
    %v6863 = vmax.f32 %v6637, 0.0
    %v6864 = vmax.f32 %v6642, 0.0
    %v6865 = vmax.f32 %v6647, 0.0
    %v6866 = vmax.f32 %v6652, 0.0
    %v6867 = vmax.f32 %v6657, 0.0
    %v6868 = vmax.f32 %v6662, 0.0
    %v6869 = vmax.f32 %v6667, 0.0
    %v6870 = vmax.f32 %v6672, 0.0
    %v6871 = vmax.f32 %v6677, 0.0
    %v6872 = vmax.f32 %v6682, 0.0
    %v6873 = vmax.f32 %v6687, 0.0
    %v6874 = vmax.f32 %v6692, 0.0
    %v6875 = vmax.f32 %v6697, 0.0
    %v6876 = vmax.f32 %v6702, 0.0
    %v6877 = vmax.f32 %v6707, 0.0
    %v6878 = vmax.f32 %v6712, 0.0
    %v6879 = vmax.f32 %v6717, 0.0
    %v6880 = vmax.f32 %v6722, 0.0
    %v6881 = vmax.f32 %v6727, 0.0
    %v6882 = vmax.f32 %v6732, 0.0
    %v6883 = vmax.f32 %v6737, 0.0
    %v6884 = vmax.f32 %v6742, 0.0
    %v6885 = vmax.f32 %v6747, 0.0
    %v6886 = vmax.f32 %v6752, 0.0
    %v6887 = vmax.f32 %v6757, 0.0
    %v6888 = vmax.f32 %v6762, 0.0
    %v6889 = vmax.f32 %v6767, 0.0
    %v6890 = vmax.f32 %v6772, 0.0
    %v6891 = vmax.f32 %v6777, 0.0
    %v6892 = vmax.f32 %v6782, 0.0
    %v6893 = vmax.f32 %v6787, 0.0
    %v6894 = vmax.f32 %v6792, 0.0
    %v6895 = vmax.f32 %v6797, 0.0
    %v6896 = vmax.f32 %v6802, 0.0
    %v6897 = vmax.f32 %v6807, 0.0
    %v6898 = vmax.f32 %v6812, 0.0
    %v6899 = vmax.f32 %v6817, 0.0
    %v6900 = vmax.f32 %v6822, 0.0
    %v6901 = vmax.f32 %v6827, 0.0
    %v6902 = vmax.f32 %v6832, 0.0
    %v6903 = vmax.f32 %v6837, 0.0
    %v6904 = vadd.f32 %v6840, %v6842
    %v6905 = vadd.f32 %v6841, %v6843
    %v6906 = vadd.f32 %v6844, %v6846
    %v6907 = vadd.f32 %v6845, %v6847
    %v6908 = vadd.f32 %v6848, %v6850
    %v6909 = vadd.f32 %v6849, %v6851
    %v6910 = vadd.f32 %v6852, %v6854
    %v6911 = vadd.f32 %v6853, %v6855
    %v6912 = vadd.f32 %v6856, %v6858
    %v6913 = vadd.f32 %v6857, %v6859
    %v6914 = vadd.f32 %v6860, %v6862
    %v6915 = vadd.f32 %v6861, %v6863
    %v6916 = vadd.f32 %v6864, %v6866
    %v6917 = vadd.f32 %v6865, %v6867
    %v6918 = vadd.f32 %v6868, %v6870
    %v6919 = vadd.f32 %v6869, %v6871
    %v6920 = vadd.f32 %v6872, %v6874
    %v6921 = vadd.f32 %v6873, %v6875
    %v6922 = vadd.f32 %v6876, %v6878
    %v6923 = vadd.f32 %v6877, %v6879
    %v6924 = vadd.f32 %v6880, %v6882
    %v6925 = vadd.f32 %v6881, %v6883
    %v6926 = vadd.f32 %v6884, %v6886
    %v6927 = vadd.f32 %v6885, %v6887
    %v6928 = vadd.f32 %v6888, %v6890
    %v6929 = vadd.f32 %v6889, %v6891
    %v6930 = vadd.f32 %v6892, %v6894
    %v6931 = vadd.f32 %v6893, %v6895
    %v6932 = vadd.f32 %v6896, %v6898
    %v6933 = vadd.f32 %v6897, %v6899
    %v6934 = vadd.f32 %v6900, %v6902
    %v6935 = vadd.f32 %v6901, %v6903
    %vm6936 = vcmask 130048
    %6937 = vst.msk [vmem:[#allocation4] sm:$0xff] %vm6936, 0.0
    %vm6938 = vcmask 124928
    %6939 = vst.msk [vmem:[#allocation4 + $0x8] sm:$0x7] %vm6938, 0.0
    %6940 = vst.msk [vmem:[#allocation4 + $0x10] sm:$0xff] %vm6936, 0.0
    %6941 = vst.msk [vmem:[#allocation4 + $0x18] sm:$0x7] %vm6938, 0.0
    %6942 = vst.msk [vmem:[#allocation4 + $0x20] sm:$0xff] %vm6936, 0.0
    %6943 = vst.msk [vmem:[#allocation4 + $0x28] sm:$0x7] %vm6938, 0.0
    %6944 = vst.msk [vmem:[#allocation4 + $0x30] sm:$0xff] %vm6936, 0.0
    %6945 = vst.msk [vmem:[#allocation4 + $0x38] sm:$0x7] %vm6938, 0.0
    %6946 = vst.msk [vmem:[#allocation4 + $0x40] sm:$0xff] %vm6936, 0.0
    %6947 = vst.msk [vmem:[#allocation4 + $0x48] sm:$0x7] %vm6938, 0.0
    %6948 = vst.msk [vmem:[#allocation4 + $0x50] sm:$0xff] %vm6936, 0.0
    %6949 = vst.msk [vmem:[#allocation4 + $0x58] sm:$0x7] %vm6938, 0.0
    %6950 = vst.msk [vmem:[#allocation4 + $0x60] sm:$0xff] %vm6936, 0.0
    %6951 = vst.msk [vmem:[#allocation4 + $0x68] sm:$0x7] %vm6938, 0.0
    %6952 = vst.msk [vmem:[#allocation4 + $0x70] sm:$0xff] %vm6936, 0.0
    %6953 = vst.msk [vmem:[#allocation4 + $0x78] sm:$0x7] %vm6938, 0.0
    %6954 = vst.msk [vmem:[#allocation4 + $0x80] sm:$0xff] %vm6936, 0.0
    %6955 = vst.msk [vmem:[#allocation4 + $0x88] sm:$0x7] %vm6938, 0.0
    %6956 = vst.msk [vmem:[#allocation4 + $0x90] sm:$0xff] %vm6936, 0.0
    %6957 = vst.msk [vmem:[#allocation4 + $0x98] sm:$0x7] %vm6938, 0.0
    %6958 = vst.msk [vmem:[#allocation4 + $0xa0] sm:$0xff] %vm6936, 0.0
    %6959 = vst.msk [vmem:[#allocation4 + $0xa8] sm:$0x7] %vm6938, 0.0
    %6960 = vst.msk [vmem:[#allocation4 + $0xb0] sm:$0xff] %vm6936, 0.0
    %6961 = vst.msk [vmem:[#allocation4 + $0xb8] sm:$0x7] %vm6938, 0.0
    %6962 = vst.msk [vmem:[#allocation4 + $0xc0] sm:$0xff] %vm6936, 0.0
    %6963 = vst.msk [vmem:[#allocation4 + $0xc8] sm:$0x7] %vm6938, 0.0
    %6964 = vst.msk [vmem:[#allocation4 + $0xd0] sm:$0xff] %vm6936, 0.0
    %6965 = vst.msk [vmem:[#allocation4 + $0xd8] sm:$0x7] %vm6938, 0.0
    %6966 = vst.msk [vmem:[#allocation4 + $0xe0] sm:$0xff] %vm6936, 0.0
    %6967 = vst.msk [vmem:[#allocation4 + $0xe8] sm:$0x7] %vm6938, 0.0
    %6968 = vst.msk [vmem:[#allocation4 + $0xf0] sm:$0xff] %vm6936, 0.0
    %6969 = vst.msk [vmem:[#allocation4 + $0xf8] sm:$0x7] %vm6938, 0.0
    %6970 = vst.msk [vmem:[#allocation4 + $0x100] sm:$0xff] %vm6936, 0.0
    %6971 = vst.msk [vmem:[#allocation4 + $0x108] sm:$0x7] %vm6938, 0.0
    %6972 = vst.msk [vmem:[#allocation4 + $0x110] sm:$0xff] %vm6936, 0.0
    %6973 = vst.msk [vmem:[#allocation4 + $0x118] sm:$0x7] %vm6938, 0.0
    %6974 = vst.msk [vmem:[#allocation4 + $0x120] sm:$0xff] %vm6936, 0.0
    %6975 = vst.msk [vmem:[#allocation4 + $0x128] sm:$0x7] %vm6938, 0.0
    %6976 = vst.msk [vmem:[#allocation4 + $0x130] sm:$0xff] %vm6936, 0.0
    %6977 = vst.msk [vmem:[#allocation4 + $0x138] sm:$0x7] %vm6938, 0.0
    %6978 = vst.msk [vmem:[#allocation4 + $0x140] sm:$0xff] %vm6936, 0.0
    %6979 = vst.msk [vmem:[#allocation4 + $0x148] sm:$0x7] %vm6938, 0.0
    %6980 = vst.msk [vmem:[#allocation4 + $0x150] sm:$0xff] %vm6936, 0.0
    %6981 = vst.msk [vmem:[#allocation4 + $0x158] sm:$0x7] %vm6938, 0.0
    %v6998 = vrot.slane %v6904, 1
    %v6999 = vrot.slane %v6906, 1
    %v7000 = vrot.slane %v6908, 1
    %v7001 = vrot.slane %v6910, 1
    %v7002 = vrot.slane %v6912, 1
    %v7003 = vrot.slane %v6914, 1
    %v7004 = vrot.slane %v6916, 1
    %v7005 = vrot.slane %v6918, 1
    %v7006 = vrot.slane %v6920, 1
    %v7007 = vrot.slane %v6922, 1
    %v7008 = vrot.slane %v6924, 1
    %v7009 = vrot.slane %v6926, 1
    %v7010 = vrot.slane %v6928, 1
    %v7011 = vrot.slane %v6930, 1
    %v7012 = vrot.slane %v6932, 1
    %v7013 = vrot.slane %v6934, 1
    %v7030 = vadd.f32 %v6904, %v6998
    %v7031 = vadd.f32 %v6906, %v6999
    %v7032 = vadd.f32 %v6908, %v7000
    %v7033 = vadd.f32 %v6910, %v7001
    %v7034 = vadd.f32 %v6912, %v7002
    %v7035 = vadd.f32 %v6914, %v7003
    %v7036 = vadd.f32 %v6916, %v7004
    %v7037 = vadd.f32 %v6918, %v7005
    %v7038 = vadd.f32 %v6920, %v7006
    %v7039 = vadd.f32 %v6922, %v7007
    %v7040 = vadd.f32 %v6924, %v7008
    %v7041 = vadd.f32 %v6926, %v7009
    %v7042 = vadd.f32 %v6928, %v7010
    %v7043 = vadd.f32 %v6930, %v7011
    %v7044 = vadd.f32 %v6932, %v7012
    %v7045 = vadd.f32 %v6934, %v7013
    %v7046 = vmul.f32 %v7030, 0.5
    %v7047 = vmul.f32 %v7031, 0.5
    %v7048 = vmul.f32 %v7032, 0.5
    %v7049 = vmul.f32 %v7033, 0.5
    %v7050 = vmul.f32 %v7034, 0.5
    %v7051 = vmul.f32 %v7035, 0.5
    %v7052 = vmul.f32 %v7036, 0.5
    %v7053 = vmul.f32 %v7037, 0.5
    %v7054 = vmul.f32 %v7038, 0.5
    %v7055 = vmul.f32 %v7039, 0.5
    %v7056 = vmul.f32 %v7040, 0.5
    %v7057 = vmul.f32 %v7041, 0.5
    %v7058 = vmul.f32 %v7042, 0.5
    %v7059 = vmul.f32 %v7043, 0.5
    %v7060 = vmul.f32 %v7044, 0.5
    %v7061 = vmul.f32 %v7045, 0.5
    %s7062 = scalar_lea.vmem [#allocation4], 32
    %vm7063 = vcmask 122880
    %7064 = vst.msk [vmem:[%s7062 + $0x2] sm:$0x1] %vm7063, %v7046
    %7065 = vst.msk [vmem:[%s7062 + $0x12] sm:$0x1] %vm7063, %v7047
    %7066 = vst.msk [vmem:[%s7062 + $0x22] sm:$0x1] %vm7063, %v7048
    %7067 = vst.msk [vmem:[%s7062 + $0x32] sm:$0x1] %vm7063, %v7049
    %7068 = vst.msk [vmem:[%s7062 + $0x42] sm:$0x1] %vm7063, %v7050
    %7069 = vst.msk [vmem:[%s7062 + $0x52] sm:$0x1] %vm7063, %v7051
    %7070 = vst.msk [vmem:[%s7062 + $0x62] sm:$0x1] %vm7063, %v7052
    %7071 = vst.msk [vmem:[%s7062 + $0x72] sm:$0x1] %vm7063, %v7053
    %7072 = vst.msk [vmem:[%s7062 + $0xb2] sm:$0x1] %vm7063, %v7054
    %7073 = vst.msk [vmem:[%s7062 + $0xc2] sm:$0x1] %vm7063, %v7055
    %7074 = vst.msk [vmem:[%s7062 + $0xd2] sm:$0x1] %vm7063, %v7056
    %7075 = vst.msk [vmem:[%s7062 + $0xe2] sm:$0x1] %vm7063, %v7057
    %7076 = vst.msk [vmem:[%s7062 + $0xf2] sm:$0x1] %vm7063, %v7058
    %7077 = vst.msk [vmem:[%s7062 + $0x102] sm:$0x1] %vm7063, %v7059
    %7078 = vst.msk [vmem:[%s7062 + $0x112] sm:$0x1] %vm7063, %v7060
    %7079 = vst.msk [vmem:[%s7062 + $0x122] sm:$0x1] %vm7063, %v7061
    %vm7080 = vcmask 124930
    %7081 = vst.msk [vmem:[%s7062 + $0x1] sm:$0x4] %vm7080, %v7046
    %7082 = vst.msk [vmem:[%s7062 + $0x11] sm:$0x4] %vm7080, %v7047
    %7083 = vst.msk [vmem:[%s7062 + $0x21] sm:$0x4] %vm7080, %v7048
    %7084 = vst.msk [vmem:[%s7062 + $0x31] sm:$0x4] %vm7080, %v7049
    %7085 = vst.msk [vmem:[%s7062 + $0x41] sm:$0x4] %vm7080, %v7050
    %7086 = vst.msk [vmem:[%s7062 + $0x51] sm:$0x4] %vm7080, %v7051
    %7087 = vst.msk [vmem:[%s7062 + $0x61] sm:$0x4] %vm7080, %v7052
    %7088 = vst.msk [vmem:[%s7062 + $0x71] sm:$0x4] %vm7080, %v7053
    %7089 = vst.msk [vmem:[%s7062 + $0xb1] sm:$0x4] %vm7080, %v7054
    %7090 = vst.msk [vmem:[%s7062 + $0xc1] sm:$0x4] %vm7080, %v7055
    %7091 = vst.msk [vmem:[%s7062 + $0xd1] sm:$0x4] %vm7080, %v7056
    %7092 = vst.msk [vmem:[%s7062 + $0xe1] sm:$0x4] %vm7080, %v7057
    %7093 = vst.msk [vmem:[%s7062 + $0xf1] sm:$0x4] %vm7080, %v7058
    %7094 = vst.msk [vmem:[%s7062 + $0x101] sm:$0x4] %vm7080, %v7059
    %7095 = vst.msk [vmem:[%s7062 + $0x111] sm:$0x4] %vm7080, %v7060
    %7096 = vst.msk [vmem:[%s7062 + $0x121] sm:$0x4] %vm7080, %v7061
    %vm7097 = vcmask 126980
    %7098 = vst.msk [vmem:[%s7062] sm:$0x10] %vm7097, %v7046
    %7099 = vst.msk [vmem:[%s7062 + $0x10] sm:$0x10] %vm7097, %v7047
    %7100 = vst.msk [vmem:[%s7062 + $0x20] sm:$0x10] %vm7097, %v7048
    %7101 = vst.msk [vmem:[%s7062 + $0x30] sm:$0x10] %vm7097, %v7049
    %7102 = vst.msk [vmem:[%s7062 + $0x40] sm:$0x10] %vm7097, %v7050
    %7103 = vst.msk [vmem:[%s7062 + $0x50] sm:$0x10] %vm7097, %v7051
    %7104 = vst.msk [vmem:[%s7062 + $0x60] sm:$0x10] %vm7097, %v7052
    %7105 = vst.msk [vmem:[%s7062 + $0x70] sm:$0x10] %vm7097, %v7053
    %7106 = vst.msk [vmem:[%s7062 + $0xb0] sm:$0x10] %vm7097, %v7054
    %7107 = vst.msk [vmem:[%s7062 + $0xc0] sm:$0x10] %vm7097, %v7055
    %7108 = vst.msk [vmem:[%s7062 + $0xd0] sm:$0x10] %vm7097, %v7056
    %7109 = vst.msk [vmem:[%s7062 + $0xe0] sm:$0x10] %vm7097, %v7057
    %7110 = vst.msk [vmem:[%s7062 + $0xf0] sm:$0x10] %vm7097, %v7058
    %7111 = vst.msk [vmem:[%s7062 + $0x100] sm:$0x10] %vm7097, %v7059
    %7112 = vst.msk [vmem:[%s7062 + $0x110] sm:$0x10] %vm7097, %v7060
    %7113 = vst.msk [vmem:[%s7062 + $0x120] sm:$0x10] %vm7097, %v7061
    %vm7114 = vcmask 129030
    %7115 = vst.msk [vmem:[%s7062 - $0x1] sm:$0x40] %vm7114, %v7046
    %7116 = vst.msk [vmem:[%s7062 + $0xf] sm:$0x40] %vm7114, %v7047
    %7117 = vst.msk [vmem:[%s7062 + $0x1f] sm:$0x40] %vm7114, %v7048
    %7118 = vst.msk [vmem:[%s7062 + $0x2f] sm:$0x40] %vm7114, %v7049
    %7119 = vst.msk [vmem:[%s7062 + $0x3f] sm:$0x40] %vm7114, %v7050
    %7120 = vst.msk [vmem:[%s7062 + $0x4f] sm:$0x40] %vm7114, %v7051
    %7121 = vst.msk [vmem:[%s7062 + $0x5f] sm:$0x40] %vm7114, %v7052
    %7122 = vst.msk [vmem:[%s7062 + $0x6f] sm:$0x40] %vm7114, %v7053
    %7123 = vst.msk [vmem:[%s7062 + $0xaf] sm:$0x40] %vm7114, %v7054
    %7124 = vst.msk [vmem:[%s7062 + $0xbf] sm:$0x40] %vm7114, %v7055
    %7125 = vst.msk [vmem:[%s7062 + $0xcf] sm:$0x40] %vm7114, %v7056
    %7126 = vst.msk [vmem:[%s7062 + $0xdf] sm:$0x40] %vm7114, %v7057
    %7127 = vst.msk [vmem:[%s7062 + $0xef] sm:$0x40] %vm7114, %v7058
    %7128 = vst.msk [vmem:[%s7062 + $0xff] sm:$0x40] %vm7114, %v7059
    %7129 = vst.msk [vmem:[%s7062 + $0x10f] sm:$0x40] %vm7114, %v7060
    %7130 = vst.msk [vmem:[%s7062 + $0x11f] sm:$0x40] %vm7114, %v7061
    %v7147 = vrot.slane %v6905, 1
    %v7148 = vrot.slane %v6907, 1
    %v7149 = vrot.slane %v6909, 1
    %v7150 = vrot.slane %v6911, 1
    %v7151 = vrot.slane %v6913, 1
    %v7152 = vrot.slane %v6915, 1
    %v7153 = vrot.slane %v6917, 1
    %v7154 = vrot.slane %v6919, 1
    %v7155 = vrot.slane %v6921, 1
    %v7156 = vrot.slane %v6923, 1
    %v7157 = vrot.slane %v6925, 1
    %v7158 = vrot.slane %v6927, 1
    %v7159 = vrot.slane %v6929, 1
    %v7160 = vrot.slane %v6931, 1
    %v7161 = vrot.slane %v6933, 1
    %v7162 = vrot.slane %v6935, 1
    %v7179 = vadd.f32 %v6905, %v7147
    %v7180 = vadd.f32 %v6907, %v7148
    %v7181 = vadd.f32 %v6909, %v7149
    %v7182 = vadd.f32 %v6911, %v7150
    %v7183 = vadd.f32 %v6913, %v7151
    %v7184 = vadd.f32 %v6915, %v7152
    %v7185 = vadd.f32 %v6917, %v7153
    %v7186 = vadd.f32 %v6919, %v7154
    %v7187 = vadd.f32 %v6921, %v7155
    %v7188 = vadd.f32 %v6923, %v7156
    %v7189 = vadd.f32 %v6925, %v7157
    %v7190 = vadd.f32 %v6927, %v7158
    %v7191 = vadd.f32 %v6929, %v7159
    %v7192 = vadd.f32 %v6931, %v7160
    %v7193 = vadd.f32 %v6933, %v7161
    %v7194 = vadd.f32 %v6935, %v7162
    %v7195 = vmul.f32 %v7179, 0.5
    %v7196 = vmul.f32 %v7180, 0.5
    %v7197 = vmul.f32 %v7181, 0.5
    %v7198 = vmul.f32 %v7182, 0.5
    %v7199 = vmul.f32 %v7183, 0.5
    %v7200 = vmul.f32 %v7184, 0.5
    %v7201 = vmul.f32 %v7185, 0.5
    %v7202 = vmul.f32 %v7186, 0.5
    %v7203 = vmul.f32 %v7187, 0.5
    %v7204 = vmul.f32 %v7188, 0.5
    %v7205 = vmul.f32 %v7189, 0.5
    %v7206 = vmul.f32 %v7190, 0.5
    %v7207 = vmul.f32 %v7191, 0.5
    %v7208 = vmul.f32 %v7192, 0.5
    %v7209 = vmul.f32 %v7193, 0.5
    %v7210 = vmul.f32 %v7194, 0.5
    %7211 = vst.msk [vmem:[%s7062 + $0x6] sm:$0x1] %vm7063, %v7195
    %7212 = vst.msk [vmem:[%s7062 + $0x16] sm:$0x1] %vm7063, %v7196
    %7213 = vst.msk [vmem:[%s7062 + $0x26] sm:$0x1] %vm7063, %v7197
    %7214 = vst.msk [vmem:[%s7062 + $0x36] sm:$0x1] %vm7063, %v7198
    %7215 = vst.msk [vmem:[%s7062 + $0x46] sm:$0x1] %vm7063, %v7199
    %7216 = vst.msk [vmem:[%s7062 + $0x56] sm:$0x1] %vm7063, %v7200
    %7217 = vst.msk [vmem:[%s7062 + $0x66] sm:$0x1] %vm7063, %v7201
    %7218 = vst.msk [vmem:[%s7062 + $0x76] sm:$0x1] %vm7063, %v7202
    %7219 = vst.msk [vmem:[%s7062 + $0xb6] sm:$0x1] %vm7063, %v7203
    %7220 = vst.msk [vmem:[%s7062 + $0xc6] sm:$0x1] %vm7063, %v7204
    %7221 = vst.msk [vmem:[%s7062 + $0xd6] sm:$0x1] %vm7063, %v7205
    %7222 = vst.msk [vmem:[%s7062 + $0xe6] sm:$0x1] %vm7063, %v7206
    %7223 = vst.msk [vmem:[%s7062 + $0xf6] sm:$0x1] %vm7063, %v7207
    %7224 = vst.msk [vmem:[%s7062 + $0x106] sm:$0x1] %vm7063, %v7208
    %7225 = vst.msk [vmem:[%s7062 + $0x116] sm:$0x1] %vm7063, %v7209
    %7226 = vst.msk [vmem:[%s7062 + $0x126] sm:$0x1] %vm7063, %v7210
    %7227 = vst.msk [vmem:[%s7062 + $0x5] sm:$0x4] %vm7080, %v7195
    %7228 = vst.msk [vmem:[%s7062 + $0x15] sm:$0x4] %vm7080, %v7196
    %7229 = vst.msk [vmem:[%s7062 + $0x25] sm:$0x4] %vm7080, %v7197
    %7230 = vst.msk [vmem:[%s7062 + $0x35] sm:$0x4] %vm7080, %v7198
    %7231 = vst.msk [vmem:[%s7062 + $0x45] sm:$0x4] %vm7080, %v7199
    %7232 = vst.msk [vmem:[%s7062 + $0x55] sm:$0x4] %vm7080, %v7200
    %7233 = vst.msk [vmem:[%s7062 + $0x65] sm:$0x4] %vm7080, %v7201
    %7234 = vst.msk [vmem:[%s7062 + $0x75] sm:$0x4] %vm7080, %v7202
    %7235 = vst.msk [vmem:[%s7062 + $0xb5] sm:$0x4] %vm7080, %v7203
    %7236 = vst.msk [vmem:[%s7062 + $0xc5] sm:$0x4] %vm7080, %v7204
    %7237 = vst.msk [vmem:[%s7062 + $0xd5] sm:$0x4] %vm7080, %v7205
    %7238 = vst.msk [vmem:[%s7062 + $0xe5] sm:$0x4] %vm7080, %v7206
    %7239 = vst.msk [vmem:[%s7062 + $0xf5] sm:$0x4] %vm7080, %v7207
    %7240 = vst.msk [vmem:[%s7062 + $0x105] sm:$0x4] %vm7080, %v7208
    %7241 = vst.msk [vmem:[%s7062 + $0x115] sm:$0x4] %vm7080, %v7209
    %7242 = vst.msk [vmem:[%s7062 + $0x125] sm:$0x4] %vm7080, %v7210
    %7243 = vst.msk [vmem:[%s7062 + $0x4] sm:$0x10] %vm7097, %v7195
    %7244 = vst.msk [vmem:[%s7062 + $0x14] sm:$0x10] %vm7097, %v7196
    %7245 = vst.msk [vmem:[%s7062 + $0x24] sm:$0x10] %vm7097, %v7197
    %7246 = vst.msk [vmem:[%s7062 + $0x34] sm:$0x10] %vm7097, %v7198
    %7247 = vst.msk [vmem:[%s7062 + $0x44] sm:$0x10] %vm7097, %v7199
    %7248 = vst.msk [vmem:[%s7062 + $0x54] sm:$0x10] %vm7097, %v7200
    %7249 = vst.msk [vmem:[%s7062 + $0x64] sm:$0x10] %vm7097, %v7201
    %7250 = vst.msk [vmem:[%s7062 + $0x74] sm:$0x10] %vm7097, %v7202
    %7251 = vst.msk [vmem:[%s7062 + $0xb4] sm:$0x10] %vm7097, %v7203
    %7252 = vst.msk [vmem:[%s7062 + $0xc4] sm:$0x10] %vm7097, %v7204
    %7253 = vst.msk [vmem:[%s7062 + $0xd4] sm:$0x10] %vm7097, %v7205
    %7254 = vst.msk [vmem:[%s7062 + $0xe4] sm:$0x10] %vm7097, %v7206
    %7255 = vst.msk [vmem:[%s7062 + $0xf4] sm:$0x10] %vm7097, %v7207
    %7256 = vst.msk [vmem:[%s7062 + $0x104] sm:$0x10] %vm7097, %v7208
    %7257 = vst.msk [vmem:[%s7062 + $0x114] sm:$0x10] %vm7097, %v7209
    %7258 = vst.msk [vmem:[%s7062 + $0x124] sm:$0x10] %vm7097, %v7210
    %7259 = vst.msk [vmem:[%s7062 + $0x3] sm:$0x40] %vm7114, %v7195
    %7260 = vst.msk [vmem:[%s7062 + $0x13] sm:$0x40] %vm7114, %v7196
    %7261 = vst.msk [vmem:[%s7062 + $0x23] sm:$0x40] %vm7114, %v7197
    %7262 = vst.msk [vmem:[%s7062 + $0x33] sm:$0x40] %vm7114, %v7198
    %7263 = vst.msk [vmem:[%s7062 + $0x43] sm:$0x40] %vm7114, %v7199
    %7264 = vst.msk [vmem:[%s7062 + $0x53] sm:$0x40] %vm7114, %v7200
    %7265 = vst.msk [vmem:[%s7062 + $0x63] sm:$0x40] %vm7114, %v7201
    %7266 = vst.msk [vmem:[%s7062 + $0x73] sm:$0x40] %vm7114, %v7202
    %7267 = vst.msk [vmem:[%s7062 + $0xb3] sm:$0x40] %vm7114, %v7203
    %7268 = vst.msk [vmem:[%s7062 + $0xc3] sm:$0x40] %vm7114, %v7204
    %7269 = vst.msk [vmem:[%s7062 + $0xd3] sm:$0x40] %vm7114, %v7205
    %7270 = vst.msk [vmem:[%s7062 + $0xe3] sm:$0x40] %vm7114, %v7206
    %7271 = vst.msk [vmem:[%s7062 + $0xf3] sm:$0x40] %vm7114, %v7207
    %7272 = vst.msk [vmem:[%s7062 + $0x103] sm:$0x40] %vm7114, %v7208
    %7273 = vst.msk [vmem:[%s7062 + $0x113] sm:$0x40] %vm7114, %v7209
    %7274 = vst.msk [vmem:[%s7062 + $0x123] sm:$0x40] %vm7114, %v7210
    %v7275 = vld [vmem:[#allocation4] sm:$0xff]
    %v7276 = vld [vmem:[#allocation4 + $0x10] sm:$0xff]
    %v7277 = vld [vmem:[#allocation4 + $0x20] sm:$0xff]
    %v7278 = vld [vmem:[#allocation4 + $0x30] sm:$0xff]
    %v7279 = vld [vmem:[#allocation4 + $0x40] sm:$0xff]
    %v7280 = vld [vmem:[#allocation4 + $0x50] sm:$0xff]
    %v7281 = vld [vmem:[#allocation4 + $0x60] sm:$0xff]
    %v7282 = vld [vmem:[#allocation4 + $0x70] sm:$0xff]
    %v7283 = vld [vmem:[#allocation4 + $0xb0] sm:$0xff]
    %v7284 = vld [vmem:[#allocation4 + $0xc0] sm:$0xff]
    %v7285 = vld [vmem:[#allocation4 + $0xd0] sm:$0xff]
    %v7286 = vld [vmem:[#allocation4 + $0xe0] sm:$0xff]
    %v7287 = vld [vmem:[#allocation4 + $0xf0] sm:$0xff]
    %v7288 = vld [vmem:[#allocation4 + $0x100] sm:$0xff]
    %v7289 = vld [vmem:[#allocation4 + $0x110] sm:$0xff]
    %v7290 = vld [vmem:[#allocation4 + $0x120] sm:$0xff]
    %7291 = vst.msk [vmem:[#allocation5] sm:$0xff] %vm6936, %v7275
    %7292 = vst.msk [vmem:[#allocation5 + $0x10] sm:$0xff] %vm6936, %v7276
    %7293 = vst.msk [vmem:[#allocation5 + $0x20] sm:$0xff] %vm6936, %v7277
    %7294 = vst.msk [vmem:[#allocation5 + $0x30] sm:$0xff] %vm6936, %v7278
    %7295 = vst.msk [vmem:[#allocation5 + $0x40] sm:$0xff] %vm6936, %v7279
    %7296 = vst.msk [vmem:[#allocation5 + $0x50] sm:$0xff] %vm6936, %v7280
    %7297 = vst.msk [vmem:[#allocation5 + $0x60] sm:$0xff] %vm6936, %v7281
    %7298 = vst.msk [vmem:[#allocation5 + $0x70] sm:$0xff] %vm6936, %v7282
    %7299 = vst.msk [vmem:[#allocation5 + $0x80] sm:$0xff] %vm6936, %v7283
    %7300 = vst.msk [vmem:[#allocation5 + $0x90] sm:$0xff] %vm6936, %v7284
    %7301 = vst.msk [vmem:[#allocation5 + $0xa0] sm:$0xff] %vm6936, %v7285
    %7302 = vst.msk [vmem:[#allocation5 + $0xb0] sm:$0xff] %vm6936, %v7286
    %7303 = vst.msk [vmem:[#allocation5 + $0xc0] sm:$0xff] %vm6936, %v7287
    %7304 = vst.msk [vmem:[#allocation5 + $0xd0] sm:$0xff] %vm6936, %v7288
    %7305 = vst.msk [vmem:[#allocation5 + $0xe0] sm:$0xff] %vm6936, %v7289
    %7306 = vst.msk [vmem:[#allocation5 + $0xf0] sm:$0xff] %vm6936, %v7290
    %v7307 = vld [vmem:[#allocation4 + $0x1] sm:$0xff]
    %v7308 = vld [vmem:[#allocation4 + $0x11] sm:$0xff]
    %v7309 = vld [vmem:[#allocation4 + $0x21] sm:$0xff]
    %v7310 = vld [vmem:[#allocation4 + $0x31] sm:$0xff]
    %v7311 = vld [vmem:[#allocation4 + $0x41] sm:$0xff]
    %v7312 = vld [vmem:[#allocation4 + $0x51] sm:$0xff]
    %v7313 = vld [vmem:[#allocation4 + $0x61] sm:$0xff]
    %v7314 = vld [vmem:[#allocation4 + $0x71] sm:$0xff]
    %v7315 = vld [vmem:[#allocation4 + $0xb1] sm:$0xff]
    %v7316 = vld [vmem:[#allocation4 + $0xc1] sm:$0xff]
    %v7317 = vld [vmem:[#allocation4 + $0xd1] sm:$0xff]
    %v7318 = vld [vmem:[#allocation4 + $0xe1] sm:$0xff]
    %v7319 = vld [vmem:[#allocation4 + $0xf1] sm:$0xff]
    %v7320 = vld [vmem:[#allocation4 + $0x101] sm:$0xff]
    %v7321 = vld [vmem:[#allocation4 + $0x111] sm:$0xff]
    %v7322 = vld [vmem:[#allocation4 + $0x121] sm:$0xff]
    %7339 = vrot.lane.b32.xlu0 %v7307, 16
    %v7340 = vpop.permute.xlu0 %7339
    %7341 = vrot.lane.b32.xlu0 %v7308, 16
    %v7342 = vpop.permute.xlu0 %7341
    %7343 = vrot.lane.b32.xlu0 %v7309, 16
    %v7344 = vpop.permute.xlu0 %7343
    %7345 = vrot.lane.b32.xlu0 %v7310, 16
    %v7346 = vpop.permute.xlu0 %7345
    %7347 = vrot.lane.b32.xlu0 %v7311, 16
    %v7348 = vpop.permute.xlu0 %7347
    %7349 = vrot.lane.b32.xlu0 %v7312, 16
    %v7350 = vpop.permute.xlu0 %7349
    %7351 = vrot.lane.b32.xlu0 %v7313, 16
    %v7352 = vpop.permute.xlu0 %7351
    %7353 = vrot.lane.b32.xlu0 %v7314, 16
    %v7354 = vpop.permute.xlu0 %7353
    %7355 = vrot.lane.b32.xlu0 %v7315, 16
    %v7356 = vpop.permute.xlu0 %7355
    %7357 = vrot.lane.b32.xlu0 %v7316, 16
    %v7358 = vpop.permute.xlu0 %7357
    %7359 = vrot.lane.b32.xlu0 %v7317, 16
    %v7360 = vpop.permute.xlu0 %7359
    %7361 = vrot.lane.b32.xlu0 %v7318, 16
    %v7362 = vpop.permute.xlu0 %7361
    %7363 = vrot.lane.b32.xlu0 %v7319, 16
    %v7364 = vpop.permute.xlu0 %7363
    %7365 = vrot.lane.b32.xlu0 %v7320, 16
    %v7366 = vpop.permute.xlu0 %7365
    %7367 = vrot.lane.b32.xlu0 %v7321, 16
    %v7368 = vpop.permute.xlu0 %7367
    %7369 = vrot.lane.b32.xlu0 %v7322, 16
    %v7370 = vpop.permute.xlu0 %7369
    %vm7387 = vcmask 261248
    %7388 = vst.msk [vmem:[#allocation5] sm:$0xff] %vm7387, %v7340
    %7389 = vst.msk [vmem:[#allocation5 + $0x10] sm:$0xff] %vm7387, %v7342
    %7390 = vst.msk [vmem:[#allocation5 + $0x20] sm:$0xff] %vm7387, %v7344
    %7391 = vst.msk [vmem:[#allocation5 + $0x30] sm:$0xff] %vm7387, %v7346
    %7392 = vst.msk [vmem:[#allocation5 + $0x40] sm:$0xff] %vm7387, %v7348
    %7393 = vst.msk [vmem:[#allocation5 + $0x50] sm:$0xff] %vm7387, %v7350
    %7394 = vst.msk [vmem:[#allocation5 + $0x60] sm:$0xff] %vm7387, %v7352
    %7395 = vst.msk [vmem:[#allocation5 + $0x70] sm:$0xff] %vm7387, %v7354
    %7396 = vst.msk [vmem:[#allocation5 + $0x80] sm:$0xff] %vm7387, %v7356
    %7397 = vst.msk [vmem:[#allocation5 + $0x90] sm:$0xff] %vm7387, %v7358
    %7398 = vst.msk [vmem:[#allocation5 + $0xa0] sm:$0xff] %vm7387, %v7360
    %7399 = vst.msk [vmem:[#allocation5 + $0xb0] sm:$0xff] %vm7387, %v7362
    %7400 = vst.msk [vmem:[#allocation5 + $0xc0] sm:$0xff] %vm7387, %v7364
    %7401 = vst.msk [vmem:[#allocation5 + $0xd0] sm:$0xff] %vm7387, %v7366
    %7402 = vst.msk [vmem:[#allocation5 + $0xe0] sm:$0xff] %vm7387, %v7368
    %7403 = vst.msk [vmem:[#allocation5 + $0xf0] sm:$0xff] %vm7387, %v7370
    %v7404 = vld [vmem:[#allocation4 + $0x2] sm:$0xff]
    %v7405 = vld [vmem:[#allocation4 + $0x12] sm:$0xff]
    %v7406 = vld [vmem:[#allocation4 + $0x22] sm:$0xff]
    %v7407 = vld [vmem:[#allocation4 + $0x32] sm:$0xff]
    %v7408 = vld [vmem:[#allocation4 + $0x42] sm:$0xff]
    %v7409 = vld [vmem:[#allocation4 + $0x52] sm:$0xff]
    %v7410 = vld [vmem:[#allocation4 + $0x62] sm:$0xff]
    %v7411 = vld [vmem:[#allocation4 + $0x72] sm:$0xff]
    %v7412 = vld [vmem:[#allocation4 + $0xb2] sm:$0xff]
    %v7413 = vld [vmem:[#allocation4 + $0xc2] sm:$0xff]
    %v7414 = vld [vmem:[#allocation4 + $0xd2] sm:$0xff]
    %v7415 = vld [vmem:[#allocation4 + $0xe2] sm:$0xff]
    %v7416 = vld [vmem:[#allocation4 + $0xf2] sm:$0xff]
    %v7417 = vld [vmem:[#allocation4 + $0x102] sm:$0xff]
    %v7418 = vld [vmem:[#allocation4 + $0x112] sm:$0xff]
    %v7419 = vld [vmem:[#allocation4 + $0x122] sm:$0xff]
    %7436 = vrot.lane.b32.xlu0 %v7404, 32
    %v7437 = vpop.permute.xlu0 %7436
    %7438 = vrot.lane.b32.xlu0 %v7405, 32
    %v7439 = vpop.permute.xlu0 %7438
    %7440 = vrot.lane.b32.xlu0 %v7406, 32
    %v7441 = vpop.permute.xlu0 %7440
    %7442 = vrot.lane.b32.xlu0 %v7407, 32
    %v7443 = vpop.permute.xlu0 %7442
    %7444 = vrot.lane.b32.xlu0 %v7408, 32
    %v7445 = vpop.permute.xlu0 %7444
    %7446 = vrot.lane.b32.xlu0 %v7409, 32
    %v7447 = vpop.permute.xlu0 %7446
    %7448 = vrot.lane.b32.xlu0 %v7410, 32
    %v7449 = vpop.permute.xlu0 %7448
    %7450 = vrot.lane.b32.xlu0 %v7411, 32
    %v7451 = vpop.permute.xlu0 %7450
    %7452 = vrot.lane.b32.xlu0 %v7412, 32
    %v7453 = vpop.permute.xlu0 %7452
    %7454 = vrot.lane.b32.xlu0 %v7413, 32
    %v7455 = vpop.permute.xlu0 %7454
    %7456 = vrot.lane.b32.xlu0 %v7414, 32
    %v7457 = vpop.permute.xlu0 %7456
    %7458 = vrot.lane.b32.xlu0 %v7415, 32
    %v7459 = vpop.permute.xlu0 %7458
    %7460 = vrot.lane.b32.xlu0 %v7416, 32
    %v7461 = vpop.permute.xlu0 %7460
    %7462 = vrot.lane.b32.xlu0 %v7417, 32
    %v7463 = vpop.permute.xlu0 %7462
    %7464 = vrot.lane.b32.xlu0 %v7418, 32
    %v7465 = vpop.permute.xlu0 %7464
    %7466 = vrot.lane.b32.xlu0 %v7419, 32
    %v7467 = vpop.permute.xlu0 %7466
    %vm7484 = vcmask 392448
    %7485 = vst.msk [vmem:[#allocation5] sm:$0xff] %vm7484, %v7437
    %7486 = vst.msk [vmem:[#allocation5 + $0x10] sm:$0xff] %vm7484, %v7439
    %7487 = vst.msk [vmem:[#allocation5 + $0x20] sm:$0xff] %vm7484, %v7441
    %7488 = vst.msk [vmem:[#allocation5 + $0x30] sm:$0xff] %vm7484, %v7443
    %7489 = vst.msk [vmem:[#allocation5 + $0x40] sm:$0xff] %vm7484, %v7445
    %7490 = vst.msk [vmem:[#allocation5 + $0x50] sm:$0xff] %vm7484, %v7447
    %7491 = vst.msk [vmem:[#allocation5 + $0x60] sm:$0xff] %vm7484, %v7449
    %7492 = vst.msk [vmem:[#allocation5 + $0x70] sm:$0xff] %vm7484, %v7451
    %7493 = vst.msk [vmem:[#allocation5 + $0x80] sm:$0xff] %vm7484, %v7453
    %7494 = vst.msk [vmem:[#allocation5 + $0x90] sm:$0xff] %vm7484, %v7455
    %7495 = vst.msk [vmem:[#allocation5 + $0xa0] sm:$0xff] %vm7484, %v7457
    %7496 = vst.msk [vmem:[#allocation5 + $0xb0] sm:$0xff] %vm7484, %v7459
    %7497 = vst.msk [vmem:[#allocation5 + $0xc0] sm:$0xff] %vm7484, %v7461
    %7498 = vst.msk [vmem:[#allocation5 + $0xd0] sm:$0xff] %vm7484, %v7463
    %7499 = vst.msk [vmem:[#allocation5 + $0xe0] sm:$0xff] %vm7484, %v7465
    %7500 = vst.msk [vmem:[#allocation5 + $0xf0] sm:$0xff] %vm7484, %v7467
    %v7501 = vld [vmem:[#allocation4 + $0x3] sm:$0xff]
    %v7502 = vld [vmem:[#allocation4 + $0x13] sm:$0xff]
    %v7503 = vld [vmem:[#allocation4 + $0x23] sm:$0xff]
    %v7504 = vld [vmem:[#allocation4 + $0x33] sm:$0xff]
    %v7505 = vld [vmem:[#allocation4 + $0x43] sm:$0xff]
    %v7506 = vld [vmem:[#allocation4 + $0x53] sm:$0xff]
    %v7507 = vld [vmem:[#allocation4 + $0x63] sm:$0xff]
    %v7508 = vld [vmem:[#allocation4 + $0x73] sm:$0xff]
    %v7509 = vld [vmem:[#allocation4 + $0xb3] sm:$0xff]
    %v7510 = vld [vmem:[#allocation4 + $0xc3] sm:$0xff]
    %v7511 = vld [vmem:[#allocation4 + $0xd3] sm:$0xff]
    %v7512 = vld [vmem:[#allocation4 + $0xe3] sm:$0xff]
    %v7513 = vld [vmem:[#allocation4 + $0xf3] sm:$0xff]
    %v7514 = vld [vmem:[#allocation4 + $0x103] sm:$0xff]
    %v7515 = vld [vmem:[#allocation4 + $0x113] sm:$0xff]
    %v7516 = vld [vmem:[#allocation4 + $0x123] sm:$0xff]
    %7533 = vrot.lane.b32.xlu0 %v7501, 48
    %v7534 = vpop.permute.xlu0 %7533
    %7535 = vrot.lane.b32.xlu0 %v7502, 48
    %v7536 = vpop.permute.xlu0 %7535
    %7537 = vrot.lane.b32.xlu0 %v7503, 48
    %v7538 = vpop.permute.xlu0 %7537
    %7539 = vrot.lane.b32.xlu0 %v7504, 48
    %v7540 = vpop.permute.xlu0 %7539
    %7541 = vrot.lane.b32.xlu0 %v7505, 48
    %v7542 = vpop.permute.xlu0 %7541
    %7543 = vrot.lane.b32.xlu0 %v7506, 48
    %v7544 = vpop.permute.xlu0 %7543
    %7545 = vrot.lane.b32.xlu0 %v7507, 48
    %v7546 = vpop.permute.xlu0 %7545
    %7547 = vrot.lane.b32.xlu0 %v7508, 48
    %v7548 = vpop.permute.xlu0 %7547
    %7549 = vrot.lane.b32.xlu0 %v7509, 48
    %v7550 = vpop.permute.xlu0 %7549
    %7551 = vrot.lane.b32.xlu0 %v7510, 48
    %v7552 = vpop.permute.xlu0 %7551
    %7553 = vrot.lane.b32.xlu0 %v7511, 48
    %v7554 = vpop.permute.xlu0 %7553
    %7555 = vrot.lane.b32.xlu0 %v7512, 48
    %v7556 = vpop.permute.xlu0 %7555
    %7557 = vrot.lane.b32.xlu0 %v7513, 48
    %v7558 = vpop.permute.xlu0 %7557
    %7559 = vrot.lane.b32.xlu0 %v7514, 48
    %v7560 = vpop.permute.xlu0 %7559
    %7561 = vrot.lane.b32.xlu0 %v7515, 48
    %v7562 = vpop.permute.xlu0 %7561
    %7563 = vrot.lane.b32.xlu0 %v7516, 48
    %v7564 = vpop.permute.xlu0 %7563
    %vm7581 = vcmask 523648
    %7582 = vst.msk [vmem:[#allocation5] sm:$0xff] %vm7581, %v7534
    %7583 = vst.msk [vmem:[#allocation5 + $0x10] sm:$0xff] %vm7581, %v7536
    %7584 = vst.msk [vmem:[#allocation5 + $0x20] sm:$0xff] %vm7581, %v7538
    %7585 = vst.msk [vmem:[#allocation5 + $0x30] sm:$0xff] %vm7581, %v7540
    %7586 = vst.msk [vmem:[#allocation5 + $0x40] sm:$0xff] %vm7581, %v7542
    %7587 = vst.msk [vmem:[#allocation5 + $0x50] sm:$0xff] %vm7581, %v7544
    %7588 = vst.msk [vmem:[#allocation5 + $0x60] sm:$0xff] %vm7581, %v7546
    %7589 = vst.msk [vmem:[#allocation5 + $0x70] sm:$0xff] %vm7581, %v7548
    %7590 = vst.msk [vmem:[#allocation5 + $0x80] sm:$0xff] %vm7581, %v7550
    %7591 = vst.msk [vmem:[#allocation5 + $0x90] sm:$0xff] %vm7581, %v7552
    %7592 = vst.msk [vmem:[#allocation5 + $0xa0] sm:$0xff] %vm7581, %v7554
    %7593 = vst.msk [vmem:[#allocation5 + $0xb0] sm:$0xff] %vm7581, %v7556
    %7594 = vst.msk [vmem:[#allocation5 + $0xc0] sm:$0xff] %vm7581, %v7558
    %7595 = vst.msk [vmem:[#allocation5 + $0xd0] sm:$0xff] %vm7581, %v7560
    %7596 = vst.msk [vmem:[#allocation5 + $0xe0] sm:$0xff] %vm7581, %v7562
    %7597 = vst.msk [vmem:[#allocation5 + $0xf0] sm:$0xff] %vm7581, %v7564
    %s7598 = scalar_lea.vmem [#allocation4], 16
    %v7599 = vld [vmem:[%s7598] sm:$0xff]
    %v7600 = vld [vmem:[%s7598 + $0x10] sm:$0xff]
    %v7601 = vld [vmem:[%s7598 + $0x20] sm:$0xff]
    %v7602 = vld [vmem:[%s7598 + $0x30] sm:$0xff]
    %v7603 = vld [vmem:[%s7598 + $0x40] sm:$0xff]
    %v7604 = vld [vmem:[%s7598 + $0x50] sm:$0xff]
    %v7605 = vld [vmem:[%s7598 + $0x60] sm:$0xff]
    %v7606 = vld [vmem:[%s7598 + $0x70] sm:$0xff]
    %v7607 = vld [vmem:[%s7598 + $0xb0] sm:$0xff]
    %v7608 = vld [vmem:[%s7598 + $0xc0] sm:$0xff]
    %v7609 = vld [vmem:[%s7598 + $0xd0] sm:$0xff]
    %v7610 = vld [vmem:[%s7598 + $0xe0] sm:$0xff]
    %v7611 = vld [vmem:[%s7598 + $0xf0] sm:$0xff]
    %v7612 = vld [vmem:[%s7598 + $0x100] sm:$0xff]
    %v7613 = vld [vmem:[%s7598 + $0x110] sm:$0xff]
    %v7614 = vld [vmem:[%s7598 + $0x120] sm:$0xff]
    %7631 = vrot.lane.b32.xlu0 %v7599, 64
    %v7632 = vpop.permute.xlu0 %7631
    %7633 = vrot.lane.b32.xlu0 %v7600, 64
    %v7634 = vpop.permute.xlu0 %7633
    %7635 = vrot.lane.b32.xlu0 %v7601, 64
    %v7636 = vpop.permute.xlu0 %7635
    %7637 = vrot.lane.b32.xlu0 %v7602, 64
    %v7638 = vpop.permute.xlu0 %7637
    %7639 = vrot.lane.b32.xlu0 %v7603, 64
    %v7640 = vpop.permute.xlu0 %7639
    %7641 = vrot.lane.b32.xlu0 %v7604, 64
    %v7642 = vpop.permute.xlu0 %7641
    %7643 = vrot.lane.b32.xlu0 %v7605, 64
    %v7644 = vpop.permute.xlu0 %7643
    %7645 = vrot.lane.b32.xlu0 %v7606, 64
    %v7646 = vpop.permute.xlu0 %7645
    %7647 = vrot.lane.b32.xlu0 %v7607, 64
    %v7648 = vpop.permute.xlu0 %7647
    %7649 = vrot.lane.b32.xlu0 %v7608, 64
    %v7650 = vpop.permute.xlu0 %7649
    %7651 = vrot.lane.b32.xlu0 %v7609, 64
    %v7652 = vpop.permute.xlu0 %7651
    %7653 = vrot.lane.b32.xlu0 %v7610, 64
    %v7654 = vpop.permute.xlu0 %7653
    %7655 = vrot.lane.b32.xlu0 %v7611, 64
    %v7656 = vpop.permute.xlu0 %7655
    %7657 = vrot.lane.b32.xlu0 %v7612, 64
    %v7658 = vpop.permute.xlu0 %7657
    %7659 = vrot.lane.b32.xlu0 %v7613, 64
    %v7660 = vpop.permute.xlu0 %7659
    %7661 = vrot.lane.b32.xlu0 %v7614, 64
    %v7662 = vpop.permute.xlu0 %7661
    %vm7679 = vcmask 654848
    %7680 = vst.msk [vmem:[#allocation5] sm:$0xff] %vm7679, %v7632
    %7681 = vst.msk [vmem:[#allocation5 + $0x10] sm:$0xff] %vm7679, %v7634
    %7682 = vst.msk [vmem:[#allocation5 + $0x20] sm:$0xff] %vm7679, %v7636
    %7683 = vst.msk [vmem:[#allocation5 + $0x30] sm:$0xff] %vm7679, %v7638
    %7684 = vst.msk [vmem:[#allocation5 + $0x40] sm:$0xff] %vm7679, %v7640
    %7685 = vst.msk [vmem:[#allocation5 + $0x50] sm:$0xff] %vm7679, %v7642
    %7686 = vst.msk [vmem:[#allocation5 + $0x60] sm:$0xff] %vm7679, %v7644
    %7687 = vst.msk [vmem:[#allocation5 + $0x70] sm:$0xff] %vm7679, %v7646
    %7688 = vst.msk [vmem:[#allocation5 + $0x80] sm:$0xff] %vm7679, %v7648
    %7689 = vst.msk [vmem:[#allocation5 + $0x90] sm:$0xff] %vm7679, %v7650
    %7690 = vst.msk [vmem:[#allocation5 + $0xa0] sm:$0xff] %vm7679, %v7652
    %7691 = vst.msk [vmem:[#allocation5 + $0xb0] sm:$0xff] %vm7679, %v7654
    %7692 = vst.msk [vmem:[#allocation5 + $0xc0] sm:$0xff] %vm7679, %v7656
    %7693 = vst.msk [vmem:[#allocation5 + $0xd0] sm:$0xff] %vm7679, %v7658
    %7694 = vst.msk [vmem:[#allocation5 + $0xe0] sm:$0xff] %vm7679, %v7660
    %7695 = vst.msk [vmem:[#allocation5 + $0xf0] sm:$0xff] %vm7679, %v7662
    %v7696 = vld [vmem:[%s7598 + $0x1] sm:$0xff]
    %v7697 = vld [vmem:[%s7598 + $0x11] sm:$0xff]
    %v7698 = vld [vmem:[%s7598 + $0x21] sm:$0xff]
    %v7699 = vld [vmem:[%s7598 + $0x31] sm:$0xff]
    %v7700 = vld [vmem:[%s7598 + $0x41] sm:$0xff]
    %v7701 = vld [vmem:[%s7598 + $0x51] sm:$0xff]
    %v7702 = vld [vmem:[%s7598 + $0x61] sm:$0xff]
    %v7703 = vld [vmem:[%s7598 + $0x71] sm:$0xff]
    %v7704 = vld [vmem:[%s7598 + $0xb1] sm:$0xff]
    %v7705 = vld [vmem:[%s7598 + $0xc1] sm:$0xff]
    %v7706 = vld [vmem:[%s7598 + $0xd1] sm:$0xff]
    %v7707 = vld [vmem:[%s7598 + $0xe1] sm:$0xff]
    %v7708 = vld [vmem:[%s7598 + $0xf1] sm:$0xff]
    %v7709 = vld [vmem:[%s7598 + $0x101] sm:$0xff]
    %v7710 = vld [vmem:[%s7598 + $0x111] sm:$0xff]
    %v7711 = vld [vmem:[%s7598 + $0x121] sm:$0xff]
    %7728 = vrot.lane.b32.xlu0 %v7696, 80
    %v7729 = vpop.permute.xlu0 %7728
    %7730 = vrot.lane.b32.xlu0 %v7697, 80
    %v7731 = vpop.permute.xlu0 %7730
    %7732 = vrot.lane.b32.xlu0 %v7698, 80
    %v7733 = vpop.permute.xlu0 %7732
    %7734 = vrot.lane.b32.xlu0 %v7699, 80
    %v7735 = vpop.permute.xlu0 %7734
    %7736 = vrot.lane.b32.xlu0 %v7700, 80
    %v7737 = vpop.permute.xlu0 %7736
    %7738 = vrot.lane.b32.xlu0 %v7701, 80
    %v7739 = vpop.permute.xlu0 %7738
    %7740 = vrot.lane.b32.xlu0 %v7702, 80
    %v7741 = vpop.permute.xlu0 %7740
    %7742 = vrot.lane.b32.xlu0 %v7703, 80
    %v7743 = vpop.permute.xlu0 %7742
    %7744 = vrot.lane.b32.xlu0 %v7704, 80
    %v7745 = vpop.permute.xlu0 %7744
    %7746 = vrot.lane.b32.xlu0 %v7705, 80
    %v7747 = vpop.permute.xlu0 %7746
    %7748 = vrot.lane.b32.xlu0 %v7706, 80
    %v7749 = vpop.permute.xlu0 %7748
    %7750 = vrot.lane.b32.xlu0 %v7707, 80
    %v7751 = vpop.permute.xlu0 %7750
    %7752 = vrot.lane.b32.xlu0 %v7708, 80
    %v7753 = vpop.permute.xlu0 %7752
    %7754 = vrot.lane.b32.xlu0 %v7709, 80
    %v7755 = vpop.permute.xlu0 %7754
    %7756 = vrot.lane.b32.xlu0 %v7710, 80
    %v7757 = vpop.permute.xlu0 %7756
    %7758 = vrot.lane.b32.xlu0 %v7711, 80
    %v7759 = vpop.permute.xlu0 %7758
    %vm7776 = vcmask 786048
    %7777 = vst.msk [vmem:[#allocation5] sm:$0xff] %vm7776, %v7729
    %7778 = vst.msk [vmem:[#allocation5 + $0x10] sm:$0xff] %vm7776, %v7731
    %7779 = vst.msk [vmem:[#allocation5 + $0x20] sm:$0xff] %vm7776, %v7733
    %7780 = vst.msk [vmem:[#allocation5 + $0x30] sm:$0xff] %vm7776, %v7735
    %7781 = vst.msk [vmem:[#allocation5 + $0x40] sm:$0xff] %vm7776, %v7737
    %7782 = vst.msk [vmem:[#allocation5 + $0x50] sm:$0xff] %vm7776, %v7739
    %7783 = vst.msk [vmem:[#allocation5 + $0x60] sm:$0xff] %vm7776, %v7741
    %7784 = vst.msk [vmem:[#allocation5 + $0x70] sm:$0xff] %vm7776, %v7743
    %7785 = vst.msk [vmem:[#allocation5 + $0x80] sm:$0xff] %vm7776, %v7745
    %7786 = vst.msk [vmem:[#allocation5 + $0x90] sm:$0xff] %vm7776, %v7747
    %7787 = vst.msk [vmem:[#allocation5 + $0xa0] sm:$0xff] %vm7776, %v7749
    %7788 = vst.msk [vmem:[#allocation5 + $0xb0] sm:$0xff] %vm7776, %v7751
    %7789 = vst.msk [vmem:[#allocation5 + $0xc0] sm:$0xff] %vm7776, %v7753
    %7790 = vst.msk [vmem:[#allocation5 + $0xd0] sm:$0xff] %vm7776, %v7755
    %7791 = vst.msk [vmem:[#allocation5 + $0xe0] sm:$0xff] %vm7776, %v7757
    %7792 = vst.msk [vmem:[#allocation5 + $0xf0] sm:$0xff] %vm7776, %v7759
    %v7793 = vld [vmem:[%s7598 + $0x2] sm:$0xff]
    %v7794 = vld [vmem:[%s7598 + $0x12] sm:$0xff]
    %v7795 = vld [vmem:[%s7598 + $0x22] sm:$0xff]
    %v7796 = vld [vmem:[%s7598 + $0x32] sm:$0xff]
    %v7797 = vld [vmem:[%s7598 + $0x42] sm:$0xff]
    %v7798 = vld [vmem:[%s7598 + $0x52] sm:$0xff]
    %v7799 = vld [vmem:[%s7598 + $0x62] sm:$0xff]
    %v7800 = vld [vmem:[%s7598 + $0x72] sm:$0xff]
    %v7801 = vld [vmem:[%s7598 + $0xb2] sm:$0xff]
    %v7802 = vld [vmem:[%s7598 + $0xc2] sm:$0xff]
    %v7803 = vld [vmem:[%s7598 + $0xd2] sm:$0xff]
    %v7804 = vld [vmem:[%s7598 + $0xe2] sm:$0xff]
    %v7805 = vld [vmem:[%s7598 + $0xf2] sm:$0xff]
    %v7806 = vld [vmem:[%s7598 + $0x102] sm:$0xff]
    %v7807 = vld [vmem:[%s7598 + $0x112] sm:$0xff]
    %v7808 = vld [vmem:[%s7598 + $0x122] sm:$0xff]
    %7825 = vrot.lane.b32.xlu0 %v7793, 96
    %v7826 = vpop.permute.xlu0 %7825
    %7827 = vrot.lane.b32.xlu0 %v7794, 96
    %v7828 = vpop.permute.xlu0 %7827
    %7829 = vrot.lane.b32.xlu0 %v7795, 96
    %v7830 = vpop.permute.xlu0 %7829
    %7831 = vrot.lane.b32.xlu0 %v7796, 96
    %v7832 = vpop.permute.xlu0 %7831
    %7833 = vrot.lane.b32.xlu0 %v7797, 96
    %v7834 = vpop.permute.xlu0 %7833
    %7835 = vrot.lane.b32.xlu0 %v7798, 96
    %v7836 = vpop.permute.xlu0 %7835
    %7837 = vrot.lane.b32.xlu0 %v7799, 96
    %v7838 = vpop.permute.xlu0 %7837
    %7839 = vrot.lane.b32.xlu0 %v7800, 96
    %v7840 = vpop.permute.xlu0 %7839
    %7841 = vrot.lane.b32.xlu0 %v7801, 96
    %v7842 = vpop.permute.xlu0 %7841
    %7843 = vrot.lane.b32.xlu0 %v7802, 96
    %v7844 = vpop.permute.xlu0 %7843
    %7845 = vrot.lane.b32.xlu0 %v7803, 96
    %v7846 = vpop.permute.xlu0 %7845
    %7847 = vrot.lane.b32.xlu0 %v7804, 96
    %v7848 = vpop.permute.xlu0 %7847
    %7849 = vrot.lane.b32.xlu0 %v7805, 96
    %v7850 = vpop.permute.xlu0 %7849
    %7851 = vrot.lane.b32.xlu0 %v7806, 96
    %v7852 = vpop.permute.xlu0 %7851
    %7853 = vrot.lane.b32.xlu0 %v7807, 96
    %v7854 = vpop.permute.xlu0 %7853
    %7855 = vrot.lane.b32.xlu0 %v7808, 96
    %v7856 = vpop.permute.xlu0 %7855
    %vm7873 = vcmask 917248
    %7874 = vst.msk [vmem:[#allocation5] sm:$0xff] %vm7873, %v7826
    %7875 = vst.msk [vmem:[#allocation5 + $0x10] sm:$0xff] %vm7873, %v7828
    %7876 = vst.msk [vmem:[#allocation5 + $0x20] sm:$0xff] %vm7873, %v7830
    %7877 = vst.msk [vmem:[#allocation5 + $0x30] sm:$0xff] %vm7873, %v7832
    %7878 = vst.msk [vmem:[#allocation5 + $0x40] sm:$0xff] %vm7873, %v7834
    %7879 = vst.msk [vmem:[#allocation5 + $0x50] sm:$0xff] %vm7873, %v7836
    %7880 = vst.msk [vmem:[#allocation5 + $0x60] sm:$0xff] %vm7873, %v7838
    %7881 = vst.msk [vmem:[#allocation5 + $0x70] sm:$0xff] %vm7873, %v7840
    %7882 = vst.msk [vmem:[#allocation5 + $0x80] sm:$0xff] %vm7873, %v7842
    %7883 = vst.msk [vmem:[#allocation5 + $0x90] sm:$0xff] %vm7873, %v7844
    %7884 = vst.msk [vmem:[#allocation5 + $0xa0] sm:$0xff] %vm7873, %v7846
    %7885 = vst.msk [vmem:[#allocation5 + $0xb0] sm:$0xff] %vm7873, %v7848
    %7886 = vst.msk [vmem:[#allocation5 + $0xc0] sm:$0xff] %vm7873, %v7850
    %7887 = vst.msk [vmem:[#allocation5 + $0xd0] sm:$0xff] %vm7873, %v7852
    %7888 = vst.msk [vmem:[#allocation5 + $0xe0] sm:$0xff] %vm7873, %v7854
    %7889 = vst.msk [vmem:[#allocation5 + $0xf0] sm:$0xff] %vm7873, %v7856
    %v7890 = vld [vmem:[%s7598 + $0x3] sm:$0xff]
    %v7891 = vld [vmem:[%s7598 + $0x13] sm:$0xff]
    %v7892 = vld [vmem:[%s7598 + $0x23] sm:$0xff]
    %v7893 = vld [vmem:[%s7598 + $0x33] sm:$0xff]
    %v7894 = vld [vmem:[%s7598 + $0x43] sm:$0xff]
    %v7895 = vld [vmem:[%s7598 + $0x53] sm:$0xff]
    %v7896 = vld [vmem:[%s7598 + $0x63] sm:$0xff]
    %v7897 = vld [vmem:[%s7598 + $0x73] sm:$0xff]
    %v7898 = vld [vmem:[%s7598 + $0xb3] sm:$0xff]
    %v7899 = vld [vmem:[%s7598 + $0xc3] sm:$0xff]
    %v7900 = vld [vmem:[%s7598 + $0xd3] sm:$0xff]
    %v7901 = vld [vmem:[%s7598 + $0xe3] sm:$0xff]
    %v7902 = vld [vmem:[%s7598 + $0xf3] sm:$0xff]
    %v7903 = vld [vmem:[%s7598 + $0x103] sm:$0xff]
    %v7904 = vld [vmem:[%s7598 + $0x113] sm:$0xff]
    %v7905 = vld [vmem:[%s7598 + $0x123] sm:$0xff]
    %7922 = vrot.lane.b32.xlu0 %v7890, 112
    %v7923 = vpop.permute.xlu0 %7922
    %7924 = vrot.lane.b32.xlu0 %v7891, 112
    %v7925 = vpop.permute.xlu0 %7924
    %7926 = vrot.lane.b32.xlu0 %v7892, 112
    %v7927 = vpop.permute.xlu0 %7926
    %7928 = vrot.lane.b32.xlu0 %v7893, 112
    %v7929 = vpop.permute.xlu0 %7928
    %7930 = vrot.lane.b32.xlu0 %v7894, 112
    %v7931 = vpop.permute.xlu0 %7930
    %7932 = vrot.lane.b32.xlu0 %v7895, 112
    %v7933 = vpop.permute.xlu0 %7932
    %7934 = vrot.lane.b32.xlu0 %v7896, 112
    %v7935 = vpop.permute.xlu0 %7934
    %7936 = vrot.lane.b32.xlu0 %v7897, 112
    %v7937 = vpop.permute.xlu0 %7936
    %7938 = vrot.lane.b32.xlu0 %v7898, 112
    %v7939 = vpop.permute.xlu0 %7938
    %7940 = vrot.lane.b32.xlu0 %v7899, 112
    %v7941 = vpop.permute.xlu0 %7940
    %7942 = vrot.lane.b32.xlu0 %v7900, 112
    %v7943 = vpop.permute.xlu0 %7942
    %7944 = vrot.lane.b32.xlu0 %v7901, 112
    %v7945 = vpop.permute.xlu0 %7944
    %7946 = vrot.lane.b32.xlu0 %v7902, 112
    %v7947 = vpop.permute.xlu0 %7946
    %7948 = vrot.lane.b32.xlu0 %v7903, 112
    %v7949 = vpop.permute.xlu0 %7948
    %7950 = vrot.lane.b32.xlu0 %v7904, 112
    %v7951 = vpop.permute.xlu0 %7950
    %7952 = vrot.lane.b32.xlu0 %v7905, 112
    %v7953 = vpop.permute.xlu0 %7952
    %vm7970 = vcmask 1048448
    %7971 = vst.msk [vmem:[#allocation5] sm:$0xff] %vm7970, %v7923
    %7972 = vst.msk [vmem:[#allocation5 + $0x10] sm:$0xff] %vm7970, %v7925
    %7973 = vst.msk [vmem:[#allocation5 + $0x20] sm:$0xff] %vm7970, %v7927
    %7974 = vst.msk [vmem:[#allocation5 + $0x30] sm:$0xff] %vm7970, %v7929
    %7975 = vst.msk [vmem:[#allocation5 + $0x40] sm:$0xff] %vm7970, %v7931
    %7976 = vst.msk [vmem:[#allocation5 + $0x50] sm:$0xff] %vm7970, %v7933
    %7977 = vst.msk [vmem:[#allocation5 + $0x60] sm:$0xff] %vm7970, %v7935
    %7978 = vst.msk [vmem:[#allocation5 + $0x70] sm:$0xff] %vm7970, %v7937
    %7979 = vst.msk [vmem:[#allocation5 + $0x80] sm:$0xff] %vm7970, %v7939
    %7980 = vst.msk [vmem:[#allocation5 + $0x90] sm:$0xff] %vm7970, %v7941
    %7981 = vst.msk [vmem:[#allocation5 + $0xa0] sm:$0xff] %vm7970, %v7943
    %7982 = vst.msk [vmem:[#allocation5 + $0xb0] sm:$0xff] %vm7970, %v7945
    %7983 = vst.msk [vmem:[#allocation5 + $0xc0] sm:$0xff] %vm7970, %v7947
    %7984 = vst.msk [vmem:[#allocation5 + $0xd0] sm:$0xff] %vm7970, %v7949
    %7985 = vst.msk [vmem:[#allocation5 + $0xe0] sm:$0xff] %vm7970, %v7951
    %7986 = vst.msk [vmem:[#allocation5 + $0xf0] sm:$0xff] %vm7970, %v7953
    %v7987 = vld [vmem:[%s7062] sm:$0xff]
    %v7988 = vld [vmem:[%s7062 + $0x10] sm:$0xff]
    %v7989 = vld [vmem:[%s7062 + $0x20] sm:$0xff]
    %v7990 = vld [vmem:[%s7062 + $0x30] sm:$0xff]
    %v7991 = vld [vmem:[%s7062 + $0x40] sm:$0xff]
    %v7992 = vld [vmem:[%s7062 + $0x50] sm:$0xff]
    %v7993 = vld [vmem:[%s7062 + $0x60] sm:$0xff]
    %v7994 = vld [vmem:[%s7062 + $0x70] sm:$0xff]
    %v7995 = vld [vmem:[%s7062 + $0xb0] sm:$0xff]
    %v7996 = vld [vmem:[%s7062 + $0xc0] sm:$0xff]
    %v7997 = vld [vmem:[%s7062 + $0xd0] sm:$0xff]
    %v7998 = vld [vmem:[%s7062 + $0xe0] sm:$0xff]
    %v7999 = vld [vmem:[%s7062 + $0xf0] sm:$0xff]
    %v8000 = vld [vmem:[%s7062 + $0x100] sm:$0xff]
    %v8001 = vld [vmem:[%s7062 + $0x110] sm:$0xff]
    %v8002 = vld [vmem:[%s7062 + $0x120] sm:$0xff]
    %8003 = vst.msk [vmem:[#allocation5 + $0x8] sm:$0xff] %vm6936, %v7987
    %8004 = vst.msk [vmem:[#allocation5 + $0x18] sm:$0xff] %vm6936, %v7988
    %8005 = vst.msk [vmem:[#allocation5 + $0x28] sm:$0xff] %vm6936, %v7989
    %8006 = vst.msk [vmem:[#allocation5 + $0x38] sm:$0xff] %vm6936, %v7990
    %8007 = vst.msk [vmem:[#allocation5 + $0x48] sm:$0xff] %vm6936, %v7991
    %8008 = vst.msk [vmem:[#allocation5 + $0x58] sm:$0xff] %vm6936, %v7992
    %8009 = vst.msk [vmem:[#allocation5 + $0x68] sm:$0xff] %vm6936, %v7993
    %8010 = vst.msk [vmem:[#allocation5 + $0x78] sm:$0xff] %vm6936, %v7994
    %8011 = vst.msk [vmem:[#allocation5 + $0x88] sm:$0xff] %vm6936, %v7995
    %8012 = vst.msk [vmem:[#allocation5 + $0x98] sm:$0xff] %vm6936, %v7996
    %8013 = vst.msk [vmem:[#allocation5 + $0xa8] sm:$0xff] %vm6936, %v7997
    %8014 = vst.msk [vmem:[#allocation5 + $0xb8] sm:$0xff] %vm6936, %v7998
    %8015 = vst.msk [vmem:[#allocation5 + $0xc8] sm:$0xff] %vm6936, %v7999
    %8016 = vst.msk [vmem:[#allocation5 + $0xd8] sm:$0xff] %vm6936, %v8000
    %8017 = vst.msk [vmem:[#allocation5 + $0xe8] sm:$0xff] %vm6936, %v8001
    %8018 = vst.msk [vmem:[#allocation5 + $0xf8] sm:$0xff] %vm6936, %v8002
    %v8019 = vld [vmem:[%s7062 + $0x1] sm:$0xff]
    %v8020 = vld [vmem:[%s7062 + $0x11] sm:$0xff]
    %v8021 = vld [vmem:[%s7062 + $0x21] sm:$0xff]
    %v8022 = vld [vmem:[%s7062 + $0x31] sm:$0xff]
    %v8023 = vld [vmem:[%s7062 + $0x41] sm:$0xff]
    %v8024 = vld [vmem:[%s7062 + $0x51] sm:$0xff]
    %v8025 = vld [vmem:[%s7062 + $0x61] sm:$0xff]
    %v8026 = vld [vmem:[%s7062 + $0x71] sm:$0xff]
    %v8027 = vld [vmem:[%s7062 + $0xb1] sm:$0xff]
    %v8028 = vld [vmem:[%s7062 + $0xc1] sm:$0xff]
    %v8029 = vld [vmem:[%s7062 + $0xd1] sm:$0xff]
    %v8030 = vld [vmem:[%s7062 + $0xe1] sm:$0xff]
    %v8031 = vld [vmem:[%s7062 + $0xf1] sm:$0xff]
    %v8032 = vld [vmem:[%s7062 + $0x101] sm:$0xff]
    %v8033 = vld [vmem:[%s7062 + $0x111] sm:$0xff]
    %v8034 = vld [vmem:[%s7062 + $0x121] sm:$0xff]
    %8051 = vrot.lane.b32.xlu0 %v8019, 16
    %v8052 = vpop.permute.xlu0 %8051
    %8053 = vrot.lane.b32.xlu0 %v8020, 16
    %v8054 = vpop.permute.xlu0 %8053
    %8055 = vrot.lane.b32.xlu0 %v8021, 16
    %v8056 = vpop.permute.xlu0 %8055
    %8057 = vrot.lane.b32.xlu0 %v8022, 16
    %v8058 = vpop.permute.xlu0 %8057
    %8059 = vrot.lane.b32.xlu0 %v8023, 16
    %v8060 = vpop.permute.xlu0 %8059
    %8061 = vrot.lane.b32.xlu0 %v8024, 16
    %v8062 = vpop.permute.xlu0 %8061
    %8063 = vrot.lane.b32.xlu0 %v8025, 16
    %v8064 = vpop.permute.xlu0 %8063
    %8065 = vrot.lane.b32.xlu0 %v8026, 16
    %v8066 = vpop.permute.xlu0 %8065
    %8067 = vrot.lane.b32.xlu0 %v8027, 16
    %v8068 = vpop.permute.xlu0 %8067
    %8069 = vrot.lane.b32.xlu0 %v8028, 16
    %v8070 = vpop.permute.xlu0 %8069
    %8071 = vrot.lane.b32.xlu0 %v8029, 16
    %v8072 = vpop.permute.xlu0 %8071
    %8073 = vrot.lane.b32.xlu0 %v8030, 16
    %v8074 = vpop.permute.xlu0 %8073
    %8075 = vrot.lane.b32.xlu0 %v8031, 16
    %v8076 = vpop.permute.xlu0 %8075
    %8077 = vrot.lane.b32.xlu0 %v8032, 16
    %v8078 = vpop.permute.xlu0 %8077
    %8079 = vrot.lane.b32.xlu0 %v8033, 16
    %v8080 = vpop.permute.xlu0 %8079
    %8081 = vrot.lane.b32.xlu0 %v8034, 16
    %v8082 = vpop.permute.xlu0 %8081
    %8099 = vst.msk [vmem:[#allocation5 + $0x8] sm:$0xff] %vm7387, %v8052
    %8100 = vst.msk [vmem:[#allocation5 + $0x18] sm:$0xff] %vm7387, %v8054
    %8101 = vst.msk [vmem:[#allocation5 + $0x28] sm:$0xff] %vm7387, %v8056
    %8102 = vst.msk [vmem:[#allocation5 + $0x38] sm:$0xff] %vm7387, %v8058
    %8103 = vst.msk [vmem:[#allocation5 + $0x48] sm:$0xff] %vm7387, %v8060
    %8104 = vst.msk [vmem:[#allocation5 + $0x58] sm:$0xff] %vm7387, %v8062
    %8105 = vst.msk [vmem:[#allocation5 + $0x68] sm:$0xff] %vm7387, %v8064
    %8106 = vst.msk [vmem:[#allocation5 + $0x78] sm:$0xff] %vm7387, %v8066
    %8107 = vst.msk [vmem:[#allocation5 + $0x88] sm:$0xff] %vm7387, %v8068
    %8108 = vst.msk [vmem:[#allocation5 + $0x98] sm:$0xff] %vm7387, %v8070
    %8109 = vst.msk [vmem:[#allocation5 + $0xa8] sm:$0xff] %vm7387, %v8072
    %8110 = vst.msk [vmem:[#allocation5 + $0xb8] sm:$0xff] %vm7387, %v8074
    %8111 = vst.msk [vmem:[#allocation5 + $0xc8] sm:$0xff] %vm7387, %v8076
    %8112 = vst.msk [vmem:[#allocation5 + $0xd8] sm:$0xff] %vm7387, %v8078
    %8113 = vst.msk [vmem:[#allocation5 + $0xe8] sm:$0xff] %vm7387, %v8080
    %8114 = vst.msk [vmem:[#allocation5 + $0xf8] sm:$0xff] %vm7387, %v8082
    %v8115 = vld [vmem:[%s7062 + $0x2] sm:$0xff]
    %v8116 = vld [vmem:[%s7062 + $0x12] sm:$0xff]
    %v8117 = vld [vmem:[%s7062 + $0x22] sm:$0xff]
    %v8118 = vld [vmem:[%s7062 + $0x32] sm:$0xff]
    %v8119 = vld [vmem:[%s7062 + $0x42] sm:$0xff]
    %v8120 = vld [vmem:[%s7062 + $0x52] sm:$0xff]
    %v8121 = vld [vmem:[%s7062 + $0x62] sm:$0xff]
    %v8122 = vld [vmem:[%s7062 + $0x72] sm:$0xff]
    %v8123 = vld [vmem:[%s7062 + $0xb2] sm:$0xff]
    %v8124 = vld [vmem:[%s7062 + $0xc2] sm:$0xff]
    %v8125 = vld [vmem:[%s7062 + $0xd2] sm:$0xff]
    %v8126 = vld [vmem:[%s7062 + $0xe2] sm:$0xff]
    %v8127 = vld [vmem:[%s7062 + $0xf2] sm:$0xff]
    %v8128 = vld [vmem:[%s7062 + $0x102] sm:$0xff]
    %v8129 = vld [vmem:[%s7062 + $0x112] sm:$0xff]
    %v8130 = vld [vmem:[%s7062 + $0x122] sm:$0xff]
    %8147 = vrot.lane.b32.xlu0 %v8115, 32
    %v8148 = vpop.permute.xlu0 %8147
    %8149 = vrot.lane.b32.xlu0 %v8116, 32
    %v8150 = vpop.permute.xlu0 %8149
    %8151 = vrot.lane.b32.xlu0 %v8117, 32
    %v8152 = vpop.permute.xlu0 %8151
    %8153 = vrot.lane.b32.xlu0 %v8118, 32
    %v8154 = vpop.permute.xlu0 %8153
    %8155 = vrot.lane.b32.xlu0 %v8119, 32
    %v8156 = vpop.permute.xlu0 %8155
    %8157 = vrot.lane.b32.xlu0 %v8120, 32
    %v8158 = vpop.permute.xlu0 %8157
    %8159 = vrot.lane.b32.xlu0 %v8121, 32
    %v8160 = vpop.permute.xlu0 %8159
    %8161 = vrot.lane.b32.xlu0 %v8122, 32
    %v8162 = vpop.permute.xlu0 %8161
    %8163 = vrot.lane.b32.xlu0 %v8123, 32
    %v8164 = vpop.permute.xlu0 %8163
    %8165 = vrot.lane.b32.xlu0 %v8124, 32
    %v8166 = vpop.permute.xlu0 %8165
    %8167 = vrot.lane.b32.xlu0 %v8125, 32
    %v8168 = vpop.permute.xlu0 %8167
    %8169 = vrot.lane.b32.xlu0 %v8126, 32
    %v8170 = vpop.permute.xlu0 %8169
    %8171 = vrot.lane.b32.xlu0 %v8127, 32
    %v8172 = vpop.permute.xlu0 %8171
    %8173 = vrot.lane.b32.xlu0 %v8128, 32
    %v8174 = vpop.permute.xlu0 %8173
    %8175 = vrot.lane.b32.xlu0 %v8129, 32
    %v8176 = vpop.permute.xlu0 %8175
    %8177 = vrot.lane.b32.xlu0 %v8130, 32
    %v8178 = vpop.permute.xlu0 %8177
    %8195 = vst.msk [vmem:[#allocation5 + $0x8] sm:$0xff] %vm7484, %v8148
    %8196 = vst.msk [vmem:[#allocation5 + $0x18] sm:$0xff] %vm7484, %v8150
    %8197 = vst.msk [vmem:[#allocation5 + $0x28] sm:$0xff] %vm7484, %v8152
    %8198 = vst.msk [vmem:[#allocation5 + $0x38] sm:$0xff] %vm7484, %v8154
    %8199 = vst.msk [vmem:[#allocation5 + $0x48] sm:$0xff] %vm7484, %v8156
    %8200 = vst.msk [vmem:[#allocation5 + $0x58] sm:$0xff] %vm7484, %v8158
    %8201 = vst.msk [vmem:[#allocation5 + $0x68] sm:$0xff] %vm7484, %v8160
    %8202 = vst.msk [vmem:[#allocation5 + $0x78] sm:$0xff] %vm7484, %v8162
    %8203 = vst.msk [vmem:[#allocation5 + $0x88] sm:$0xff] %vm7484, %v8164
    %8204 = vst.msk [vmem:[#allocation5 + $0x98] sm:$0xff] %vm7484, %v8166
    %8205 = vst.msk [vmem:[#allocation5 + $0xa8] sm:$0xff] %vm7484, %v8168
    %8206 = vst.msk [vmem:[#allocation5 + $0xb8] sm:$0xff] %vm7484, %v8170
    %8207 = vst.msk [vmem:[#allocation5 + $0xc8] sm:$0xff] %vm7484, %v8172
    %8208 = vst.msk [vmem:[#allocation5 + $0xd8] sm:$0xff] %vm7484, %v8174
    %8209 = vst.msk [vmem:[#allocation5 + $0xe8] sm:$0xff] %vm7484, %v8176
    %8210 = vst.msk [vmem:[#allocation5 + $0xf8] sm:$0xff] %vm7484, %v8178
    %v8211 = vld [vmem:[%s7062 + $0x3] sm:$0xff]
    %v8212 = vld [vmem:[%s7062 + $0x13] sm:$0xff]
    %v8213 = vld [vmem:[%s7062 + $0x23] sm:$0xff]
    %v8214 = vld [vmem:[%s7062 + $0x33] sm:$0xff]
    %v8215 = vld [vmem:[%s7062 + $0x43] sm:$0xff]
    %v8216 = vld [vmem:[%s7062 + $0x53] sm:$0xff]
    %v8217 = vld [vmem:[%s7062 + $0x63] sm:$0xff]
    %v8218 = vld [vmem:[%s7062 + $0x73] sm:$0xff]
    %v8219 = vld [vmem:[%s7062 + $0xb3] sm:$0xff]
    %v8220 = vld [vmem:[%s7062 + $0xc3] sm:$0xff]
    %v8221 = vld [vmem:[%s7062 + $0xd3] sm:$0xff]
    %v8222 = vld [vmem:[%s7062 + $0xe3] sm:$0xff]
    %v8223 = vld [vmem:[%s7062 + $0xf3] sm:$0xff]
    %v8224 = vld [vmem:[%s7062 + $0x103] sm:$0xff]
    %v8225 = vld [vmem:[%s7062 + $0x113] sm:$0xff]
    %v8226 = vld [vmem:[%s7062 + $0x123] sm:$0xff]
    %8243 = vrot.lane.b32.xlu0 %v8211, 48
    %v8244 = vpop.permute.xlu0 %8243
    %8245 = vrot.lane.b32.xlu0 %v8212, 48
    %v8246 = vpop.permute.xlu0 %8245
    %8247 = vrot.lane.b32.xlu0 %v8213, 48
    %v8248 = vpop.permute.xlu0 %8247
    %8249 = vrot.lane.b32.xlu0 %v8214, 48
    %v8250 = vpop.permute.xlu0 %8249
    %8251 = vrot.lane.b32.xlu0 %v8215, 48
    %v8252 = vpop.permute.xlu0 %8251
    %8253 = vrot.lane.b32.xlu0 %v8216, 48
    %v8254 = vpop.permute.xlu0 %8253
    %8255 = vrot.lane.b32.xlu0 %v8217, 48
    %v8256 = vpop.permute.xlu0 %8255
    %8257 = vrot.lane.b32.xlu0 %v8218, 48
    %v8258 = vpop.permute.xlu0 %8257
    %8259 = vrot.lane.b32.xlu0 %v8219, 48
    %v8260 = vpop.permute.xlu0 %8259
    %8261 = vrot.lane.b32.xlu0 %v8220, 48
    %v8262 = vpop.permute.xlu0 %8261
    %8263 = vrot.lane.b32.xlu0 %v8221, 48
    %v8264 = vpop.permute.xlu0 %8263
    %8265 = vrot.lane.b32.xlu0 %v8222, 48
    %v8266 = vpop.permute.xlu0 %8265
    %8267 = vrot.lane.b32.xlu0 %v8223, 48
    %v8268 = vpop.permute.xlu0 %8267
    %8269 = vrot.lane.b32.xlu0 %v8224, 48
    %v8270 = vpop.permute.xlu0 %8269
    %8271 = vrot.lane.b32.xlu0 %v8225, 48
    %v8272 = vpop.permute.xlu0 %8271
    %8273 = vrot.lane.b32.xlu0 %v8226, 48
    %v8274 = vpop.permute.xlu0 %8273
    %8291 = vst.msk [vmem:[#allocation5 + $0x8] sm:$0xff] %vm7581, %v8244
    %8292 = vst.msk [vmem:[#allocation5 + $0x18] sm:$0xff] %vm7581, %v8246
    %8293 = vst.msk [vmem:[#allocation5 + $0x28] sm:$0xff] %vm7581, %v8248
    %8294 = vst.msk [vmem:[#allocation5 + $0x38] sm:$0xff] %vm7581, %v8250
    %8295 = vst.msk [vmem:[#allocation5 + $0x48] sm:$0xff] %vm7581, %v8252
    %8296 = vst.msk [vmem:[#allocation5 + $0x58] sm:$0xff] %vm7581, %v8254
    %8297 = vst.msk [vmem:[#allocation5 + $0x68] sm:$0xff] %vm7581, %v8256
    %8298 = vst.msk [vmem:[#allocation5 + $0x78] sm:$0xff] %vm7581, %v8258
    %8299 = vst.msk [vmem:[#allocation5 + $0x88] sm:$0xff] %vm7581, %v8260
    %8300 = vst.msk [vmem:[#allocation5 + $0x98] sm:$0xff] %vm7581, %v8262
    %8301 = vst.msk [vmem:[#allocation5 + $0xa8] sm:$0xff] %vm7581, %v8264
    %8302 = vst.msk [vmem:[#allocation5 + $0xb8] sm:$0xff] %vm7581, %v8266
    %8303 = vst.msk [vmem:[#allocation5 + $0xc8] sm:$0xff] %vm7581, %v8268
    %8304 = vst.msk [vmem:[#allocation5 + $0xd8] sm:$0xff] %vm7581, %v8270
    %8305 = vst.msk [vmem:[#allocation5 + $0xe8] sm:$0xff] %vm7581, %v8272
    %8306 = vst.msk [vmem:[#allocation5 + $0xf8] sm:$0xff] %vm7581, %v8274
    %s8307 = scalar_lea.vmem [#allocation4], 48
    %v8308 = vld [vmem:[%s8307] sm:$0xff]
    %v8309 = vld [vmem:[%s8307 + $0x10] sm:$0xff]
    %v8310 = vld [vmem:[%s8307 + $0x20] sm:$0xff]
    %v8311 = vld [vmem:[%s8307 + $0x30] sm:$0xff]
    %v8312 = vld [vmem:[%s8307 + $0x40] sm:$0xff]
    %v8313 = vld [vmem:[%s8307 + $0x50] sm:$0xff]
    %v8314 = vld [vmem:[%s8307 + $0x60] sm:$0xff]
    %v8315 = vld [vmem:[%s8307 + $0x70] sm:$0xff]
    %v8316 = vld [vmem:[%s8307 + $0xb0] sm:$0xff]
    %v8317 = vld [vmem:[%s8307 + $0xc0] sm:$0xff]
    %v8318 = vld [vmem:[%s8307 + $0xd0] sm:$0xff]
    %v8319 = vld [vmem:[%s8307 + $0xe0] sm:$0xff]
    %v8320 = vld [vmem:[%s8307 + $0xf0] sm:$0xff]
    %v8321 = vld [vmem:[%s8307 + $0x100] sm:$0xff]
    %v8322 = vld [vmem:[%s8307 + $0x110] sm:$0xff]
    %v8323 = vld [vmem:[%s8307 + $0x120] sm:$0xff]
    %8340 = vrot.lane.b32.xlu0 %v8308, 64
    %v8341 = vpop.permute.xlu0 %8340
    %8342 = vrot.lane.b32.xlu0 %v8309, 64
    %v8343 = vpop.permute.xlu0 %8342
    %8344 = vrot.lane.b32.xlu0 %v8310, 64
    %v8345 = vpop.permute.xlu0 %8344
    %8346 = vrot.lane.b32.xlu0 %v8311, 64
    %v8347 = vpop.permute.xlu0 %8346
    %8348 = vrot.lane.b32.xlu0 %v8312, 64
    %v8349 = vpop.permute.xlu0 %8348
    %8350 = vrot.lane.b32.xlu0 %v8313, 64
    %v8351 = vpop.permute.xlu0 %8350
    %8352 = vrot.lane.b32.xlu0 %v8314, 64
    %v8353 = vpop.permute.xlu0 %8352
    %8354 = vrot.lane.b32.xlu0 %v8315, 64
    %v8355 = vpop.permute.xlu0 %8354
    %8356 = vrot.lane.b32.xlu0 %v8316, 64
    %v8357 = vpop.permute.xlu0 %8356
    %8358 = vrot.lane.b32.xlu0 %v8317, 64
    %v8359 = vpop.permute.xlu0 %8358
    %8360 = vrot.lane.b32.xlu0 %v8318, 64
    %v8361 = vpop.permute.xlu0 %8360
    %8362 = vrot.lane.b32.xlu0 %v8319, 64
    %v8363 = vpop.permute.xlu0 %8362
    %8364 = vrot.lane.b32.xlu0 %v8320, 64
    %v8365 = vpop.permute.xlu0 %8364
    %8366 = vrot.lane.b32.xlu0 %v8321, 64
    %v8367 = vpop.permute.xlu0 %8366
    %8368 = vrot.lane.b32.xlu0 %v8322, 64
    %v8369 = vpop.permute.xlu0 %8368
    %8370 = vrot.lane.b32.xlu0 %v8323, 64
    %v8371 = vpop.permute.xlu0 %8370
    %8388 = vst.msk [vmem:[#allocation5 + $0x8] sm:$0xff] %vm7679, %v8341
    %8389 = vst.msk [vmem:[#allocation5 + $0x18] sm:$0xff] %vm7679, %v8343
    %8390 = vst.msk [vmem:[#allocation5 + $0x28] sm:$0xff] %vm7679, %v8345
    %8391 = vst.msk [vmem:[#allocation5 + $0x38] sm:$0xff] %vm7679, %v8347
    %8392 = vst.msk [vmem:[#allocation5 + $0x48] sm:$0xff] %vm7679, %v8349
    %8393 = vst.msk [vmem:[#allocation5 + $0x58] sm:$0xff] %vm7679, %v8351
    %8394 = vst.msk [vmem:[#allocation5 + $0x68] sm:$0xff] %vm7679, %v8353
    %8395 = vst.msk [vmem:[#allocation5 + $0x78] sm:$0xff] %vm7679, %v8355
    %8396 = vst.msk [vmem:[#allocation5 + $0x88] sm:$0xff] %vm7679, %v8357
    %8397 = vst.msk [vmem:[#allocation5 + $0x98] sm:$0xff] %vm7679, %v8359
    %8398 = vst.msk [vmem:[#allocation5 + $0xa8] sm:$0xff] %vm7679, %v8361
    %8399 = vst.msk [vmem:[#allocation5 + $0xb8] sm:$0xff] %vm7679, %v8363
    %8400 = vst.msk [vmem:[#allocation5 + $0xc8] sm:$0xff] %vm7679, %v8365
    %8401 = vst.msk [vmem:[#allocation5 + $0xd8] sm:$0xff] %vm7679, %v8367
    %8402 = vst.msk [vmem:[#allocation5 + $0xe8] sm:$0xff] %vm7679, %v8369
    %8403 = vst.msk [vmem:[#allocation5 + $0xf8] sm:$0xff] %vm7679, %v8371
    %v8404 = vld [vmem:[%s8307 + $0x1] sm:$0xff]
    %v8405 = vld [vmem:[%s8307 + $0x11] sm:$0xff]
    %v8406 = vld [vmem:[%s8307 + $0x21] sm:$0xff]
    %v8407 = vld [vmem:[%s8307 + $0x31] sm:$0xff]
    %v8408 = vld [vmem:[%s8307 + $0x41] sm:$0xff]
    %v8409 = vld [vmem:[%s8307 + $0x51] sm:$0xff]
    %v8410 = vld [vmem:[%s8307 + $0x61] sm:$0xff]
    %v8411 = vld [vmem:[%s8307 + $0x71] sm:$0xff]
    %v8412 = vld [vmem:[%s8307 + $0xb1] sm:$0xff]
    %v8413 = vld [vmem:[%s8307 + $0xc1] sm:$0xff]
    %v8414 = vld [vmem:[%s8307 + $0xd1] sm:$0xff]
    %v8415 = vld [vmem:[%s8307 + $0xe1] sm:$0xff]
    %v8416 = vld [vmem:[%s8307 + $0xf1] sm:$0xff]
    %v8417 = vld [vmem:[%s8307 + $0x101] sm:$0xff]
    %v8418 = vld [vmem:[%s8307 + $0x111] sm:$0xff]
    %v8419 = vld [vmem:[%s8307 + $0x121] sm:$0xff]
    %8436 = vrot.lane.b32.xlu0 %v8404, 80
    %v8437 = vpop.permute.xlu0 %8436
    %8438 = vrot.lane.b32.xlu0 %v8405, 80
    %v8439 = vpop.permute.xlu0 %8438
    %8440 = vrot.lane.b32.xlu0 %v8406, 80
    %v8441 = vpop.permute.xlu0 %8440
    %8442 = vrot.lane.b32.xlu0 %v8407, 80
    %v8443 = vpop.permute.xlu0 %8442
    %8444 = vrot.lane.b32.xlu0 %v8408, 80
    %v8445 = vpop.permute.xlu0 %8444
    %8446 = vrot.lane.b32.xlu0 %v8409, 80
    %v8447 = vpop.permute.xlu0 %8446
    %8448 = vrot.lane.b32.xlu0 %v8410, 80
    %v8449 = vpop.permute.xlu0 %8448
    %8450 = vrot.lane.b32.xlu0 %v8411, 80
    %v8451 = vpop.permute.xlu0 %8450
    %8452 = vrot.lane.b32.xlu0 %v8412, 80
    %v8453 = vpop.permute.xlu0 %8452
    %8454 = vrot.lane.b32.xlu0 %v8413, 80
    %v8455 = vpop.permute.xlu0 %8454
    %8456 = vrot.lane.b32.xlu0 %v8414, 80
    %v8457 = vpop.permute.xlu0 %8456
    %8458 = vrot.lane.b32.xlu0 %v8415, 80
    %v8459 = vpop.permute.xlu0 %8458
    %8460 = vrot.lane.b32.xlu0 %v8416, 80
    %v8461 = vpop.permute.xlu0 %8460
    %8462 = vrot.lane.b32.xlu0 %v8417, 80
    %v8463 = vpop.permute.xlu0 %8462
    %8464 = vrot.lane.b32.xlu0 %v8418, 80
    %v8465 = vpop.permute.xlu0 %8464
    %8466 = vrot.lane.b32.xlu0 %v8419, 80
    %v8467 = vpop.permute.xlu0 %8466
    %8484 = vst.msk [vmem:[#allocation5 + $0x8] sm:$0xff] %vm7776, %v8437
    %8485 = vst.msk [vmem:[#allocation5 + $0x18] sm:$0xff] %vm7776, %v8439
    %8486 = vst.msk [vmem:[#allocation5 + $0x28] sm:$0xff] %vm7776, %v8441
    %8487 = vst.msk [vmem:[#allocation5 + $0x38] sm:$0xff] %vm7776, %v8443
    %8488 = vst.msk [vmem:[#allocation5 + $0x48] sm:$0xff] %vm7776, %v8445
    %8489 = vst.msk [vmem:[#allocation5 + $0x58] sm:$0xff] %vm7776, %v8447
    %8490 = vst.msk [vmem:[#allocation5 + $0x68] sm:$0xff] %vm7776, %v8449
    %8491 = vst.msk [vmem:[#allocation5 + $0x78] sm:$0xff] %vm7776, %v8451
    %8492 = vst.msk [vmem:[#allocation5 + $0x88] sm:$0xff] %vm7776, %v8453
    %8493 = vst.msk [vmem:[#allocation5 + $0x98] sm:$0xff] %vm7776, %v8455
    %8494 = vst.msk [vmem:[#allocation5 + $0xa8] sm:$0xff] %vm7776, %v8457
    %8495 = vst.msk [vmem:[#allocation5 + $0xb8] sm:$0xff] %vm7776, %v8459
    %8496 = vst.msk [vmem:[#allocation5 + $0xc8] sm:$0xff] %vm7776, %v8461
    %8497 = vst.msk [vmem:[#allocation5 + $0xd8] sm:$0xff] %vm7776, %v8463
    %8498 = vst.msk [vmem:[#allocation5 + $0xe8] sm:$0xff] %vm7776, %v8465
    %8499 = vst.msk [vmem:[#allocation5 + $0xf8] sm:$0xff] %vm7776, %v8467
    %v8500 = vld [vmem:[%s8307 + $0x2] sm:$0xff]
    %v8501 = vld [vmem:[%s8307 + $0x12] sm:$0xff]
    %v8502 = vld [vmem:[%s8307 + $0x22] sm:$0xff]
    %v8503 = vld [vmem:[%s8307 + $0x32] sm:$0xff]
    %v8504 = vld [vmem:[%s8307 + $0x42] sm:$0xff]
    %v8505 = vld [vmem:[%s8307 + $0x52] sm:$0xff]
    %v8506 = vld [vmem:[%s8307 + $0x62] sm:$0xff]
    %v8507 = vld [vmem:[%s8307 + $0x72] sm:$0xff]
    %v8508 = vld [vmem:[%s8307 + $0xb2] sm:$0xff]
    %v8509 = vld [vmem:[%s8307 + $0xc2] sm:$0xff]
    %v8510 = vld [vmem:[%s8307 + $0xd2] sm:$0xff]
    %v8511 = vld [vmem:[%s8307 + $0xe2] sm:$0xff]
    %v8512 = vld [vmem:[%s8307 + $0xf2] sm:$0xff]
    %v8513 = vld [vmem:[%s8307 + $0x102] sm:$0xff]
    %v8514 = vld [vmem:[%s8307 + $0x112] sm:$0xff]
    %v8515 = vld [vmem:[%s8307 + $0x122] sm:$0xff]
    %8532 = vrot.lane.b32.xlu0 %v8500, 96
    %v8533 = vpop.permute.xlu0 %8532
    %8534 = vrot.lane.b32.xlu0 %v8501, 96
    %v8535 = vpop.permute.xlu0 %8534
    %8536 = vrot.lane.b32.xlu0 %v8502, 96
    %v8537 = vpop.permute.xlu0 %8536
    %8538 = vrot.lane.b32.xlu0 %v8503, 96
    %v8539 = vpop.permute.xlu0 %8538
    %8540 = vrot.lane.b32.xlu0 %v8504, 96
    %v8541 = vpop.permute.xlu0 %8540
    %8542 = vrot.lane.b32.xlu0 %v8505, 96
    %v8543 = vpop.permute.xlu0 %8542
    %8544 = vrot.lane.b32.xlu0 %v8506, 96
    %v8545 = vpop.permute.xlu0 %8544
    %8546 = vrot.lane.b32.xlu0 %v8507, 96
    %v8547 = vpop.permute.xlu0 %8546
    %8548 = vrot.lane.b32.xlu0 %v8508, 96
    %v8549 = vpop.permute.xlu0 %8548
    %8550 = vrot.lane.b32.xlu0 %v8509, 96
    %v8551 = vpop.permute.xlu0 %8550
    %8552 = vrot.lane.b32.xlu0 %v8510, 96
    %v8553 = vpop.permute.xlu0 %8552
    %8554 = vrot.lane.b32.xlu0 %v8511, 96
    %v8555 = vpop.permute.xlu0 %8554
    %8556 = vrot.lane.b32.xlu0 %v8512, 96
    %v8557 = vpop.permute.xlu0 %8556
    %8558 = vrot.lane.b32.xlu0 %v8513, 96
    %v8559 = vpop.permute.xlu0 %8558
    %8560 = vrot.lane.b32.xlu0 %v8514, 96
    %v8561 = vpop.permute.xlu0 %8560
    %8562 = vrot.lane.b32.xlu0 %v8515, 96
    %v8563 = vpop.permute.xlu0 %8562
    %8580 = vst.msk [vmem:[#allocation5 + $0x8] sm:$0xff] %vm7873, %v8533
    %8581 = vst.msk [vmem:[#allocation5 + $0x18] sm:$0xff] %vm7873, %v8535
    %8582 = vst.msk [vmem:[#allocation5 + $0x28] sm:$0xff] %vm7873, %v8537
    %8583 = vst.msk [vmem:[#allocation5 + $0x38] sm:$0xff] %vm7873, %v8539
    %8584 = vst.msk [vmem:[#allocation5 + $0x48] sm:$0xff] %vm7873, %v8541
    %8585 = vst.msk [vmem:[#allocation5 + $0x58] sm:$0xff] %vm7873, %v8543
    %8586 = vst.msk [vmem:[#allocation5 + $0x68] sm:$0xff] %vm7873, %v8545
    %8587 = vst.msk [vmem:[#allocation5 + $0x78] sm:$0xff] %vm7873, %v8547
    %8588 = vst.msk [vmem:[#allocation5 + $0x88] sm:$0xff] %vm7873, %v8549
    %8589 = vst.msk [vmem:[#allocation5 + $0x98] sm:$0xff] %vm7873, %v8551
    %8590 = vst.msk [vmem:[#allocation5 + $0xa8] sm:$0xff] %vm7873, %v8553
    %8591 = vst.msk [vmem:[#allocation5 + $0xb8] sm:$0xff] %vm7873, %v8555
    %8592 = vst.msk [vmem:[#allocation5 + $0xc8] sm:$0xff] %vm7873, %v8557
    %8593 = vst.msk [vmem:[#allocation5 + $0xd8] sm:$0xff] %vm7873, %v8559
    %8594 = vst.msk [vmem:[#allocation5 + $0xe8] sm:$0xff] %vm7873, %v8561
    %8595 = vst.msk [vmem:[#allocation5 + $0xf8] sm:$0xff] %vm7873, %v8563
    %v8596 = vld [vmem:[%s8307 + $0x3] sm:$0xff]
    %v8597 = vld [vmem:[%s8307 + $0x13] sm:$0xff]
    %v8598 = vld [vmem:[%s8307 + $0x23] sm:$0xff]
    %v8599 = vld [vmem:[%s8307 + $0x33] sm:$0xff]
    %v8600 = vld [vmem:[%s8307 + $0x43] sm:$0xff]
    %v8601 = vld [vmem:[%s8307 + $0x53] sm:$0xff]
    %v8602 = vld [vmem:[%s8307 + $0x63] sm:$0xff]
    %v8603 = vld [vmem:[%s8307 + $0x73] sm:$0xff]
    %v8604 = vld [vmem:[%s8307 + $0xb3] sm:$0xff]
    %v8605 = vld [vmem:[%s8307 + $0xc3] sm:$0xff]
    %v8606 = vld [vmem:[%s8307 + $0xd3] sm:$0xff]
    %v8607 = vld [vmem:[%s8307 + $0xe3] sm:$0xff]
    %v8608 = vld [vmem:[%s8307 + $0xf3] sm:$0xff]
    %v8609 = vld [vmem:[%s8307 + $0x103] sm:$0xff]
    %v8610 = vld [vmem:[%s8307 + $0x113] sm:$0xff]
    %v8611 = vld [vmem:[%s8307 + $0x123] sm:$0xff]
    %8628 = vrot.lane.b32.xlu0 %v8596, 112
    %v8629 = vpop.permute.xlu0 %8628
    %8630 = vrot.lane.b32.xlu0 %v8597, 112
    %v8631 = vpop.permute.xlu0 %8630
    %8632 = vrot.lane.b32.xlu0 %v8598, 112
    %v8633 = vpop.permute.xlu0 %8632
    %8634 = vrot.lane.b32.xlu0 %v8599, 112
    %v8635 = vpop.permute.xlu0 %8634
    %8636 = vrot.lane.b32.xlu0 %v8600, 112
    %v8637 = vpop.permute.xlu0 %8636
    %8638 = vrot.lane.b32.xlu0 %v8601, 112
    %v8639 = vpop.permute.xlu0 %8638
    %8640 = vrot.lane.b32.xlu0 %v8602, 112
    %v8641 = vpop.permute.xlu0 %8640
    %8642 = vrot.lane.b32.xlu0 %v8603, 112
    %v8643 = vpop.permute.xlu0 %8642
    %8644 = vrot.lane.b32.xlu0 %v8604, 112
    %v8645 = vpop.permute.xlu0 %8644
    %8646 = vrot.lane.b32.xlu0 %v8605, 112
    %v8647 = vpop.permute.xlu0 %8646
    %8648 = vrot.lane.b32.xlu0 %v8606, 112
    %v8649 = vpop.permute.xlu0 %8648
    %8650 = vrot.lane.b32.xlu0 %v8607, 112
    %v8651 = vpop.permute.xlu0 %8650
    %8652 = vrot.lane.b32.xlu0 %v8608, 112
    %v8653 = vpop.permute.xlu0 %8652
    %8654 = vrot.lane.b32.xlu0 %v8609, 112
    %v8655 = vpop.permute.xlu0 %8654
    %8656 = vrot.lane.b32.xlu0 %v8610, 112
    %v8657 = vpop.permute.xlu0 %8656
    %8658 = vrot.lane.b32.xlu0 %v8611, 112
    %v8659 = vpop.permute.xlu0 %8658
    %8676 = vst.msk [vmem:[#allocation5 + $0x8] sm:$0xff] %vm7970, %v8629
    %8677 = vst.msk [vmem:[#allocation5 + $0x18] sm:$0xff] %vm7970, %v8631
    %8678 = vst.msk [vmem:[#allocation5 + $0x28] sm:$0xff] %vm7970, %v8633
    %8679 = vst.msk [vmem:[#allocation5 + $0x38] sm:$0xff] %vm7970, %v8635
    %8680 = vst.msk [vmem:[#allocation5 + $0x48] sm:$0xff] %vm7970, %v8637
    %8681 = vst.msk [vmem:[#allocation5 + $0x58] sm:$0xff] %vm7970, %v8639
    %8682 = vst.msk [vmem:[#allocation5 + $0x68] sm:$0xff] %vm7970, %v8641
    %8683 = vst.msk [vmem:[#allocation5 + $0x78] sm:$0xff] %vm7970, %v8643
    %8684 = vst.msk [vmem:[#allocation5 + $0x88] sm:$0xff] %vm7970, %v8645
    %8685 = vst.msk [vmem:[#allocation5 + $0x98] sm:$0xff] %vm7970, %v8647
    %8686 = vst.msk [vmem:[#allocation5 + $0xa8] sm:$0xff] %vm7970, %v8649
    %8687 = vst.msk [vmem:[#allocation5 + $0xb8] sm:$0xff] %vm7970, %v8651
    %8688 = vst.msk [vmem:[#allocation5 + $0xc8] sm:$0xff] %vm7970, %v8653
    %8689 = vst.msk [vmem:[#allocation5 + $0xd8] sm:$0xff] %vm7970, %v8655
    %8690 = vst.msk [vmem:[#allocation5 + $0xe8] sm:$0xff] %vm7970, %v8657
    %8691 = vst.msk [vmem:[#allocation5 + $0xf8] sm:$0xff] %vm7970, %v8659
    %v8692 = vld [vmem:[#allocation5] sm:$0xff]
    %v8693 = vld [vmem:[#allocation5 + $0x8] sm:$0xff]
    %v8694 = vld [vmem:[#allocation5 + $0x10] sm:$0xff]
    %v8695 = vld [vmem:[#allocation5 + $0x18] sm:$0xff]
    %v8696 = vld [vmem:[#allocation5 + $0x20] sm:$0xff]
    %v8697 = vld [vmem:[#allocation5 + $0x28] sm:$0xff]
    %v8698 = vld [vmem:[#allocation5 + $0x30] sm:$0xff]
    %v8699 = vld [vmem:[#allocation5 + $0x38] sm:$0xff]
    %v8700 = vld [vmem:[#allocation5 + $0x40] sm:$0xff]
    %v8701 = vld [vmem:[#allocation5 + $0x48] sm:$0xff]
    %v8702 = vld [vmem:[#allocation5 + $0x50] sm:$0xff]
    %v8703 = vld [vmem:[#allocation5 + $0x58] sm:$0xff]
    %v8704 = vld [vmem:[#allocation5 + $0x60] sm:$0xff]
    %v8705 = vld [vmem:[#allocation5 + $0x68] sm:$0xff]
    %v8706 = vld [vmem:[#allocation5 + $0x70] sm:$0xff]
    %v8707 = vld [vmem:[#allocation5 + $0x78] sm:$0xff]
    %v8708 = vld [vmem:[#allocation5 + $0x80] sm:$0xff]
    %v8709 = vld [vmem:[#allocation5 + $0x88] sm:$0xff]
    %v8710 = vld [vmem:[#allocation5 + $0x90] sm:$0xff]
    %v8711 = vld [vmem:[#allocation5 + $0x98] sm:$0xff]
    %v8712 = vld [vmem:[#allocation5 + $0xa0] sm:$0xff]
    %v8713 = vld [vmem:[#allocation5 + $0xa8] sm:$0xff]
    %v8714 = vld [vmem:[#allocation5 + $0xb0] sm:$0xff]
    %v8715 = vld [vmem:[#allocation5 + $0xb8] sm:$0xff]
    %v8716 = vld [vmem:[#allocation5 + $0xc0] sm:$0xff]
    %v8717 = vld [vmem:[#allocation5 + $0xc8] sm:$0xff]
    %v8718 = vld [vmem:[#allocation5 + $0xd0] sm:$0xff]
    %v8719 = vld [vmem:[#allocation5 + $0xd8] sm:$0xff]
    %v8720 = vld [vmem:[#allocation5 + $0xe0] sm:$0xff]
    %v8721 = vld [vmem:[#allocation5 + $0xe8] sm:$0xff]
    %v8722 = vld [vmem:[#allocation5 + $0xf0] sm:$0xff]
    %v8723 = vld [vmem:[#allocation5 + $0xf8] sm:$0xff]
    %v8724 = vld [vmem:[%s3] sm:$0xff]
    %v8725 = vld [vmem:[%s3 + $0x8] sm:$0xff]
    %v8726 = vld [vmem:[%s3 + $0x10] sm:$0xff]
    %v8727 = vld [vmem:[%s3 + $0x18] sm:$0xff]
    %v8728 = vld [vmem:[%s3 + $0x20] sm:$0xff]
    %v8729 = vld [vmem:[%s3 + $0x28] sm:$0xff]
    %v8730 = vld [vmem:[%s3 + $0x30] sm:$0xff]
    %v8731 = vld [vmem:[%s3 + $0x38] sm:$0xff]
    %v8732 = vld [vmem:[%s3 + $0x40] sm:$0xff]
    %v8733 = vld [vmem:[%s3 + $0x48] sm:$0xff]
    %v8734 = vld [vmem:[%s3 + $0x50] sm:$0xff]
    %v8735 = vld [vmem:[%s3 + $0x58] sm:$0xff]
    %v8736 = vld [vmem:[%s3 + $0x60] sm:$0xff]
    %v8737 = vld [vmem:[%s3 + $0x68] sm:$0xff]
    %v8738 = vld [vmem:[%s3 + $0x70] sm:$0xff]
    %v8739 = vld [vmem:[%s3 + $0x78] sm:$0xff]
    %v8740 = vld [vmem:[%s3 + $0x80] sm:$0xff]
    %v8741 = vld [vmem:[%s3 + $0x88] sm:$0xff]
    %v8742 = vld [vmem:[%s3 + $0x90] sm:$0xff]
    %v8743 = vld [vmem:[%s3 + $0x98] sm:$0xff]
    %v8744 = vld [vmem:[%s3 + $0xa0] sm:$0xff]
    %v8745 = vld [vmem:[%s3 + $0xa8] sm:$0xff]
    %v8746 = vld [vmem:[%s3 + $0xb0] sm:$0xff]
    %v8747 = vld [vmem:[%s3 + $0xb8] sm:$0xff]
    %v8748 = vld [vmem:[%s3 + $0xc0] sm:$0xff]
    %v8749 = vld [vmem:[%s3 + $0xc8] sm:$0xff]
    %v8750 = vld [vmem:[%s3 + $0xd0] sm:$0xff]
    %v8751 = vld [vmem:[%s3 + $0xd8] sm:$0xff]
    %v8752 = vld [vmem:[%s3 + $0xe0] sm:$0xff]
    %v8753 = vld [vmem:[%s3 + $0xe8] sm:$0xff]
    %v8754 = vld [vmem:[%s3 + $0xf0] sm:$0xff]
    %v8755 = vld [vmem:[%s3 + $0xf8] sm:$0xff]
    %v8756 = vld [vmem:[%s4] sm:$0x1]
    %v8758 = vlaneseq
    %v8759 = vshrl.u32 %v8758, 7
    %v8760 = vsub.s32 0, %v8759
    %v8761 = vrot.slane %v8756, %v8760
    %8763 = vmatprep.subr.mxu0 0.0
    %8764 = vmatpush1.msra.mxu0 %v8739
    %8765 = vmatprep.subr.mxu0 0.0
    %8766 = vmatpush1.msra.mxu0 %v8738
    %8767 = vmatprep.subr.mxu0 0.0
    %8768 = vmatpush1.msra.mxu0 %v8737
    %8769 = vmatprep.subr.mxu0 0.0
    %8770 = vmatpush1.msra.mxu0 %v8736
    %8771 = vmatprep.subr.mxu0 0.0
    %8772 = vmatpush1.msra.mxu0 %v8735
    %8773 = vmatprep.subr.mxu0 0.0
    %8774 = vmatpush1.msra.mxu0 %v8734
    %8775 = vmatprep.subr.mxu0 0.0
    %8776 = vmatpush1.msra.mxu0 %v8733
    %8777 = vmatprep.subr.mxu0 0.0
    %8778 = vmatpush1.msra.mxu0 %v8732
    %8779 = vmatprep.subr.mxu0 0.0
    %8780 = vmatpush1.msra.mxu0 %v8731
    %8781 = vmatprep.subr.mxu0 0.0
    %8782 = vmatpush1.msra.mxu0 %v8730
    %8783 = vmatprep.subr.mxu0 0.0
    %8784 = vmatpush1.msra.mxu0 %v8729
    %8785 = vmatprep.subr.mxu0 0.0
    %8786 = vmatpush1.msra.mxu0 %v8728
    %8787 = vmatprep.subr.mxu0 0.0
    %8788 = vmatpush1.msra.mxu0 %v8727
    %8789 = vmatprep.subr.mxu0 0.0
    %8790 = vmatpush1.msra.mxu0 %v8726
    %8791 = vmatprep.subr.mxu0 0.0
    %8792 = vmatpush1.msra.mxu0 %v8725
    %8793 = vmatprep.subr.mxu0 0.0
    %8794 = vmatpush1.msra.mxu0 %v8724
    %8795 = vmatprep.subr.mxu0 0.0
    %8796 = vmatpush2.msra.mxu0 %v8755
    %8797 = vmatprep.subr.mxu0 0.0
    %8798 = vmatpush2.msra.mxu0 %v8754
    %8799 = vmatprep.subr.mxu0 0.0
    %8800 = vmatpush2.msra.mxu0 %v8753
    %8801 = vmatprep.subr.mxu0 0.0
    %8802 = vmatpush2.msra.mxu0 %v8752
    %8803 = vmatprep.subr.mxu0 0.0
    %8804 = vmatpush2.msra.mxu0 %v8751
    %8805 = vmatprep.subr.mxu0 0.0
    %8806 = vmatpush2.msra.mxu0 %v8750
    %8807 = vmatprep.subr.mxu0 0.0
    %8808 = vmatpush2.msra.mxu0 %v8749
    %8809 = vmatprep.subr.mxu0 0.0
    %8810 = vmatpush2.msra.mxu0 %v8748
    %8811 = vmatprep.subr.mxu0 0.0
    %8812 = vmatpush2.msra.mxu0 %v8747
    %8813 = vmatprep.subr.mxu0 0.0
    %8814 = vmatpush2.msra.mxu0 %v8746
    %8815 = vmatprep.subr.mxu0 0.0
    %8816 = vmatpush2.msra.mxu0 %v8745
    %8817 = vmatprep.subr.mxu0 0.0
    %8818 = vmatpush2.msra.mxu0 %v8744
    %8819 = vmatprep.subr.mxu0 0.0
    %8820 = vmatpush2.msra.mxu0 %v8743
    %8821 = vmatprep.subr.mxu0 0.0
    %8822 = vmatpush2.msra.mxu0 %v8742
    %8823 = vmatprep.subr.mxu0 0.0
    %8824 = vmatpush2.msra.mxu0 %v8741
    %8825 = vmatprep.subr.mxu0 0.0
    %8826 = vmatpush2.msra.mxu0 %v8740
    %8827 = vmatprep.mubr.f32.mxu0 %v8693
    %8828 = vmatmul.mubr.f32.gmra.mxu0 %v8692
    %v8829 = vpop.f32.mrf.mxu0
    %v8830 = vadd.f32 %v8761, %v8829
    %v8831 = vpop.f32.mrf.mxu0
    %8832 = vmatprep.mubr.f32.mxu0 %v8695
    %8833 = vmatmul.mubr.f32.gmra.mxu0 %v8694
    %v8834 = vpop.f32.mrf.mxu0
    %v8835 = vadd.f32 %v8761, %v8834
    %v8836 = vpop.f32.mrf.mxu0
    %8837 = vmatprep.mubr.f32.mxu0 %v8697
    %8838 = vmatmul.mubr.f32.gmra.mxu0 %v8696
    %v8839 = vpop.f32.mrf.mxu0
    %v8840 = vadd.f32 %v8761, %v8839
    %v8841 = vpop.f32.mrf.mxu0
    %8842 = vmatprep.mubr.f32.mxu0 %v8699
    %8843 = vmatmul.mubr.f32.gmra.mxu0 %v8698
    %v8844 = vpop.f32.mrf.mxu0
    %v8845 = vadd.f32 %v8761, %v8844
    %v8846 = vpop.f32.mrf.mxu0
    %8847 = vmatprep.mubr.f32.mxu0 %v8701
    %8848 = vmatmul.mubr.f32.gmra.mxu0 %v8700
    %v8849 = vpop.f32.mrf.mxu0
    %v8850 = vadd.f32 %v8761, %v8849
    %v8851 = vpop.f32.mrf.mxu0
    %8852 = vmatprep.mubr.f32.mxu0 %v8703
    %8853 = vmatmul.mubr.f32.gmra.mxu0 %v8702
    %v8854 = vpop.f32.mrf.mxu0
    %v8855 = vadd.f32 %v8761, %v8854
    %v8856 = vpop.f32.mrf.mxu0
    %8857 = vmatprep.mubr.f32.mxu0 %v8705
    %8858 = vmatmul.mubr.f32.gmra.mxu0 %v8704
    %v8859 = vpop.f32.mrf.mxu0
    %v8860 = vadd.f32 %v8761, %v8859
    %v8861 = vpop.f32.mrf.mxu0
    %8862 = vmatprep.mubr.f32.mxu0 %v8707
    %8863 = vmatmul.mubr.f32.gmra.mxu0 %v8706
    %v8864 = vpop.f32.mrf.mxu0
    %v8865 = vadd.f32 %v8761, %v8864
    %v8866 = vpop.f32.mrf.mxu0
    %8867 = vmatprep.mubr.f32.mxu0 %v8709
    %8868 = vmatmul.mubr.f32.gmra.mxu0 %v8708
    %v8869 = vpop.f32.mrf.mxu0
    %v8870 = vadd.f32 %v8761, %v8869
    %v8871 = vpop.f32.mrf.mxu0
    %8872 = vmatprep.mubr.f32.mxu0 %v8711
    %8873 = vmatmul.mubr.f32.gmra.mxu0 %v8710
    %v8874 = vpop.f32.mrf.mxu0
    %v8875 = vadd.f32 %v8761, %v8874
    %v8876 = vpop.f32.mrf.mxu0
    %8877 = vmatprep.mubr.f32.mxu0 %v8713
    %8878 = vmatmul.mubr.f32.gmra.mxu0 %v8712
    %v8879 = vpop.f32.mrf.mxu0
    %v8880 = vadd.f32 %v8761, %v8879
    %v8881 = vpop.f32.mrf.mxu0
    %8882 = vmatprep.mubr.f32.mxu0 %v8715
    %8883 = vmatmul.mubr.f32.gmra.mxu0 %v8714
    %v8884 = vpop.f32.mrf.mxu0
    %v8885 = vadd.f32 %v8761, %v8884
    %v8886 = vpop.f32.mrf.mxu0
    %8887 = vmatprep.mubr.f32.mxu0 %v8717
    %8888 = vmatmul.mubr.f32.gmra.mxu0 %v8716
    %v8889 = vpop.f32.mrf.mxu0
    %v8890 = vadd.f32 %v8761, %v8889
    %v8891 = vpop.f32.mrf.mxu0
    %8892 = vmatprep.mubr.f32.mxu0 %v8719
    %8893 = vmatmul.mubr.f32.gmra.mxu0 %v8718
    %v8894 = vpop.f32.mrf.mxu0
    %v8895 = vadd.f32 %v8761, %v8894
    %v8896 = vpop.f32.mrf.mxu0
    %8897 = vmatprep.mubr.f32.mxu0 %v8721
    %8898 = vmatmul.mubr.f32.gmra.mxu0 %v8720
    %v8899 = vpop.f32.mrf.mxu0
    %v8900 = vadd.f32 %v8761, %v8899
    %v8901 = vpop.f32.mrf.mxu0
    %8902 = vmatprep.mubr.f32.mxu0 %v8723
    %8903 = vmatmul.mubr.f32.gmra.mxu0 %v8722
    %v8904 = vpop.f32.mrf.mxu0
    %v8905 = vadd.f32 %v8761, %v8904
    %v8906 = vpop.f32.mrf.mxu0
    %8907 = vdwg.mxu0
    %v8908 = vmax.f32 %v8830, 0.0
    %v8909 = vmax.f32 %v8835, 0.0
    %v8910 = vmax.f32 %v8840, 0.0
    %v8911 = vmax.f32 %v8845, 0.0
    %v8912 = vmax.f32 %v8850, 0.0
    %v8913 = vmax.f32 %v8855, 0.0
    %v8914 = vmax.f32 %v8860, 0.0
    %v8915 = vmax.f32 %v8865, 0.0
    %v8916 = vmax.f32 %v8870, 0.0
    %v8917 = vmax.f32 %v8875, 0.0
    %v8918 = vmax.f32 %v8880, 0.0
    %v8919 = vmax.f32 %v8885, 0.0
    %v8920 = vmax.f32 %v8890, 0.0
    %v8921 = vmax.f32 %v8895, 0.0
    %v8922 = vmax.f32 %v8900, 0.0
    %v8923 = vmax.f32 %v8905, 0.0
    %v8924 = vadd.f32 %v8908, %v8909
    %v8925 = vadd.f32 %v8910, %v8911
    %v8926 = vadd.f32 %v8912, %v8913
    %v8927 = vadd.f32 %v8914, %v8915
    %v8928 = vadd.f32 %v8916, %v8917
    %v8929 = vadd.f32 %v8918, %v8919
    %v8930 = vadd.f32 %v8920, %v8921
    %v8931 = vadd.f32 %v8922, %v8923
    %v8934 = vrot.slane %v8924, 1
    %v8935 = vrot.slane %v8928, 1
    %v8938 = vadd.f32 %v8924, %v8934
    %v8939 = vadd.f32 %v8928, %v8935
    %v8940 = vmul.f32 %v8938, 0.5
    %v8941 = vmul.f32 %v8939, 0.5
    %v8945 = vunpack.c.l.s4 1983009808
    %v8946 = vunpack.c.0.s8 %v8945
    %v8947 = vlaneseq
    %v8948 = vshrl.u32 %v8947, 7
    %v8949 = vsub.s32 %v8946, %v8948
    %v8950 = vrot.slane %v8940, %v8949
    %v8952 = vunpack.c.l.s4 1983009808
    %v8953 = vunpack.c.0.s8 %v8952
    %v8954 = vlaneseq
    %v8955 = vshrl.u32 %v8954, 7
    %v8956 = vsub.s32 %v8953, %v8955
    %v8957 = vrot.slane %v8941, %v8956
    %vm8958 = vcmask 1044484
    %v8959 = vsel %vm8958, %v8950, %v8950
    %vm8960 = vcmask 1046534
    %v8961 = vsel %vm8960, %v8950, %v8959
    %v8962 = vrot.slane %v8957, 7
    %vm8963 = vcmask 1041409
    %v8964 = vsel %vm8963, %v8962, %v8961
    %vm8965 = vcmask 1043459
    %v8966 = vsel %vm8965, %v8962, %v8964
    %vm8967 = vcmask 1045509
    %v8968 = vsel %vm8967, %v8962, %v8966
    %vm8969 = vcmask 1047559
    %v8970 = vsel %vm8969, %v8962, %v8968
    %vm8972 = vcmask 254976
    %8973 = vst.msk [vmem:[#allocation6] sm:$0x3] %vm8972, %v8970
    %v8974 = vcombine.high %v8950, %v8950
    %v8975 = vcombine.high %v8957, %v8957
    %v8976 = vsel %vm8958, %v8974, %v8974
    %v8977 = vsel %vm8960, %v8974, %v8976
    %v8978 = vrot.slane %v8975, 7
    %v8979 = vsel %vm8963, %v8978, %v8977
    %v8980 = vsel %vm8965, %v8978, %v8979
    %v8981 = vsel %vm8967, %v8978, %v8980
    %v8982 = vsel %vm8969, %v8978, %v8981
    %8983 = vrot.lane.b32.xlu0 %v8982, 32
    %v8984 = vpop.permute.xlu0 %8983
    %vm8986 = vcmask 517376
    %8987 = vst.msk [vmem:[#allocation6] sm:$0x3] %vm8986, %v8984
    %v8988 = vcombine.high %v8940, %v8940
    %v8990 = vunpack.c.l.s4 1983009808
    %v8991 = vunpack.c.0.s8 %v8990
    %v8992 = vlaneseq
    %v8993 = vshrl.u32 %v8992, 7
    %v8994 = vsub.s32 %v8991, %v8993
    %v8995 = vrot.slane %v8988, %v8994
    %v8996 = vcombine.high %v8941, %v8941
    %v8998 = vunpack.c.l.s4 1983009808
    %v8999 = vunpack.c.0.s8 %v8998
    %v9000 = vlaneseq
    %v9001 = vshrl.u32 %v9000, 7
    %v9002 = vsub.s32 %v8999, %v9001
    %v9003 = vrot.slane %v8996, %v9002
    %v9004 = vsel %vm8958, %v8995, %v8995
    %v9005 = vsel %vm8960, %v8995, %v9004
    %v9006 = vrot.slane %v9003, 7
    %v9007 = vsel %vm8963, %v9006, %v9005
    %v9008 = vsel %vm8965, %v9006, %v9007
    %v9009 = vsel %vm8967, %v9006, %v9008
    %v9010 = vsel %vm8969, %v9006, %v9009
    %9011 = vrot.lane.b32.xlu0 %v9010, 64
    %v9012 = vpop.permute.xlu0 %9011
    %vm9014 = vcmask 779776
    %9015 = vst.msk [vmem:[#allocation6] sm:$0x3] %vm9014, %v9012
    %v9016 = vcombine.high %v8995, %v8995
    %v9017 = vcombine.high %v9003, %v9003
    %v9018 = vsel %vm8958, %v9016, %v9016
    %v9019 = vsel %vm8960, %v9016, %v9018
    %v9020 = vrot.slane %v9017, 7
    %v9021 = vsel %vm8963, %v9020, %v9019
    %v9022 = vsel %vm8965, %v9020, %v9021
    %v9023 = vsel %vm8967, %v9020, %v9022
    %v9024 = vsel %vm8969, %v9020, %v9023
    %9025 = vrot.lane.b32.xlu0 %v9024, 96
    %v9026 = vpop.permute.xlu0 %9025
    %vm9028 = vcmask 1042176
    %9029 = vst.msk [vmem:[#allocation6] sm:$0x3] %vm9028, %v9026
    %v9032 = vrot.slane %v8925, 1
    %v9033 = vrot.slane %v8929, 1
    %v9036 = vadd.f32 %v8925, %v9032
    %v9037 = vadd.f32 %v8929, %v9033
    %v9038 = vmul.f32 %v9036, 0.5
    %v9039 = vmul.f32 %v9037, 0.5
    %v9043 = vunpack.c.l.s4 1983009808
    %v9044 = vunpack.c.0.s8 %v9043
    %v9045 = vlaneseq
    %v9046 = vshrl.u32 %v9045, 7
    %v9047 = vsub.s32 %v9044, %v9046
    %v9048 = vrot.slane %v9038, %v9047
    %v9050 = vunpack.c.l.s4 1983009808
    %v9051 = vunpack.c.0.s8 %v9050
    %v9052 = vlaneseq
    %v9053 = vshrl.u32 %v9052, 7
    %v9054 = vsub.s32 %v9051, %v9053
    %v9055 = vrot.slane %v9039, %v9054
    %v9056 = vsel %vm8958, %v9048, %v9048
    %v9057 = vsel %vm8960, %v9048, %v9056
    %v9058 = vrot.slane %v9055, 7
    %v9059 = vsel %vm8963, %v9058, %v9057
    %v9060 = vsel %vm8965, %v9058, %v9059
    %v9061 = vsel %vm8967, %v9058, %v9060
    %v9062 = vsel %vm8969, %v9058, %v9061
    %9064 = vst.msk [vmem:[#allocation6 + $0x2] sm:$0x3] %vm8972, %v9062
    %v9065 = vcombine.high %v9048, %v9048
    %v9066 = vcombine.high %v9055, %v9055
    %v9067 = vsel %vm8958, %v9065, %v9065
    %v9068 = vsel %vm8960, %v9065, %v9067
    %v9069 = vrot.slane %v9066, 7
    %v9070 = vsel %vm8963, %v9069, %v9068
    %v9071 = vsel %vm8965, %v9069, %v9070
    %v9072 = vsel %vm8967, %v9069, %v9071
    %v9073 = vsel %vm8969, %v9069, %v9072
    %9074 = vrot.lane.b32.xlu0 %v9073, 32
    %v9075 = vpop.permute.xlu0 %9074
    %9077 = vst.msk [vmem:[#allocation6 + $0x2] sm:$0x3] %vm8986, %v9075
    %v9078 = vcombine.high %v9038, %v9038
    %v9080 = vunpack.c.l.s4 1983009808
    %v9081 = vunpack.c.0.s8 %v9080
    %v9082 = vlaneseq
    %v9083 = vshrl.u32 %v9082, 7
    %v9084 = vsub.s32 %v9081, %v9083
    %v9085 = vrot.slane %v9078, %v9084
    %v9086 = vcombine.high %v9039, %v9039
    %v9088 = vunpack.c.l.s4 1983009808
    %v9089 = vunpack.c.0.s8 %v9088
    %v9090 = vlaneseq
    %v9091 = vshrl.u32 %v9090, 7
    %v9092 = vsub.s32 %v9089, %v9091
    %v9093 = vrot.slane %v9086, %v9092
    %v9094 = vsel %vm8958, %v9085, %v9085
    %v9095 = vsel %vm8960, %v9085, %v9094
    %v9096 = vrot.slane %v9093, 7
    %v9097 = vsel %vm8963, %v9096, %v9095
    %v9098 = vsel %vm8965, %v9096, %v9097
    %v9099 = vsel %vm8967, %v9096, %v9098
    %v9100 = vsel %vm8969, %v9096, %v9099
    %9101 = vrot.lane.b32.xlu0 %v9100, 64
    %v9102 = vpop.permute.xlu0 %9101
    %9104 = vst.msk [vmem:[#allocation6 + $0x2] sm:$0x3] %vm9014, %v9102
    %v9105 = vcombine.high %v9085, %v9085
    %v9106 = vcombine.high %v9093, %v9093
    %v9107 = vsel %vm8958, %v9105, %v9105
    %v9108 = vsel %vm8960, %v9105, %v9107
    %v9109 = vrot.slane %v9106, 7
    %v9110 = vsel %vm8963, %v9109, %v9108
    %v9111 = vsel %vm8965, %v9109, %v9110
    %v9112 = vsel %vm8967, %v9109, %v9111
    %v9113 = vsel %vm8969, %v9109, %v9112
    %9114 = vrot.lane.b32.xlu0 %v9113, 96
    %v9115 = vpop.permute.xlu0 %9114
    %9117 = vst.msk [vmem:[#allocation6 + $0x2] sm:$0x3] %vm9028, %v9115
    %v9120 = vrot.slane %v8926, 1
    %v9121 = vrot.slane %v8930, 1
    %v9124 = vadd.f32 %v8926, %v9120
    %v9125 = vadd.f32 %v8930, %v9121
    %v9126 = vmul.f32 %v9124, 0.5
    %v9127 = vmul.f32 %v9125, 0.5
    %v9131 = vunpack.c.l.s4 1983009808
    %v9132 = vunpack.c.0.s8 %v9131
    %v9133 = vlaneseq
    %v9134 = vshrl.u32 %v9133, 7
    %v9135 = vsub.s32 %v9132, %v9134
    %v9136 = vrot.slane %v9126, %v9135
    %v9138 = vunpack.c.l.s4 1983009808
    %v9139 = vunpack.c.0.s8 %v9138
    %v9140 = vlaneseq
    %v9141 = vshrl.u32 %v9140, 7
    %v9142 = vsub.s32 %v9139, %v9141
    %v9143 = vrot.slane %v9127, %v9142
    %v9144 = vsel %vm8958, %v9136, %v9136
    %v9145 = vsel %vm8960, %v9136, %v9144
    %v9146 = vrot.slane %v9143, 7
    %v9147 = vsel %vm8963, %v9146, %v9145
    %v9148 = vsel %vm8965, %v9146, %v9147
    %v9149 = vsel %vm8967, %v9146, %v9148
    %v9150 = vsel %vm8969, %v9146, %v9149
    %9152 = vst.msk [vmem:[#allocation6 + $0x4] sm:$0x3] %vm8972, %v9150
    %v9153 = vcombine.high %v9136, %v9136
    %v9154 = vcombine.high %v9143, %v9143
    %v9155 = vsel %vm8958, %v9153, %v9153
    %v9156 = vsel %vm8960, %v9153, %v9155
    %v9157 = vrot.slane %v9154, 7
    %v9158 = vsel %vm8963, %v9157, %v9156
    %v9159 = vsel %vm8965, %v9157, %v9158
    %v9160 = vsel %vm8967, %v9157, %v9159
    %v9161 = vsel %vm8969, %v9157, %v9160
    %9162 = vrot.lane.b32.xlu0 %v9161, 32
    %v9163 = vpop.permute.xlu0 %9162
    %9165 = vst.msk [vmem:[#allocation6 + $0x4] sm:$0x3] %vm8986, %v9163
    %v9166 = vcombine.high %v9126, %v9126
    %v9168 = vunpack.c.l.s4 1983009808
    %v9169 = vunpack.c.0.s8 %v9168
    %v9170 = vlaneseq
    %v9171 = vshrl.u32 %v9170, 7
    %v9172 = vsub.s32 %v9169, %v9171
    %v9173 = vrot.slane %v9166, %v9172
    %v9174 = vcombine.high %v9127, %v9127
    %v9176 = vunpack.c.l.s4 1983009808
    %v9177 = vunpack.c.0.s8 %v9176
    %v9178 = vlaneseq
    %v9179 = vshrl.u32 %v9178, 7
    %v9180 = vsub.s32 %v9177, %v9179
    %v9181 = vrot.slane %v9174, %v9180
    %v9182 = vsel %vm8958, %v9173, %v9173
    %v9183 = vsel %vm8960, %v9173, %v9182
    %v9184 = vrot.slane %v9181, 7
    %v9185 = vsel %vm8963, %v9184, %v9183
    %v9186 = vsel %vm8965, %v9184, %v9185
    %v9187 = vsel %vm8967, %v9184, %v9186
    %v9188 = vsel %vm8969, %v9184, %v9187
    %9189 = vrot.lane.b32.xlu0 %v9188, 64
    %v9190 = vpop.permute.xlu0 %9189
    %9192 = vst.msk [vmem:[#allocation6 + $0x4] sm:$0x3] %vm9014, %v9190
    %v9193 = vcombine.high %v9173, %v9173
    %v9194 = vcombine.high %v9181, %v9181
    %v9195 = vsel %vm8958, %v9193, %v9193
    %v9196 = vsel %vm8960, %v9193, %v9195
    %v9197 = vrot.slane %v9194, 7
    %v9198 = vsel %vm8963, %v9197, %v9196
    %v9199 = vsel %vm8965, %v9197, %v9198
    %v9200 = vsel %vm8967, %v9197, %v9199
    %v9201 = vsel %vm8969, %v9197, %v9200
    %9202 = vrot.lane.b32.xlu0 %v9201, 96
    %v9203 = vpop.permute.xlu0 %9202
    %9205 = vst.msk [vmem:[#allocation6 + $0x4] sm:$0x3] %vm9028, %v9203
    %v9208 = vrot.slane %v8927, 1
    %v9209 = vrot.slane %v8931, 1
    %v9212 = vadd.f32 %v8927, %v9208
    %v9213 = vadd.f32 %v8931, %v9209
    %v9214 = vmul.f32 %v9212, 0.5
    %v9215 = vmul.f32 %v9213, 0.5
    %v9219 = vunpack.c.l.s4 1983009808
    %v9220 = vunpack.c.0.s8 %v9219
    %v9221 = vlaneseq
    %v9222 = vshrl.u32 %v9221, 7
    %v9223 = vsub.s32 %v9220, %v9222
    %v9224 = vrot.slane %v9214, %v9223
    %v9226 = vunpack.c.l.s4 1983009808
    %v9227 = vunpack.c.0.s8 %v9226
    %v9228 = vlaneseq
    %v9229 = vshrl.u32 %v9228, 7
    %v9230 = vsub.s32 %v9227, %v9229
    %v9231 = vrot.slane %v9215, %v9230
    %v9232 = vsel %vm8958, %v9224, %v9224
    %v9233 = vsel %vm8960, %v9224, %v9232
    %v9234 = vrot.slane %v9231, 7
    %v9235 = vsel %vm8963, %v9234, %v9233
    %v9236 = vsel %vm8965, %v9234, %v9235
    %v9237 = vsel %vm8967, %v9234, %v9236
    %v9238 = vsel %vm8969, %v9234, %v9237
    %9240 = vst.msk [vmem:[#allocation6 + $0x6] sm:$0x3] %vm8972, %v9238
    %v9241 = vcombine.high %v9224, %v9224
    %v9242 = vcombine.high %v9231, %v9231
    %v9243 = vsel %vm8958, %v9241, %v9241
    %v9244 = vsel %vm8960, %v9241, %v9243
    %v9245 = vrot.slane %v9242, 7
    %v9246 = vsel %vm8963, %v9245, %v9244
    %v9247 = vsel %vm8965, %v9245, %v9246
    %v9248 = vsel %vm8967, %v9245, %v9247
    %v9249 = vsel %vm8969, %v9245, %v9248
    %9250 = vrot.lane.b32.xlu0 %v9249, 32
    %v9251 = vpop.permute.xlu0 %9250
    %9253 = vst.msk [vmem:[#allocation6 + $0x6] sm:$0x3] %vm8986, %v9251
    %v9254 = vcombine.high %v9214, %v9214
    %v9256 = vunpack.c.l.s4 1983009808
    %v9257 = vunpack.c.0.s8 %v9256
    %v9258 = vlaneseq
    %v9259 = vshrl.u32 %v9258, 7
    %v9260 = vsub.s32 %v9257, %v9259
    %v9261 = vrot.slane %v9254, %v9260
    %v9262 = vcombine.high %v9215, %v9215
    %v9264 = vunpack.c.l.s4 1983009808
    %v9265 = vunpack.c.0.s8 %v9264
    %v9266 = vlaneseq
    %v9267 = vshrl.u32 %v9266, 7
    %v9268 = vsub.s32 %v9265, %v9267
    %v9269 = vrot.slane %v9262, %v9268
    %v9270 = vsel %vm8958, %v9261, %v9261
    %v9271 = vsel %vm8960, %v9261, %v9270
    %v9272 = vrot.slane %v9269, 7
    %v9273 = vsel %vm8963, %v9272, %v9271
    %v9274 = vsel %vm8965, %v9272, %v9273
    %v9275 = vsel %vm8967, %v9272, %v9274
    %v9276 = vsel %vm8969, %v9272, %v9275
    %9277 = vrot.lane.b32.xlu0 %v9276, 64
    %v9278 = vpop.permute.xlu0 %9277
    %9280 = vst.msk [vmem:[#allocation6 + $0x6] sm:$0x3] %vm9014, %v9278
    %v9281 = vcombine.high %v9261, %v9261
    %v9282 = vcombine.high %v9269, %v9269
    %v9283 = vsel %vm8958, %v9281, %v9281
    %v9284 = vsel %vm8960, %v9281, %v9283
    %v9285 = vrot.slane %v9282, 7
    %v9286 = vsel %vm8963, %v9285, %v9284
    %v9287 = vsel %vm8965, %v9285, %v9286
    %v9288 = vsel %vm8967, %v9285, %v9287
    %v9289 = vsel %vm8969, %v9285, %v9288
    %9290 = vrot.lane.b32.xlu0 %v9289, 96
    %v9291 = vpop.permute.xlu0 %9290
    %9293 = vst.msk [vmem:[#allocation6 + $0x6] sm:$0x3] %vm9028, %v9291
    %v9294 = vld [vmem:[#allocation6] sm:$0xff]
    %v9295 = vld [vmem:[%s5] sm:$0xff]
    %v9296 = vld [vmem:[%s5 + $0x8] sm:$0xff]
    %v9297 = vld [vmem:[%s5 + $0x10] sm:$0xff]
    %v9298 = vld [vmem:[%s5 + $0x18] sm:$0xff]
    %v9299 = vld [vmem:[%s5 + $0x20] sm:$0xff]
    %v9300 = vld [vmem:[%s5 + $0x28] sm:$0xff]
    %v9301 = vld [vmem:[%s5 + $0x30] sm:$0xff]
    %v9302 = vld [vmem:[%s5 + $0x38] sm:$0xff]
    %v9303 = vld [vmem:[%s5 + $0x40] sm:$0xff]
    %v9304 = vld [vmem:[%s5 + $0x48] sm:$0xff]
    %v9305 = vld [vmem:[%s5 + $0x50] sm:$0xff]
    %v9306 = vld [vmem:[%s5 + $0x58] sm:$0xff]
    %v9307 = vld [vmem:[%s5 + $0x60] sm:$0xff]
    %v9308 = vld [vmem:[%s5 + $0x68] sm:$0xff]
    %v9309 = vld [vmem:[%s5 + $0x70] sm:$0xff]
    %v9310 = vld [vmem:[%s5 + $0x78] sm:$0xff]
    %v9311 = vld [vmem:[%s5 + $0x80] sm:$0xff]
    %v9312 = vld [vmem:[%s5 + $0x88] sm:$0xff]
    %v9313 = vld [vmem:[%s5 + $0x90] sm:$0xff]
    %v9314 = vld [vmem:[%s5 + $0x98] sm:$0xff]
    %v9315 = vld [vmem:[%s5 + $0xa0] sm:$0xff]
    %v9316 = vld [vmem:[%s5 + $0xa8] sm:$0xff]
    %v9317 = vld [vmem:[%s5 + $0xb0] sm:$0xff]
    %v9318 = vld [vmem:[%s5 + $0xb8] sm:$0xff]
    %v9319 = vld [vmem:[%s5 + $0xc0] sm:$0xff]
    %v9320 = vld [vmem:[%s5 + $0xc8] sm:$0xff]
    %v9321 = vld [vmem:[%s5 + $0xd0] sm:$0xff]
    %v9322 = vld [vmem:[%s5 + $0xd8] sm:$0xff]
    %v9323 = vld [vmem:[%s5 + $0xe0] sm:$0xff]
    %v9324 = vld [vmem:[%s5 + $0xe8] sm:$0xff]
    %v9325 = vld [vmem:[%s5 + $0xf0] sm:$0xff]
    %v9326 = vld [vmem:[%s5 + $0xf8] sm:$0xff]
    %v9327 = vld [vmem:[%s5 + $0x100] sm:$0xff]
    %v9328 = vld [vmem:[%s5 + $0x108] sm:$0xff]
    %v9329 = vld [vmem:[%s5 + $0x110] sm:$0xff]
    %v9330 = vld [vmem:[%s5 + $0x118] sm:$0xff]
    %v9331 = vld [vmem:[%s5 + $0x120] sm:$0xff]
    %v9332 = vld [vmem:[%s5 + $0x128] sm:$0xff]
    %v9333 = vld [vmem:[%s5 + $0x130] sm:$0xff]
    %v9334 = vld [vmem:[%s5 + $0x138] sm:$0xff]
    %v9335 = vld [vmem:[%s5 + $0x140] sm:$0xff]
    %v9336 = vld [vmem:[%s5 + $0x148] sm:$0xff]
    %v9337 = vld [vmem:[%s5 + $0x150] sm:$0xff]
    %v9338 = vld [vmem:[%s5 + $0x158] sm:$0xff]
    %v9339 = vld [vmem:[%s5 + $0x160] sm:$0xff]
    %v9340 = vld [vmem:[%s5 + $0x168] sm:$0xff]
    %v9341 = vld [vmem:[%s5 + $0x170] sm:$0xff]
    %v9342 = vld [vmem:[%s5 + $0x178] sm:$0xff]
    %v9343 = vld [vmem:[%s5 + $0x180] sm:$0xff]
    %v9344 = vld [vmem:[%s5 + $0x188] sm:$0xff]
    %v9345 = vld [vmem:[%s5 + $0x190] sm:$0xff]
    %v9346 = vld [vmem:[%s5 + $0x198] sm:$0xff]
    %v9347 = vld [vmem:[%s5 + $0x1a0] sm:$0xff]
    %v9348 = vld [vmem:[%s5 + $0x1a8] sm:$0xff]
    %v9349 = vld [vmem:[%s5 + $0x1b0] sm:$0xff]
    %v9350 = vld [vmem:[%s5 + $0x1b8] sm:$0xff]
    %v9351 = vld [vmem:[%s5 + $0x1c0] sm:$0xff]
    %v9352 = vld [vmem:[%s5 + $0x1c8] sm:$0xff]
    %v9353 = vld [vmem:[%s5 + $0x1d0] sm:$0xff]
    %v9354 = vld [vmem:[%s5 + $0x1d8] sm:$0xff]
    %v9355 = vld [vmem:[%s5 + $0x1e0] sm:$0xff]
    %v9356 = vld [vmem:[%s5 + $0x1e8] sm:$0xff]
    %v9357 = vld [vmem:[%s5 + $0x1f0] sm:$0xff]
    %v9358 = vld [vmem:[%s5 + $0x1f8] sm:$0xff]
    %v9359 = vld [vmem:[%s6] sm:$0x1]
    %v9361 = vlaneseq
    %v9362 = vshrl.u32 %v9361, 7
    %v9363 = vsub.s32 0, %v9362
    %v9364 = vrot.slane %v9359, %v9363
    %v9367 = vcombine.high %v9294, %v9294
    %v9369 = vunpack.c.l.s4 1983009808
    %v9370 = vunpack.c.0.s8 %v9369
    %v9371 = vlaneseq
    %v9372 = vshrl.u32 %v9371, 7
    %v9373 = vsub.s32 %v9370, %v9372
    %v9374 = vrot.slane %v9294, %v9373
    %v9376 = vunpack.c.l.s4 1983009808
    %v9377 = vunpack.c.0.s8 %v9376
    %v9378 = vlaneseq
    %v9379 = vshrl.u32 %v9378, 7
    %v9380 = vsub.s32 %v9377, %v9379
    %v9381 = vrot.slane %v9367, %v9380
    %v9382 = vcombine.high %v9374, %v9374
    %v9383 = vcombine.high %v9381, %v9381
    %9388 = vmatprep.subr.mxu0 0.0
    %9389 = vmatpush1.msra.mxu0 %v9310
    %9390 = vmatprep.subr.mxu0 0.0
    %9391 = vmatpush1.msra.mxu0 %v9309
    %9392 = vmatprep.subr.mxu0 0.0
    %9393 = vmatpush1.msra.mxu0 %v9308
    %9394 = vmatprep.subr.mxu0 0.0
    %9395 = vmatpush1.msra.mxu0 %v9307
    %9396 = vmatprep.subr.mxu0 0.0
    %9397 = vmatpush1.msra.mxu0 %v9306
    %9398 = vmatprep.subr.mxu0 0.0
    %9399 = vmatpush1.msra.mxu0 %v9305
    %9400 = vmatprep.subr.mxu0 0.0
    %9401 = vmatpush1.msra.mxu0 %v9304
    %9402 = vmatprep.subr.mxu0 0.0
    %9403 = vmatpush1.msra.mxu0 %v9303
    %9404 = vmatprep.subr.mxu0 0.0
    %9405 = vmatpush1.msra.mxu0 %v9302
    %9406 = vmatprep.subr.mxu0 0.0
    %9407 = vmatpush1.msra.mxu0 %v9301
    %9408 = vmatprep.subr.mxu0 0.0
    %9409 = vmatpush1.msra.mxu0 %v9300
    %9410 = vmatprep.subr.mxu0 0.0
    %9411 = vmatpush1.msra.mxu0 %v9299
    %9412 = vmatprep.subr.mxu0 0.0
    %9413 = vmatpush1.msra.mxu0 %v9298
    %9414 = vmatprep.subr.mxu0 0.0
    %9415 = vmatpush1.msra.mxu0 %v9297
    %9416 = vmatprep.subr.mxu0 0.0
    %9417 = vmatpush1.msra.mxu0 %v9296
    %9418 = vmatprep.subr.mxu0 0.0
    %9419 = vmatpush1.msra.mxu0 %v9295
    %9420 = vmatprep.subr.mxu0 0.0
    %9421 = vmatpush2.msra.mxu0 %v9326
    %9422 = vmatprep.subr.mxu0 0.0
    %9423 = vmatpush2.msra.mxu0 %v9325
    %9424 = vmatprep.subr.mxu0 0.0
    %9425 = vmatpush2.msra.mxu0 %v9324
    %9426 = vmatprep.subr.mxu0 0.0
    %9427 = vmatpush2.msra.mxu0 %v9323
    %9428 = vmatprep.subr.mxu0 0.0
    %9429 = vmatpush2.msra.mxu0 %v9322
    %9430 = vmatprep.subr.mxu0 0.0
    %9431 = vmatpush2.msra.mxu0 %v9321
    %9432 = vmatprep.subr.mxu0 0.0
    %9433 = vmatpush2.msra.mxu0 %v9320
    %9434 = vmatprep.subr.mxu0 0.0
    %9435 = vmatpush2.msra.mxu0 %v9319
    %9436 = vmatprep.subr.mxu0 0.0
    %9437 = vmatpush2.msra.mxu0 %v9318
    %9438 = vmatprep.subr.mxu0 0.0
    %9439 = vmatpush2.msra.mxu0 %v9317
    %9440 = vmatprep.subr.mxu0 0.0
    %9441 = vmatpush2.msra.mxu0 %v9316
    %9442 = vmatprep.subr.mxu0 0.0
    %9443 = vmatpush2.msra.mxu0 %v9315
    %9444 = vmatprep.subr.mxu0 0.0
    %9445 = vmatpush2.msra.mxu0 %v9314
    %9446 = vmatprep.subr.mxu0 0.0
    %9447 = vmatpush2.msra.mxu0 %v9313
    %9448 = vmatprep.subr.mxu0 0.0
    %9449 = vmatpush2.msra.mxu0 %v9312
    %9450 = vmatprep.subr.mxu0 0.0
    %9451 = vmatpush2.msra.mxu0 %v9311
    %9452 = vmatprep.mubr.f32.mxu0 %v9382
    %9453 = vmatmul.mubr.f32.gmra.mxu0 %v9374
    %v9454 = vpop.f32.mrf.mxu0
    %v9455 = vadd.f32 %v9364, %v9454
    %v9456 = vpop.f32.mrf.mxu0
    %9457 = vdwg.mxu0
    %9458 = vmatprep.subr.mxu0 0.0
    %9459 = vmatpush1.msra.mxu0 %v9342
    %9460 = vmatprep.subr.mxu0 0.0
    %9461 = vmatpush1.msra.mxu0 %v9341
    %9462 = vmatprep.subr.mxu0 0.0
    %9463 = vmatpush1.msra.mxu0 %v9340
    %9464 = vmatprep.subr.mxu0 0.0
    %9465 = vmatpush1.msra.mxu0 %v9339
    %9466 = vmatprep.subr.mxu0 0.0
    %9467 = vmatpush1.msra.mxu0 %v9338
    %9468 = vmatprep.subr.mxu0 0.0
    %9469 = vmatpush1.msra.mxu0 %v9337
    %9470 = vmatprep.subr.mxu0 0.0
    %9471 = vmatpush1.msra.mxu0 %v9336
    %9472 = vmatprep.subr.mxu0 0.0
    %9473 = vmatpush1.msra.mxu0 %v9335
    %9474 = vmatprep.subr.mxu0 0.0
    %9475 = vmatpush1.msra.mxu0 %v9334
    %9476 = vmatprep.subr.mxu0 0.0
    %9477 = vmatpush1.msra.mxu0 %v9333
    %9478 = vmatprep.subr.mxu0 0.0
    %9479 = vmatpush1.msra.mxu0 %v9332
    %9480 = vmatprep.subr.mxu0 0.0
    %9481 = vmatpush1.msra.mxu0 %v9331
    %9482 = vmatprep.subr.mxu0 0.0
    %9483 = vmatpush1.msra.mxu0 %v9330
    %9484 = vmatprep.subr.mxu0 0.0
    %9485 = vmatpush1.msra.mxu0 %v9329
    %9486 = vmatprep.subr.mxu0 0.0
    %9487 = vmatpush1.msra.mxu0 %v9328
    %9488 = vmatprep.subr.mxu0 0.0
    %9489 = vmatpush1.msra.mxu0 %v9327
    %9490 = vmatprep.subr.mxu0 0.0
    %9491 = vmatpush2.msra.mxu0 %v9358
    %9492 = vmatprep.subr.mxu0 0.0
    %9493 = vmatpush2.msra.mxu0 %v9357
    %9494 = vmatprep.subr.mxu0 0.0
    %9495 = vmatpush2.msra.mxu0 %v9356
    %9496 = vmatprep.subr.mxu0 0.0
    %9497 = vmatpush2.msra.mxu0 %v9355
    %9498 = vmatprep.subr.mxu0 0.0
    %9499 = vmatpush2.msra.mxu0 %v9354
    %9500 = vmatprep.subr.mxu0 0.0
    %9501 = vmatpush2.msra.mxu0 %v9353
    %9502 = vmatprep.subr.mxu0 0.0
    %9503 = vmatpush2.msra.mxu0 %v9352
    %9504 = vmatprep.subr.mxu0 0.0
    %9505 = vmatpush2.msra.mxu0 %v9351
    %9506 = vmatprep.subr.mxu0 0.0
    %9507 = vmatpush2.msra.mxu0 %v9350
    %9508 = vmatprep.subr.mxu0 0.0
    %9509 = vmatpush2.msra.mxu0 %v9349
    %9510 = vmatprep.subr.mxu0 0.0
    %9511 = vmatpush2.msra.mxu0 %v9348
    %9512 = vmatprep.subr.mxu0 0.0
    %9513 = vmatpush2.msra.mxu0 %v9347
    %9514 = vmatprep.subr.mxu0 0.0
    %9515 = vmatpush2.msra.mxu0 %v9346
    %9516 = vmatprep.subr.mxu0 0.0
    %9517 = vmatpush2.msra.mxu0 %v9345
    %9518 = vmatprep.subr.mxu0 0.0
    %9519 = vmatpush2.msra.mxu0 %v9344
    %9520 = vmatprep.subr.mxu0 0.0
    %9521 = vmatpush2.msra.mxu0 %v9343
    %9522 = vmatprep.mubr.f32.mxu0 %v9383
    %9523 = vmatmul.mubr.f32.gmra.mxu0 %v9381
    %v9524 = vpop.f32.mrf.mxu0
    %v9525 = vadd.f32 %v9455, %v9524
    %v9526 = vpop.f32.mrf.mxu0
    %9527 = vdwg.mxu0
    %v9528 = vmax.f32 %v9525, 0.0
    %v9529 = vld [vmem:[%s7] sm:$0xff]
    %v9530 = vld [vmem:[%s7 + $0x8] sm:$0xff]
    %v9531 = vld [vmem:[%s7 + $0x10] sm:$0xff]
    %v9532 = vld [vmem:[%s7 + $0x18] sm:$0xff]
    %v9533 = vld [vmem:[%s7 + $0x20] sm:$0xff]
    %v9534 = vld [vmem:[%s7 + $0x28] sm:$0xff]
    %v9535 = vld [vmem:[%s7 + $0x30] sm:$0xff]
    %v9536 = vld [vmem:[%s7 + $0x38] sm:$0xff]
    %v9537 = vld [vmem:[%s7 + $0x40] sm:$0xff]
    %v9538 = vld [vmem:[%s7 + $0x48] sm:$0xff]
    %v9539 = vld [vmem:[%s7 + $0x50] sm:$0xff]
    %v9540 = vld [vmem:[%s7 + $0x58] sm:$0xff]
    %v9541 = vld [vmem:[%s7 + $0x60] sm:$0xf]
    %v9542 = vld [vmem:[%s8] sm:$0x1]
    %v9544 = vlaneseq
    %v9545 = vshrl.u32 %v9544, 7
    %v9546 = vsub.s32 0, %v9545
    %v9547 = vrot.slane %v9542, %v9546
    %vm9549 = vcmask 818176
    %v9551 = vsel %vm9549, %v9528, 0
    %vm9553 = vcmask 1043456
    %v9555 = vsel %vm9553, %v9541, 0
    %9557 = vmatprep.subr.mxu0 0.0
    %9558 = vmatpush1.msra.mxu0 0.0
    %9559 = vmatprep.subr.mxu0 0.0
    %9560 = vmatpush1.msra.mxu0 0.0
    %9561 = vmatprep.subr.mxu0 0.0
    %9562 = vmatpush1.msra.mxu0 0.0
    %9563 = vmatprep.subr.mxu0 0.0
    %9564 = vmatpush1.msra.mxu0 %v9555
    %9565 = vmatprep.subr.mxu0 0.0
    %9566 = vmatpush1.msra.mxu0 %v9540
    %9567 = vmatprep.subr.mxu0 0.0
    %9568 = vmatpush1.msra.mxu0 %v9539
    %9569 = vmatprep.subr.mxu0 0.0
    %9570 = vmatpush1.msra.mxu0 %v9538
    %9571 = vmatprep.subr.mxu0 0.0
    %9572 = vmatpush1.msra.mxu0 %v9537
    %9573 = vmatprep.subr.mxu0 0.0
    %9574 = vmatpush1.msra.mxu0 %v9536
    %9575 = vmatprep.subr.mxu0 0.0
    %9576 = vmatpush1.msra.mxu0 %v9535
    %9577 = vmatprep.subr.mxu0 0.0
    %9578 = vmatpush1.msra.mxu0 %v9534
    %9579 = vmatprep.subr.mxu0 0.0
    %9580 = vmatpush1.msra.mxu0 %v9533
    %9581 = vmatprep.subr.mxu0 0.0
    %9582 = vmatpush1.msra.mxu0 %v9532
    %9583 = vmatprep.subr.mxu0 0.0
    %9584 = vmatpush1.msra.mxu0 %v9531
    %9585 = vmatprep.subr.mxu0 0.0
    %9586 = vmatpush1.msra.mxu0 %v9530
    %9587 = vmatprep.subr.mxu0 0.0
    %9588 = vmatpush1.msra.mxu0 %v9529
    %9589 = vmatprep.subr.mxu0 0.0
    %9590 = vmatpush2.msra.mxu0 0.0
    %9591 = vmatprep.subr.mxu0 0.0
    %9592 = vmatpush2.msra.mxu0 0.0
    %9593 = vmatprep.subr.mxu0 0.0
    %9594 = vmatpush2.msra.mxu0 0.0
    %9595 = vmatprep.subr.mxu0 0.0
    %9596 = vmatpush2.msra.mxu0 0.0
    %9597 = vmatprep.subr.mxu0 0.0
    %9598 = vmatpush2.msra.mxu0 0.0
    %9599 = vmatprep.subr.mxu0 0.0
    %9600 = vmatpush2.msra.mxu0 0.0
    %9601 = vmatprep.subr.mxu0 0.0
    %9602 = vmatpush2.msra.mxu0 0.0
    %9603 = vmatprep.subr.mxu0 0.0
    %9604 = vmatpush2.msra.mxu0 0.0
    %9605 = vmatprep.subr.mxu0 0.0
    %9606 = vmatpush2.msra.mxu0 0.0
    %9607 = vmatprep.subr.mxu0 0.0
    %9608 = vmatpush2.msra.mxu0 0.0
    %9609 = vmatprep.subr.mxu0 0.0
    %9610 = vmatpush2.msra.mxu0 0.0
    %9611 = vmatprep.subr.mxu0 0.0
    %9612 = vmatpush2.msra.mxu0 0.0
    %9613 = vmatprep.subr.mxu0 0.0
    %9614 = vmatpush2.msra.mxu0 0.0
    %9615 = vmatprep.subr.mxu0 0.0
    %9616 = vmatpush2.msra.mxu0 0.0
    %9617 = vmatprep.subr.mxu0 0.0
    %9618 = vmatpush2.msra.mxu0 0.0
    %9619 = vmatprep.subr.mxu0 0.0
    %9620 = vmatpush2.msra.mxu0 0.0
    %9621 = vmatprep.mubr.f32.mxu0 0.0
    %9622 = vmatmul.mubr.f32.gmra.mxu0 %v9551
    %v9623 = vpop.f32.mrf.mxu0
    %v9624 = vadd.f32 %v9547, %v9623
    %v9625 = vpop.f32.mrf.mxu0
    %9626 = vdwg.mxu0
    %vm9627 = vcmask 74752
    %9628 = vst.msk [vmem:[#allocation7] sm:$0x3] %vm9627, %v9624
    // Predicated region
    $region38: #{aol_2c2f_forward.1} parent=1 // pred_check
      _
    $region39: #{aol_2c2f_forward.1} parent=1 // pred_check_branch
      %9630 = sbr.rel (0) target = $region41
    $region40: #{aol_2c2f_forward.1} parent=1 // pred_region
      %s9632 = ssub.s32 32, 32
      %9633 = vsyncadd [#allocation8], %s9632
      %s9635 = sshll.u32 [#allocation7], 4
      %s9636 = int_to_ptr.vmem [resolvable:$true] %s9635
      %9638 = dma.vmem_to_hbm [thread:$0]  %s9636, 32, %s9, [#allocation8]
    $region41: #{aol_2c2f_forward.1} parent=1 // pred_fallthru
      _
    // Predicated region
    $region42: #{aol_2c2f_forward.1} parent=1 // pred_check
      _
    $region43: #{aol_2c2f_forward.1} parent=1 // pred_check_branch
      %9640 = sbr.rel (0) target = $region45
    $region44: #{aol_2c2f_forward.1} parent=1 // pred_region
      %9641 = dma.done [#allocation8], 32
    $region45: #{aol_2c2f_forward.1} parent=1 // pred_fallthru
      _
    %9642 = vsyncpa [#allocation8], 1

</llo_original>
